<compile_context>
chip_gen: v7x
topology: tpu7x:2x2x1
jax: 0.10.0
libtpu: 0.0.40
codegen_flags: <defaults>
</compile_context>

<pallas_src>
import jax
import jax.numpy as jnp
from jax import lax
from jax.experimental import pallas as pl
from jax.experimental.pallas import tpu as pltpu

IMG_SIZES = (64, 32, 16, 8)       # feature-map spatial sizes (reference order)
OUT_DIMS = (64, 128, 256, 512)    # feature-map channel counts (reference order)
# Level order for the fused pooled-feature matmul: 64-channel level goes last so the
# in-kernel concat boundaries (0, 128, 384, 896) are all 128-lane aligned.
FEAT_ORDER = (1, 2, 3, 0)


# --------------------------------------------------------------------------- #
# In-kernel helpers
# --------------------------------------------------------------------------- #
def _bilinear_pool(h, w, fmap, img_size):
    """Reference PointProjection.project for one level, as a one-hot MXU gather.

    h, w: (N, 1) f32 already clamped to [0, 127].  fmap: (S*S, C) bf16, row-major
    (index = y*S + x).  The torch reference's integer corner weights degenerate to a
    single surviving corner: since x.long() == x1 and y.long() == y1 always hold after
    the clamp, Q12/Q21/Q22 have weight 0 and Q11 has weight
    (x2 - floor(x)) * (y2 - floor(y)) which is exactly 0 or 1.  The gather is a
    bf16 x bf16 matmul with f32 accumulation -- bit-identical to an exact f32 gather
    followed by a bf16 cast (the weight is 0/1 and the features are already bf16).
    """
    S = img_size
    N = h.shape[0]
    scale = 128.0 / S                               # exact power of two for S in IMG_SIZES
    x = w / scale
    y = h / scale
    xf, yf = jnp.floor(x), jnp.floor(y)             # == .long() for x, y >= 0; always <= S-1
    x2 = jnp.minimum(jnp.ceil(x), S - 1.0)
    y2 = jnp.minimum(jnp.ceil(y), S - 1.0)
    wt = (x2 - xf) * (y2 - yf)                      # (N, 1) exactly 0.0 or 1.0
    flat = yf.astype(jnp.int32) * S + xf.astype(jnp.int32)          # surviving corner index
    j = lax.broadcasted_iota(jnp.int32, (N, S * S), 1)
    onehot = jnp.where(j == flat, wt, 0.0).astype(jnp.bfloat16)     # (N, S*S) bf16
    return jnp.dot(onehot, fmap, preferred_element_type=jnp.float32)  # (N, C) f32


def _fused_two_stage_kernel(small_ref, code1_ref, code2_ref,
                            f0_ref, f1_ref, f2_ref, f3_ref,
                            wpts1_ref, wfeat1_ref, w2a_ref, b2a_ref,
                            wpts2_ref, wfeat2_ref, w2b_ref, b2b_ref,
                            out_ref):
    small = small_ref[0]                            # (N+4, 3) f32
    pm_rot_t = small[0:3, :]                        # proMatrix[:3, :3]^T
    pm_off = small[3:4, :]                          # proMatrix[:3, 3]
    pts0 = small[4:, :]                             # (N, 3) input points (noise)
    feats = (f0_ref, f1_ref, f2_ref, f3_ref)

    def project(pts):
        # bmm(proMatrix, [pts; 1]) rows 0..2  ==  pts @ pm[:3,:3]^T + pm[:3,3]
        ann = jnp.dot(pts, pm_rot_t, preferred_element_type=jnp.float32) + pm_off
        z = ann[:, 2:3]                             # plain divide, matching the reference
        w = jnp.clip(ann[:, 0:1] / z, 0.0, 127.0)
        h = jnp.clip(ann[:, 1:2] / z, 0.0, 127.0)
        return h, w

    def stage(pts, code_ref, wpts_ref, wfeat_ref, w2_ref, b2_ref):
        h, w = project(pts)
        # Linear 1, split row-wise: points block + per-batch codeword bias (incl. b1)
        hidden = (jnp.dot(pts, wpts_ref[...], preferred_element_type=jnp.float32)
                  + code_ref[0])                                            # (N, H) f32
        pooled = [_bilinear_pool(h, w, feats[i][0], IMG_SIZES[i]) for i in FEAT_ORDER]
        q_all = jnp.concatenate(pooled, axis=1).astype(jnp.bfloat16)        # (N, 960)
        hidden = hidden + jnp.dot(q_all, wfeat_ref[...],
                                  preferred_element_type=jnp.float32)
        hidden = jnp.maximum(hidden, 0.0)           # ReLU + epilogue in f32 (v5e: no bf16 VPU)
        out = (jnp.dot(hidden, w2_ref[...], preferred_element_type=jnp.float32)
               + b2_ref[...])
        return out, h, w

    x_prim, _, _ = stage(pts0, code1_ref, wpts1_ref, wfeat1_ref, w2a_ref, b2a_ref)
    x_out, h2, w2 = stage(x_prim, code2_ref, wpts2_ref, wfeat2_ref, w2b_ref, b2b_ref)
    # Single lane-packed writeback: [x_primitive(3) | x_out(Dout) | h2(1) | w2(1)]
    out_ref[0] = jnp.concatenate([x_prim, x_out, h2, w2], axis=1)


# --------------------------------------------------------------------------- #
# pallas_call wrapper: ONE fused kernel for both PointGeneration stages
# --------------------------------------------------------------------------- #
def fused_two_stage_generation(small, code1, code2, featflat, g1, g2):
    B = small.shape[0]
    N = small.shape[1] - 4
    H1, H2 = code1.shape[2], code2.shape[2]
    Dout = g2["W2"].shape[1]
    assert g1["W2"].shape[1] == 3, "stage-1 output must be 3-D points for re-projection"
    f0, f1, f2, f3 = featflat

    batch3 = lambda b: (b, 0, 0)
    whole2 = lambda b: (0, 0)

    in_specs = [
        pl.BlockSpec((1, N + 4, 3), batch3),        # packed [pm_rot^T | pm_off | pts]
        pl.BlockSpec((1, 1, H1), batch3),           # G1 per-batch codeword bias
        pl.BlockSpec((1, 1, H2), batch3),           # G2 per-batch codeword bias
    ]
    in_specs += [pl.BlockSpec((1,) + f.shape[1:], batch3) for f in featflat]
    for g in (g1, g2):                              # resident weights (both stages)
        in_specs += [pl.BlockSpec(g["W_pts"].shape, whole2),
                     pl.BlockSpec(g["W_feat"].shape, whole2),
                     pl.BlockSpec(g["W2"].shape, whole2),
                     pl.BlockSpec(g["b2"].shape, whole2)]

    slab = 3 + Dout + 2
    return pl.pallas_call(
        _fused_two_stage_kernel,
        out_shape=jax.ShapeDtypeStruct((B, N, slab), jnp.float32),
        grid=(B,),
        in_specs=in_specs,
        out_specs=pl.BlockSpec((1, N, slab), batch3),
        compiler_params=pltpu.CompilerParams(dimension_semantics=("parallel",)),
    )(small, code1, code2, f0, f1, f2, f3,
      g1["W_pts"], g1["W_feat"], g1["W2"], g1["b2"],
      g2["W_pts"], g2["W_feat"], g2["W2"], g2["b2"])


# --------------------------------------------------------------------------- #
# Parameters: PointGeneration weights pre-split / pre-packed / pre-cast ONCE
# --------------------------------------------------------------------------- #
def init_point_generation(key, latent_dim, hidden, out_dim, feat_dims=OUT_DIMS):
    in_dim = 3 + latent_dim + sum(feat_dims)
    k1, k2 = jax.random.split(key)

    def xavier(kk, fi, fo):
        lim = (6.0 / (fi + fo)) ** 0.5
        return jax.random.uniform(kk, (fi, fo), jnp.float32, -lim, lim)

    W1 = xavier(k1, in_dim, hidden)   # rows: [pts(3) | code(latent) | feat levels(960)]
    W2 = xavier(k2, hidden, out_dim)

    o = 3 + latent_dim
    blocks, start = [], o
    for c in feat_dims:
        blocks.append(W1[start:start + c, :])
        start += c
    # One resident bf16 feature-weight slab, row blocks reordered per FEAT_ORDER so the
    # in-kernel pooled-feature concat lands on 128-lane-aligned boundaries.
    W_feat = jnp.concatenate([blocks[i] for i in FEAT_ORDER], axis=0).astype(jnp.bfloat16)

    return {
        "W_pts": W1[:3, :],
        "W_code": W1[3:o, :],
        "W_feat": W_feat,                           # (960, hidden) bf16
        "b1": jnp.zeros((hidden,), jnp.float32),
        "W2": W2,
        "b2": jnp.zeros((1, out_dim), jnp.float32),
    }


# --------------------------------------------------------------------------- #
# GeneratorVanilla forward
# --------------------------------------------------------------------------- #
def _synth_encoder(params, x):
    # TODO(synk): SegNet is undefined in the reference; deterministic stand-in producing
    # (img_latent, img_recons, featlist).  Feature maps are stored/emitted as channel-last
    # flattened (B, S*S, C) bf16 slabs so the forward path has no transpose or cast.
    pooled = jnp.mean(x, axis=(2, 3))               # (B, C_in)
    img_latent = jnp.tanh(pooled @ params["W_lat"])  # (B, LATENT)
    img_recons = x                                   # placeholder reconstruction
    return img_latent, img_recons, params["featflat"]


def generator_vanilla_forward(params, x, noise, proMatrix):
    img_latent, img_recons, featflat = _synth_encoder(params, x)
    g1, g2 = params["G1"], params["G2"]

    # Pack projection params with the points: rows [pm_rot^T(3) | pm_off(1) | pts(N)]
    pm_rot_t = jnp.transpose(proMatrix[:, :3, :3], (0, 2, 1))        # (B, 3, 3)
    pm_off = proMatrix[:, :3, 3][:, None, :]                         # (B, 1, 3)
    small = jnp.concatenate([pm_rot_t, pm_off, noise], axis=1)       # (B, N+4, 3)

    # codeword is constant over N: fold img_latent @ W_code + b1 into a per-batch bias.
    code1 = (img_latent @ g1["W_code"] + g1["b1"])[:, None, :]       # (B, 1, H1)
    code2 = (img_latent @ g2["W_code"] + g2["b1"])[:, None, :]       # (B, 1, H2)

    out = fused_two_stage_generation(small, code1, code2, featflat, g1, g2)
    Dout = g2["W2"].shape[1]
    x_primitive = out[..., 0:3]
    x_out = out[..., 3:3 + Dout]
    h2 = out[..., 3 + Dout:4 + Dout]
    w2 = out[..., 4 + Dout:5 + Dout]
    return h2, w2, img_recons, x_primitive, x_out


# --------------------------------------------------------------------------- #
if __name__ == "__main__":
    key = jax.random.PRNGKey(0)
    B = 2
    grid_dims = (4, 4)
    N = grid_dims[0] * grid_dims[1]
    LATENT = 32
    HIDDEN = 64

    k = jax.random.split(key, 10)
    x = jax.random.normal(k[0], (B, 3, 128, 128), jnp.float32)
    noise = jax.random.uniform(k[1], (B, N, 3), jnp.float32, -0.5, 0.5)

    pm = jnp.array([[50.0, 0.0, 0.0, 64.0],
                    [0.0, 50.0, 0.0, 64.0],
                    [0.0, 0.0, 0.0, 1.0],
                    [0.0, 0.0, 0.0, 1.0]], jnp.float32)
    proMatrix = jnp.tile(pm[None], (B, 1, 1))

    # Channel-last flattened bf16 feature slabs (what a real encoder port should emit).
    featflat = [
        (0.1 * jax.random.normal(k[2 + i], (B, s * s, c), jnp.float32)).astype(jnp.bfloat16)
        for i, (s, c) in enumerate(zip(IMG_SIZES, OUT_DIMS))
    ]

    params = {
        "G1": init_point_generation(k[6], LATENT, HIDDEN, 3),
        "G2": init_point_generation(k[7], LATENT, HIDDEN, 3),
        "W_lat": 0.1 * jax.random.normal(k[8], (3, LATENT), jnp.float32),
        "featflat": featflat,
    }

    fwd = jax.jit(generator_vanilla_forward)
    h2, w2, img_recons, x_prim, x_out = fwd(params, x, noise, proMatrix)
    jax.block_until_ready((h2, w2, img_recons, x_prim, x_out))

    assert h2.shape == (B, N, 1) and w2.shape == (B, N, 1)
    assert img_recons.shape == (B, 3, 128, 128)
    assert x_prim.shape == (B, N, 3) and x_out.shape == (B, N, 3)
    print("KERNEL_OK")
</pallas_src>

<mosaic_0001>
module attributes {stable_mosaic.version = 11 : i64} {
  func.func @_fused_two_stage_kernel(%arg0: i32, %arg1: memref<1x20x3xf32, #tpu.memory_space<vmem>>, %arg2: memref<1x1x64xf32, #tpu.memory_space<vmem>>, %arg3: memref<1x1x64xf32, #tpu.memory_space<vmem>>, %arg4: memref<1x4096x64xbf16, #tpu.memory_space<vmem>>, %arg5: memref<1x1024x128xbf16, #tpu.memory_space<vmem>>, %arg6: memref<1x256x256xbf16, #tpu.memory_space<vmem>>, %arg7: memref<1x64x512xbf16, #tpu.memory_space<vmem>>, %arg8: memref<3x64xf32, #tpu.memory_space<vmem>>, %arg9: memref<960x64xbf16, #tpu.memory_space<vmem>>, %arg10: memref<64x3xf32, #tpu.memory_space<vmem>>, %arg11: memref<1x3xf32, #tpu.memory_space<vmem>>, %arg12: memref<3x64xf32, #tpu.memory_space<vmem>>, %arg13: memref<960x64xbf16, #tpu.memory_space<vmem>>, %arg14: memref<64x3xf32, #tpu.memory_space<vmem>>, %arg15: memref<1x3xf32, #tpu.memory_space<vmem>>, %arg16: memref<1x16x8xf32, #tpu.memory_space<vmem>>) attributes {dimension_semantics = [#tpu.dimension_semantics<parallel>], iteration_bounds = array<i64: 2>, scalar_prefetch = 0 : i64, scratch_operands = 0 : i64, tpu.core_type = #tpu.core_type<tc>, window_params = [{transform_indices = @transform_0, window_bounds = array<i64: 1, 20, 3>}, {transform_indices = @transform_1, window_bounds = array<i64: 1, 1, 64>}, {transform_indices = @transform_2, window_bounds = array<i64: 1, 1, 64>}, {transform_indices = @transform_3, window_bounds = array<i64: 1, 4096, 64>}, {transform_indices = @transform_4, window_bounds = array<i64: 1, 1024, 128>}, {transform_indices = @transform_5, window_bounds = array<i64: 1, 256, 256>}, {transform_indices = @transform_6, window_bounds = array<i64: 1, 64, 512>}, {pipeline_mode = #tpu.pipeline_mode<synchronous>, transform_indices = @transform_7, window_bounds = array<i64: 3, 64>}, {pipeline_mode = #tpu.pipeline_mode<synchronous>, transform_indices = @transform_8, window_bounds = array<i64: 960, 64>}, {pipeline_mode = #tpu.pipeline_mode<synchronous>, transform_indices = @transform_9, window_bounds = array<i64: 64, 3>}, {pipeline_mode = #tpu.pipeline_mode<synchronous>, transform_indices = @transform_10, window_bounds = array<i64: 1, 3>}, {pipeline_mode = #tpu.pipeline_mode<synchronous>, transform_indices = @transform_11, window_bounds = array<i64: 3, 64>}, {pipeline_mode = #tpu.pipeline_mode<synchronous>, transform_indices = @transform_12, window_bounds = array<i64: 960, 64>}, {pipeline_mode = #tpu.pipeline_mode<synchronous>, transform_indices = @transform_13, window_bounds = array<i64: 64, 3>}, {pipeline_mode = #tpu.pipeline_mode<synchronous>, transform_indices = @transform_14, window_bounds = array<i64: 1, 3>}, {transform_indices = @transform_15, window_bounds = array<i64: 1, 16, 8>}]} {
    %c0 = arith.constant 0 : index
    %c0_0 = arith.constant 0 : index
    %c0_1 = arith.constant 0 : index
    %0 = vector.load %arg1[%c0, %c0_0, %c0_1] : memref<1x20x3xf32, #tpu.memory_space<vmem>>, vector<1x20x3xf32>
    %1 = vector.shape_cast %0 : vector<1x20x3xf32> to vector<20x3xf32>
    %2 = vector.extract_strided_slice %1 {offsets = [0, 0], sizes = [3, 3], strides = [1, 1]} : vector<20x3xf32> to vector<3x3xf32>
    %3 = vector.extract_strided_slice %1 {offsets = [3, 0], sizes = [1, 3], strides = [1, 1]} : vector<20x3xf32> to vector<1x3xf32>
    %4 = vector.extract_strided_slice %1 {offsets = [4, 0], sizes = [16, 3], strides = [1, 1]} : vector<20x3xf32> to vector<16x3xf32>
    %cst = arith.constant dense<0.000000e+00> : vector<16x3xf32>
    %5 = tpu.matmul %4, %2, %cst {dimension_numbers = #tpu.dot_dimension_numbers<[1], [0], [0], [1], [0, 0, 1, 1], [], []>} : vector<16x3xf32>, vector<3x3xf32>, vector<16x3xf32> -> vector<16x3xf32>
    %6 = vector.broadcast %3 : vector<1x3xf32> to vector<16x3xf32>
    %7 = arith.addf %5, %6 : vector<16x3xf32>
    %8 = vector.extract_strided_slice %7 {offsets = [0, 2], sizes = [16, 1], strides = [1, 1]} : vector<16x3xf32> to vector<16x1xf32>
    %9 = vector.extract_strided_slice %7 {offsets = [0, 0], sizes = [16, 1], strides = [1, 1]} : vector<16x3xf32> to vector<16x1xf32>
    %10 = arith.divf %9, %8 : vector<16x1xf32>
    %cst_2 = arith.constant 0.000000e+00 : f32
    %cst_3 = arith.constant 1.270000e+02 : f32
    %11 = vector.broadcast %cst_2 : f32 to vector<16x1xf32>
    %12 = arith.maximumf %11, %10 : vector<16x1xf32>
    %13 = vector.broadcast %cst_3 : f32 to vector<16x1xf32>
    %14 = arith.minimumf %13, %12 : vector<16x1xf32>
    %15 = vector.extract_strided_slice %7 {offsets = [0, 1], sizes = [16, 1], strides = [1, 1]} : vector<16x3xf32> to vector<16x1xf32>
    %16 = arith.divf %15, %8 : vector<16x1xf32>
    %cst_4 = arith.constant 0.000000e+00 : f32
    %cst_5 = arith.constant 1.270000e+02 : f32
    %17 = vector.broadcast %cst_4 : f32 to vector<16x1xf32>
    %18 = arith.maximumf %17, %16 : vector<16x1xf32>
    %19 = vector.broadcast %cst_5 : f32 to vector<16x1xf32>
    %20 = arith.minimumf %19, %18 : vector<16x1xf32>
    %c0_6 = arith.constant 0 : index
    %c0_7 = arith.constant 0 : index
    %21 = vector.load %arg8[%c0_6, %c0_7] : memref<3x64xf32, #tpu.memory_space<vmem>>, vector<3x64xf32>
    %cst_8 = arith.constant dense<0.000000e+00> : vector<16x64xf32>
    %22 = tpu.matmul %4, %21, %cst_8 {dimension_numbers = #tpu.dot_dimension_numbers<[1], [0], [0], [1], [0, 0, 1, 1], [], []>} : vector<16x3xf32>, vector<3x64xf32>, vector<16x64xf32> -> vector<16x64xf32>
    %c0_9 = arith.constant 0 : index
    %c0_10 = arith.constant 0 : index
    %c0_11 = arith.constant 0 : index
    %23 = vector.load %arg2[%c0_9, %c0_10, %c0_11] : memref<1x1x64xf32, #tpu.memory_space<vmem>>, vector<1x1x64xf32>
    %24 = vector.shape_cast %23 : vector<1x1x64xf32> to vector<1x64xf32>
    %25 = vector.broadcast %24 : vector<1x64xf32> to vector<16x64xf32>
    %26 = arith.addf %22, %25 : vector<16x64xf32>
    %c0_12 = arith.constant 0 : index
    %c0_13 = arith.constant 0 : index
    %c0_14 = arith.constant 0 : index
    %27 = vector.load %arg5[%c0_12, %c0_13, %c0_14] : memref<1x1024x128xbf16, #tpu.memory_space<vmem>>, vector<1x1024x128xbf16>
    %28 = vector.shape_cast %27 : vector<1x1024x128xbf16> to vector<1024x128xbf16>
    %cst_15 = arith.constant 4.000000e+00 : f32
    %29 = vector.broadcast %cst_15 : f32 to vector<16x1xf32>
    %30 = arith.divf %14, %29 : vector<16x1xf32>
    %cst_16 = arith.constant 4.000000e+00 : f32
    %31 = vector.broadcast %cst_16 : f32 to vector<16x1xf32>
    %32 = arith.divf %20, %31 : vector<16x1xf32>
    %33 = math.floor %30 : vector<16x1xf32>
    %34 = math.floor %32 : vector<16x1xf32>
    %35 = math.ceil %30 : vector<16x1xf32>
    %cst_17 = arith.constant 3.100000e+01 : f32
    %36 = vector.broadcast %cst_17 : f32 to vector<16x1xf32>
    %37 = arith.minimumf %35, %36 : vector<16x1xf32>
    %38 = math.ceil %32 : vector<16x1xf32>
    %cst_18 = arith.constant 3.100000e+01 : f32
    %39 = vector.broadcast %cst_18 : f32 to vector<16x1xf32>
    %40 = arith.minimumf %38, %39 : vector<16x1xf32>
    %41 = arith.subf %37, %33 : vector<16x1xf32>
    %42 = arith.subf %40, %34 : vector<16x1xf32>
    %43 = arith.mulf %41, %42 : vector<16x1xf32>
    %44 = arith.fptosi %34 : vector<16x1xf32> to vector<16x1xi32>
    %c32_i32 = arith.constant 32 : i32
    %45 = vector.broadcast %c32_i32 : i32 to vector<16x1xi32>
    %46 = arith.muli %44, %45 : vector<16x1xi32>
    %47 = arith.fptosi %33 : vector<16x1xf32> to vector<16x1xi32>
    %48 = arith.addi %46, %47 : vector<16x1xi32>
    %49 = tpu.iota {dimensions = array<i32: 1>} : vector<16x1024xi32>
    %50 = vector.broadcast %48 : vector<16x1xi32> to vector<16x1024xi32>
    %51 = arith.cmpi eq, %49, %50 : vector<16x1024xi32>
    %cst_19 = arith.constant 0.000000e+00 : f32
    %52 = vector.shape_cast %43 : vector<16x1xf32> to vector<16x1xf32>
    %53 = vector.broadcast %52 : vector<16x1xf32> to vector<16x1024xf32>
    %54 = vector.broadcast %cst_19 : f32 to vector<16x1024xf32>
    %55 = arith.select %51, %53, %54 : vector<16x1024xi1>, vector<16x1024xf32>
    %56 = arith.truncf %55 : vector<16x1024xf32> to vector<16x1024xbf16>
    %cst_20 = arith.constant dense<0.000000e+00> : vector<16x128xf32>
    %57 = tpu.matmul %56, %28, %cst_20 {dimension_numbers = #tpu.dot_dimension_numbers<[1], [0], [0], [1], [0, 0, 1, 1], [], []>} : vector<16x1024xbf16>, vector<1024x128xbf16>, vector<16x128xf32> -> vector<16x128xf32>
    %c0_21 = arith.constant 0 : index
    %c0_22 = arith.constant 0 : index
    %c0_23 = arith.constant 0 : index
    %58 = vector.load %arg6[%c0_21, %c0_22, %c0_23] : memref<1x256x256xbf16, #tpu.memory_space<vmem>>, vector<1x256x256xbf16>
    %59 = vector.shape_cast %58 : vector<1x256x256xbf16> to vector<256x256xbf16>
    %cst_24 = arith.constant 8.000000e+00 : f32
    %60 = vector.broadcast %cst_24 : f32 to vector<16x1xf32>
    %61 = arith.divf %14, %60 : vector<16x1xf32>
    %cst_25 = arith.constant 8.000000e+00 : f32
    %62 = vector.broadcast %cst_25 : f32 to vector<16x1xf32>
    %63 = arith.divf %20, %62 : vector<16x1xf32>
    %64 = math.floor %61 : vector<16x1xf32>
    %65 = math.floor %63 : vector<16x1xf32>
    %66 = math.ceil %61 : vector<16x1xf32>
    %cst_26 = arith.constant 1.500000e+01 : f32
    %67 = vector.broadcast %cst_26 : f32 to vector<16x1xf32>
    %68 = arith.minimumf %66, %67 : vector<16x1xf32>
    %69 = math.ceil %63 : vector<16x1xf32>
    %cst_27 = arith.constant 1.500000e+01 : f32
    %70 = vector.broadcast %cst_27 : f32 to vector<16x1xf32>
    %71 = arith.minimumf %69, %70 : vector<16x1xf32>
    %72 = arith.subf %68, %64 : vector<16x1xf32>
    %73 = arith.subf %71, %65 : vector<16x1xf32>
    %74 = arith.mulf %72, %73 : vector<16x1xf32>
    %75 = arith.fptosi %65 : vector<16x1xf32> to vector<16x1xi32>
    %c16_i32 = arith.constant 16 : i32
    %76 = vector.broadcast %c16_i32 : i32 to vector<16x1xi32>
    %77 = arith.muli %75, %76 : vector<16x1xi32>
    %78 = arith.fptosi %64 : vector<16x1xf32> to vector<16x1xi32>
    %79 = arith.addi %77, %78 : vector<16x1xi32>
    %80 = tpu.iota {dimensions = array<i32: 1>} : vector<16x256xi32>
    %81 = vector.broadcast %79 : vector<16x1xi32> to vector<16x256xi32>
    %82 = arith.cmpi eq, %80, %81 : vector<16x256xi32>
    %cst_28 = arith.constant 0.000000e+00 : f32
    %83 = vector.shape_cast %74 : vector<16x1xf32> to vector<16x1xf32>
    %84 = vector.broadcast %83 : vector<16x1xf32> to vector<16x256xf32>
    %85 = vector.broadcast %cst_28 : f32 to vector<16x256xf32>
    %86 = arith.select %82, %84, %85 : vector<16x256xi1>, vector<16x256xf32>
    %87 = arith.truncf %86 : vector<16x256xf32> to vector<16x256xbf16>
    %cst_29 = arith.constant dense<0.000000e+00> : vector<16x256xf32>
    %88 = tpu.matmul %87, %59, %cst_29 {dimension_numbers = #tpu.dot_dimension_numbers<[1], [0], [0], [1], [0, 0, 1, 1], [], []>} : vector<16x256xbf16>, vector<256x256xbf16>, vector<16x256xf32> -> vector<16x256xf32>
    %c0_30 = arith.constant 0 : index
    %c0_31 = arith.constant 0 : index
    %c0_32 = arith.constant 0 : index
    %89 = vector.load %arg7[%c0_30, %c0_31, %c0_32] : memref<1x64x512xbf16, #tpu.memory_space<vmem>>, vector<1x64x512xbf16>
    %90 = vector.shape_cast %89 : vector<1x64x512xbf16> to vector<64x512xbf16>
    %cst_33 = arith.constant 1.600000e+01 : f32
    %91 = vector.broadcast %cst_33 : f32 to vector<16x1xf32>
    %92 = arith.divf %14, %91 : vector<16x1xf32>
    %cst_34 = arith.constant 1.600000e+01 : f32
    %93 = vector.broadcast %cst_34 : f32 to vector<16x1xf32>
    %94 = arith.divf %20, %93 : vector<16x1xf32>
    %95 = math.floor %92 : vector<16x1xf32>
    %96 = math.floor %94 : vector<16x1xf32>
    %97 = math.ceil %92 : vector<16x1xf32>
    %cst_35 = arith.constant 7.000000e+00 : f32
    %98 = vector.broadcast %cst_35 : f32 to vector<16x1xf32>
    %99 = arith.minimumf %97, %98 : vector<16x1xf32>
    %100 = math.ceil %94 : vector<16x1xf32>
    %cst_36 = arith.constant 7.000000e+00 : f32
    %101 = vector.broadcast %cst_36 : f32 to vector<16x1xf32>
    %102 = arith.minimumf %100, %101 : vector<16x1xf32>
    %103 = arith.subf %99, %95 : vector<16x1xf32>
    %104 = arith.subf %102, %96 : vector<16x1xf32>
    %105 = arith.mulf %103, %104 : vector<16x1xf32>
    %106 = arith.fptosi %96 : vector<16x1xf32> to vector<16x1xi32>
    %c8_i32 = arith.constant 8 : i32
    %107 = vector.broadcast %c8_i32 : i32 to vector<16x1xi32>
    %108 = arith.muli %106, %107 : vector<16x1xi32>
    %109 = arith.fptosi %95 : vector<16x1xf32> to vector<16x1xi32>
    %110 = arith.addi %108, %109 : vector<16x1xi32>
    %111 = tpu.iota {dimensions = array<i32: 1>} : vector<16x64xi32>
    %112 = vector.broadcast %110 : vector<16x1xi32> to vector<16x64xi32>
    %113 = arith.cmpi eq, %111, %112 : vector<16x64xi32>
    %cst_37 = arith.constant 0.000000e+00 : f32
    %114 = vector.shape_cast %105 : vector<16x1xf32> to vector<16x1xf32>
    %115 = vector.broadcast %114 : vector<16x1xf32> to vector<16x64xf32>
    %116 = vector.broadcast %cst_37 : f32 to vector<16x64xf32>
    %117 = arith.select %113, %115, %116 : vector<16x64xi1>, vector<16x64xf32>
    %118 = arith.truncf %117 : vector<16x64xf32> to vector<16x64xbf16>
    %cst_38 = arith.constant dense<0.000000e+00> : vector<16x512xf32>
    %119 = tpu.matmul %118, %90, %cst_38 {dimension_numbers = #tpu.dot_dimension_numbers<[1], [0], [0], [1], [0, 0, 1, 1], [], []>} : vector<16x64xbf16>, vector<64x512xbf16>, vector<16x512xf32> -> vector<16x512xf32>
    %c0_39 = arith.constant 0 : index
    %c0_40 = arith.constant 0 : index
    %c0_41 = arith.constant 0 : index
    %120 = vector.load %arg4[%c0_39, %c0_40, %c0_41] : memref<1x4096x64xbf16, #tpu.memory_space<vmem>>, vector<1x4096x64xbf16>
    %121 = vector.shape_cast %120 : vector<1x4096x64xbf16> to vector<4096x64xbf16>
    %cst_42 = arith.constant 2.000000e+00 : f32
    %122 = vector.broadcast %cst_42 : f32 to vector<16x1xf32>
    %123 = arith.divf %14, %122 : vector<16x1xf32>
    %cst_43 = arith.constant 2.000000e+00 : f32
    %124 = vector.broadcast %cst_43 : f32 to vector<16x1xf32>
    %125 = arith.divf %20, %124 : vector<16x1xf32>
    %126 = math.floor %123 : vector<16x1xf32>
    %127 = math.floor %125 : vector<16x1xf32>
    %128 = math.ceil %123 : vector<16x1xf32>
    %cst_44 = arith.constant 6.300000e+01 : f32
    %129 = vector.broadcast %cst_44 : f32 to vector<16x1xf32>
    %130 = arith.minimumf %128, %129 : vector<16x1xf32>
    %131 = math.ceil %125 : vector<16x1xf32>
    %cst_45 = arith.constant 6.300000e+01 : f32
    %132 = vector.broadcast %cst_45 : f32 to vector<16x1xf32>
    %133 = arith.minimumf %131, %132 : vector<16x1xf32>
    %134 = arith.subf %130, %126 : vector<16x1xf32>
    %135 = arith.subf %133, %127 : vector<16x1xf32>
    %136 = arith.mulf %134, %135 : vector<16x1xf32>
    %137 = arith.fptosi %127 : vector<16x1xf32> to vector<16x1xi32>
    %c64_i32 = arith.constant 64 : i32
    %138 = vector.broadcast %c64_i32 : i32 to vector<16x1xi32>
    %139 = arith.muli %137, %138 : vector<16x1xi32>
    %140 = arith.fptosi %126 : vector<16x1xf32> to vector<16x1xi32>
    %141 = arith.addi %139, %140 : vector<16x1xi32>
    %142 = tpu.iota {dimensions = array<i32: 1>} : vector<16x4096xi32>
    %143 = vector.broadcast %141 : vector<16x1xi32> to vector<16x4096xi32>
    %144 = arith.cmpi eq, %142, %143 : vector<16x4096xi32>
    %cst_46 = arith.constant 0.000000e+00 : f32
    %145 = vector.shape_cast %136 : vector<16x1xf32> to vector<16x1xf32>
    %146 = vector.broadcast %145 : vector<16x1xf32> to vector<16x4096xf32>
    %147 = vector.broadcast %cst_46 : f32 to vector<16x4096xf32>
    %148 = arith.select %144, %146, %147 : vector<16x4096xi1>, vector<16x4096xf32>
    %149 = arith.truncf %148 : vector<16x4096xf32> to vector<16x4096xbf16>
    %cst_47 = arith.constant dense<0.000000e+00> : vector<16x64xf32>
    %150 = tpu.matmul %149, %121, %cst_47 {dimension_numbers = #tpu.dot_dimension_numbers<[1], [0], [0], [1], [0, 0, 1, 1], [], []>} : vector<16x4096xbf16>, vector<4096x64xbf16>, vector<16x64xf32> -> vector<16x64xf32>
    %151 = tpu.concatenate %57, %88, %119, %150 in 1 : vector<16x128xf32>, vector<16x256xf32>, vector<16x512xf32>, vector<16x64xf32> -> vector<16x960xf32>
    %152 = arith.truncf %151 : vector<16x960xf32> to vector<16x960xbf16>
    %c0_48 = arith.constant 0 : index
    %c0_49 = arith.constant 0 : index
    %153 = vector.load %arg9[%c0_48, %c0_49] : memref<960x64xbf16, #tpu.memory_space<vmem>>, vector<960x64xbf16>
    %cst_50 = arith.constant dense<0.000000e+00> : vector<16x64xf32>
    %154 = tpu.matmul %152, %153, %cst_50 {dimension_numbers = #tpu.dot_dimension_numbers<[1], [0], [0], [1], [0, 0, 1, 1], [], []>} : vector<16x960xbf16>, vector<960x64xbf16>, vector<16x64xf32> -> vector<16x64xf32>
    %155 = arith.addf %26, %154 : vector<16x64xf32>
    %cst_51 = arith.constant 0.000000e+00 : f32
    %156 = vector.broadcast %cst_51 : f32 to vector<16x64xf32>
    %157 = arith.maximumf %155, %156 : vector<16x64xf32>
    %c0_52 = arith.constant 0 : index
    %c0_53 = arith.constant 0 : index
    %158 = vector.load %arg10[%c0_52, %c0_53] : memref<64x3xf32, #tpu.memory_space<vmem>>, vector<64x3xf32>
    %cst_54 = arith.constant dense<0.000000e+00> : vector<16x3xf32>
    %159 = tpu.matmul %157, %158, %cst_54 {dimension_numbers = #tpu.dot_dimension_numbers<[1], [0], [0], [1], [0, 0, 1, 1], [], []>} : vector<16x64xf32>, vector<64x3xf32>, vector<16x3xf32> -> vector<16x3xf32>
    %c0_55 = arith.constant 0 : index
    %c0_56 = arith.constant 0 : index
    %160 = vector.load %arg11[%c0_55, %c0_56] : memref<1x3xf32, #tpu.memory_space<vmem>>, vector<1x3xf32>
    %161 = vector.broadcast %160 : vector<1x3xf32> to vector<16x3xf32>
    %162 = arith.addf %159, %161 : vector<16x3xf32>
    %cst_57 = arith.constant dense<0.000000e+00> : vector<16x3xf32>
    %163 = tpu.matmul %162, %2, %cst_57 {dimension_numbers = #tpu.dot_dimension_numbers<[1], [0], [0], [1], [0, 0, 1, 1], [], []>} : vector<16x3xf32>, vector<3x3xf32>, vector<16x3xf32> -> vector<16x3xf32>
    %164 = vector.broadcast %3 : vector<1x3xf32> to vector<16x3xf32>
    %165 = arith.addf %163, %164 : vector<16x3xf32>
    %166 = vector.extract_strided_slice %165 {offsets = [0, 2], sizes = [16, 1], strides = [1, 1]} : vector<16x3xf32> to vector<16x1xf32>
    %167 = vector.extract_strided_slice %165 {offsets = [0, 0], sizes = [16, 1], strides = [1, 1]} : vector<16x3xf32> to vector<16x1xf32>
    %168 = arith.divf %167, %166 : vector<16x1xf32>
    %cst_58 = arith.constant 0.000000e+00 : f32
    %cst_59 = arith.constant 1.270000e+02 : f32
    %169 = vector.broadcast %cst_58 : f32 to vector<16x1xf32>
    %170 = arith.maximumf %169, %168 : vector<16x1xf32>
    %171 = vector.broadcast %cst_59 : f32 to vector<16x1xf32>
    %172 = arith.minimumf %171, %170 : vector<16x1xf32>
    %173 = vector.extract_strided_slice %165 {offsets = [0, 1], sizes = [16, 1], strides = [1, 1]} : vector<16x3xf32> to vector<16x1xf32>
    %174 = arith.divf %173, %166 : vector<16x1xf32>
    %cst_60 = arith.constant 0.000000e+00 : f32
    %cst_61 = arith.constant 1.270000e+02 : f32
    %175 = vector.broadcast %cst_60 : f32 to vector<16x1xf32>
    %176 = arith.maximumf %175, %174 : vector<16x1xf32>
    %177 = vector.broadcast %cst_61 : f32 to vector<16x1xf32>
    %178 = arith.minimumf %177, %176 : vector<16x1xf32>
    %c0_62 = arith.constant 0 : index
    %c0_63 = arith.constant 0 : index
    %179 = vector.load %arg12[%c0_62, %c0_63] : memref<3x64xf32, #tpu.memory_space<vmem>>, vector<3x64xf32>
    %cst_64 = arith.constant dense<0.000000e+00> : vector<16x64xf32>
    %180 = tpu.matmul %162, %179, %cst_64 {dimension_numbers = #tpu.dot_dimension_numbers<[1], [0], [0], [1], [0, 0, 1, 1], [], []>} : vector<16x3xf32>, vector<3x64xf32>, vector<16x64xf32> -> vector<16x64xf32>
    %c0_65 = arith.constant 0 : index
    %c0_66 = arith.constant 0 : index
    %c0_67 = arith.constant 0 : index
    %181 = vector.load %arg3[%c0_65, %c0_66, %c0_67] : memref<1x1x64xf32, #tpu.memory_space<vmem>>, vector<1x1x64xf32>
    %182 = vector.shape_cast %181 : vector<1x1x64xf32> to vector<1x64xf32>
    %183 = vector.broadcast %182 : vector<1x64xf32> to vector<16x64xf32>
    %184 = arith.addf %180, %183 : vector<16x64xf32>
    %c0_68 = arith.constant 0 : index
    %c0_69 = arith.constant 0 : index
    %c0_70 = arith.constant 0 : index
    %185 = vector.load %arg5[%c0_68, %c0_69, %c0_70] : memref<1x1024x128xbf16, #tpu.memory_space<vmem>>, vector<1x1024x128xbf16>
    %186 = vector.shape_cast %185 : vector<1x1024x128xbf16> to vector<1024x128xbf16>
    %cst_71 = arith.constant 4.000000e+00 : f32
    %187 = vector.broadcast %cst_71 : f32 to vector<16x1xf32>
    %188 = arith.divf %172, %187 : vector<16x1xf32>
    %cst_72 = arith.constant 4.000000e+00 : f32
    %189 = vector.broadcast %cst_72 : f32 to vector<16x1xf32>
    %190 = arith.divf %178, %189 : vector<16x1xf32>
    %191 = math.floor %188 : vector<16x1xf32>
    %192 = math.floor %190 : vector<16x1xf32>
    %193 = math.ceil %188 : vector<16x1xf32>
    %cst_73 = arith.constant 3.100000e+01 : f32
    %194 = vector.broadcast %cst_73 : f32 to vector<16x1xf32>
    %195 = arith.minimumf %193, %194 : vector<16x1xf32>
    %196 = math.ceil %190 : vector<16x1xf32>
    %cst_74 = arith.constant 3.100000e+01 : f32
    %197 = vector.broadcast %cst_74 : f32 to vector<16x1xf32>
    %198 = arith.minimumf %196, %197 : vector<16x1xf32>
    %199 = arith.subf %195, %191 : vector<16x1xf32>
    %200 = arith.subf %198, %192 : vector<16x1xf32>
    %201 = arith.mulf %199, %200 : vector<16x1xf32>
    %202 = arith.fptosi %192 : vector<16x1xf32> to vector<16x1xi32>
    %c32_i32_75 = arith.constant 32 : i32
    %203 = vector.broadcast %c32_i32_75 : i32 to vector<16x1xi32>
    %204 = arith.muli %202, %203 : vector<16x1xi32>
    %205 = arith.fptosi %191 : vector<16x1xf32> to vector<16x1xi32>
    %206 = arith.addi %204, %205 : vector<16x1xi32>
    %207 = tpu.iota {dimensions = array<i32: 1>} : vector<16x1024xi32>
    %208 = vector.broadcast %206 : vector<16x1xi32> to vector<16x1024xi32>
    %209 = arith.cmpi eq, %207, %208 : vector<16x1024xi32>
    %cst_76 = arith.constant 0.000000e+00 : f32
    %210 = vector.shape_cast %201 : vector<16x1xf32> to vector<16x1xf32>
    %211 = vector.broadcast %210 : vector<16x1xf32> to vector<16x1024xf32>
    %212 = vector.broadcast %cst_76 : f32 to vector<16x1024xf32>
    %213 = arith.select %209, %211, %212 : vector<16x1024xi1>, vector<16x1024xf32>
    %214 = arith.truncf %213 : vector<16x1024xf32> to vector<16x1024xbf16>
    %cst_77 = arith.constant dense<0.000000e+00> : vector<16x128xf32>
    %215 = tpu.matmul %214, %186, %cst_77 {dimension_numbers = #tpu.dot_dimension_numbers<[1], [0], [0], [1], [0, 0, 1, 1], [], []>} : vector<16x1024xbf16>, vector<1024x128xbf16>, vector<16x128xf32> -> vector<16x128xf32>
    %c0_78 = arith.constant 0 : index
    %c0_79 = arith.constant 0 : index
    %c0_80 = arith.constant 0 : index
    %216 = vector.load %arg6[%c0_78, %c0_79, %c0_80] : memref<1x256x256xbf16, #tpu.memory_space<vmem>>, vector<1x256x256xbf16>
    %217 = vector.shape_cast %216 : vector<1x256x256xbf16> to vector<256x256xbf16>
    %cst_81 = arith.constant 8.000000e+00 : f32
    %218 = vector.broadcast %cst_81 : f32 to vector<16x1xf32>
    %219 = arith.divf %172, %218 : vector<16x1xf32>
    %cst_82 = arith.constant 8.000000e+00 : f32
    %220 = vector.broadcast %cst_82 : f32 to vector<16x1xf32>
    %221 = arith.divf %178, %220 : vector<16x1xf32>
    %222 = math.floor %219 : vector<16x1xf32>
    %223 = math.floor %221 : vector<16x1xf32>
    %224 = math.ceil %219 : vector<16x1xf32>
    %cst_83 = arith.constant 1.500000e+01 : f32
    %225 = vector.broadcast %cst_83 : f32 to vector<16x1xf32>
    %226 = arith.minimumf %224, %225 : vector<16x1xf32>
    %227 = math.ceil %221 : vector<16x1xf32>
    %cst_84 = arith.constant 1.500000e+01 : f32
    %228 = vector.broadcast %cst_84 : f32 to vector<16x1xf32>
    %229 = arith.minimumf %227, %228 : vector<16x1xf32>
    %230 = arith.subf %226, %222 : vector<16x1xf32>
    %231 = arith.subf %229, %223 : vector<16x1xf32>
    %232 = arith.mulf %230, %231 : vector<16x1xf32>
    %233 = arith.fptosi %223 : vector<16x1xf32> to vector<16x1xi32>
    %c16_i32_85 = arith.constant 16 : i32
    %234 = vector.broadcast %c16_i32_85 : i32 to vector<16x1xi32>
    %235 = arith.muli %233, %234 : vector<16x1xi32>
    %236 = arith.fptosi %222 : vector<16x1xf32> to vector<16x1xi32>
    %237 = arith.addi %235, %236 : vector<16x1xi32>
    %238 = tpu.iota {dimensions = array<i32: 1>} : vector<16x256xi32>
    %239 = vector.broadcast %237 : vector<16x1xi32> to vector<16x256xi32>
    %240 = arith.cmpi eq, %238, %239 : vector<16x256xi32>
    %cst_86 = arith.constant 0.000000e+00 : f32
    %241 = vector.shape_cast %232 : vector<16x1xf32> to vector<16x1xf32>
    %242 = vector.broadcast %241 : vector<16x1xf32> to vector<16x256xf32>
    %243 = vector.broadcast %cst_86 : f32 to vector<16x256xf32>
    %244 = arith.select %240, %242, %243 : vector<16x256xi1>, vector<16x256xf32>
    %245 = arith.truncf %244 : vector<16x256xf32> to vector<16x256xbf16>
    %cst_87 = arith.constant dense<0.000000e+00> : vector<16x256xf32>
    %246 = tpu.matmul %245, %217, %cst_87 {dimension_numbers = #tpu.dot_dimension_numbers<[1], [0], [0], [1], [0, 0, 1, 1], [], []>} : vector<16x256xbf16>, vector<256x256xbf16>, vector<16x256xf32> -> vector<16x256xf32>
    %c0_88 = arith.constant 0 : index
    %c0_89 = arith.constant 0 : index
    %c0_90 = arith.constant 0 : index
    %247 = vector.load %arg7[%c0_88, %c0_89, %c0_90] : memref<1x64x512xbf16, #tpu.memory_space<vmem>>, vector<1x64x512xbf16>
    %248 = vector.shape_cast %247 : vector<1x64x512xbf16> to vector<64x512xbf16>
    %cst_91 = arith.constant 1.600000e+01 : f32
    %249 = vector.broadcast %cst_91 : f32 to vector<16x1xf32>
    %250 = arith.divf %172, %249 : vector<16x1xf32>
    %cst_92 = arith.constant 1.600000e+01 : f32
    %251 = vector.broadcast %cst_92 : f32 to vector<16x1xf32>
    %252 = arith.divf %178, %251 : vector<16x1xf32>
    %253 = math.floor %250 : vector<16x1xf32>
    %254 = math.floor %252 : vector<16x1xf32>
    %255 = math.ceil %250 : vector<16x1xf32>
    %cst_93 = arith.constant 7.000000e+00 : f32
    %256 = vector.broadcast %cst_93 : f32 to vector<16x1xf32>
    %257 = arith.minimumf %255, %256 : vector<16x1xf32>
    %258 = math.ceil %252 : vector<16x1xf32>
    %cst_94 = arith.constant 7.000000e+00 : f32
    %259 = vector.broadcast %cst_94 : f32 to vector<16x1xf32>
    %260 = arith.minimumf %258, %259 : vector<16x1xf32>
    %261 = arith.subf %257, %253 : vector<16x1xf32>
    %262 = arith.subf %260, %254 : vector<16x1xf32>
    %263 = arith.mulf %261, %262 : vector<16x1xf32>
    %264 = arith.fptosi %254 : vector<16x1xf32> to vector<16x1xi32>
    %c8_i32_95 = arith.constant 8 : i32
    %265 = vector.broadcast %c8_i32_95 : i32 to vector<16x1xi32>
    %266 = arith.muli %264, %265 : vector<16x1xi32>
    %267 = arith.fptosi %253 : vector<16x1xf32> to vector<16x1xi32>
    %268 = arith.addi %266, %267 : vector<16x1xi32>
    %269 = tpu.iota {dimensions = array<i32: 1>} : vector<16x64xi32>
    %270 = vector.broadcast %268 : vector<16x1xi32> to vector<16x64xi32>
    %271 = arith.cmpi eq, %269, %270 : vector<16x64xi32>
    %cst_96 = arith.constant 0.000000e+00 : f32
    %272 = vector.shape_cast %263 : vector<16x1xf32> to vector<16x1xf32>
    %273 = vector.broadcast %272 : vector<16x1xf32> to vector<16x64xf32>
    %274 = vector.broadcast %cst_96 : f32 to vector<16x64xf32>
    %275 = arith.select %271, %273, %274 : vector<16x64xi1>, vector<16x64xf32>
    %276 = arith.truncf %275 : vector<16x64xf32> to vector<16x64xbf16>
    %cst_97 = arith.constant dense<0.000000e+00> : vector<16x512xf32>
    %277 = tpu.matmul %276, %248, %cst_97 {dimension_numbers = #tpu.dot_dimension_numbers<[1], [0], [0], [1], [0, 0, 1, 1], [], []>} : vector<16x64xbf16>, vector<64x512xbf16>, vector<16x512xf32> -> vector<16x512xf32>
    %c0_98 = arith.constant 0 : index
    %c0_99 = arith.constant 0 : index
    %c0_100 = arith.constant 0 : index
    %278 = vector.load %arg4[%c0_98, %c0_99, %c0_100] : memref<1x4096x64xbf16, #tpu.memory_space<vmem>>, vector<1x4096x64xbf16>
    %279 = vector.shape_cast %278 : vector<1x4096x64xbf16> to vector<4096x64xbf16>
    %cst_101 = arith.constant 2.000000e+00 : f32
    %280 = vector.broadcast %cst_101 : f32 to vector<16x1xf32>
    %281 = arith.divf %172, %280 : vector<16x1xf32>
    %cst_102 = arith.constant 2.000000e+00 : f32
    %282 = vector.broadcast %cst_102 : f32 to vector<16x1xf32>
    %283 = arith.divf %178, %282 : vector<16x1xf32>
    %284 = math.floor %281 : vector<16x1xf32>
    %285 = math.floor %283 : vector<16x1xf32>
    %286 = math.ceil %281 : vector<16x1xf32>
    %cst_103 = arith.constant 6.300000e+01 : f32
    %287 = vector.broadcast %cst_103 : f32 to vector<16x1xf32>
    %288 = arith.minimumf %286, %287 : vector<16x1xf32>
    %289 = math.ceil %283 : vector<16x1xf32>
    %cst_104 = arith.constant 6.300000e+01 : f32
    %290 = vector.broadcast %cst_104 : f32 to vector<16x1xf32>
    %291 = arith.minimumf %289, %290 : vector<16x1xf32>
    %292 = arith.subf %288, %284 : vector<16x1xf32>
    %293 = arith.subf %291, %285 : vector<16x1xf32>
    %294 = arith.mulf %292, %293 : vector<16x1xf32>
    %295 = arith.fptosi %285 : vector<16x1xf32> to vector<16x1xi32>
    %c64_i32_105 = arith.constant 64 : i32
    %296 = vector.broadcast %c64_i32_105 : i32 to vector<16x1xi32>
    %297 = arith.muli %295, %296 : vector<16x1xi32>
    %298 = arith.fptosi %284 : vector<16x1xf32> to vector<16x1xi32>
    %299 = arith.addi %297, %298 : vector<16x1xi32>
    %300 = tpu.iota {dimensions = array<i32: 1>} : vector<16x4096xi32>
    %301 = vector.broadcast %299 : vector<16x1xi32> to vector<16x4096xi32>
    %302 = arith.cmpi eq, %300, %301 : vector<16x4096xi32>
    %cst_106 = arith.constant 0.000000e+00 : f32
    %303 = vector.shape_cast %294 : vector<16x1xf32> to vector<16x1xf32>
    %304 = vector.broadcast %303 : vector<16x1xf32> to vector<16x4096xf32>
    %305 = vector.broadcast %cst_106 : f32 to vector<16x4096xf32>
    %306 = arith.select %302, %304, %305 : vector<16x4096xi1>, vector<16x4096xf32>
    %307 = arith.truncf %306 : vector<16x4096xf32> to vector<16x4096xbf16>
    %cst_107 = arith.constant dense<0.000000e+00> : vector<16x64xf32>
    %308 = tpu.matmul %307, %279, %cst_107 {dimension_numbers = #tpu.dot_dimension_numbers<[1], [0], [0], [1], [0, 0, 1, 1], [], []>} : vector<16x4096xbf16>, vector<4096x64xbf16>, vector<16x64xf32> -> vector<16x64xf32>
    %309 = tpu.concatenate %215, %246, %277, %308 in 1 : vector<16x128xf32>, vector<16x256xf32>, vector<16x512xf32>, vector<16x64xf32> -> vector<16x960xf32>
    %310 = arith.truncf %309 : vector<16x960xf32> to vector<16x960xbf16>
    %c0_108 = arith.constant 0 : index
    %c0_109 = arith.constant 0 : index
    %311 = vector.load %arg13[%c0_108, %c0_109] : memref<960x64xbf16, #tpu.memory_space<vmem>>, vector<960x64xbf16>
    %cst_110 = arith.constant dense<0.000000e+00> : vector<16x64xf32>
    %312 = tpu.matmul %310, %311, %cst_110 {dimension_numbers = #tpu.dot_dimension_numbers<[1], [0], [0], [1], [0, 0, 1, 1], [], []>} : vector<16x960xbf16>, vector<960x64xbf16>, vector<16x64xf32> -> vector<16x64xf32>
    %313 = arith.addf %184, %312 : vector<16x64xf32>
    %cst_111 = arith.constant 0.000000e+00 : f32
    %314 = vector.broadcast %cst_111 : f32 to vector<16x64xf32>
    %315 = arith.maximumf %313, %314 : vector<16x64xf32>
    %c0_112 = arith.constant 0 : index
    %c0_113 = arith.constant 0 : index
    %316 = vector.load %arg14[%c0_112, %c0_113] : memref<64x3xf32, #tpu.memory_space<vmem>>, vector<64x3xf32>
    %cst_114 = arith.constant dense<0.000000e+00> : vector<16x3xf32>
    %317 = tpu.matmul %315, %316, %cst_114 {dimension_numbers = #tpu.dot_dimension_numbers<[1], [0], [0], [1], [0, 0, 1, 1], [], []>} : vector<16x64xf32>, vector<64x3xf32>, vector<16x3xf32> -> vector<16x3xf32>
    %c0_115 = arith.constant 0 : index
    %c0_116 = arith.constant 0 : index
    %318 = vector.load %arg15[%c0_115, %c0_116] : memref<1x3xf32, #tpu.memory_space<vmem>>, vector<1x3xf32>
    %319 = vector.broadcast %318 : vector<1x3xf32> to vector<16x3xf32>
    %320 = arith.addf %317, %319 : vector<16x3xf32>
    %321 = tpu.concatenate %162, %320, %178, %172 in 1 : vector<16x3xf32>, vector<16x3xf32>, vector<16x1xf32>, vector<16x1xf32> -> vector<16x8xf32>
    %c0_117 = arith.constant 0 : index
    %c0_118 = arith.constant 0 : index
    %c0_119 = arith.constant 0 : index
    %322 = vector.load %arg16[%c0_117, %c0_118, %c0_119] : memref<1x16x8xf32, #tpu.memory_space<vmem>>, vector<1x16x8xf32>
    %323 = vector.shape_cast %322 : vector<1x16x8xf32> to vector<16x8xf32>
    %324 = vector.shape_cast %321 : vector<16x8xf32> to vector<1x16x8xf32>
    tpu.vector_store %arg16[%c0_117, %c0_118, %c0_119], %324 {strides = array<i32>} : memref<1x16x8xf32, #tpu.memory_space<vmem>>, vector<1x16x8xf32>,
    return
  }
  func.func @transform_0(%arg0: i32) -> (i32, i32, i32) {
    %c0_i32 = arith.constant 0 : i32
    %c0_i32_0 = arith.constant 0 : i32
    %c0_i32_1 = arith.constant 0 : i32
    return %arg0, %c0_i32, %c0_i32_0 : i32, i32, i32
  }
  func.func @transform_1(%arg0: i32) -> (i32, i32, i32) {
    %c0_i32 = arith.constant 0 : i32
    %c0_i32_0 = arith.constant 0 : i32
    %c0_i32_1 = arith.constant 0 : i32
    return %arg0, %c0_i32, %c0_i32_0 : i32, i32, i32
  }
  func.func @transform_2(%arg0: i32) -> (i32, i32, i32) {
    %c0_i32 = arith.constant 0 : i32
    %c0_i32_0 = arith.constant 0 : i32
    %c0_i32_1 = arith.constant 0 : i32
    return %arg0, %c0_i32, %c0_i32_0 : i32, i32, i32
  }
  func.func @transform_3(%arg0: i32) -> (i32, i32, i32) {
    %c0_i32 = arith.constant 0 : i32
    %c0_i32_0 = arith.constant 0 : i32
    %c0_i32_1 = arith.constant 0 : i32
    return %arg0, %c0_i32, %c0_i32_0 : i32, i32, i32
  }
  func.func @transform_4(%arg0: i32) -> (i32, i32, i32) {
    %c0_i32 = arith.constant 0 : i32
    %c0_i32_0 = arith.constant 0 : i32
    %c0_i32_1 = arith.constant 0 : i32
    return %arg0, %c0_i32, %c0_i32_0 : i32, i32, i32
  }
  func.func @transform_5(%arg0: i32) -> (i32, i32, i32) {
    %c0_i32 = arith.constant 0 : i32
    %c0_i32_0 = arith.constant 0 : i32
    %c0_i32_1 = arith.constant 0 : i32
    return %arg0, %c0_i32, %c0_i32_0 : i32, i32, i32
  }
  func.func @transform_6(%arg0: i32) -> (i32, i32, i32) {
    %c0_i32 = arith.constant 0 : i32
    %c0_i32_0 = arith.constant 0 : i32
    %c0_i32_1 = arith.constant 0 : i32
    return %arg0, %c0_i32, %c0_i32_0 : i32, i32, i32
  }
  func.func @transform_7(%arg0: i32) -> (i32, i32) {
    %c0_i32 = arith.constant 0 : i32
    %c0_i32_0 = arith.constant 0 : i32
    %c0_i32_1 = arith.constant 0 : i32
    return %c0_i32, %c0_i32_0 : i32, i32
  }
  func.func @transform_8(%arg0: i32) -> (i32, i32) {
    %c0_i32 = arith.constant 0 : i32
    %c0_i32_0 = arith.constant 0 : i32
    %c0_i32_1 = arith.constant 0 : i32
    return %c0_i32, %c0_i32_0 : i32, i32
  }
  func.func @transform_9(%arg0: i32) -> (i32, i32) {
    %c0_i32 = arith.constant 0 : i32
    %c0_i32_0 = arith.constant 0 : i32
    %c0_i32_1 = arith.constant 0 : i32
    return %c0_i32, %c0_i32_0 : i32, i32
  }
  func.func @transform_10(%arg0: i32) -> (i32, i32) {
    %c0_i32 = arith.constant 0 : i32
    %c0_i32_0 = arith.constant 0 : i32
    %c0_i32_1 = arith.constant 0 : i32
    return %c0_i32, %c0_i32_0 : i32, i32
  }
  func.func @transform_11(%arg0: i32) -> (i32, i32) {
    %c0_i32 = arith.constant 0 : i32
    %c0_i32_0 = arith.constant 0 : i32
    %c0_i32_1 = arith.constant 0 : i32
    return %c0_i32, %c0_i32_0 : i32, i32
  }
  func.func @transform_12(%arg0: i32) -> (i32, i32) {
    %c0_i32 = arith.constant 0 : i32
    %c0_i32_0 = arith.constant 0 : i32
    %c0_i32_1 = arith.constant 0 : i32
    return %c0_i32, %c0_i32_0 : i32, i32
  }
  func.func @transform_13(%arg0: i32) -> (i32, i32) {
    %c0_i32 = arith.constant 0 : i32
    %c0_i32_0 = arith.constant 0 : i32
    %c0_i32_1 = arith.constant 0 : i32
    return %c0_i32, %c0_i32_0 : i32, i32
  }
  func.func @transform_14(%arg0: i32) -> (i32, i32) {
    %c0_i32 = arith.constant 0 : i32
    %c0_i32_0 = arith.constant 0 : i32
    %c0_i32_1 = arith.constant 0 : i32
    return %c0_i32, %c0_i32_0 : i32, i32
  }
  func.func @transform_15(%arg0: i32) -> (i32, i32, i32) {
    %c0_i32 = arith.constant 0 : i32
    %c0_i32_0 = arith.constant 0 : i32
    %c0_i32_1 = arith.constant 0 : i32
    return %arg0, %c0_i32, %c0_i32_0 : i32, i32, i32
  }
}

</mosaic_0001>

<llo_original>
// kernel: generator_vanilla_forward.1
$region0: #{generator_vanilla_forward.1}
  #allocation0 [shape = 'u32[]', space=smem, size = 0x4, offset = 0x4, fixed_abs, tag = 'smem constant byte address 0x4 - core index']
  #allocation1 [shape = 'u32[144,128]{1,0:T(1,128)}', space=vmem, size = 0x12000, scoped, tag = 'internal scratch']
  %s0 = inlined_call_operand.vmem [shape: f32[2,20,3], index: 0, kind: input, shape index: {}]
  %s1 = inlined_call_operand.vmem [shape: f32[2,1,64], index: 1, kind: input, shape index: {}]
  %s2 = inlined_call_operand.vmem [shape: f32[2,1,64], index: 2, kind: input, shape index: {}]
  %s3 = inlined_call_operand.vmem [shape: bf16[2,4096,64], index: 3, kind: input, shape index: {}]
  %s4 = inlined_call_operand.vmem [shape: bf16[2,1024,128], index: 4, kind: input, shape index: {}]
  %s5 = inlined_call_operand.vmem [shape: bf16[2,256,256], index: 5, kind: input, shape index: {}]
  %s6 = inlined_call_operand.vmem [shape: bf16[2,64,512], index: 6, kind: input, shape index: {}]
  %s7 = inlined_call_operand.vmem [shape: f32[3,64], index: 7, kind: input, shape index: {}]
  %s8 = inlined_call_operand.vmem [shape: bf16[960,64], index: 8, kind: input, shape index: {}]
  %s9 = inlined_call_operand.vmem [shape: f32[64,3], index: 9, kind: input, shape index: {}]
  %s10 = inlined_call_operand.vmem [shape: f32[1,3], index: 10, kind: input, shape index: {}]
  %s11 = inlined_call_operand.vmem [shape: f32[3,64], index: 11, kind: input, shape index: {}]
  %s12 = inlined_call_operand.vmem [shape: bf16[960,64], index: 12, kind: input, shape index: {}]
  %s13 = inlined_call_operand.vmem [shape: f32[64,3], index: 13, kind: input, shape index: {}]
  %s14 = inlined_call_operand.vmem [shape: f32[1,3], index: 14, kind: input, shape index: {}]
  %s15 = inlined_call_operand.vmem [shape: f32[2,16,8], index: 15, kind: output, shape index: {}]
  %s16 = sld [smem:[#allocation0]]
  $region93: #{generator_vanilla_forward.1} parent=0
    _
  %s18 = ssub.s32 1, %s16
  %s19 = scalar_select 0, %s18, %s16
  loop: start=0, step=1, limit=4
  $region2: #{generator_vanilla_forward.1} parent=0 // loop_pre_header
    _
  $region3: #{generator_vanilla_forward.1} parent=0 // loop_header
    %s21 = sphi 0, %s25
    %p22 = scmp.ge.s32.totalorder %s21, 4
    %s31 = sphi 0, %s33
    %s34 = sphi 0, %s31
    %s35 = sphi 0, %s34
    %s51 = sphi 0, %s35
    %s57 = sphi 0, %s59
    %s60 = sphi 0, %s57
    %s61 = sphi 0, %s60
    %s77 = sphi 0, %s61
    %s83 = sphi 0, %s85
    %s86 = sphi 0, %s83
    %s87 = sphi 0, %s86
    %s103 = sphi 0, %s87
    %s109 = sphi 0, %s111
    %s112 = sphi 0, %s109
    %s113 = sphi 0, %s112
    %s129 = sphi 0, %s113
    %s135 = sphi 0, %s137
    %s138 = sphi 0, %s135
    %s139 = sphi 0, %s138
    %s155 = sphi 0, %s139
    %s161 = sphi 0, %s163
    %s164 = sphi 0, %s161
    %s165 = sphi 0, %s164
    %s181 = sphi 0, %s165
    %s187 = sphi 0, %s189
    %s190 = sphi 0, %s187
    %s191 = sphi 0, %s190
    %s207 = sphi 0, %s191
    %s211 = sphi 0, %s211
    %s213 = sphi 0, %s211
    %s214 = sphi 0, %s213
    %s228 = sphi 0, %s214
    %s232 = sphi 0, %s232
    %s234 = sphi 0, %s232
    %s235 = sphi 0, %s234
    %s249 = sphi 0, %s235
    %s253 = sphi 0, %s253
    %s255 = sphi 0, %s253
    %s256 = sphi 0, %s255
    %s270 = sphi 0, %s256
    %s274 = sphi 0, %s274
    %s276 = sphi 0, %s274
    %s277 = sphi 0, %s276
    %s291 = sphi 0, %s277
    %s295 = sphi 0, %s295
    %s297 = sphi 0, %s295
    %s298 = sphi 0, %s297
    %s312 = sphi 0, %s298
    %s316 = sphi 0, %s316
    %s318 = sphi 0, %s316
    %s319 = sphi 0, %s318
    %s333 = sphi 0, %s319
    %s337 = sphi 0, %s337
    %s339 = sphi 0, %s337
    %s340 = sphi 0, %s339
    %s354 = sphi 0, %s340
    %s358 = sphi 0, %s358
    %s360 = sphi 0, %s358
    %s361 = sphi 0, %s360
    %s375 = sphi 0, %s361
    %s381 = sphi 0, %s383
    %s384 = sphi 0, %s381
    %s385 = sphi 0, %s384
    %s401 = sphi 0, %s385
  $region4: #{generator_vanilla_forward.1} parent=0 // loop_header_branch
    %24 = sbr.rel (%p22) target = $region8
  $region5: #{generator_vanilla_forward.1} parent=0 // loop_body
    %s26 = ssub.s32 %s21, 1
    %s27 = ssub.s32 %s21, 2
    %s28 = sadd.s32 %s21, 1
    %s29 = ssub.s32 %s21, %s28
    %p30 = scmp.eq.s32.totalorder %s29, 0
    %s32 = sadd.s32 %s31, 1
    %s33 = scalar_select %p30, %s31, %s32
    %p36 = pneg %p30
    %p37 = scmp.eq.s32.totalorder %s21, 1
    %p38 = por %p36, %p37
    %p39 = scmp.ne.s32.totalorder %s31, %s34
    %p40 = scmp.eq.s32.totalorder %s21, 0
    %p41 = por %p39, %p40
    %p42 = scmp.ne.s32.totalorder %s31, %s34
    %p43 = scmp.eq.s32.totalorder %s26, 1
    %p44 = por %p42, %p43
    %p45 = scmp.ne.s32.totalorder %s34, %s35
    %p46 = scmp.eq.s32.totalorder %s26, 0
    %p47 = por %p45, %p46
    %p48 = scmp.ne.s32.totalorder %s34, %s35
    %p49 = scmp.eq.s32.totalorder %s27, 1
    %p50 = por %p48, %p49
    %p52 = scmp.ne.s32.totalorder %s35, %s51
    %p53 = scmp.eq.s32.totalorder %s27, 0
    %p54 = por %p52, %p53
    %s55 = ssub.s32 %s21, %s28
    %p56 = scmp.eq.s32.totalorder %s55, 0
    %s58 = sadd.s32 %s57, 1
    %s59 = scalar_select %p56, %s57, %s58
    %p62 = pneg %p56
    %p63 = scmp.eq.s32.totalorder %s21, 1
    %p64 = por %p62, %p63
    %p65 = scmp.ne.s32.totalorder %s57, %s60
    %p66 = scmp.eq.s32.totalorder %s21, 0
    %p67 = por %p65, %p66
    %p68 = scmp.ne.s32.totalorder %s57, %s60
    %p69 = scmp.eq.s32.totalorder %s26, 1
    %p70 = por %p68, %p69
    %p71 = scmp.ne.s32.totalorder %s60, %s61
    %p72 = scmp.eq.s32.totalorder %s26, 0
    %p73 = por %p71, %p72
    %p74 = scmp.ne.s32.totalorder %s60, %s61
    %p75 = scmp.eq.s32.totalorder %s27, 1
    %p76 = por %p74, %p75
    %p78 = scmp.ne.s32.totalorder %s61, %s77
    %p79 = scmp.eq.s32.totalorder %s27, 0
    %p80 = por %p78, %p79
    %s81 = ssub.s32 %s21, %s28
    %p82 = scmp.eq.s32.totalorder %s81, 0
    %s84 = sadd.s32 %s83, 1
    %s85 = scalar_select %p82, %s83, %s84
    %p88 = pneg %p82
    %p89 = scmp.eq.s32.totalorder %s21, 1
    %p90 = por %p88, %p89
    %p91 = scmp.ne.s32.totalorder %s83, %s86
    %p92 = scmp.eq.s32.totalorder %s21, 0
    %p93 = por %p91, %p92
    %p94 = scmp.ne.s32.totalorder %s83, %s86
    %p95 = scmp.eq.s32.totalorder %s26, 1
    %p96 = por %p94, %p95
    %p97 = scmp.ne.s32.totalorder %s86, %s87
    %p98 = scmp.eq.s32.totalorder %s26, 0
    %p99 = por %p97, %p98
    %p100 = scmp.ne.s32.totalorder %s86, %s87
    %p101 = scmp.eq.s32.totalorder %s27, 1
    %p102 = por %p100, %p101
    %p104 = scmp.ne.s32.totalorder %s87, %s103
    %p105 = scmp.eq.s32.totalorder %s27, 0
    %p106 = por %p104, %p105
    %s107 = ssub.s32 %s21, %s28
    %p108 = scmp.eq.s32.totalorder %s107, 0
    %s110 = sadd.s32 %s109, 1
    %s111 = scalar_select %p108, %s109, %s110
    %p114 = pneg %p108
    %p115 = scmp.eq.s32.totalorder %s21, 1
    %p116 = por %p114, %p115
    %p117 = scmp.ne.s32.totalorder %s109, %s112
    %p118 = scmp.eq.s32.totalorder %s21, 0
    %p119 = por %p117, %p118
    %p120 = scmp.ne.s32.totalorder %s109, %s112
    %p121 = scmp.eq.s32.totalorder %s26, 1
    %p122 = por %p120, %p121
    %p123 = scmp.ne.s32.totalorder %s112, %s113
    %p124 = scmp.eq.s32.totalorder %s26, 0
    %p125 = por %p123, %p124
    %p126 = scmp.ne.s32.totalorder %s112, %s113
    %p127 = scmp.eq.s32.totalorder %s27, 1
    %p128 = por %p126, %p127
    %p130 = scmp.ne.s32.totalorder %s113, %s129
    %p131 = scmp.eq.s32.totalorder %s27, 0
    %p132 = por %p130, %p131
    %s133 = ssub.s32 %s21, %s28
    %p134 = scmp.eq.s32.totalorder %s133, 0
    %s136 = sadd.s32 %s135, 1
    %s137 = scalar_select %p134, %s135, %s136
    %p140 = pneg %p134
    %p141 = scmp.eq.s32.totalorder %s21, 1
    %p142 = por %p140, %p141
    %p143 = scmp.ne.s32.totalorder %s135, %s138
    %p144 = scmp.eq.s32.totalorder %s21, 0
    %p145 = por %p143, %p144
    %p146 = scmp.ne.s32.totalorder %s135, %s138
    %p147 = scmp.eq.s32.totalorder %s26, 1
    %p148 = por %p146, %p147
    %p149 = scmp.ne.s32.totalorder %s138, %s139
    %p150 = scmp.eq.s32.totalorder %s26, 0
    %p151 = por %p149, %p150
    %p152 = scmp.ne.s32.totalorder %s138, %s139
    %p153 = scmp.eq.s32.totalorder %s27, 1
    %p154 = por %p152, %p153
    %p156 = scmp.ne.s32.totalorder %s139, %s155
    %p157 = scmp.eq.s32.totalorder %s27, 0
    %p158 = por %p156, %p157
    %s159 = ssub.s32 %s21, %s28
    %p160 = scmp.eq.s32.totalorder %s159, 0
    %s162 = sadd.s32 %s161, 1
    %s163 = scalar_select %p160, %s161, %s162
    %p166 = pneg %p160
    %p167 = scmp.eq.s32.totalorder %s21, 1
    %p168 = por %p166, %p167
    %p169 = scmp.ne.s32.totalorder %s161, %s164
    %p170 = scmp.eq.s32.totalorder %s21, 0
    %p171 = por %p169, %p170
    %p172 = scmp.ne.s32.totalorder %s161, %s164
    %p173 = scmp.eq.s32.totalorder %s26, 1
    %p174 = por %p172, %p173
    %p175 = scmp.ne.s32.totalorder %s164, %s165
    %p176 = scmp.eq.s32.totalorder %s26, 0
    %p177 = por %p175, %p176
    %p178 = scmp.ne.s32.totalorder %s164, %s165
    %p179 = scmp.eq.s32.totalorder %s27, 1
    %p180 = por %p178, %p179
    %p182 = scmp.ne.s32.totalorder %s165, %s181
    %p183 = scmp.eq.s32.totalorder %s27, 0
    %p184 = por %p182, %p183
    %s185 = ssub.s32 %s21, %s28
    %p186 = scmp.eq.s32.totalorder %s185, 0
    %s188 = sadd.s32 %s187, 1
    %s189 = scalar_select %p186, %s187, %s188
    %p192 = pneg %p186
    %p193 = scmp.eq.s32.totalorder %s21, 1
    %p194 = por %p192, %p193
    %p195 = scmp.ne.s32.totalorder %s187, %s190
    %p196 = scmp.eq.s32.totalorder %s21, 0
    %p197 = por %p195, %p196
    %p198 = scmp.ne.s32.totalorder %s187, %s190
    %p199 = scmp.eq.s32.totalorder %s26, 1
    %p200 = por %p198, %p199
    %p201 = scmp.ne.s32.totalorder %s190, %s191
    %p202 = scmp.eq.s32.totalorder %s26, 0
    %p203 = por %p201, %p202
    %p204 = scmp.ne.s32.totalorder %s190, %s191
    %p205 = scmp.eq.s32.totalorder %s27, 1
    %p206 = por %p204, %p205
    %p208 = scmp.ne.s32.totalorder %s191, %s207
    %p209 = scmp.eq.s32.totalorder %s27, 0
    %p210 = por %p208, %p209
    %s212 = sadd.s32 %s211, 1
    %p215 = scmp.eq.s32.totalorder %s21, 1
    %p216 = scmp.ne.s32.totalorder %s211, %s213
    %p217 = scmp.eq.s32.totalorder %s21, 0
    %p218 = por %p216, %p217
    %p219 = scmp.ne.s32.totalorder %s211, %s213
    %p220 = scmp.eq.s32.totalorder %s26, 1
    %p221 = por %p219, %p220
    %p222 = scmp.ne.s32.totalorder %s213, %s214
    %p223 = scmp.eq.s32.totalorder %s26, 0
    %p224 = por %p222, %p223
    %p225 = scmp.ne.s32.totalorder %s213, %s214
    %p226 = scmp.eq.s32.totalorder %s27, 1
    %p227 = por %p225, %p226
    %p229 = scmp.ne.s32.totalorder %s214, %s228
    %p230 = scmp.eq.s32.totalorder %s27, 0
    %p231 = por %p229, %p230
    %s233 = sadd.s32 %s232, 1
    %p236 = scmp.eq.s32.totalorder %s21, 1
    %p237 = scmp.ne.s32.totalorder %s232, %s234
    %p238 = scmp.eq.s32.totalorder %s21, 0
    %p239 = por %p237, %p238
    %p240 = scmp.ne.s32.totalorder %s232, %s234
    %p241 = scmp.eq.s32.totalorder %s26, 1
    %p242 = por %p240, %p241
    %p243 = scmp.ne.s32.totalorder %s234, %s235
    %p244 = scmp.eq.s32.totalorder %s26, 0
    %p245 = por %p243, %p244
    %p246 = scmp.ne.s32.totalorder %s234, %s235
    %p247 = scmp.eq.s32.totalorder %s27, 1
    %p248 = por %p246, %p247
    %p250 = scmp.ne.s32.totalorder %s235, %s249
    %p251 = scmp.eq.s32.totalorder %s27, 0
    %p252 = por %p250, %p251
    %s254 = sadd.s32 %s253, 1
    %p257 = scmp.eq.s32.totalorder %s21, 1
    %p258 = scmp.ne.s32.totalorder %s253, %s255
    %p259 = scmp.eq.s32.totalorder %s21, 0
    %p260 = por %p258, %p259
    %p261 = scmp.ne.s32.totalorder %s253, %s255
    %p262 = scmp.eq.s32.totalorder %s26, 1
    %p263 = por %p261, %p262
    %p264 = scmp.ne.s32.totalorder %s255, %s256
    %p265 = scmp.eq.s32.totalorder %s26, 0
    %p266 = por %p264, %p265
    %p267 = scmp.ne.s32.totalorder %s255, %s256
    %p268 = scmp.eq.s32.totalorder %s27, 1
    %p269 = por %p267, %p268
    %p271 = scmp.ne.s32.totalorder %s256, %s270
    %p272 = scmp.eq.s32.totalorder %s27, 0
    %p273 = por %p271, %p272
    %s275 = sadd.s32 %s274, 1
    %p278 = scmp.eq.s32.totalorder %s21, 1
    %p279 = scmp.ne.s32.totalorder %s274, %s276
    %p280 = scmp.eq.s32.totalorder %s21, 0
    %p281 = por %p279, %p280
    %p282 = scmp.ne.s32.totalorder %s274, %s276
    %p283 = scmp.eq.s32.totalorder %s26, 1
    %p284 = por %p282, %p283
    %p285 = scmp.ne.s32.totalorder %s276, %s277
    %p286 = scmp.eq.s32.totalorder %s26, 0
    %p287 = por %p285, %p286
    %p288 = scmp.ne.s32.totalorder %s276, %s277
    %p289 = scmp.eq.s32.totalorder %s27, 1
    %p290 = por %p288, %p289
    %p292 = scmp.ne.s32.totalorder %s277, %s291
    %p293 = scmp.eq.s32.totalorder %s27, 0
    %p294 = por %p292, %p293
    %s296 = sadd.s32 %s295, 1
    %p299 = scmp.eq.s32.totalorder %s21, 1
    %p300 = scmp.ne.s32.totalorder %s295, %s297
    %p301 = scmp.eq.s32.totalorder %s21, 0
    %p302 = por %p300, %p301
    %p303 = scmp.ne.s32.totalorder %s295, %s297
    %p304 = scmp.eq.s32.totalorder %s26, 1
    %p305 = por %p303, %p304
    %p306 = scmp.ne.s32.totalorder %s297, %s298
    %p307 = scmp.eq.s32.totalorder %s26, 0
    %p308 = por %p306, %p307
    %p309 = scmp.ne.s32.totalorder %s297, %s298
    %p310 = scmp.eq.s32.totalorder %s27, 1
    %p311 = por %p309, %p310
    %p313 = scmp.ne.s32.totalorder %s298, %s312
    %p314 = scmp.eq.s32.totalorder %s27, 0
    %p315 = por %p313, %p314
    %s317 = sadd.s32 %s316, 1
    %p320 = scmp.eq.s32.totalorder %s21, 1
    %p321 = scmp.ne.s32.totalorder %s316, %s318
    %p322 = scmp.eq.s32.totalorder %s21, 0
    %p323 = por %p321, %p322
    %p324 = scmp.ne.s32.totalorder %s316, %s318
    %p325 = scmp.eq.s32.totalorder %s26, 1
    %p326 = por %p324, %p325
    %p327 = scmp.ne.s32.totalorder %s318, %s319
    %p328 = scmp.eq.s32.totalorder %s26, 0
    %p329 = por %p327, %p328
    %p330 = scmp.ne.s32.totalorder %s318, %s319
    %p331 = scmp.eq.s32.totalorder %s27, 1
    %p332 = por %p330, %p331
    %p334 = scmp.ne.s32.totalorder %s319, %s333
    %p335 = scmp.eq.s32.totalorder %s27, 0
    %p336 = por %p334, %p335
    %s338 = sadd.s32 %s337, 1
    %p341 = scmp.eq.s32.totalorder %s21, 1
    %p342 = scmp.ne.s32.totalorder %s337, %s339
    %p343 = scmp.eq.s32.totalorder %s21, 0
    %p344 = por %p342, %p343
    %p345 = scmp.ne.s32.totalorder %s337, %s339
    %p346 = scmp.eq.s32.totalorder %s26, 1
    %p347 = por %p345, %p346
    %p348 = scmp.ne.s32.totalorder %s339, %s340
    %p349 = scmp.eq.s32.totalorder %s26, 0
    %p350 = por %p348, %p349
    %p351 = scmp.ne.s32.totalorder %s339, %s340
    %p352 = scmp.eq.s32.totalorder %s27, 1
    %p353 = por %p351, %p352
    %p355 = scmp.ne.s32.totalorder %s340, %s354
    %p356 = scmp.eq.s32.totalorder %s27, 0
    %p357 = por %p355, %p356
    %s359 = sadd.s32 %s358, 1
    %p362 = scmp.eq.s32.totalorder %s21, 1
    %p363 = scmp.ne.s32.totalorder %s358, %s360
    %p364 = scmp.eq.s32.totalorder %s21, 0
    %p365 = por %p363, %p364
    %p366 = scmp.ne.s32.totalorder %s358, %s360
    %p367 = scmp.eq.s32.totalorder %s26, 1
    %p368 = por %p366, %p367
    %p369 = scmp.ne.s32.totalorder %s360, %s361
    %p370 = scmp.eq.s32.totalorder %s26, 0
    %p371 = por %p369, %p370
    %p372 = scmp.ne.s32.totalorder %s360, %s361
    %p373 = scmp.eq.s32.totalorder %s27, 1
    %p374 = por %p372, %p373
    %p376 = scmp.ne.s32.totalorder %s361, %s375
    %p377 = scmp.eq.s32.totalorder %s27, 0
    %p378 = por %p376, %p377
    %s379 = ssub.s32 %s21, %s28
    %p380 = scmp.eq.s32.totalorder %s379, 0
    %s382 = sadd.s32 %s381, 1
    %s383 = scalar_select %p380, %s381, %s382
    %p386 = pneg %p380
    %p387 = scmp.eq.s32.totalorder %s21, 1
    %p388 = por %p386, %p387
    %p389 = scmp.ne.s32.totalorder %s381, %s384
    %p390 = scmp.eq.s32.totalorder %s21, 0
    %p391 = por %p389, %p390
    %p392 = scmp.ne.s32.totalorder %s381, %s384
    %p393 = scmp.eq.s32.totalorder %s26, 1
    %p394 = por %p392, %p393
    %p395 = scmp.ne.s32.totalorder %s384, %s385
    %p396 = scmp.eq.s32.totalorder %s26, 0
    %p397 = por %p395, %p396
    %p398 = scmp.ne.s32.totalorder %s384, %s385
    %p399 = scmp.eq.s32.totalorder %s27, 1
    %p400 = por %p398, %p399
    %p402 = scmp.ne.s32.totalorder %s385, %s401
    %p403 = scmp.eq.s32.totalorder %s27, 0
    %p404 = por %p402, %p403
    %p405 = scmp.le.s32.totalorder 1, %s21
    %p406 = scmp.lt.s32.totalorder %s21, 3
    %p407 = pnand %p405, %p406
    %p408 = pneg %p407
    // Predicated region
    $region9: #{generator_vanilla_forward.1} parent=5 // pred_check
      _
    $region10: #{generator_vanilla_forward.1} parent=5 // pred_check_branch
      %410 = sbr.rel (%p407) target = $region12
    $region11: #{generator_vanilla_forward.1} parent=5 // pred_region
      %s411 = ssub.s32 %s21, 1
      // Predicated region
      $region13: #{generator_vanilla_forward.1} parent=11 // pred_check
        %p412 = pneg %p224
      $region14: #{generator_vanilla_forward.1} parent=11 // pred_check_branch
        %414 = sbr.rel (%p412) target = $region16
      $region15: #{generator_vanilla_forward.1} parent=11 // pred_region
        _
      $region16: #{generator_vanilla_forward.1} parent=11 // pred_fallthru
        _
      // Predicated region
      $region17: #{generator_vanilla_forward.1} parent=11 // pred_check
        %p415 = pneg %p245
      $region18: #{generator_vanilla_forward.1} parent=11 // pred_check_branch
        %417 = sbr.rel (%p415) target = $region20
      $region19: #{generator_vanilla_forward.1} parent=11 // pred_region
        _
      $region20: #{generator_vanilla_forward.1} parent=11 // pred_fallthru
        _
      // Predicated region
      $region21: #{generator_vanilla_forward.1} parent=11 // pred_check
        %p418 = pneg %p266
      $region22: #{generator_vanilla_forward.1} parent=11 // pred_check_branch
        %420 = sbr.rel (%p418) target = $region24
      $region23: #{generator_vanilla_forward.1} parent=11 // pred_region
        _
      $region24: #{generator_vanilla_forward.1} parent=11 // pred_fallthru
        _
      // Predicated region
      $region25: #{generator_vanilla_forward.1} parent=11 // pred_check
        %p421 = pneg %p287
      $region26: #{generator_vanilla_forward.1} parent=11 // pred_check_branch
        %423 = sbr.rel (%p421) target = $region28
      $region27: #{generator_vanilla_forward.1} parent=11 // pred_region
        _
      $region28: #{generator_vanilla_forward.1} parent=11 // pred_fallthru
        _
      // Predicated region
      $region29: #{generator_vanilla_forward.1} parent=11 // pred_check
        %p424 = pneg %p308
      $region30: #{generator_vanilla_forward.1} parent=11 // pred_check_branch
        %426 = sbr.rel (%p424) target = $region32
      $region31: #{generator_vanilla_forward.1} parent=11 // pred_region
        _
      $region32: #{generator_vanilla_forward.1} parent=11 // pred_fallthru
        _
      // Predicated region
      $region33: #{generator_vanilla_forward.1} parent=11 // pred_check
        %p427 = pneg %p329
      $region34: #{generator_vanilla_forward.1} parent=11 // pred_check_branch
        %429 = sbr.rel (%p427) target = $region36
      $region35: #{generator_vanilla_forward.1} parent=11 // pred_region
        _
      $region36: #{generator_vanilla_forward.1} parent=11 // pred_fallthru
        _
      // Predicated region
      $region37: #{generator_vanilla_forward.1} parent=11 // pred_check
        %p430 = pneg %p350
      $region38: #{generator_vanilla_forward.1} parent=11 // pred_check_branch
        %432 = sbr.rel (%p430) target = $region40
      $region39: #{generator_vanilla_forward.1} parent=11 // pred_region
        _
      $region40: #{generator_vanilla_forward.1} parent=11 // pred_fallthru
        _
      // Predicated region
      $region41: #{generator_vanilla_forward.1} parent=11 // pred_check
        %p433 = pneg %p371
      $region42: #{generator_vanilla_forward.1} parent=11 // pred_check_branch
        %435 = sbr.rel (%p433) target = $region44
      $region43: #{generator_vanilla_forward.1} parent=11 // pred_region
        _
      $region44: #{generator_vanilla_forward.1} parent=11 // pred_fallthru
        _
    $region12: #{generator_vanilla_forward.1} parent=5 // pred_fallthru
      _
    %p436 = scmp.lt.s32.totalorder %s21, 2
    // Predicated region
    $region45: #{generator_vanilla_forward.1} parent=5 // pred_check
      %p437 = pneg %p436
    $region46: #{generator_vanilla_forward.1} parent=5 // pred_check_branch
      %439 = sbr.rel (%p437) target = $region48
    $region47: #{generator_vanilla_forward.1} parent=5 // pred_region
      // Predicated region
      $region49: #{generator_vanilla_forward.1} parent=47 // pred_check
        %p440 = pneg %p41
      $region50: #{generator_vanilla_forward.1} parent=47 // pred_check_branch
        %442 = sbr.rel (%p440) target = $region52
      $region51: #{generator_vanilla_forward.1} parent=47 // pred_region
        %p443 = scmp.lt.s32.totalorder %s21, 1
        %s444 = scalar_select %p443, %s21, 1
        %s445 = smul.addr %s444, 3
        %s446 = smul.addr %s445, 8
        %s447 = scalar_lea.vmem %s0, %s446
      $region52: #{generator_vanilla_forward.1} parent=47 // pred_fallthru
        _
      // Predicated region
      $region53: #{generator_vanilla_forward.1} parent=47 // pred_check
        %p448 = pneg %p67
      $region54: #{generator_vanilla_forward.1} parent=47 // pred_check_branch
        %450 = sbr.rel (%p448) target = $region56
      $region55: #{generator_vanilla_forward.1} parent=47 // pred_region
        %p451 = scmp.lt.s32.totalorder %s21, 1
        %s452 = scalar_select %p451, %s21, 1
        %s453 = scalar_lea.vmem %s1, %s452
      $region56: #{generator_vanilla_forward.1} parent=47 // pred_fallthru
        _
      // Predicated region
      $region57: #{generator_vanilla_forward.1} parent=47 // pred_check
        %p454 = pneg %p93
      $region58: #{generator_vanilla_forward.1} parent=47 // pred_check_branch
        %456 = sbr.rel (%p454) target = $region60
      $region59: #{generator_vanilla_forward.1} parent=47 // pred_region
        %p457 = scmp.lt.s32.totalorder %s21, 1
        %s458 = scalar_select %p457, %s21, 1
        %s459 = scalar_lea.vmem %s2, %s458
      $region60: #{generator_vanilla_forward.1} parent=47 // pred_fallthru
        _
      // Predicated region
      $region61: #{generator_vanilla_forward.1} parent=47 // pred_check
        %p460 = pneg %p119
      $region62: #{generator_vanilla_forward.1} parent=47 // pred_check_branch
        %462 = sbr.rel (%p460) target = $region64
      $region63: #{generator_vanilla_forward.1} parent=47 // pred_region
        %p463 = scmp.lt.s32.totalorder %s21, 1
        %s464 = scalar_select %p463, %s21, 1
        %s465 = smul.addr %s464, 512
        %s466 = smul.addr %s465, 4
        %s467 = scalar_lea.vmem %s3, %s466
      $region64: #{generator_vanilla_forward.1} parent=47 // pred_fallthru
        _
      // Predicated region
      $region65: #{generator_vanilla_forward.1} parent=47 // pred_check
        %p468 = pneg %p145
      $region66: #{generator_vanilla_forward.1} parent=47 // pred_check_branch
        %470 = sbr.rel (%p468) target = $region68
      $region67: #{generator_vanilla_forward.1} parent=47 // pred_region
        %p471 = scmp.lt.s32.totalorder %s21, 1
        %s472 = scalar_select %p471, %s21, 1
        %s473 = smul.addr %s472, 128
        %s474 = smul.addr %s473, 4
        %s475 = scalar_lea.vmem %s4, %s474
      $region68: #{generator_vanilla_forward.1} parent=47 // pred_fallthru
        _
      // Predicated region
      $region69: #{generator_vanilla_forward.1} parent=47 // pred_check
        %p476 = pneg %p171
      $region70: #{generator_vanilla_forward.1} parent=47 // pred_check_branch
        %478 = sbr.rel (%p476) target = $region72
      $region71: #{generator_vanilla_forward.1} parent=47 // pred_region
        %p479 = scmp.lt.s32.totalorder %s21, 1
        %s480 = scalar_select %p479, %s21, 1
        %s481 = smul.addr %s480, 64
        %s482 = smul.addr %s481, 4
        %s483 = scalar_lea.vmem %s5, %s482
      $region72: #{generator_vanilla_forward.1} parent=47 // pred_fallthru
        _
      // Predicated region
      $region73: #{generator_vanilla_forward.1} parent=47 // pred_check
        %p484 = pneg %p197
      $region74: #{generator_vanilla_forward.1} parent=47 // pred_check_branch
        %486 = sbr.rel (%p484) target = $region76
      $region75: #{generator_vanilla_forward.1} parent=47 // pred_region
        %p487 = scmp.lt.s32.totalorder %s21, 1
        %s488 = scalar_select %p487, %s21, 1
        %s489 = smul.addr %s488, 32
        %s490 = smul.addr %s489, 4
        %s491 = scalar_lea.vmem %s6, %s490
      $region76: #{generator_vanilla_forward.1} parent=47 // pred_fallthru
        _
    $region48: #{generator_vanilla_forward.1} parent=5 // pred_fallthru
      _
    %p492 = scmp.le.s32.totalorder 1, %s21
    %p493 = scmp.lt.s32.totalorder %s21, 3
    %p494 = pnand %p492, %p493
    %p495 = pneg %p494
    // Predicated region
    $region77: #{generator_vanilla_forward.1} parent=5 // pred_check
      _
    $region78: #{generator_vanilla_forward.1} parent=5 // pred_check_branch
      %497 = sbr.rel (%p494) target = $region80
    $region79: #{generator_vanilla_forward.1} parent=5 // pred_region
      %s498 = ssub.s32 %s21, 1
      %p499 = scmp.lt.s32.totalorder %s26, 1
      %s500 = scalar_select %p499, %s26, 1
      %s501 = smul.addr %s500, 3
      %s502 = smul.addr %s501, 8
      %s503 = scalar_lea.vmem %s0, %s502
      %p504 = pneg %p47
      %p505 = pneg %p44
      %p506 = scmp.lt.s32.totalorder %s26, 1
      %s507 = scalar_select %p506, %s26, 1
      %s508 = scalar_lea.vmem %s1, %s507
      %p509 = pneg %p73
      %p510 = pneg %p70
      %p511 = scmp.lt.s32.totalorder %s26, 1
      %s512 = scalar_select %p511, %s26, 1
      %s513 = scalar_lea.vmem %s2, %s512
      %p514 = pneg %p99
      %p515 = pneg %p96
      %p516 = scmp.lt.s32.totalorder %s26, 1
      %s517 = scalar_select %p516, %s26, 1
      %s518 = smul.addr %s517, 512
      %s519 = smul.addr %s518, 4
      %s520 = scalar_lea.vmem %s3, %s519
      %p521 = pneg %p125
      %p522 = pneg %p122
      %p523 = scmp.lt.s32.totalorder %s26, 1
      %s524 = scalar_select %p523, %s26, 1
      %s525 = smul.addr %s524, 128
      %s526 = smul.addr %s525, 4
      %s527 = scalar_lea.vmem %s4, %s526
      %p528 = pneg %p151
      %p529 = pneg %p148
      %p530 = scmp.lt.s32.totalorder %s26, 1
      %s531 = scalar_select %p530, %s26, 1
      %s532 = smul.addr %s531, 64
      %s533 = smul.addr %s532, 4
      %s534 = scalar_lea.vmem %s5, %s533
      %p535 = pneg %p177
      %p536 = pneg %p174
      %p537 = scmp.lt.s32.totalorder %s26, 1
      %s538 = scalar_select %p537, %s26, 1
      %s539 = smul.addr %s538, 32
      %s540 = smul.addr %s539, 4
      %s541 = scalar_lea.vmem %s6, %s540
      %p542 = pneg %p203
      %p543 = pneg %p200
      %p544 = pneg %p224
      %p545 = pneg %p221
      %p546 = pneg %p245
      %p547 = pneg %p242
      %p548 = pneg %p266
      %p549 = pneg %p263
      %p550 = pneg %p287
      %p551 = pneg %p284
      %p552 = pneg %p308
      %p553 = pneg %p305
      %p554 = pneg %p329
      %p555 = pneg %p326
      %p556 = pneg %p350
      %p557 = pneg %p347
      %p558 = pneg %p371
      %p559 = pneg %p368
      %p560 = pneg %p397
      %p561 = pneg %p394
      %p562 = scmp.lt.s32.totalorder %s26, 1
      %s563 = scalar_select %p562, %s26, 1
      %s564 = smul.addr %s563, 2
      %s565 = smul.addr %s564, 8
      %s566 = scalar_lea.vmem %s15, %s565
      %p567 = scmp.lt.s32.totalorder %s26, 1
      %s568 = scalar_select %p567, %s26, 1
      %s569 = smul.addr %s568, 3
      %s570 = smul.addr %s569, 8
      %s571 = scalar_lea.vmem %s0, %s570
      %p572 = scmp.lt.s32.totalorder %s26, 1
      %s573 = scalar_select %p572, %s26, 1
      %s574 = scalar_lea.vmem %s1, %s573
      %p575 = scmp.lt.s32.totalorder %s26, 1
      %s576 = scalar_select %p575, %s26, 1
      %s577 = scalar_lea.vmem %s2, %s576
      %p578 = scmp.lt.s32.totalorder %s26, 1
      %s579 = scalar_select %p578, %s26, 1
      %s580 = smul.addr %s579, 512
      %s581 = smul.addr %s580, 4
      %s582 = scalar_lea.vmem %s3, %s581
      %p583 = scmp.lt.s32.totalorder %s26, 1
      %s584 = scalar_select %p583, %s26, 1
      %s585 = smul.addr %s584, 128
      %s586 = smul.addr %s585, 4
      %s587 = scalar_lea.vmem %s4, %s586
      %p588 = scmp.lt.s32.totalorder %s26, 1
      %s589 = scalar_select %p588, %s26, 1
      %s590 = smul.addr %s589, 64
      %s591 = smul.addr %s590, 4
      %s592 = scalar_lea.vmem %s5, %s591
      %p593 = scmp.lt.s32.totalorder %s26, 1
      %s594 = scalar_select %p593, %s26, 1
      %s595 = smul.addr %s594, 32
      %s596 = smul.addr %s595, 4
      %s597 = scalar_lea.vmem %s6, %s596
      %p598 = scmp.lt.s32.totalorder %s26, 1
      %s599 = scalar_select %p598, %s26, 1
      %s600 = smul.addr %s599, 2
      %s601 = smul.addr %s600, 8
      %s602 = scalar_lea.vmem %s15, %s601
      %v604 = vld [vmem:[%s571] sm:$0xff]
      %v605 = vld [vmem:[%s571 + $0x8] sm:$0xff]
      %v606 = vld [vmem:[%s571 + $0x10] sm:$0xf]
      %v607 = vlaneseq
      %v608 = vshrl.u32 %v607, 7
      %v609 = vsub.s32 3, %v608
      %v610 = vrot.slane %v604, %v609
      %vm614 = vcmask 1043456
      %v615 = vrot.slane %v604, 4
      %v616 = vrot.slane %v605, 4
      %v617 = vsel %vm614, %v615, %v616
      %v618 = vrot.slane %v606, 4
      %v619 = vsel %vm614, %v616, %v618
      %vm620 = vcmask 23552
      %v621 = vsel %vm620, %v617, 0
      %v623 = vsel %vm620, %v619, 0
      %vm625 = vcmask 1042432
      %v626 = vsel %vm625, %v604, 0
      %628 = vmatprep.subr.mxu0 0.0
      %629 = vmatpush1.msra.mxu0 %v626
      %630 = vmatprep.subr.mxu0 0.0
      %631 = vmatpush1.msra.mxu0 0.0
      %632 = vmatprep.subr.mxu0 0.0
      %633 = vmatpush1.msra.mxu0 0.0
      %634 = vmatprep.subr.mxu0 0.0
      %635 = vmatpush1.msra.mxu0 0.0
      %636 = vmatprep.subr.mxu0 0.0
      %637 = vmatpush1.msra.mxu0 0.0
      %638 = vmatprep.subr.mxu0 0.0
      %639 = vmatpush1.msra.mxu0 0.0
      %640 = vmatprep.subr.mxu0 0.0
      %641 = vmatpush1.msra.mxu0 0.0
      %642 = vmatprep.subr.mxu0 0.0
      %643 = vmatpush1.msra.mxu0 0.0
      %644 = vmatprep.subr.mxu0 0.0
      %645 = vmatpush1.msra.mxu0 0.0
      %646 = vmatprep.subr.mxu0 0.0
      %647 = vmatpush1.msra.mxu0 0.0
      %648 = vmatprep.subr.mxu0 0.0
      %649 = vmatpush1.msra.mxu0 0.0
      %650 = vmatprep.subr.mxu0 0.0
      %651 = vmatpush1.msra.mxu0 0.0
      %652 = vmatprep.subr.mxu0 0.0
      %653 = vmatpush1.msra.mxu0 0.0
      %654 = vmatprep.subr.mxu0 0.0
      %655 = vmatpush1.msra.mxu0 0.0
      %656 = vmatprep.subr.mxu0 0.0
      %657 = vmatpush1.msra.mxu0 0.0
      %658 = vmatprep.subr.mxu0 0.0
      %659 = vmatpush1.msra.mxu0 0.0
      %660 = vmatprep.subr.mxu0 0.0
      %661 = vmatpush1.msra.mxu0 0.0
      %662 = vmatprep.subr.mxu0 0.0
      %663 = vmatpush1.msra.mxu0 0.0
      %664 = vmatprep.subr.mxu0 0.0
      %665 = vmatpush1.msra.mxu0 0.0
      %666 = vmatprep.subr.mxu0 0.0
      %667 = vmatpush1.msra.mxu0 0.0
      %668 = vmatprep.subr.mxu0 0.0
      %669 = vmatpush1.msra.mxu0 0.0
      %670 = vmatprep.subr.mxu0 0.0
      %671 = vmatpush1.msra.mxu0 0.0
      %672 = vmatprep.subr.mxu0 0.0
      %673 = vmatpush1.msra.mxu0 0.0
      %674 = vmatprep.subr.mxu0 0.0
      %675 = vmatpush1.msra.mxu0 0.0
      %676 = vmatprep.subr.mxu0 0.0
      %677 = vmatpush1.msra.mxu0 0.0
      %678 = vmatprep.subr.mxu0 0.0
      %679 = vmatpush1.msra.mxu0 0.0
      %680 = vmatprep.subr.mxu0 0.0
      %681 = vmatpush1.msra.mxu0 0.0
      %682 = vmatprep.subr.mxu0 0.0
      %683 = vmatpush1.msra.mxu0 0.0
      %684 = vmatprep.subr.mxu0 0.0
      %685 = vmatpush1.msra.mxu0 0.0
      %686 = vmatprep.subr.mxu0 0.0
      %687 = vmatpush1.msra.mxu0 0.0
      %688 = vmatprep.subr.mxu0 0.0
      %689 = vmatpush1.msra.mxu0 0.0
      %690 = vmatprep.subr.mxu0 0.0
      %691 = vmatpush1.msra.mxu0 0.0
      %692 = vmatprep.mubr.f32.mxu0 0.0
      %693 = vmatmul.mubr.f32.gmra.mrb[0].mxu0 %v621
      %v694 = vpop.f32.mrb[0].mxu0
      %v695 = vadd.f32 %v610, %v694
      %v696 = vpop.f32.mrb[0].mxu0
      %697 = vmatprep.mubr.f32.mxu0 0.0
      %698 = vmatmul.mubr.f32.gmra.mrb[0].mxu0 %v623
      %v699 = vpop.f32.mrb[0].mxu0
      %v700 = vadd.f32 %v610, %v699
      %v701 = vpop.f32.mrb[0].mxu0
      %702 = vdwg.mxu0
      %705 = vrot.lane.b32.xlu0 %v695, 126
      %v706 = vpop.permute.xlu0 %705
      %707 = vrot.lane.b32.xlu0 %v700, 126
      %v708 = vpop.permute.xlu0 %707
      %v711 = vrcp.pop %v706
      %v712 = vmul.f32 %v695, %v711
      %v713 = vrcp.pop %v708
      %v714 = vmul.f32 %v700, %v713
      %v715 = vmax.f32 %v712, 0.0
      %v716 = vmax.f32 %v714, 0.0
      %v717 = vmin.f32 %v715, 127.0
      %v718 = vmin.f32 %v716, 127.0
      %719 = vrot.lane.b32.xlu0 %v695, 127
      %v720 = vpop.permute.xlu0 %719
      %721 = vrot.lane.b32.xlu0 %v700, 127
      %v722 = vpop.permute.xlu0 %721
      %v725 = vrcp.pop %v720
      %v726 = vmul.f32 %v695, %v725
      %v727 = vrcp.pop %v722
      %v728 = vmul.f32 %v700, %v727
      %v729 = vmax.f32 %v726, 0.0
      %v730 = vmax.f32 %v728, 0.0
      %v731 = vmin.f32 %v729, 127.0
      %v732 = vmin.f32 %v730, 127.0
      %v733 = vld [vmem:[%s7] sm:$0x7]
      %v734 = vld [vmem:[%s574] sm:$0x1]
      %v736 = vlaneseq
      %v737 = vshrl.u32 %v736, 7
      %v738 = vsub.s32 0, %v737
      %v739 = vrot.slane %v734, %v738
      %v742 = vsel %vm625, %v733, 0
      %744 = vmatprep.subr.mxu0 0.0
      %745 = vmatpush1.msra.mxu0 %v742
      %746 = vmatprep.subr.mxu0 0.0
      %747 = vmatpush1.msra.mxu0 0.0
      %748 = vmatprep.subr.mxu0 0.0
      %749 = vmatpush1.msra.mxu0 0.0
      %750 = vmatprep.subr.mxu0 0.0
      %751 = vmatpush1.msra.mxu0 0.0
      %752 = vmatprep.subr.mxu0 0.0
      %753 = vmatpush1.msra.mxu0 0.0
      %754 = vmatprep.subr.mxu0 0.0
      %755 = vmatpush1.msra.mxu0 0.0
      %756 = vmatprep.subr.mxu0 0.0
      %757 = vmatpush1.msra.mxu0 0.0
      %758 = vmatprep.subr.mxu0 0.0
      %759 = vmatpush1.msra.mxu0 0.0
      %760 = vmatprep.subr.mxu0 0.0
      %761 = vmatpush1.msra.mxu0 0.0
      %762 = vmatprep.subr.mxu0 0.0
      %763 = vmatpush1.msra.mxu0 0.0
      %764 = vmatprep.subr.mxu0 0.0
      %765 = vmatpush1.msra.mxu0 0.0
      %766 = vmatprep.subr.mxu0 0.0
      %767 = vmatpush1.msra.mxu0 0.0
      %768 = vmatprep.subr.mxu0 0.0
      %769 = vmatpush1.msra.mxu0 0.0
      %770 = vmatprep.subr.mxu0 0.0
      %771 = vmatpush1.msra.mxu0 0.0
      %772 = vmatprep.subr.mxu0 0.0
      %773 = vmatpush1.msra.mxu0 0.0
      %774 = vmatprep.subr.mxu0 0.0
      %775 = vmatpush1.msra.mxu0 0.0
      %776 = vmatprep.subr.mxu0 0.0
      %777 = vmatpush1.msra.mxu0 0.0
      %778 = vmatprep.subr.mxu0 0.0
      %779 = vmatpush1.msra.mxu0 0.0
      %780 = vmatprep.subr.mxu0 0.0
      %781 = vmatpush1.msra.mxu0 0.0
      %782 = vmatprep.subr.mxu0 0.0
      %783 = vmatpush1.msra.mxu0 0.0
      %784 = vmatprep.subr.mxu0 0.0
      %785 = vmatpush1.msra.mxu0 0.0
      %786 = vmatprep.subr.mxu0 0.0
      %787 = vmatpush1.msra.mxu0 0.0
      %788 = vmatprep.subr.mxu0 0.0
      %789 = vmatpush1.msra.mxu0 0.0
      %790 = vmatprep.subr.mxu0 0.0
      %791 = vmatpush1.msra.mxu0 0.0
      %792 = vmatprep.subr.mxu0 0.0
      %793 = vmatpush1.msra.mxu0 0.0
      %794 = vmatprep.subr.mxu0 0.0
      %795 = vmatpush1.msra.mxu0 0.0
      %796 = vmatprep.subr.mxu0 0.0
      %797 = vmatpush1.msra.mxu0 0.0
      %798 = vmatprep.subr.mxu0 0.0
      %799 = vmatpush1.msra.mxu0 0.0
      %800 = vmatprep.subr.mxu0 0.0
      %801 = vmatpush1.msra.mxu0 0.0
      %802 = vmatprep.subr.mxu0 0.0
      %803 = vmatpush1.msra.mxu0 0.0
      %804 = vmatprep.subr.mxu0 0.0
      %805 = vmatpush1.msra.mxu0 0.0
      %806 = vmatprep.subr.mxu0 0.0
      %807 = vmatpush1.msra.mxu0 0.0
      %808 = vmatprep.mubr.f32.mxu0 0.0
      %809 = vmatmul.mubr.f32.gmra.mrb[0].mxu0 %v621
      %v810 = vpop.f32.mrb[0].mxu0
      %v811 = vadd.f32 %v739, %v810
      %v812 = vpop.f32.mrb[0].mxu0
      %813 = vmatprep.mubr.f32.mxu0 0.0
      %814 = vmatmul.mubr.f32.gmra.mrb[0].mxu0 %v623
      %v815 = vpop.f32.mrb[0].mxu0
      %v816 = vadd.f32 %v739, %v815
      %v817 = vpop.f32.mrb[0].mxu0
      %818 = vdwg.mxu0
      %v819 = vld [vmem:[%s587] sm:$0xf]
      %v820 = vld [vmem:[%s587 + $0x4] sm:$0xf]
      %v821 = vld [vmem:[%s587 + $0x8] sm:$0xf]
      %v822 = vld [vmem:[%s587 + $0xc] sm:$0xf]
      %v823 = vld [vmem:[%s587 + $0x10] sm:$0xf]
      %v824 = vld [vmem:[%s587 + $0x14] sm:$0xf]
      %v825 = vld [vmem:[%s587 + $0x18] sm:$0xf]
      %v826 = vld [vmem:[%s587 + $0x1c] sm:$0xf]
      %v827 = vld [vmem:[%s587 + $0x20] sm:$0xf]
      %v828 = vld [vmem:[%s587 + $0x24] sm:$0xf]
      %v829 = vld [vmem:[%s587 + $0x28] sm:$0xf]
      %v830 = vld [vmem:[%s587 + $0x2c] sm:$0xf]
      %v831 = vld [vmem:[%s587 + $0x30] sm:$0xf]
      %v832 = vld [vmem:[%s587 + $0x34] sm:$0xf]
      %v833 = vld [vmem:[%s587 + $0x38] sm:$0xf]
      %v834 = vld [vmem:[%s587 + $0x3c] sm:$0xf]
      %v835 = vld [vmem:[%s587 + $0x40] sm:$0xf]
      %v836 = vld [vmem:[%s587 + $0x44] sm:$0xf]
      %v837 = vld [vmem:[%s587 + $0x48] sm:$0xf]
      %v838 = vld [vmem:[%s587 + $0x4c] sm:$0xf]
      %v839 = vld [vmem:[%s587 + $0x50] sm:$0xf]
      %v840 = vld [vmem:[%s587 + $0x54] sm:$0xf]
      %v841 = vld [vmem:[%s587 + $0x58] sm:$0xf]
      %v842 = vld [vmem:[%s587 + $0x5c] sm:$0xf]
      %v843 = vld [vmem:[%s587 + $0x60] sm:$0xf]
      %v844 = vld [vmem:[%s587 + $0x64] sm:$0xf]
      %v845 = vld [vmem:[%s587 + $0x68] sm:$0xf]
      %v846 = vld [vmem:[%s587 + $0x6c] sm:$0xf]
      %v847 = vld [vmem:[%s587 + $0x70] sm:$0xf]
      %v848 = vld [vmem:[%s587 + $0x74] sm:$0xf]
      %v849 = vld [vmem:[%s587 + $0x78] sm:$0xf]
      %v850 = vld [vmem:[%s587 + $0x7c] sm:$0xf]
      %v851 = vld [vmem:[%s587 + $0x80] sm:$0xf]
      %v852 = vld [vmem:[%s587 + $0x84] sm:$0xf]
      %v853 = vld [vmem:[%s587 + $0x88] sm:$0xf]
      %v854 = vld [vmem:[%s587 + $0x8c] sm:$0xf]
      %v855 = vld [vmem:[%s587 + $0x90] sm:$0xf]
      %v856 = vld [vmem:[%s587 + $0x94] sm:$0xf]
      %v857 = vld [vmem:[%s587 + $0x98] sm:$0xf]
      %v858 = vld [vmem:[%s587 + $0x9c] sm:$0xf]
      %v859 = vld [vmem:[%s587 + $0xa0] sm:$0xf]
      %v860 = vld [vmem:[%s587 + $0xa4] sm:$0xf]
      %v861 = vld [vmem:[%s587 + $0xa8] sm:$0xf]
      %v862 = vld [vmem:[%s587 + $0xac] sm:$0xf]
      %v863 = vld [vmem:[%s587 + $0xb0] sm:$0xf]
      %v864 = vld [vmem:[%s587 + $0xb4] sm:$0xf]
      %v865 = vld [vmem:[%s587 + $0xb8] sm:$0xf]
      %v866 = vld [vmem:[%s587 + $0xbc] sm:$0xf]
      %v867 = vld [vmem:[%s587 + $0xc0] sm:$0xf]
      %v868 = vld [vmem:[%s587 + $0xc4] sm:$0xf]
      %v869 = vld [vmem:[%s587 + $0xc8] sm:$0xf]
      %v870 = vld [vmem:[%s587 + $0xcc] sm:$0xf]
      %v871 = vld [vmem:[%s587 + $0xd0] sm:$0xf]
      %v872 = vld [vmem:[%s587 + $0xd4] sm:$0xf]
      %v873 = vld [vmem:[%s587 + $0xd8] sm:$0xf]
      %v874 = vld [vmem:[%s587 + $0xdc] sm:$0xf]
      %v875 = vld [vmem:[%s587 + $0xe0] sm:$0xf]
      %v876 = vld [vmem:[%s587 + $0xe4] sm:$0xf]
      %v877 = vld [vmem:[%s587 + $0xe8] sm:$0xf]
      %v878 = vld [vmem:[%s587 + $0xec] sm:$0xf]
      %v879 = vld [vmem:[%s587 + $0xf0] sm:$0xf]
      %v880 = vld [vmem:[%s587 + $0xf4] sm:$0xf]
      %v881 = vld [vmem:[%s587 + $0xf8] sm:$0xf]
      %v882 = vld [vmem:[%s587 + $0xfc] sm:$0xf]
      %v883 = vld [vmem:[%s587 + $0x100] sm:$0xf]
      %v884 = vld [vmem:[%s587 + $0x104] sm:$0xf]
      %v885 = vld [vmem:[%s587 + $0x108] sm:$0xf]
      %v886 = vld [vmem:[%s587 + $0x10c] sm:$0xf]
      %v887 = vld [vmem:[%s587 + $0x110] sm:$0xf]
      %v888 = vld [vmem:[%s587 + $0x114] sm:$0xf]
      %v889 = vld [vmem:[%s587 + $0x118] sm:$0xf]
      %v890 = vld [vmem:[%s587 + $0x11c] sm:$0xf]
      %v891 = vld [vmem:[%s587 + $0x120] sm:$0xf]
      %v892 = vld [vmem:[%s587 + $0x124] sm:$0xf]
      %v893 = vld [vmem:[%s587 + $0x128] sm:$0xf]
      %v894 = vld [vmem:[%s587 + $0x12c] sm:$0xf]
      %v895 = vld [vmem:[%s587 + $0x130] sm:$0xf]
      %v896 = vld [vmem:[%s587 + $0x134] sm:$0xf]
      %v897 = vld [vmem:[%s587 + $0x138] sm:$0xf]
      %v898 = vld [vmem:[%s587 + $0x13c] sm:$0xf]
      %v899 = vld [vmem:[%s587 + $0x140] sm:$0xf]
      %v900 = vld [vmem:[%s587 + $0x144] sm:$0xf]
      %v901 = vld [vmem:[%s587 + $0x148] sm:$0xf]
      %v902 = vld [vmem:[%s587 + $0x14c] sm:$0xf]
      %v903 = vld [vmem:[%s587 + $0x150] sm:$0xf]
      %v904 = vld [vmem:[%s587 + $0x154] sm:$0xf]
      %v905 = vld [vmem:[%s587 + $0x158] sm:$0xf]
      %v906 = vld [vmem:[%s587 + $0x15c] sm:$0xf]
      %v907 = vld [vmem:[%s587 + $0x160] sm:$0xf]
      %v908 = vld [vmem:[%s587 + $0x164] sm:$0xf]
      %v909 = vld [vmem:[%s587 + $0x168] sm:$0xf]
      %v910 = vld [vmem:[%s587 + $0x16c] sm:$0xf]
      %v911 = vld [vmem:[%s587 + $0x170] sm:$0xf]
      %v912 = vld [vmem:[%s587 + $0x174] sm:$0xf]
      %v913 = vld [vmem:[%s587 + $0x178] sm:$0xf]
      %v914 = vld [vmem:[%s587 + $0x17c] sm:$0xf]
      %v915 = vld [vmem:[%s587 + $0x180] sm:$0xf]
      %v916 = vld [vmem:[%s587 + $0x184] sm:$0xf]
      %v917 = vld [vmem:[%s587 + $0x188] sm:$0xf]
      %v918 = vld [vmem:[%s587 + $0x18c] sm:$0xf]
      %v919 = vld [vmem:[%s587 + $0x190] sm:$0xf]
      %v920 = vld [vmem:[%s587 + $0x194] sm:$0xf]
      %v921 = vld [vmem:[%s587 + $0x198] sm:$0xf]
      %v922 = vld [vmem:[%s587 + $0x19c] sm:$0xf]
      %v923 = vld [vmem:[%s587 + $0x1a0] sm:$0xf]
      %v924 = vld [vmem:[%s587 + $0x1a4] sm:$0xf]
      %v925 = vld [vmem:[%s587 + $0x1a8] sm:$0xf]
      %v926 = vld [vmem:[%s587 + $0x1ac] sm:$0xf]
      %v927 = vld [vmem:[%s587 + $0x1b0] sm:$0xf]
      %v928 = vld [vmem:[%s587 + $0x1b4] sm:$0xf]
      %v929 = vld [vmem:[%s587 + $0x1b8] sm:$0xf]
      %v930 = vld [vmem:[%s587 + $0x1bc] sm:$0xf]
      %v931 = vld [vmem:[%s587 + $0x1c0] sm:$0xf]
      %v932 = vld [vmem:[%s587 + $0x1c4] sm:$0xf]
      %v933 = vld [vmem:[%s587 + $0x1c8] sm:$0xf]
      %v934 = vld [vmem:[%s587 + $0x1cc] sm:$0xf]
      %v935 = vld [vmem:[%s587 + $0x1d0] sm:$0xf]
      %v936 = vld [vmem:[%s587 + $0x1d4] sm:$0xf]
      %v937 = vld [vmem:[%s587 + $0x1d8] sm:$0xf]
      %v938 = vld [vmem:[%s587 + $0x1dc] sm:$0xf]
      %v939 = vld [vmem:[%s587 + $0x1e0] sm:$0xf]
      %v940 = vld [vmem:[%s587 + $0x1e4] sm:$0xf]
      %v941 = vld [vmem:[%s587 + $0x1e8] sm:$0xf]
      %v942 = vld [vmem:[%s587 + $0x1ec] sm:$0xf]
      %v943 = vld [vmem:[%s587 + $0x1f0] sm:$0xf]
      %v944 = vld [vmem:[%s587 + $0x1f4] sm:$0xf]
      %v945 = vld [vmem:[%s587 + $0x1f8] sm:$0xf]
      %v946 = vld [vmem:[%s587 + $0x1fc] sm:$0xf]
      %v947 = vrcp.pop 4.0
      %v948 = vmul.f32 %v717, %v947
      %v949 = vmul.f32 %v718, %v947
      %v950 = vmul.f32 %v731, %v947
      %v951 = vmul.f32 %v732, %v947
      %v952 = vfloor.f32 %v948
      %v953 = vfloor.f32 %v949
      %v954 = vfloor.f32 %v950
      %v955 = vfloor.f32 %v951
      %v956 = vceil.f32 %v948
      %v957 = vceil.f32 %v949
      %v958 = vmin.f32 %v956, 31.0
      %v959 = vmin.f32 %v957, 31.0
      %v960 = vceil.f32 %v950
      %v961 = vceil.f32 %v951
      %v962 = vmin.f32 %v960, 31.0
      %v963 = vmin.f32 %v961, 31.0
      %v964 = vsub.f32 %v958, %v952
      %v965 = vsub.f32 %v959, %v953
      %v966 = vsub.f32 %v962, %v954
      %v967 = vsub.f32 %v963, %v955
      %970 = vrot.lane.b32.xlu0 %v966, 127
      %v971 = vpop.permute.xlu0 %970
      %972 = vrot.lane.b32.xlu0 %v967, 127
      %v973 = vpop.permute.xlu0 %972
      %v976 = vmul.f32 %v964, %v971
      %v977 = vmul.f32 %v965, %v973
      %v978 = vcvt.f32.s32.to.zero.pseudo %v954
      %v979 = vcvt.f32.s32.to.zero.pseudo %v955
      %v980 = vmul.u32 %v978, 32
      %v981 = vmul.u32 %v979, 32
      %v982 = vcvt.f32.s32.to.zero.pseudo %v952
      %v983 = vcvt.f32.s32.to.zero.pseudo %v953
      %984 = vrot.lane.b32.xlu0 %v982, 1
      %v985 = vpop.permute.xlu0 %984
      %986 = vrot.lane.b32.xlu0 %v983, 1
      %v987 = vpop.permute.xlu0 %986
      %v988 = vadd.s32 %v980, %v985
      %v989 = vadd.s32 %v981, %v987
      %v990 = vlaneseq
      %v991 = vand.u32 %v990, 127
      %v992 = vadd.s32 %v991, 128
      %v993 = vadd.s32 %v991, 256
      %v994 = vadd.s32 %v991, 384
      %v995 = vadd.s32 %v991, 512
      %v996 = vadd.s32 %v991, 640
      %v997 = vadd.s32 %v991, 768
      %v998 = vadd.s32 %v991, 896
      %999 = vset.pattern.permute.xlu0 1
      %1000 = vperm.xlu0 %999, %v988
      %v1001 = vpop.permute.xlu0 %1000
      %1002 = vset.pattern.permute.xlu0 1
      %1003 = vperm.xlu0 %1002, %v989
      %v1004 = vpop.permute.xlu0 %1003
      %vm1005 = vcmp.eq.s32.totalorder %v991, %v1001
      %vm1006 = vcmp.eq.s32.totalorder %v992, %v1001
      %vm1007 = vcmp.eq.s32.totalorder %v993, %v1001
      %vm1008 = vcmp.eq.s32.totalorder %v994, %v1001
      %vm1009 = vcmp.eq.s32.totalorder %v995, %v1001
      %vm1010 = vcmp.eq.s32.totalorder %v996, %v1001
      %vm1011 = vcmp.eq.s32.totalorder %v997, %v1001
      %vm1012 = vcmp.eq.s32.totalorder %v998, %v1001
      %vm1013 = vcmp.eq.s32.totalorder %v991, %v1004
      %vm1014 = vcmp.eq.s32.totalorder %v992, %v1004
      %vm1015 = vcmp.eq.s32.totalorder %v993, %v1004
      %vm1016 = vcmp.eq.s32.totalorder %v994, %v1004
      %vm1017 = vcmp.eq.s32.totalorder %v995, %v1004
      %vm1018 = vcmp.eq.s32.totalorder %v996, %v1004
      %vm1019 = vcmp.eq.s32.totalorder %v997, %v1004
      %vm1020 = vcmp.eq.s32.totalorder %v998, %v1004
      %1022 = vset.pattern.permute.xlu0 0
      %1023 = vperm.xlu0 %1022, %v976
      %v1024 = vpop.permute.xlu0 %1023
      %1027 = vset.pattern.permute.xlu0 0
      %1028 = vperm.xlu0 %1027, %v977
      %v1029 = vpop.permute.xlu0 %1028
      %v1031 = vsel %vm1005, %v1024, 0.0
      %v1032 = vsel %vm1006, %v1024, 0.0
      %v1033 = vsel %vm1007, %v1024, 0.0
      %v1034 = vsel %vm1008, %v1024, 0.0
      %v1035 = vsel %vm1009, %v1024, 0.0
      %v1036 = vsel %vm1010, %v1024, 0.0
      %v1037 = vsel %vm1011, %v1024, 0.0
      %v1038 = vsel %vm1012, %v1024, 0.0
      %v1039 = vsel %vm1013, %v1029, 0.0
      %v1040 = vsel %vm1014, %v1029, 0.0
      %v1041 = vsel %vm1015, %v1029, 0.0
      %v1042 = vsel %vm1016, %v1029, 0.0
      %v1043 = vsel %vm1017, %v1029, 0.0
      %v1044 = vsel %vm1018, %v1029, 0.0
      %v1045 = vsel %vm1019, %v1029, 0.0
      %v1046 = vsel %vm1020, %v1029, 0.0
      %v1047 = vpack.c.bf16 %v1039, %v1031
      %v1048 = vpack.c.bf16 %v1040, %v1032
      %v1049 = vpack.c.bf16 %v1041, %v1033
      %v1050 = vpack.c.bf16 %v1042, %v1034
      %v1051 = vpack.c.bf16 %v1043, %v1035
      %v1052 = vpack.c.bf16 %v1044, %v1036
      %v1053 = vpack.c.bf16 %v1045, %v1037
      %v1054 = vpack.c.bf16 %v1046, %v1038
      %v1183 = vunpack.c.l.b16 %v819
      %v1184 = vunpack.c.l.b16 %v820
      %v1185 = vunpack.c.l.b16 %v821
      %v1186 = vunpack.c.l.b16 %v822
      %v1187 = vunpack.c.l.b16 %v823
      %v1188 = vunpack.c.l.b16 %v824
      %v1189 = vunpack.c.l.b16 %v825
      %v1190 = vunpack.c.l.b16 %v826
      %v1191 = vunpack.c.l.b16 %v827
      %v1192 = vunpack.c.l.b16 %v828
      %v1193 = vunpack.c.l.b16 %v829
      %v1194 = vunpack.c.l.b16 %v830
      %v1195 = vunpack.c.l.b16 %v831
      %v1196 = vunpack.c.l.b16 %v832
      %v1197 = vunpack.c.l.b16 %v833
      %v1198 = vunpack.c.l.b16 %v834
      %v1199 = vunpack.c.l.b16 %v835
      %v1200 = vunpack.c.l.b16 %v836
      %v1201 = vunpack.c.l.b16 %v837
      %v1202 = vunpack.c.l.b16 %v838
      %v1203 = vunpack.c.l.b16 %v839
      %v1204 = vunpack.c.l.b16 %v840
      %v1205 = vunpack.c.l.b16 %v841
      %v1206 = vunpack.c.l.b16 %v842
      %v1207 = vunpack.c.l.b16 %v843
      %v1208 = vunpack.c.l.b16 %v844
      %v1209 = vunpack.c.l.b16 %v845
      %v1210 = vunpack.c.l.b16 %v846
      %v1211 = vunpack.c.l.b16 %v847
      %v1212 = vunpack.c.l.b16 %v848
      %v1213 = vunpack.c.l.b16 %v849
      %v1214 = vunpack.c.l.b16 %v850
      %v1215 = vunpack.c.l.b16 %v851
      %v1216 = vunpack.c.l.b16 %v852
      %v1217 = vunpack.c.l.b16 %v853
      %v1218 = vunpack.c.l.b16 %v854
      %v1219 = vunpack.c.l.b16 %v855
      %v1220 = vunpack.c.l.b16 %v856
      %v1221 = vunpack.c.l.b16 %v857
      %v1222 = vunpack.c.l.b16 %v858
      %v1223 = vunpack.c.l.b16 %v859
      %v1224 = vunpack.c.l.b16 %v860
      %v1225 = vunpack.c.l.b16 %v861
      %v1226 = vunpack.c.l.b16 %v862
      %v1227 = vunpack.c.l.b16 %v863
      %v1228 = vunpack.c.l.b16 %v864
      %v1229 = vunpack.c.l.b16 %v865
      %v1230 = vunpack.c.l.b16 %v866
      %v1231 = vunpack.c.l.b16 %v867
      %v1232 = vunpack.c.l.b16 %v868
      %v1233 = vunpack.c.l.b16 %v869
      %v1234 = vunpack.c.l.b16 %v870
      %v1235 = vunpack.c.l.b16 %v871
      %v1236 = vunpack.c.l.b16 %v872
      %v1237 = vunpack.c.l.b16 %v873
      %v1238 = vunpack.c.l.b16 %v874
      %v1239 = vunpack.c.l.b16 %v875
      %v1240 = vunpack.c.l.b16 %v876
      %v1241 = vunpack.c.l.b16 %v877
      %v1242 = vunpack.c.l.b16 %v878
      %v1243 = vunpack.c.l.b16 %v879
      %v1244 = vunpack.c.l.b16 %v880
      %v1245 = vunpack.c.l.b16 %v881
      %v1246 = vunpack.c.l.b16 %v882
      %v1247 = vunpack.c.l.b16 %v883
      %v1248 = vunpack.c.l.b16 %v884
      %v1249 = vunpack.c.l.b16 %v885
      %v1250 = vunpack.c.l.b16 %v886
      %v1251 = vunpack.c.l.b16 %v887
      %v1252 = vunpack.c.l.b16 %v888
      %v1253 = vunpack.c.l.b16 %v889
      %v1254 = vunpack.c.l.b16 %v890
      %v1255 = vunpack.c.l.b16 %v891
      %v1256 = vunpack.c.l.b16 %v892
      %v1257 = vunpack.c.l.b16 %v893
      %v1258 = vunpack.c.l.b16 %v894
      %v1259 = vunpack.c.l.b16 %v895
      %v1260 = vunpack.c.l.b16 %v896
      %v1261 = vunpack.c.l.b16 %v897
      %v1262 = vunpack.c.l.b16 %v898
      %v1263 = vunpack.c.l.b16 %v899
      %v1264 = vunpack.c.l.b16 %v900
      %v1265 = vunpack.c.l.b16 %v901
      %v1266 = vunpack.c.l.b16 %v902
      %v1267 = vunpack.c.l.b16 %v903
      %v1268 = vunpack.c.l.b16 %v904
      %v1269 = vunpack.c.l.b16 %v905
      %v1270 = vunpack.c.l.b16 %v906
      %v1271 = vunpack.c.l.b16 %v907
      %v1272 = vunpack.c.l.b16 %v908
      %v1273 = vunpack.c.l.b16 %v909
      %v1274 = vunpack.c.l.b16 %v910
      %v1275 = vunpack.c.l.b16 %v911
      %v1276 = vunpack.c.l.b16 %v912
      %v1277 = vunpack.c.l.b16 %v913
      %v1278 = vunpack.c.l.b16 %v914
      %v1279 = vunpack.c.l.b16 %v915
      %v1280 = vunpack.c.l.b16 %v916
      %v1281 = vunpack.c.l.b16 %v917
      %v1282 = vunpack.c.l.b16 %v918
      %v1283 = vunpack.c.l.b16 %v919
      %v1284 = vunpack.c.l.b16 %v920
      %v1285 = vunpack.c.l.b16 %v921
      %v1286 = vunpack.c.l.b16 %v922
      %v1287 = vunpack.c.l.b16 %v923
      %v1288 = vunpack.c.l.b16 %v924
      %v1289 = vunpack.c.l.b16 %v925
      %v1290 = vunpack.c.l.b16 %v926
      %v1291 = vunpack.c.l.b16 %v927
      %v1292 = vunpack.c.l.b16 %v928
      %v1293 = vunpack.c.l.b16 %v929
      %v1294 = vunpack.c.l.b16 %v930
      %v1295 = vunpack.c.l.b16 %v931
      %v1296 = vunpack.c.l.b16 %v932
      %v1297 = vunpack.c.l.b16 %v933
      %v1298 = vunpack.c.l.b16 %v934
      %v1299 = vunpack.c.l.b16 %v935
      %v1300 = vunpack.c.l.b16 %v936
      %v1301 = vunpack.c.l.b16 %v937
      %v1302 = vunpack.c.l.b16 %v938
      %v1303 = vunpack.c.l.b16 %v939
      %v1304 = vunpack.c.l.b16 %v940
      %v1305 = vunpack.c.l.b16 %v941
      %v1306 = vunpack.c.l.b16 %v942
      %v1307 = vunpack.c.l.b16 %v943
      %v1308 = vunpack.c.l.b16 %v944
      %v1309 = vunpack.c.l.b16 %v945
      %v1310 = vunpack.c.l.b16 %v946
      %v1311 = vpack.c.b16 %v1184, %v1183
      %v1312 = vpack.c.b16 %v1186, %v1185
      %v1313 = vpack.c.b16 %v1188, %v1187
      %v1314 = vpack.c.b16 %v1190, %v1189
      %v1315 = vpack.c.b16 %v1192, %v1191
      %v1316 = vpack.c.b16 %v1194, %v1193
      %v1317 = vpack.c.b16 %v1196, %v1195
      %v1318 = vpack.c.b16 %v1198, %v1197
      %v1319 = vpack.c.b16 %v1200, %v1199
      %v1320 = vpack.c.b16 %v1202, %v1201
      %v1321 = vpack.c.b16 %v1204, %v1203
      %v1322 = vpack.c.b16 %v1206, %v1205
      %v1323 = vpack.c.b16 %v1208, %v1207
      %v1324 = vpack.c.b16 %v1210, %v1209
      %v1325 = vpack.c.b16 %v1212, %v1211
      %v1326 = vpack.c.b16 %v1214, %v1213
      %v1327 = vpack.c.b16 %v1216, %v1215
      %v1328 = vpack.c.b16 %v1218, %v1217
      %v1329 = vpack.c.b16 %v1220, %v1219
      %v1330 = vpack.c.b16 %v1222, %v1221
      %v1331 = vpack.c.b16 %v1224, %v1223
      %v1332 = vpack.c.b16 %v1226, %v1225
      %v1333 = vpack.c.b16 %v1228, %v1227
      %v1334 = vpack.c.b16 %v1230, %v1229
      %v1335 = vpack.c.b16 %v1232, %v1231
      %v1336 = vpack.c.b16 %v1234, %v1233
      %v1337 = vpack.c.b16 %v1236, %v1235
      %v1338 = vpack.c.b16 %v1238, %v1237
      %v1339 = vpack.c.b16 %v1240, %v1239
      %v1340 = vpack.c.b16 %v1242, %v1241
      %v1341 = vpack.c.b16 %v1244, %v1243
      %v1342 = vpack.c.b16 %v1246, %v1245
      %v1343 = vpack.c.b16 %v1248, %v1247
      %v1344 = vpack.c.b16 %v1250, %v1249
      %v1345 = vpack.c.b16 %v1252, %v1251
      %v1346 = vpack.c.b16 %v1254, %v1253
      %v1347 = vpack.c.b16 %v1256, %v1255
      %v1348 = vpack.c.b16 %v1258, %v1257
      %v1349 = vpack.c.b16 %v1260, %v1259
      %v1350 = vpack.c.b16 %v1262, %v1261
      %v1351 = vpack.c.b16 %v1264, %v1263
      %v1352 = vpack.c.b16 %v1266, %v1265
      %v1353 = vpack.c.b16 %v1268, %v1267
      %v1354 = vpack.c.b16 %v1270, %v1269
      %v1355 = vpack.c.b16 %v1272, %v1271
      %v1356 = vpack.c.b16 %v1274, %v1273
      %v1357 = vpack.c.b16 %v1276, %v1275
      %v1358 = vpack.c.b16 %v1278, %v1277
      %v1359 = vpack.c.b16 %v1280, %v1279
      %v1360 = vpack.c.b16 %v1282, %v1281
      %v1361 = vpack.c.b16 %v1284, %v1283
      %v1362 = vpack.c.b16 %v1286, %v1285
      %v1363 = vpack.c.b16 %v1288, %v1287
      %v1364 = vpack.c.b16 %v1290, %v1289
      %v1365 = vpack.c.b16 %v1292, %v1291
      %v1366 = vpack.c.b16 %v1294, %v1293
      %v1367 = vpack.c.b16 %v1296, %v1295
      %v1368 = vpack.c.b16 %v1298, %v1297
      %v1369 = vpack.c.b16 %v1300, %v1299
      %v1370 = vpack.c.b16 %v1302, %v1301
      %v1371 = vpack.c.b16 %v1304, %v1303
      %v1372 = vpack.c.b16 %v1306, %v1305
      %v1373 = vpack.c.b16 %v1308, %v1307
      %v1374 = vpack.c.b16 %v1310, %v1309
      %1439 = vmatprep.subr.bf16.mxu0 0
      %1440 = vmatpush1.bf16.msra.mxu0 %v1311
      %1441 = vmatprep.subr.bf16.mxu0 0
      %1442 = vmatpush1.bf16.msra.mxu0 %v1312
      %1443 = vmatprep.subr.bf16.mxu0 0
      %1444 = vmatpush1.bf16.msra.mxu0 %v1313
      %1445 = vmatprep.subr.bf16.mxu0 0
      %1446 = vmatpush1.bf16.msra.mxu0 %v1314
      %1447 = vmatprep.subr.bf16.mxu0 0
      %1448 = vmatpush1.bf16.msra.mxu0 %v1315
      %1449 = vmatprep.subr.bf16.mxu0 0
      %1450 = vmatpush1.bf16.msra.mxu0 %v1316
      %1451 = vmatprep.subr.bf16.mxu0 0
      %1452 = vmatpush1.bf16.msra.mxu0 %v1317
      %1453 = vmatprep.subr.bf16.mxu0 0
      %1454 = vmatpush1.bf16.msra.mxu0 %v1318
      %1455 = vmatprep.subr.bf16.mxu0 0
      %1456 = vmatpush1.bf16.msra.mxu0 %v1319
      %1457 = vmatprep.subr.bf16.mxu0 0
      %1458 = vmatpush1.bf16.msra.mxu0 %v1320
      %1459 = vmatprep.subr.bf16.mxu0 0
      %1460 = vmatpush1.bf16.msra.mxu0 %v1321
      %1461 = vmatprep.subr.bf16.mxu0 0
      %1462 = vmatpush1.bf16.msra.mxu0 %v1322
      %1463 = vmatprep.subr.bf16.mxu0 0
      %1464 = vmatpush1.bf16.msra.mxu0 %v1323
      %1465 = vmatprep.subr.bf16.mxu0 0
      %1466 = vmatpush1.bf16.msra.mxu0 %v1324
      %1467 = vmatprep.subr.bf16.mxu0 0
      %1468 = vmatpush1.bf16.msra.mxu0 %v1325
      %1469 = vmatprep.subr.bf16.mxu0 0
      %1470 = vmatpush1.bf16.msra.mxu0 %v1326
      %1471 = vmatprep.mubr.bf16.mxu0 %v1048
      %1472 = vmatmul.mubr.bf16.gmra.mrb[0].mxu0 %v1047
      %v1473 = vpop.f32.mrb[0].mxu0
      %v1474 = vadd.f32 0.0, %v1473
      %v1475 = vpop.f32.mrb[0].mxu0
      %v1476 = vpop.f32.mrb[0].mxu0
      %v1477 = vadd.f32 0.0, %v1476
      %v1478 = vpop.f32.mrb[0].mxu0
      %1479 = vdwg.mxu0
      %1480 = vmatprep.subr.bf16.mxu0 0
      %1481 = vmatpush1.bf16.msra.mxu0 %v1327
      %1482 = vmatprep.subr.bf16.mxu0 0
      %1483 = vmatpush1.bf16.msra.mxu0 %v1328
      %1484 = vmatprep.subr.bf16.mxu0 0
      %1485 = vmatpush1.bf16.msra.mxu0 %v1329
      %1486 = vmatprep.subr.bf16.mxu0 0
      %1487 = vmatpush1.bf16.msra.mxu0 %v1330
      %1488 = vmatprep.subr.bf16.mxu0 0
      %1489 = vmatpush1.bf16.msra.mxu0 %v1331
      %1490 = vmatprep.subr.bf16.mxu0 0
      %1491 = vmatpush1.bf16.msra.mxu0 %v1332
      %1492 = vmatprep.subr.bf16.mxu0 0
      %1493 = vmatpush1.bf16.msra.mxu0 %v1333
      %1494 = vmatprep.subr.bf16.mxu0 0
      %1495 = vmatpush1.bf16.msra.mxu0 %v1334
      %1496 = vmatprep.subr.bf16.mxu0 0
      %1497 = vmatpush1.bf16.msra.mxu0 %v1335
      %1498 = vmatprep.subr.bf16.mxu0 0
      %1499 = vmatpush1.bf16.msra.mxu0 %v1336
      %1500 = vmatprep.subr.bf16.mxu0 0
      %1501 = vmatpush1.bf16.msra.mxu0 %v1337
      %1502 = vmatprep.subr.bf16.mxu0 0
      %1503 = vmatpush1.bf16.msra.mxu0 %v1338
      %1504 = vmatprep.subr.bf16.mxu0 0
      %1505 = vmatpush1.bf16.msra.mxu0 %v1339
      %1506 = vmatprep.subr.bf16.mxu0 0
      %1507 = vmatpush1.bf16.msra.mxu0 %v1340
      %1508 = vmatprep.subr.bf16.mxu0 0
      %1509 = vmatpush1.bf16.msra.mxu0 %v1341
      %1510 = vmatprep.subr.bf16.mxu0 0
      %1511 = vmatpush1.bf16.msra.mxu0 %v1342
      %1512 = vmatprep.mubr.bf16.mxu0 %v1050
      %1513 = vmatmul.mubr.bf16.gmra.mrb[0].mxu0 %v1049
      %v1514 = vpop.f32.mrb[0].mxu0
      %v1515 = vadd.f32 %v1474, %v1514
      %v1516 = vpop.f32.mrb[0].mxu0
      %v1517 = vpop.f32.mrb[0].mxu0
      %v1518 = vadd.f32 %v1477, %v1517
      %v1519 = vpop.f32.mrb[0].mxu0
      %1520 = vdwg.mxu0
      %1521 = vmatprep.subr.bf16.mxu0 0
      %1522 = vmatpush1.bf16.msra.mxu0 %v1343
      %1523 = vmatprep.subr.bf16.mxu0 0
      %1524 = vmatpush1.bf16.msra.mxu0 %v1344
      %1525 = vmatprep.subr.bf16.mxu0 0
      %1526 = vmatpush1.bf16.msra.mxu0 %v1345
      %1527 = vmatprep.subr.bf16.mxu0 0
      %1528 = vmatpush1.bf16.msra.mxu0 %v1346
      %1529 = vmatprep.subr.bf16.mxu0 0
      %1530 = vmatpush1.bf16.msra.mxu0 %v1347
      %1531 = vmatprep.subr.bf16.mxu0 0
      %1532 = vmatpush1.bf16.msra.mxu0 %v1348
      %1533 = vmatprep.subr.bf16.mxu0 0
      %1534 = vmatpush1.bf16.msra.mxu0 %v1349
      %1535 = vmatprep.subr.bf16.mxu0 0
      %1536 = vmatpush1.bf16.msra.mxu0 %v1350
      %1537 = vmatprep.subr.bf16.mxu0 0
      %1538 = vmatpush1.bf16.msra.mxu0 %v1351
      %1539 = vmatprep.subr.bf16.mxu0 0
      %1540 = vmatpush1.bf16.msra.mxu0 %v1352
      %1541 = vmatprep.subr.bf16.mxu0 0
      %1542 = vmatpush1.bf16.msra.mxu0 %v1353
      %1543 = vmatprep.subr.bf16.mxu0 0
      %1544 = vmatpush1.bf16.msra.mxu0 %v1354
      %1545 = vmatprep.subr.bf16.mxu0 0
      %1546 = vmatpush1.bf16.msra.mxu0 %v1355
      %1547 = vmatprep.subr.bf16.mxu0 0
      %1548 = vmatpush1.bf16.msra.mxu0 %v1356
      %1549 = vmatprep.subr.bf16.mxu0 0
      %1550 = vmatpush1.bf16.msra.mxu0 %v1357
      %1551 = vmatprep.subr.bf16.mxu0 0
      %1552 = vmatpush1.bf16.msra.mxu0 %v1358
      %1553 = vmatprep.mubr.bf16.mxu0 %v1052
      %1554 = vmatmul.mubr.bf16.gmra.mrb[0].mxu0 %v1051
      %v1555 = vpop.f32.mrb[0].mxu0
      %v1556 = vadd.f32 %v1515, %v1555
      %v1557 = vpop.f32.mrb[0].mxu0
      %v1558 = vpop.f32.mrb[0].mxu0
      %v1559 = vadd.f32 %v1518, %v1558
      %v1560 = vpop.f32.mrb[0].mxu0
      %1561 = vdwg.mxu0
      %1562 = vmatprep.subr.bf16.mxu0 0
      %1563 = vmatpush1.bf16.msra.mxu0 %v1359
      %1564 = vmatprep.subr.bf16.mxu0 0
      %1565 = vmatpush1.bf16.msra.mxu0 %v1360
      %1566 = vmatprep.subr.bf16.mxu0 0
      %1567 = vmatpush1.bf16.msra.mxu0 %v1361
      %1568 = vmatprep.subr.bf16.mxu0 0
      %1569 = vmatpush1.bf16.msra.mxu0 %v1362
      %1570 = vmatprep.subr.bf16.mxu0 0
      %1571 = vmatpush1.bf16.msra.mxu0 %v1363
      %1572 = vmatprep.subr.bf16.mxu0 0
      %1573 = vmatpush1.bf16.msra.mxu0 %v1364
      %1574 = vmatprep.subr.bf16.mxu0 0
      %1575 = vmatpush1.bf16.msra.mxu0 %v1365
      %1576 = vmatprep.subr.bf16.mxu0 0
      %1577 = vmatpush1.bf16.msra.mxu0 %v1366
      %1578 = vmatprep.subr.bf16.mxu0 0
      %1579 = vmatpush1.bf16.msra.mxu0 %v1367
      %1580 = vmatprep.subr.bf16.mxu0 0
      %1581 = vmatpush1.bf16.msra.mxu0 %v1368
      %1582 = vmatprep.subr.bf16.mxu0 0
      %1583 = vmatpush1.bf16.msra.mxu0 %v1369
      %1584 = vmatprep.subr.bf16.mxu0 0
      %1585 = vmatpush1.bf16.msra.mxu0 %v1370
      %1586 = vmatprep.subr.bf16.mxu0 0
      %1587 = vmatpush1.bf16.msra.mxu0 %v1371
      %1588 = vmatprep.subr.bf16.mxu0 0
      %1589 = vmatpush1.bf16.msra.mxu0 %v1372
      %1590 = vmatprep.subr.bf16.mxu0 0
      %1591 = vmatpush1.bf16.msra.mxu0 %v1373
      %1592 = vmatprep.subr.bf16.mxu0 0
      %1593 = vmatpush1.bf16.msra.mxu0 %v1374
      %1594 = vmatprep.mubr.bf16.mxu0 %v1054
      %1595 = vmatmul.mubr.bf16.gmra.mrb[0].mxu0 %v1053
      %v1596 = vpop.f32.mrb[0].mxu0
      %v1597 = vadd.f32 %v1556, %v1596
      %v1598 = vpop.f32.mrb[0].mxu0
      %v1599 = vpop.f32.mrb[0].mxu0
      %v1600 = vadd.f32 %v1559, %v1599
      %v1601 = vpop.f32.mrb[0].mxu0
      %1602 = vdwg.mxu0
      %v1603 = vld [vmem:[%s592] sm:$0xff]
      %v1604 = vld [vmem:[%s592 + $0x8] sm:$0xff]
      %v1605 = vld [vmem:[%s592 + $0x10] sm:$0xff]
      %v1606 = vld [vmem:[%s592 + $0x18] sm:$0xff]
      %v1607 = vld [vmem:[%s592 + $0x20] sm:$0xff]
      %v1608 = vld [vmem:[%s592 + $0x28] sm:$0xff]
      %v1609 = vld [vmem:[%s592 + $0x30] sm:$0xff]
      %v1610 = vld [vmem:[%s592 + $0x38] sm:$0xff]
      %v1611 = vld [vmem:[%s592 + $0x40] sm:$0xff]
      %v1612 = vld [vmem:[%s592 + $0x48] sm:$0xff]
      %v1613 = vld [vmem:[%s592 + $0x50] sm:$0xff]
      %v1614 = vld [vmem:[%s592 + $0x58] sm:$0xff]
      %v1615 = vld [vmem:[%s592 + $0x60] sm:$0xff]
      %v1616 = vld [vmem:[%s592 + $0x68] sm:$0xff]
      %v1617 = vld [vmem:[%s592 + $0x70] sm:$0xff]
      %v1618 = vld [vmem:[%s592 + $0x78] sm:$0xff]
      %v1619 = vld [vmem:[%s592 + $0x80] sm:$0xff]
      %v1620 = vld [vmem:[%s592 + $0x88] sm:$0xff]
      %v1621 = vld [vmem:[%s592 + $0x90] sm:$0xff]
      %v1622 = vld [vmem:[%s592 + $0x98] sm:$0xff]
      %v1623 = vld [vmem:[%s592 + $0xa0] sm:$0xff]
      %v1624 = vld [vmem:[%s592 + $0xa8] sm:$0xff]
      %v1625 = vld [vmem:[%s592 + $0xb0] sm:$0xff]
      %v1626 = vld [vmem:[%s592 + $0xb8] sm:$0xff]
      %v1627 = vld [vmem:[%s592 + $0xc0] sm:$0xff]
      %v1628 = vld [vmem:[%s592 + $0xc8] sm:$0xff]
      %v1629 = vld [vmem:[%s592 + $0xd0] sm:$0xff]
      %v1630 = vld [vmem:[%s592 + $0xd8] sm:$0xff]
      %v1631 = vld [vmem:[%s592 + $0xe0] sm:$0xff]
      %v1632 = vld [vmem:[%s592 + $0xe8] sm:$0xff]
      %v1633 = vld [vmem:[%s592 + $0xf0] sm:$0xff]
      %v1634 = vld [vmem:[%s592 + $0xf8] sm:$0xff]
      %v1635 = vrcp.pop 8.0
      %v1636 = vmul.f32 %v717, %v1635
      %v1637 = vmul.f32 %v718, %v1635
      %v1638 = vmul.f32 %v731, %v1635
      %v1639 = vmul.f32 %v732, %v1635
      %v1640 = vfloor.f32 %v1636
      %v1641 = vfloor.f32 %v1637
      %v1642 = vfloor.f32 %v1638
      %v1643 = vfloor.f32 %v1639
      %v1644 = vceil.f32 %v1636
      %v1645 = vceil.f32 %v1637
      %v1646 = vmin.f32 %v1644, 15.0
      %v1647 = vmin.f32 %v1645, 15.0
      %v1648 = vceil.f32 %v1638
      %v1649 = vceil.f32 %v1639
      %v1650 = vmin.f32 %v1648, 15.0
      %v1651 = vmin.f32 %v1649, 15.0
      %v1652 = vsub.f32 %v1646, %v1640
      %v1653 = vsub.f32 %v1647, %v1641
      %v1654 = vsub.f32 %v1650, %v1642
      %v1655 = vsub.f32 %v1651, %v1643
      %1658 = vrot.lane.b32.xlu0 %v1654, 127
      %v1659 = vpop.permute.xlu0 %1658
      %1660 = vrot.lane.b32.xlu0 %v1655, 127
      %v1661 = vpop.permute.xlu0 %1660
      %v1664 = vmul.f32 %v1652, %v1659
      %v1665 = vmul.f32 %v1653, %v1661
      %v1666 = vcvt.f32.s32.to.zero.pseudo %v1642
      %v1667 = vcvt.f32.s32.to.zero.pseudo %v1643
      %v1668 = vmul.u32 %v1666, 16
      %v1669 = vmul.u32 %v1667, 16
      %v1670 = vcvt.f32.s32.to.zero.pseudo %v1640
      %v1671 = vcvt.f32.s32.to.zero.pseudo %v1641
      %1672 = vrot.lane.b32.xlu0 %v1670, 1
      %v1673 = vpop.permute.xlu0 %1672
      %1674 = vrot.lane.b32.xlu0 %v1671, 1
      %v1675 = vpop.permute.xlu0 %1674
      %v1676 = vadd.s32 %v1668, %v1673
      %v1677 = vadd.s32 %v1669, %v1675
      %1678 = vset.pattern.permute.xlu0 1
      %1679 = vperm.xlu0 %1678, %v1676
      %v1680 = vpop.permute.xlu0 %1679
      %1681 = vset.pattern.permute.xlu0 1
      %1682 = vperm.xlu0 %1681, %v1677
      %v1683 = vpop.permute.xlu0 %1682
      %vm1684 = vcmp.eq.s32.totalorder %v991, %v1680
      %vm1685 = vcmp.eq.s32.totalorder %v992, %v1680
      %vm1686 = vcmp.eq.s32.totalorder %v991, %v1683
      %vm1687 = vcmp.eq.s32.totalorder %v992, %v1683
      %1689 = vset.pattern.permute.xlu0 0
      %1690 = vperm.xlu0 %1689, %v1664
      %v1691 = vpop.permute.xlu0 %1690
      %1694 = vset.pattern.permute.xlu0 0
      %1695 = vperm.xlu0 %1694, %v1665
      %v1696 = vpop.permute.xlu0 %1695
      %v1698 = vsel %vm1684, %v1691, 0.0
      %v1699 = vsel %vm1685, %v1691, 0.0
      %v1700 = vsel %vm1686, %v1696, 0.0
      %v1701 = vsel %vm1687, %v1696, 0.0
      %v1702 = vpack.c.bf16 %v1700, %v1698
      %v1703 = vpack.c.bf16 %v1701, %v1699
      %v1736 = vunpack.c.l.b16 %v1603
      %v1737 = vunpack.c.h.b16 %v1603
      %v1738 = vunpack.c.l.b16 %v1604
      %v1739 = vunpack.c.h.b16 %v1604
      %v1740 = vunpack.c.l.b16 %v1605
      %v1741 = vunpack.c.h.b16 %v1605
      %v1742 = vunpack.c.l.b16 %v1606
      %v1743 = vunpack.c.h.b16 %v1606
      %v1744 = vunpack.c.l.b16 %v1607
      %v1745 = vunpack.c.h.b16 %v1607
      %v1746 = vunpack.c.l.b16 %v1608
      %v1747 = vunpack.c.h.b16 %v1608
      %v1748 = vunpack.c.l.b16 %v1609
      %v1749 = vunpack.c.h.b16 %v1609
      %v1750 = vunpack.c.l.b16 %v1610
      %v1751 = vunpack.c.h.b16 %v1610
      %v1752 = vunpack.c.l.b16 %v1611
      %v1753 = vunpack.c.h.b16 %v1611
      %v1754 = vunpack.c.l.b16 %v1612
      %v1755 = vunpack.c.h.b16 %v1612
      %v1756 = vunpack.c.l.b16 %v1613
      %v1757 = vunpack.c.h.b16 %v1613
      %v1758 = vunpack.c.l.b16 %v1614
      %v1759 = vunpack.c.h.b16 %v1614
      %v1760 = vunpack.c.l.b16 %v1615
      %v1761 = vunpack.c.h.b16 %v1615
      %v1762 = vunpack.c.l.b16 %v1616
      %v1763 = vunpack.c.h.b16 %v1616
      %v1764 = vunpack.c.l.b16 %v1617
      %v1765 = vunpack.c.h.b16 %v1617
      %v1766 = vunpack.c.l.b16 %v1618
      %v1767 = vunpack.c.h.b16 %v1618
      %v1768 = vunpack.c.l.b16 %v1619
      %v1769 = vunpack.c.h.b16 %v1619
      %v1770 = vunpack.c.l.b16 %v1620
      %v1771 = vunpack.c.h.b16 %v1620
      %v1772 = vunpack.c.l.b16 %v1621
      %v1773 = vunpack.c.h.b16 %v1621
      %v1774 = vunpack.c.l.b16 %v1622
      %v1775 = vunpack.c.h.b16 %v1622
      %v1776 = vunpack.c.l.b16 %v1623
      %v1777 = vunpack.c.h.b16 %v1623
      %v1778 = vunpack.c.l.b16 %v1624
      %v1779 = vunpack.c.h.b16 %v1624
      %v1780 = vunpack.c.l.b16 %v1625
      %v1781 = vunpack.c.h.b16 %v1625
      %v1782 = vunpack.c.l.b16 %v1626
      %v1783 = vunpack.c.h.b16 %v1626
      %v1784 = vunpack.c.l.b16 %v1627
      %v1785 = vunpack.c.h.b16 %v1627
      %v1786 = vunpack.c.l.b16 %v1628
      %v1787 = vunpack.c.h.b16 %v1628
      %v1788 = vunpack.c.l.b16 %v1629
      %v1789 = vunpack.c.h.b16 %v1629
      %v1790 = vunpack.c.l.b16 %v1630
      %v1791 = vunpack.c.h.b16 %v1630
      %v1792 = vunpack.c.l.b16 %v1631
      %v1793 = vunpack.c.h.b16 %v1631
      %v1794 = vunpack.c.l.b16 %v1632
      %v1795 = vunpack.c.h.b16 %v1632
      %v1796 = vunpack.c.l.b16 %v1633
      %v1797 = vunpack.c.h.b16 %v1633
      %v1798 = vunpack.c.l.b16 %v1634
      %v1799 = vunpack.c.h.b16 %v1634
      %v1800 = vpack.c.b16 %v1738, %v1736
      %v1801 = vpack.c.b16 %v1739, %v1737
      %v1802 = vpack.c.b16 %v1742, %v1740
      %v1803 = vpack.c.b16 %v1743, %v1741
      %v1804 = vpack.c.b16 %v1746, %v1744
      %v1805 = vpack.c.b16 %v1747, %v1745
      %v1806 = vpack.c.b16 %v1750, %v1748
      %v1807 = vpack.c.b16 %v1751, %v1749
      %v1808 = vpack.c.b16 %v1754, %v1752
      %v1809 = vpack.c.b16 %v1755, %v1753
      %v1810 = vpack.c.b16 %v1758, %v1756
      %v1811 = vpack.c.b16 %v1759, %v1757
      %v1812 = vpack.c.b16 %v1762, %v1760
      %v1813 = vpack.c.b16 %v1763, %v1761
      %v1814 = vpack.c.b16 %v1766, %v1764
      %v1815 = vpack.c.b16 %v1767, %v1765
      %v1816 = vpack.c.b16 %v1770, %v1768
      %v1817 = vpack.c.b16 %v1771, %v1769
      %v1818 = vpack.c.b16 %v1774, %v1772
      %v1819 = vpack.c.b16 %v1775, %v1773
      %v1820 = vpack.c.b16 %v1778, %v1776
      %v1821 = vpack.c.b16 %v1779, %v1777
      %v1822 = vpack.c.b16 %v1782, %v1780
      %v1823 = vpack.c.b16 %v1783, %v1781
      %v1824 = vpack.c.b16 %v1786, %v1784
      %v1825 = vpack.c.b16 %v1787, %v1785
      %v1826 = vpack.c.b16 %v1790, %v1788
      %v1827 = vpack.c.b16 %v1791, %v1789
      %v1828 = vpack.c.b16 %v1794, %v1792
      %v1829 = vpack.c.b16 %v1795, %v1793
      %v1830 = vpack.c.b16 %v1798, %v1796
      %v1831 = vpack.c.b16 %v1799, %v1797
      %1864 = vmatprep.subr.bf16.mxu0 %v1801
      %1865 = vmatpush1.bf16.msra.mxu0 %v1800
      %1866 = vmatprep.subr.bf16.mxu0 %v1803
      %1867 = vmatpush1.bf16.msra.mxu0 %v1802
      %1868 = vmatprep.subr.bf16.mxu0 %v1805
      %1869 = vmatpush1.bf16.msra.mxu0 %v1804
      %1870 = vmatprep.subr.bf16.mxu0 %v1807
      %1871 = vmatpush1.bf16.msra.mxu0 %v1806
      %1872 = vmatprep.subr.bf16.mxu0 %v1809
      %1873 = vmatpush1.bf16.msra.mxu0 %v1808
      %1874 = vmatprep.subr.bf16.mxu0 %v1811
      %1875 = vmatpush1.bf16.msra.mxu0 %v1810
      %1876 = vmatprep.subr.bf16.mxu0 %v1813
      %1877 = vmatpush1.bf16.msra.mxu0 %v1812
      %1878 = vmatprep.subr.bf16.mxu0 %v1815
      %1879 = vmatpush1.bf16.msra.mxu0 %v1814
      %1880 = vmatprep.subr.bf16.mxu0 %v1817
      %1881 = vmatpush1.bf16.msra.mxu0 %v1816
      %1882 = vmatprep.subr.bf16.mxu0 %v1819
      %1883 = vmatpush1.bf16.msra.mxu0 %v1818
      %1884 = vmatprep.subr.bf16.mxu0 %v1821
      %1885 = vmatpush1.bf16.msra.mxu0 %v1820
      %1886 = vmatprep.subr.bf16.mxu0 %v1823
      %1887 = vmatpush1.bf16.msra.mxu0 %v1822
      %1888 = vmatprep.subr.bf16.mxu0 %v1825
      %1889 = vmatpush1.bf16.msra.mxu0 %v1824
      %1890 = vmatprep.subr.bf16.mxu0 %v1827
      %1891 = vmatpush1.bf16.msra.mxu0 %v1826
      %1892 = vmatprep.subr.bf16.mxu0 %v1829
      %1893 = vmatpush1.bf16.msra.mxu0 %v1828
      %1894 = vmatprep.subr.bf16.mxu0 %v1831
      %1895 = vmatpush1.bf16.msra.mxu0 %v1830
      %1896 = vmatprep.mubr.bf16.mxu0 %v1703
      %1897 = vmatmul.mubr.bf16.gmra.mrb[0].mxu0 %v1702
      %v1898 = vpop.f32.mrb[0].mxu0
      %v1899 = vadd.f32 0.0, %v1898
      %v1900 = vpop.f32.mrb[0].mxu0
      %v1901 = vadd.f32 0.0, %v1900
      %v1902 = vpop.f32.mrb[0].mxu0
      %v1903 = vadd.f32 0.0, %v1902
      %v1904 = vpop.f32.mrb[0].mxu0
      %v1905 = vadd.f32 0.0, %v1904
      %1906 = vdwg.mxu0
      %v1907 = vld [vmem:[%s597] sm:$0xff]
      %v1908 = vld [vmem:[%s597 + $0x8] sm:$0xff]
      %v1909 = vld [vmem:[%s597 + $0x10] sm:$0xff]
      %v1910 = vld [vmem:[%s597 + $0x18] sm:$0xff]
      %v1911 = vld [vmem:[%s597 + $0x20] sm:$0xff]
      %v1912 = vld [vmem:[%s597 + $0x28] sm:$0xff]
      %v1913 = vld [vmem:[%s597 + $0x30] sm:$0xff]
      %v1914 = vld [vmem:[%s597 + $0x38] sm:$0xff]
      %v1915 = vld [vmem:[%s597 + $0x40] sm:$0xff]
      %v1916 = vld [vmem:[%s597 + $0x48] sm:$0xff]
      %v1917 = vld [vmem:[%s597 + $0x50] sm:$0xff]
      %v1918 = vld [vmem:[%s597 + $0x58] sm:$0xff]
      %v1919 = vld [vmem:[%s597 + $0x60] sm:$0xff]
      %v1920 = vld [vmem:[%s597 + $0x68] sm:$0xff]
      %v1921 = vld [vmem:[%s597 + $0x70] sm:$0xff]
      %v1922 = vld [vmem:[%s597 + $0x78] sm:$0xff]
      %v1923 = vrcp.pop 16.0
      %v1924 = vmul.f32 %v717, %v1923
      %v1925 = vmul.f32 %v718, %v1923
      %v1926 = vmul.f32 %v731, %v1923
      %v1927 = vmul.f32 %v732, %v1923
      %v1928 = vfloor.f32 %v1924
      %v1929 = vfloor.f32 %v1925
      %v1930 = vfloor.f32 %v1926
      %v1931 = vfloor.f32 %v1927
      %v1932 = vceil.f32 %v1924
      %v1933 = vceil.f32 %v1925
      %v1934 = vmin.f32 %v1932, 7.0
      %v1935 = vmin.f32 %v1933, 7.0
      %v1936 = vceil.f32 %v1926
      %v1937 = vceil.f32 %v1927
      %v1938 = vmin.f32 %v1936, 7.0
      %v1939 = vmin.f32 %v1937, 7.0
      %v1940 = vsub.f32 %v1934, %v1928
      %v1941 = vsub.f32 %v1935, %v1929
      %v1942 = vsub.f32 %v1938, %v1930
      %v1943 = vsub.f32 %v1939, %v1931
      %1946 = vrot.lane.b32.xlu0 %v1942, 127
      %v1947 = vpop.permute.xlu0 %1946
      %1948 = vrot.lane.b32.xlu0 %v1943, 127
      %v1949 = vpop.permute.xlu0 %1948
      %v1952 = vmul.f32 %v1940, %v1947
      %v1953 = vmul.f32 %v1941, %v1949
      %v1954 = vcvt.f32.s32.to.zero.pseudo %v1930
      %v1955 = vcvt.f32.s32.to.zero.pseudo %v1931
      %v1956 = vmul.u32 %v1954, 8
      %v1957 = vmul.u32 %v1955, 8
      %v1958 = vcvt.f32.s32.to.zero.pseudo %v1928
      %v1959 = vcvt.f32.s32.to.zero.pseudo %v1929
      %1960 = vrot.lane.b32.xlu0 %v1958, 1
      %v1961 = vpop.permute.xlu0 %1960
      %1962 = vrot.lane.b32.xlu0 %v1959, 1
      %v1963 = vpop.permute.xlu0 %1962
      %v1964 = vadd.s32 %v1956, %v1961
      %v1965 = vadd.s32 %v1957, %v1963
      %1966 = vset.pattern.permute.xlu0 1
      %1967 = vperm.xlu0 %1966, %v1964
      %v1968 = vpop.permute.xlu0 %1967
      %1969 = vset.pattern.permute.xlu0 1
      %1970 = vperm.xlu0 %1969, %v1965
      %v1971 = vpop.permute.xlu0 %1970
      %vm1972 = vcmp.eq.s32.totalorder %v991, %v1968
      %vm1973 = vcmp.eq.s32.totalorder %v991, %v1971
      %1975 = vset.pattern.permute.xlu0 0
      %1976 = vperm.xlu0 %1975, %v1952
      %v1977 = vpop.permute.xlu0 %1976
      %1980 = vset.pattern.permute.xlu0 0
      %1981 = vperm.xlu0 %1980, %v1953
      %v1982 = vpop.permute.xlu0 %1981
      %v1984 = vsel %vm1972, %v1977, 0.0
      %v1985 = vsel %vm1973, %v1982, 0.0
      %v1986 = vpack.c.bf16 %v1985, %v1984
      %v2003 = vunpack.c.l.b16 %v1907
      %v2004 = vunpack.c.h.b16 %v1907
      %v2005 = vunpack.c.l.b16 %v1908
      %v2006 = vunpack.c.h.b16 %v1908
      %v2007 = vunpack.c.l.b16 %v1909
      %v2008 = vunpack.c.h.b16 %v1909
      %v2009 = vunpack.c.l.b16 %v1910
      %v2010 = vunpack.c.h.b16 %v1910
      %v2011 = vunpack.c.l.b16 %v1911
      %v2012 = vunpack.c.h.b16 %v1911
      %v2013 = vunpack.c.l.b16 %v1912
      %v2014 = vunpack.c.h.b16 %v1912
      %v2015 = vunpack.c.l.b16 %v1913
      %v2016 = vunpack.c.h.b16 %v1913
      %v2017 = vunpack.c.l.b16 %v1914
      %v2018 = vunpack.c.h.b16 %v1914
      %v2019 = vunpack.c.l.b16 %v1915
      %v2020 = vunpack.c.h.b16 %v1915
      %v2021 = vunpack.c.l.b16 %v1916
      %v2022 = vunpack.c.h.b16 %v1916
      %v2023 = vunpack.c.l.b16 %v1917
      %v2024 = vunpack.c.h.b16 %v1917
      %v2025 = vunpack.c.l.b16 %v1918
      %v2026 = vunpack.c.h.b16 %v1918
      %v2027 = vunpack.c.l.b16 %v1919
      %v2028 = vunpack.c.h.b16 %v1919
      %v2029 = vunpack.c.l.b16 %v1920
      %v2030 = vunpack.c.h.b16 %v1920
      %v2031 = vunpack.c.l.b16 %v1921
      %v2032 = vunpack.c.h.b16 %v1921
      %v2033 = vunpack.c.l.b16 %v1922
      %v2034 = vunpack.c.h.b16 %v1922
      %v2035 = vpack.c.b16 %v2007, %v2003
      %v2036 = vpack.c.b16 %v2008, %v2004
      %v2037 = vpack.c.b16 %v2009, %v2005
      %v2038 = vpack.c.b16 %v2010, %v2006
      %v2039 = vpack.c.b16 %v2015, %v2011
      %v2040 = vpack.c.b16 %v2016, %v2012
      %v2041 = vpack.c.b16 %v2017, %v2013
      %v2042 = vpack.c.b16 %v2018, %v2014
      %v2043 = vpack.c.b16 %v2023, %v2019
      %v2044 = vpack.c.b16 %v2024, %v2020
      %v2045 = vpack.c.b16 %v2025, %v2021
      %v2046 = vpack.c.b16 %v2026, %v2022
      %v2047 = vpack.c.b16 %v2031, %v2027
      %v2048 = vpack.c.b16 %v2032, %v2028
      %v2049 = vpack.c.b16 %v2033, %v2029
      %v2050 = vpack.c.b16 %v2034, %v2030
      %vm2067 = vcmask 523264
      %v2069 = vsel %vm2067, %v1986, 0
      %2071 = vmatprep.subr.bf16.mxu0 %v2036
      %2072 = vmatpush1.bf16.msra.mxu0 %v2035
      %2073 = vmatprep.subr.bf16.mxu0 %v2040
      %2074 = vmatpush1.bf16.msra.mxu0 %v2039
      %2075 = vmatprep.subr.bf16.mxu0 %v2044
      %2076 = vmatpush1.bf16.msra.mxu0 %v2043
      %2077 = vmatprep.subr.bf16.mxu0 %v2048
      %2078 = vmatpush1.bf16.msra.mxu0 %v2047
      %2079 = vmatprep.subr.bf16.mxu0 0
      %2080 = vmatpush1.bf16.msra.mxu0 0
      %2081 = vmatprep.subr.bf16.mxu0 0
      %2082 = vmatpush1.bf16.msra.mxu0 0
      %2083 = vmatprep.subr.bf16.mxu0 0
      %2084 = vmatpush1.bf16.msra.mxu0 0
      %2085 = vmatprep.subr.bf16.mxu0 0
      %2086 = vmatpush1.bf16.msra.mxu0 0
      %2087 = vmatprep.subr.bf16.mxu0 0
      %2088 = vmatpush1.bf16.msra.mxu0 0
      %2089 = vmatprep.subr.bf16.mxu0 0
      %2090 = vmatpush1.bf16.msra.mxu0 0
      %2091 = vmatprep.subr.bf16.mxu0 0
      %2092 = vmatpush1.bf16.msra.mxu0 0
      %2093 = vmatprep.subr.bf16.mxu0 0
      %2094 = vmatpush1.bf16.msra.mxu0 0
      %2095 = vmatprep.subr.bf16.mxu0 0
      %2096 = vmatpush1.bf16.msra.mxu0 0
      %2097 = vmatprep.subr.bf16.mxu0 0
      %2098 = vmatpush1.bf16.msra.mxu0 0
      %2099 = vmatprep.subr.bf16.mxu0 0
      %2100 = vmatpush1.bf16.msra.mxu0 0
      %2101 = vmatprep.subr.bf16.mxu0 0
      %2102 = vmatpush1.bf16.msra.mxu0 0
      %2103 = vmatprep.mubr.bf16.mxu0 0
      %2104 = vmatmul.mubr.bf16.gmra.mrb[0].mxu0 %v2069
      %v2105 = vpop.f32.mrb[0].mxu0
      %v2106 = vadd.f32 0.0, %v2105
      %v2107 = vpop.f32.mrb[0].mxu0
      %v2108 = vadd.f32 0.0, %v2107
      %v2109 = vpop.f32.mrb[0].mxu0
      %v2110 = vadd.f32 0.0, %v2109
      %v2111 = vpop.f32.mrb[0].mxu0
      %v2112 = vadd.f32 0.0, %v2111
      %2113 = vdwg.mxu0
      %2114 = vmatprep.subr.bf16.mxu0 %v2038
      %2115 = vmatpush1.bf16.msra.mxu0 %v2037
      %2116 = vmatprep.subr.bf16.mxu0 %v2042
      %2117 = vmatpush1.bf16.msra.mxu0 %v2041
      %2118 = vmatprep.subr.bf16.mxu0 %v2046
      %2119 = vmatpush1.bf16.msra.mxu0 %v2045
      %2120 = vmatprep.subr.bf16.mxu0 %v2050
      %2121 = vmatpush1.bf16.msra.mxu0 %v2049
      %2122 = vmatprep.subr.bf16.mxu0 0
      %2123 = vmatpush1.bf16.msra.mxu0 0
      %2124 = vmatprep.subr.bf16.mxu0 0
      %2125 = vmatpush1.bf16.msra.mxu0 0
      %2126 = vmatprep.subr.bf16.mxu0 0
      %2127 = vmatpush1.bf16.msra.mxu0 0
      %2128 = vmatprep.subr.bf16.mxu0 0
      %2129 = vmatpush1.bf16.msra.mxu0 0
      %2130 = vmatprep.subr.bf16.mxu0 0
      %2131 = vmatpush1.bf16.msra.mxu0 0
      %2132 = vmatprep.subr.bf16.mxu0 0
      %2133 = vmatpush1.bf16.msra.mxu0 0
      %2134 = vmatprep.subr.bf16.mxu0 0
      %2135 = vmatpush1.bf16.msra.mxu0 0
      %2136 = vmatprep.subr.bf16.mxu0 0
      %2137 = vmatpush1.bf16.msra.mxu0 0
      %2138 = vmatprep.subr.bf16.mxu0 0
      %2139 = vmatpush1.bf16.msra.mxu0 0
      %2140 = vmatprep.subr.bf16.mxu0 0
      %2141 = vmatpush1.bf16.msra.mxu0 0
      %2142 = vmatprep.subr.bf16.mxu0 0
      %2143 = vmatpush1.bf16.msra.mxu0 0
      %2144 = vmatprep.subr.bf16.mxu0 0
      %2145 = vmatpush1.bf16.msra.mxu0 0
      %2146 = vmatprep.mubr.bf16.mxu0 0
      %2147 = vmatmul.mubr.bf16.gmra.mrb[0].mxu0 %v2069
      %v2148 = vpop.f32.mrb[0].mxu0
      %v2149 = vadd.f32 0.0, %v2148
      %v2150 = vpop.f32.mrb[0].mxu0
      %v2151 = vadd.f32 0.0, %v2150
      %v2152 = vpop.f32.mrb[0].mxu0
      %v2153 = vadd.f32 0.0, %v2152
      %v2154 = vpop.f32.mrb[0].mxu0
      %v2155 = vadd.f32 0.0, %v2154
      %2156 = vdwg.mxu0
      %v2157 = vld [vmem:[%s582] sm:$0xf]
      %v2158 = vld [vmem:[%s582 + $0x4] sm:$0xf]
      %v2159 = vld [vmem:[%s582 + $0x8] sm:$0xf]
      %v2160 = vld [vmem:[%s582 + $0xc] sm:$0xf]
      %v2161 = vld [vmem:[%s582 + $0x10] sm:$0xf]
      %v2162 = vld [vmem:[%s582 + $0x14] sm:$0xf]
      %v2163 = vld [vmem:[%s582 + $0x18] sm:$0xf]
      %v2164 = vld [vmem:[%s582 + $0x1c] sm:$0xf]
      %v2165 = vld [vmem:[%s582 + $0x20] sm:$0xf]
      %v2166 = vld [vmem:[%s582 + $0x24] sm:$0xf]
      %v2167 = vld [vmem:[%s582 + $0x28] sm:$0xf]
      %v2168 = vld [vmem:[%s582 + $0x2c] sm:$0xf]
      %v2169 = vld [vmem:[%s582 + $0x30] sm:$0xf]
      %v2170 = vld [vmem:[%s582 + $0x34] sm:$0xf]
      %v2171 = vld [vmem:[%s582 + $0x38] sm:$0xf]
      %v2172 = vld [vmem:[%s582 + $0x3c] sm:$0xf]
      %v2173 = vld [vmem:[%s582 + $0x40] sm:$0xf]
      %v2174 = vld [vmem:[%s582 + $0x44] sm:$0xf]
      %v2175 = vld [vmem:[%s582 + $0x48] sm:$0xf]
      %v2176 = vld [vmem:[%s582 + $0x4c] sm:$0xf]
      %v2177 = vld [vmem:[%s582 + $0x50] sm:$0xf]
      %v2178 = vld [vmem:[%s582 + $0x54] sm:$0xf]
      %v2179 = vld [vmem:[%s582 + $0x58] sm:$0xf]
      %v2180 = vld [vmem:[%s582 + $0x5c] sm:$0xf]
      %v2181 = vld [vmem:[%s582 + $0x60] sm:$0xf]
      %v2182 = vld [vmem:[%s582 + $0x64] sm:$0xf]
      %v2183 = vld [vmem:[%s582 + $0x68] sm:$0xf]
      %v2184 = vld [vmem:[%s582 + $0x6c] sm:$0xf]
      %v2185 = vld [vmem:[%s582 + $0x70] sm:$0xf]
      %v2186 = vld [vmem:[%s582 + $0x74] sm:$0xf]
      %v2187 = vld [vmem:[%s582 + $0x78] sm:$0xf]
      %v2188 = vld [vmem:[%s582 + $0x7c] sm:$0xf]
      %v2189 = vld [vmem:[%s582 + $0x80] sm:$0xf]
      %v2190 = vld [vmem:[%s582 + $0x84] sm:$0xf]
      %v2191 = vld [vmem:[%s582 + $0x88] sm:$0xf]
      %v2192 = vld [vmem:[%s582 + $0x8c] sm:$0xf]
      %v2193 = vld [vmem:[%s582 + $0x90] sm:$0xf]
      %v2194 = vld [vmem:[%s582 + $0x94] sm:$0xf]
      %v2195 = vld [vmem:[%s582 + $0x98] sm:$0xf]
      %v2196 = vld [vmem:[%s582 + $0x9c] sm:$0xf]
      %v2197 = vld [vmem:[%s582 + $0xa0] sm:$0xf]
      %v2198 = vld [vmem:[%s582 + $0xa4] sm:$0xf]
      %v2199 = vld [vmem:[%s582 + $0xa8] sm:$0xf]
      %v2200 = vld [vmem:[%s582 + $0xac] sm:$0xf]
      %v2201 = vld [vmem:[%s582 + $0xb0] sm:$0xf]
      %v2202 = vld [vmem:[%s582 + $0xb4] sm:$0xf]
      %v2203 = vld [vmem:[%s582 + $0xb8] sm:$0xf]
      %v2204 = vld [vmem:[%s582 + $0xbc] sm:$0xf]
      %v2205 = vld [vmem:[%s582 + $0xc0] sm:$0xf]
      %v2206 = vld [vmem:[%s582 + $0xc4] sm:$0xf]
      %v2207 = vld [vmem:[%s582 + $0xc8] sm:$0xf]
      %v2208 = vld [vmem:[%s582 + $0xcc] sm:$0xf]
      %v2209 = vld [vmem:[%s582 + $0xd0] sm:$0xf]
      %v2210 = vld [vmem:[%s582 + $0xd4] sm:$0xf]
      %v2211 = vld [vmem:[%s582 + $0xd8] sm:$0xf]
      %v2212 = vld [vmem:[%s582 + $0xdc] sm:$0xf]
      %v2213 = vld [vmem:[%s582 + $0xe0] sm:$0xf]
      %v2214 = vld [vmem:[%s582 + $0xe4] sm:$0xf]
      %v2215 = vld [vmem:[%s582 + $0xe8] sm:$0xf]
      %v2216 = vld [vmem:[%s582 + $0xec] sm:$0xf]
      %v2217 = vld [vmem:[%s582 + $0xf0] sm:$0xf]
      %v2218 = vld [vmem:[%s582 + $0xf4] sm:$0xf]
      %v2219 = vld [vmem:[%s582 + $0xf8] sm:$0xf]
      %v2220 = vld [vmem:[%s582 + $0xfc] sm:$0xf]
      %v2221 = vld [vmem:[%s582 + $0x100] sm:$0xf]
      %v2222 = vld [vmem:[%s582 + $0x104] sm:$0xf]
      %v2223 = vld [vmem:[%s582 + $0x108] sm:$0xf]
      %v2224 = vld [vmem:[%s582 + $0x10c] sm:$0xf]
      %v2225 = vld [vmem:[%s582 + $0x110] sm:$0xf]
      %v2226 = vld [vmem:[%s582 + $0x114] sm:$0xf]
      %v2227 = vld [vmem:[%s582 + $0x118] sm:$0xf]
      %v2228 = vld [vmem:[%s582 + $0x11c] sm:$0xf]
      %v2229 = vld [vmem:[%s582 + $0x120] sm:$0xf]
      %v2230 = vld [vmem:[%s582 + $0x124] sm:$0xf]
      %v2231 = vld [vmem:[%s582 + $0x128] sm:$0xf]
      %v2232 = vld [vmem:[%s582 + $0x12c] sm:$0xf]
      %v2233 = vld [vmem:[%s582 + $0x130] sm:$0xf]
      %v2234 = vld [vmem:[%s582 + $0x134] sm:$0xf]
      %v2235 = vld [vmem:[%s582 + $0x138] sm:$0xf]
      %v2236 = vld [vmem:[%s582 + $0x13c] sm:$0xf]
      %v2237 = vld [vmem:[%s582 + $0x140] sm:$0xf]
      %v2238 = vld [vmem:[%s582 + $0x144] sm:$0xf]
      %v2239 = vld [vmem:[%s582 + $0x148] sm:$0xf]
      %v2240 = vld [vmem:[%s582 + $0x14c] sm:$0xf]
      %v2241 = vld [vmem:[%s582 + $0x150] sm:$0xf]
      %v2242 = vld [vmem:[%s582 + $0x154] sm:$0xf]
      %v2243 = vld [vmem:[%s582 + $0x158] sm:$0xf]
      %v2244 = vld [vmem:[%s582 + $0x15c] sm:$0xf]
      %v2245 = vld [vmem:[%s582 + $0x160] sm:$0xf]
      %v2246 = vld [vmem:[%s582 + $0x164] sm:$0xf]
      %v2247 = vld [vmem:[%s582 + $0x168] sm:$0xf]
      %v2248 = vld [vmem:[%s582 + $0x16c] sm:$0xf]
      %v2249 = vld [vmem:[%s582 + $0x170] sm:$0xf]
      %v2250 = vld [vmem:[%s582 + $0x174] sm:$0xf]
      %v2251 = vld [vmem:[%s582 + $0x178] sm:$0xf]
      %v2252 = vld [vmem:[%s582 + $0x17c] sm:$0xf]
      %v2253 = vld [vmem:[%s582 + $0x180] sm:$0xf]
      %v2254 = vld [vmem:[%s582 + $0x184] sm:$0xf]
      %v2255 = vld [vmem:[%s582 + $0x188] sm:$0xf]
      %v2256 = vld [vmem:[%s582 + $0x18c] sm:$0xf]
      %v2257 = vld [vmem:[%s582 + $0x190] sm:$0xf]
      %v2258 = vld [vmem:[%s582 + $0x194] sm:$0xf]
      %v2259 = vld [vmem:[%s582 + $0x198] sm:$0xf]
      %v2260 = vld [vmem:[%s582 + $0x19c] sm:$0xf]
      %v2261 = vld [vmem:[%s582 + $0x1a0] sm:$0xf]
      %v2262 = vld [vmem:[%s582 + $0x1a4] sm:$0xf]
      %v2263 = vld [vmem:[%s582 + $0x1a8] sm:$0xf]
      %v2264 = vld [vmem:[%s582 + $0x1ac] sm:$0xf]
      %v2265 = vld [vmem:[%s582 + $0x1b0] sm:$0xf]
      %v2266 = vld [vmem:[%s582 + $0x1b4] sm:$0xf]
      %v2267 = vld [vmem:[%s582 + $0x1b8] sm:$0xf]
      %v2268 = vld [vmem:[%s582 + $0x1bc] sm:$0xf]
      %v2269 = vld [vmem:[%s582 + $0x1c0] sm:$0xf]
      %v2270 = vld [vmem:[%s582 + $0x1c4] sm:$0xf]
      %v2271 = vld [vmem:[%s582 + $0x1c8] sm:$0xf]
      %v2272 = vld [vmem:[%s582 + $0x1cc] sm:$0xf]
      %v2273 = vld [vmem:[%s582 + $0x1d0] sm:$0xf]
      %v2274 = vld [vmem:[%s582 + $0x1d4] sm:$0xf]
      %v2275 = vld [vmem:[%s582 + $0x1d8] sm:$0xf]
      %v2276 = vld [vmem:[%s582 + $0x1dc] sm:$0xf]
      %v2277 = vld [vmem:[%s582 + $0x1e0] sm:$0xf]
      %v2278 = vld [vmem:[%s582 + $0x1e4] sm:$0xf]
      %v2279 = vld [vmem:[%s582 + $0x1e8] sm:$0xf]
      %v2280 = vld [vmem:[%s582 + $0x1ec] sm:$0xf]
      %v2281 = vld [vmem:[%s582 + $0x1f0] sm:$0xf]
      %v2282 = vld [vmem:[%s582 + $0x1f4] sm:$0xf]
      %v2283 = vld [vmem:[%s582 + $0x1f8] sm:$0xf]
      %v2284 = vld [vmem:[%s582 + $0x1fc] sm:$0xf]
      %v2285 = vld [vmem:[%s582 + $0x200] sm:$0xf]
      %v2286 = vld [vmem:[%s582 + $0x204] sm:$0xf]
      %v2287 = vld [vmem:[%s582 + $0x208] sm:$0xf]
      %v2288 = vld [vmem:[%s582 + $0x20c] sm:$0xf]
      %v2289 = vld [vmem:[%s582 + $0x210] sm:$0xf]
      %v2290 = vld [vmem:[%s582 + $0x214] sm:$0xf]
      %v2291 = vld [vmem:[%s582 + $0x218] sm:$0xf]
      %v2292 = vld [vmem:[%s582 + $0x21c] sm:$0xf]
      %v2293 = vld [vmem:[%s582 + $0x220] sm:$0xf]
      %v2294 = vld [vmem:[%s582 + $0x224] sm:$0xf]
      %v2295 = vld [vmem:[%s582 + $0x228] sm:$0xf]
      %v2296 = vld [vmem:[%s582 + $0x22c] sm:$0xf]
      %v2297 = vld [vmem:[%s582 + $0x230] sm:$0xf]
      %v2298 = vld [vmem:[%s582 + $0x234] sm:$0xf]
      %v2299 = vld [vmem:[%s582 + $0x238] sm:$0xf]
      %v2300 = vld [vmem:[%s582 + $0x23c] sm:$0xf]
      %v2301 = vld [vmem:[%s582 + $0x240] sm:$0xf]
      %v2302 = vld [vmem:[%s582 + $0x244] sm:$0xf]
      %v2303 = vld [vmem:[%s582 + $0x248] sm:$0xf]
      %v2304 = vld [vmem:[%s582 + $0x24c] sm:$0xf]
      %v2305 = vld [vmem:[%s582 + $0x250] sm:$0xf]
      %v2306 = vld [vmem:[%s582 + $0x254] sm:$0xf]
      %v2307 = vld [vmem:[%s582 + $0x258] sm:$0xf]
      %v2308 = vld [vmem:[%s582 + $0x25c] sm:$0xf]
      %v2309 = vld [vmem:[%s582 + $0x260] sm:$0xf]
      %v2310 = vld [vmem:[%s582 + $0x264] sm:$0xf]
      %v2311 = vld [vmem:[%s582 + $0x268] sm:$0xf]
      %v2312 = vld [vmem:[%s582 + $0x26c] sm:$0xf]
      %v2313 = vld [vmem:[%s582 + $0x270] sm:$0xf]
      %v2314 = vld [vmem:[%s582 + $0x274] sm:$0xf]
      %v2315 = vld [vmem:[%s582 + $0x278] sm:$0xf]
      %v2316 = vld [vmem:[%s582 + $0x27c] sm:$0xf]
      %v2317 = vld [vmem:[%s582 + $0x280] sm:$0xf]
      %v2318 = vld [vmem:[%s582 + $0x284] sm:$0xf]
      %v2319 = vld [vmem:[%s582 + $0x288] sm:$0xf]
      %v2320 = vld [vmem:[%s582 + $0x28c] sm:$0xf]
      %v2321 = vld [vmem:[%s582 + $0x290] sm:$0xf]
      %v2322 = vld [vmem:[%s582 + $0x294] sm:$0xf]
      %v2323 = vld [vmem:[%s582 + $0x298] sm:$0xf]
      %v2324 = vld [vmem:[%s582 + $0x29c] sm:$0xf]
      %v2325 = vld [vmem:[%s582 + $0x2a0] sm:$0xf]
      %v2326 = vld [vmem:[%s582 + $0x2a4] sm:$0xf]
      %v2327 = vld [vmem:[%s582 + $0x2a8] sm:$0xf]
      %v2328 = vld [vmem:[%s582 + $0x2ac] sm:$0xf]
      %v2329 = vld [vmem:[%s582 + $0x2b0] sm:$0xf]
      %v2330 = vld [vmem:[%s582 + $0x2b4] sm:$0xf]
      %v2331 = vld [vmem:[%s582 + $0x2b8] sm:$0xf]
      %v2332 = vld [vmem:[%s582 + $0x2bc] sm:$0xf]
      %v2333 = vld [vmem:[%s582 + $0x2c0] sm:$0xf]
      %v2334 = vld [vmem:[%s582 + $0x2c4] sm:$0xf]
      %v2335 = vld [vmem:[%s582 + $0x2c8] sm:$0xf]
      %v2336 = vld [vmem:[%s582 + $0x2cc] sm:$0xf]
      %v2337 = vld [vmem:[%s582 + $0x2d0] sm:$0xf]
      %v2338 = vld [vmem:[%s582 + $0x2d4] sm:$0xf]
      %v2339 = vld [vmem:[%s582 + $0x2d8] sm:$0xf]
      %v2340 = vld [vmem:[%s582 + $0x2dc] sm:$0xf]
      %v2341 = vld [vmem:[%s582 + $0x2e0] sm:$0xf]
      %v2342 = vld [vmem:[%s582 + $0x2e4] sm:$0xf]
      %v2343 = vld [vmem:[%s582 + $0x2e8] sm:$0xf]
      %v2344 = vld [vmem:[%s582 + $0x2ec] sm:$0xf]
      %v2345 = vld [vmem:[%s582 + $0x2f0] sm:$0xf]
      %v2346 = vld [vmem:[%s582 + $0x2f4] sm:$0xf]
      %v2347 = vld [vmem:[%s582 + $0x2f8] sm:$0xf]
      %v2348 = vld [vmem:[%s582 + $0x2fc] sm:$0xf]
      %v2349 = vld [vmem:[%s582 + $0x300] sm:$0xf]
      %v2350 = vld [vmem:[%s582 + $0x304] sm:$0xf]
      %v2351 = vld [vmem:[%s582 + $0x308] sm:$0xf]
      %v2352 = vld [vmem:[%s582 + $0x30c] sm:$0xf]
      %v2353 = vld [vmem:[%s582 + $0x310] sm:$0xf]
      %v2354 = vld [vmem:[%s582 + $0x314] sm:$0xf]
      %v2355 = vld [vmem:[%s582 + $0x318] sm:$0xf]
      %v2356 = vld [vmem:[%s582 + $0x31c] sm:$0xf]
      %v2357 = vld [vmem:[%s582 + $0x320] sm:$0xf]
      %v2358 = vld [vmem:[%s582 + $0x324] sm:$0xf]
      %v2359 = vld [vmem:[%s582 + $0x328] sm:$0xf]
      %v2360 = vld [vmem:[%s582 + $0x32c] sm:$0xf]
      %v2361 = vld [vmem:[%s582 + $0x330] sm:$0xf]
      %v2362 = vld [vmem:[%s582 + $0x334] sm:$0xf]
      %v2363 = vld [vmem:[%s582 + $0x338] sm:$0xf]
      %v2364 = vld [vmem:[%s582 + $0x33c] sm:$0xf]
      %v2365 = vld [vmem:[%s582 + $0x340] sm:$0xf]
      %v2366 = vld [vmem:[%s582 + $0x344] sm:$0xf]
      %v2367 = vld [vmem:[%s582 + $0x348] sm:$0xf]
      %v2368 = vld [vmem:[%s582 + $0x34c] sm:$0xf]
      %v2369 = vld [vmem:[%s582 + $0x350] sm:$0xf]
      %v2370 = vld [vmem:[%s582 + $0x354] sm:$0xf]
      %v2371 = vld [vmem:[%s582 + $0x358] sm:$0xf]
      %v2372 = vld [vmem:[%s582 + $0x35c] sm:$0xf]
      %v2373 = vld [vmem:[%s582 + $0x360] sm:$0xf]
      %v2374 = vld [vmem:[%s582 + $0x364] sm:$0xf]
      %v2375 = vld [vmem:[%s582 + $0x368] sm:$0xf]
      %v2376 = vld [vmem:[%s582 + $0x36c] sm:$0xf]
      %v2377 = vld [vmem:[%s582 + $0x370] sm:$0xf]
      %v2378 = vld [vmem:[%s582 + $0x374] sm:$0xf]
      %v2379 = vld [vmem:[%s582 + $0x378] sm:$0xf]
      %v2380 = vld [vmem:[%s582 + $0x37c] sm:$0xf]
      %v2381 = vld [vmem:[%s582 + $0x380] sm:$0xf]
      %v2382 = vld [vmem:[%s582 + $0x384] sm:$0xf]
      %v2383 = vld [vmem:[%s582 + $0x388] sm:$0xf]
      %v2384 = vld [vmem:[%s582 + $0x38c] sm:$0xf]
      %v2385 = vld [vmem:[%s582 + $0x390] sm:$0xf]
      %v2386 = vld [vmem:[%s582 + $0x394] sm:$0xf]
      %v2387 = vld [vmem:[%s582 + $0x398] sm:$0xf]
      %v2388 = vld [vmem:[%s582 + $0x39c] sm:$0xf]
      %v2389 = vld [vmem:[%s582 + $0x3a0] sm:$0xf]
      %v2390 = vld [vmem:[%s582 + $0x3a4] sm:$0xf]
      %v2391 = vld [vmem:[%s582 + $0x3a8] sm:$0xf]
      %v2392 = vld [vmem:[%s582 + $0x3ac] sm:$0xf]
      %v2393 = vld [vmem:[%s582 + $0x3b0] sm:$0xf]
      %v2394 = vld [vmem:[%s582 + $0x3b4] sm:$0xf]
      %v2395 = vld [vmem:[%s582 + $0x3b8] sm:$0xf]
      %v2396 = vld [vmem:[%s582 + $0x3bc] sm:$0xf]
      %v2397 = vld [vmem:[%s582 + $0x3c0] sm:$0xf]
      %v2398 = vld [vmem:[%s582 + $0x3c4] sm:$0xf]
      %v2399 = vld [vmem:[%s582 + $0x3c8] sm:$0xf]
      %v2400 = vld [vmem:[%s582 + $0x3cc] sm:$0xf]
      %v2401 = vld [vmem:[%s582 + $0x3d0] sm:$0xf]
      %v2402 = vld [vmem:[%s582 + $0x3d4] sm:$0xf]
      %v2403 = vld [vmem:[%s582 + $0x3d8] sm:$0xf]
      %v2404 = vld [vmem:[%s582 + $0x3dc] sm:$0xf]
      %v2405 = vld [vmem:[%s582 + $0x3e0] sm:$0xf]
      %v2406 = vld [vmem:[%s582 + $0x3e4] sm:$0xf]
      %v2407 = vld [vmem:[%s582 + $0x3e8] sm:$0xf]
      %v2408 = vld [vmem:[%s582 + $0x3ec] sm:$0xf]
      %v2409 = vld [vmem:[%s582 + $0x3f0] sm:$0xf]
      %v2410 = vld [vmem:[%s582 + $0x3f4] sm:$0xf]
      %v2411 = vld [vmem:[%s582 + $0x3f8] sm:$0xf]
      %v2412 = vld [vmem:[%s582 + $0x3fc] sm:$0xf]
      %v2413 = vld [vmem:[%s582 + $0x400] sm:$0xf]
      %v2414 = vld [vmem:[%s582 + $0x404] sm:$0xf]
      %v2415 = vld [vmem:[%s582 + $0x408] sm:$0xf]
      %v2416 = vld [vmem:[%s582 + $0x40c] sm:$0xf]
      %v2417 = vld [vmem:[%s582 + $0x410] sm:$0xf]
      %v2418 = vld [vmem:[%s582 + $0x414] sm:$0xf]
      %v2419 = vld [vmem:[%s582 + $0x418] sm:$0xf]
      %v2420 = vld [vmem:[%s582 + $0x41c] sm:$0xf]
      %v2421 = vld [vmem:[%s582 + $0x420] sm:$0xf]
      %v2422 = vld [vmem:[%s582 + $0x424] sm:$0xf]
      %v2423 = vld [vmem:[%s582 + $0x428] sm:$0xf]
      %v2424 = vld [vmem:[%s582 + $0x42c] sm:$0xf]
      %v2425 = vld [vmem:[%s582 + $0x430] sm:$0xf]
      %v2426 = vld [vmem:[%s582 + $0x434] sm:$0xf]
      %v2427 = vld [vmem:[%s582 + $0x438] sm:$0xf]
      %v2428 = vld [vmem:[%s582 + $0x43c] sm:$0xf]
      %v2429 = vld [vmem:[%s582 + $0x440] sm:$0xf]
      %v2430 = vld [vmem:[%s582 + $0x444] sm:$0xf]
      %v2431 = vld [vmem:[%s582 + $0x448] sm:$0xf]
      %v2432 = vld [vmem:[%s582 + $0x44c] sm:$0xf]
      %v2433 = vld [vmem:[%s582 + $0x450] sm:$0xf]
      %v2434 = vld [vmem:[%s582 + $0x454] sm:$0xf]
      %v2435 = vld [vmem:[%s582 + $0x458] sm:$0xf]
      %v2436 = vld [vmem:[%s582 + $0x45c] sm:$0xf]
      %v2437 = vld [vmem:[%s582 + $0x460] sm:$0xf]
      %v2438 = vld [vmem:[%s582 + $0x464] sm:$0xf]
      %v2439 = vld [vmem:[%s582 + $0x468] sm:$0xf]
      %v2440 = vld [vmem:[%s582 + $0x46c] sm:$0xf]
      %v2441 = vld [vmem:[%s582 + $0x470] sm:$0xf]
      %v2442 = vld [vmem:[%s582 + $0x474] sm:$0xf]
      %v2443 = vld [vmem:[%s582 + $0x478] sm:$0xf]
      %v2444 = vld [vmem:[%s582 + $0x47c] sm:$0xf]
      %v2445 = vld [vmem:[%s582 + $0x480] sm:$0xf]
      %v2446 = vld [vmem:[%s582 + $0x484] sm:$0xf]
      %v2447 = vld [vmem:[%s582 + $0x488] sm:$0xf]
      %v2448 = vld [vmem:[%s582 + $0x48c] sm:$0xf]
      %v2449 = vld [vmem:[%s582 + $0x490] sm:$0xf]
      %v2450 = vld [vmem:[%s582 + $0x494] sm:$0xf]
      %v2451 = vld [vmem:[%s582 + $0x498] sm:$0xf]
      %v2452 = vld [vmem:[%s582 + $0x49c] sm:$0xf]
      %v2453 = vld [vmem:[%s582 + $0x4a0] sm:$0xf]
      %v2454 = vld [vmem:[%s582 + $0x4a4] sm:$0xf]
      %v2455 = vld [vmem:[%s582 + $0x4a8] sm:$0xf]
      %v2456 = vld [vmem:[%s582 + $0x4ac] sm:$0xf]
      %v2457 = vld [vmem:[%s582 + $0x4b0] sm:$0xf]
      %v2458 = vld [vmem:[%s582 + $0x4b4] sm:$0xf]
      %v2459 = vld [vmem:[%s582 + $0x4b8] sm:$0xf]
      %v2460 = vld [vmem:[%s582 + $0x4bc] sm:$0xf]
      %v2461 = vld [vmem:[%s582 + $0x4c0] sm:$0xf]
      %v2462 = vld [vmem:[%s582 + $0x4c4] sm:$0xf]
      %v2463 = vld [vmem:[%s582 + $0x4c8] sm:$0xf]
      %v2464 = vld [vmem:[%s582 + $0x4cc] sm:$0xf]
      %v2465 = vld [vmem:[%s582 + $0x4d0] sm:$0xf]
      %v2466 = vld [vmem:[%s582 + $0x4d4] sm:$0xf]
      %v2467 = vld [vmem:[%s582 + $0x4d8] sm:$0xf]
      %v2468 = vld [vmem:[%s582 + $0x4dc] sm:$0xf]
      %v2469 = vld [vmem:[%s582 + $0x4e0] sm:$0xf]
      %v2470 = vld [vmem:[%s582 + $0x4e4] sm:$0xf]
      %v2471 = vld [vmem:[%s582 + $0x4e8] sm:$0xf]
      %v2472 = vld [vmem:[%s582 + $0x4ec] sm:$0xf]
      %v2473 = vld [vmem:[%s582 + $0x4f0] sm:$0xf]
      %v2474 = vld [vmem:[%s582 + $0x4f4] sm:$0xf]
      %v2475 = vld [vmem:[%s582 + $0x4f8] sm:$0xf]
      %v2476 = vld [vmem:[%s582 + $0x4fc] sm:$0xf]
      %v2477 = vld [vmem:[%s582 + $0x500] sm:$0xf]
      %v2478 = vld [vmem:[%s582 + $0x504] sm:$0xf]
      %v2479 = vld [vmem:[%s582 + $0x508] sm:$0xf]
      %v2480 = vld [vmem:[%s582 + $0x50c] sm:$0xf]
      %v2481 = vld [vmem:[%s582 + $0x510] sm:$0xf]
      %v2482 = vld [vmem:[%s582 + $0x514] sm:$0xf]
      %v2483 = vld [vmem:[%s582 + $0x518] sm:$0xf]
      %v2484 = vld [vmem:[%s582 + $0x51c] sm:$0xf]
      %v2485 = vld [vmem:[%s582 + $0x520] sm:$0xf]
      %v2486 = vld [vmem:[%s582 + $0x524] sm:$0xf]
      %v2487 = vld [vmem:[%s582 + $0x528] sm:$0xf]
      %v2488 = vld [vmem:[%s582 + $0x52c] sm:$0xf]
      %v2489 = vld [vmem:[%s582 + $0x530] sm:$0xf]
      %v2490 = vld [vmem:[%s582 + $0x534] sm:$0xf]
      %v2491 = vld [vmem:[%s582 + $0x538] sm:$0xf]
      %v2492 = vld [vmem:[%s582 + $0x53c] sm:$0xf]
      %v2493 = vld [vmem:[%s582 + $0x540] sm:$0xf]
      %v2494 = vld [vmem:[%s582 + $0x544] sm:$0xf]
      %v2495 = vld [vmem:[%s582 + $0x548] sm:$0xf]
      %v2496 = vld [vmem:[%s582 + $0x54c] sm:$0xf]
      %v2497 = vld [vmem:[%s582 + $0x550] sm:$0xf]
      %v2498 = vld [vmem:[%s582 + $0x554] sm:$0xf]
      %v2499 = vld [vmem:[%s582 + $0x558] sm:$0xf]
      %v2500 = vld [vmem:[%s582 + $0x55c] sm:$0xf]
      %v2501 = vld [vmem:[%s582 + $0x560] sm:$0xf]
      %v2502 = vld [vmem:[%s582 + $0x564] sm:$0xf]
      %v2503 = vld [vmem:[%s582 + $0x568] sm:$0xf]
      %v2504 = vld [vmem:[%s582 + $0x56c] sm:$0xf]
      %v2505 = vld [vmem:[%s582 + $0x570] sm:$0xf]
      %v2506 = vld [vmem:[%s582 + $0x574] sm:$0xf]
      %v2507 = vld [vmem:[%s582 + $0x578] sm:$0xf]
      %v2508 = vld [vmem:[%s582 + $0x57c] sm:$0xf]
      %v2509 = vld [vmem:[%s582 + $0x580] sm:$0xf]
      %v2510 = vld [vmem:[%s582 + $0x584] sm:$0xf]
      %v2511 = vld [vmem:[%s582 + $0x588] sm:$0xf]
      %v2512 = vld [vmem:[%s582 + $0x58c] sm:$0xf]
      %v2513 = vld [vmem:[%s582 + $0x590] sm:$0xf]
      %v2514 = vld [vmem:[%s582 + $0x594] sm:$0xf]
      %v2515 = vld [vmem:[%s582 + $0x598] sm:$0xf]
      %v2516 = vld [vmem:[%s582 + $0x59c] sm:$0xf]
      %v2517 = vld [vmem:[%s582 + $0x5a0] sm:$0xf]
      %v2518 = vld [vmem:[%s582 + $0x5a4] sm:$0xf]
      %v2519 = vld [vmem:[%s582 + $0x5a8] sm:$0xf]
      %v2520 = vld [vmem:[%s582 + $0x5ac] sm:$0xf]
      %v2521 = vld [vmem:[%s582 + $0x5b0] sm:$0xf]
      %v2522 = vld [vmem:[%s582 + $0x5b4] sm:$0xf]
      %v2523 = vld [vmem:[%s582 + $0x5b8] sm:$0xf]
      %v2524 = vld [vmem:[%s582 + $0x5bc] sm:$0xf]
      %v2525 = vld [vmem:[%s582 + $0x5c0] sm:$0xf]
      %v2526 = vld [vmem:[%s582 + $0x5c4] sm:$0xf]
      %v2527 = vld [vmem:[%s582 + $0x5c8] sm:$0xf]
      %v2528 = vld [vmem:[%s582 + $0x5cc] sm:$0xf]
      %v2529 = vld [vmem:[%s582 + $0x5d0] sm:$0xf]
      %v2530 = vld [vmem:[%s582 + $0x5d4] sm:$0xf]
      %v2531 = vld [vmem:[%s582 + $0x5d8] sm:$0xf]
      %v2532 = vld [vmem:[%s582 + $0x5dc] sm:$0xf]
      %v2533 = vld [vmem:[%s582 + $0x5e0] sm:$0xf]
      %v2534 = vld [vmem:[%s582 + $0x5e4] sm:$0xf]
      %v2535 = vld [vmem:[%s582 + $0x5e8] sm:$0xf]
      %v2536 = vld [vmem:[%s582 + $0x5ec] sm:$0xf]
      %v2537 = vld [vmem:[%s582 + $0x5f0] sm:$0xf]
      %v2538 = vld [vmem:[%s582 + $0x5f4] sm:$0xf]
      %v2539 = vld [vmem:[%s582 + $0x5f8] sm:$0xf]
      %v2540 = vld [vmem:[%s582 + $0x5fc] sm:$0xf]
      %v2541 = vld [vmem:[%s582 + $0x600] sm:$0xf]
      %v2542 = vld [vmem:[%s582 + $0x604] sm:$0xf]
      %v2543 = vld [vmem:[%s582 + $0x608] sm:$0xf]
      %v2544 = vld [vmem:[%s582 + $0x60c] sm:$0xf]
      %v2545 = vld [vmem:[%s582 + $0x610] sm:$0xf]
      %v2546 = vld [vmem:[%s582 + $0x614] sm:$0xf]
      %v2547 = vld [vmem:[%s582 + $0x618] sm:$0xf]
      %v2548 = vld [vmem:[%s582 + $0x61c] sm:$0xf]
      %v2549 = vld [vmem:[%s582 + $0x620] sm:$0xf]
      %v2550 = vld [vmem:[%s582 + $0x624] sm:$0xf]
      %v2551 = vld [vmem:[%s582 + $0x628] sm:$0xf]
      %v2552 = vld [vmem:[%s582 + $0x62c] sm:$0xf]
      %v2553 = vld [vmem:[%s582 + $0x630] sm:$0xf]
      %v2554 = vld [vmem:[%s582 + $0x634] sm:$0xf]
      %v2555 = vld [vmem:[%s582 + $0x638] sm:$0xf]
      %v2556 = vld [vmem:[%s582 + $0x63c] sm:$0xf]
      %v2557 = vld [vmem:[%s582 + $0x640] sm:$0xf]
      %v2558 = vld [vmem:[%s582 + $0x644] sm:$0xf]
      %v2559 = vld [vmem:[%s582 + $0x648] sm:$0xf]
      %v2560 = vld [vmem:[%s582 + $0x64c] sm:$0xf]
      %v2561 = vld [vmem:[%s582 + $0x650] sm:$0xf]
      %v2562 = vld [vmem:[%s582 + $0x654] sm:$0xf]
      %v2563 = vld [vmem:[%s582 + $0x658] sm:$0xf]
      %v2564 = vld [vmem:[%s582 + $0x65c] sm:$0xf]
      %v2565 = vld [vmem:[%s582 + $0x660] sm:$0xf]
      %v2566 = vld [vmem:[%s582 + $0x664] sm:$0xf]
      %v2567 = vld [vmem:[%s582 + $0x668] sm:$0xf]
      %v2568 = vld [vmem:[%s582 + $0x66c] sm:$0xf]
      %v2569 = vld [vmem:[%s582 + $0x670] sm:$0xf]
      %v2570 = vld [vmem:[%s582 + $0x674] sm:$0xf]
      %v2571 = vld [vmem:[%s582 + $0x678] sm:$0xf]
      %v2572 = vld [vmem:[%s582 + $0x67c] sm:$0xf]
      %v2573 = vld [vmem:[%s582 + $0x680] sm:$0xf]
      %v2574 = vld [vmem:[%s582 + $0x684] sm:$0xf]
      %v2575 = vld [vmem:[%s582 + $0x688] sm:$0xf]
      %v2576 = vld [vmem:[%s582 + $0x68c] sm:$0xf]
      %v2577 = vld [vmem:[%s582 + $0x690] sm:$0xf]
      %v2578 = vld [vmem:[%s582 + $0x694] sm:$0xf]
      %v2579 = vld [vmem:[%s582 + $0x698] sm:$0xf]
      %v2580 = vld [vmem:[%s582 + $0x69c] sm:$0xf]
      %v2581 = vld [vmem:[%s582 + $0x6a0] sm:$0xf]
      %v2582 = vld [vmem:[%s582 + $0x6a4] sm:$0xf]
      %v2583 = vld [vmem:[%s582 + $0x6a8] sm:$0xf]
      %v2584 = vld [vmem:[%s582 + $0x6ac] sm:$0xf]
      %v2585 = vld [vmem:[%s582 + $0x6b0] sm:$0xf]
      %v2586 = vld [vmem:[%s582 + $0x6b4] sm:$0xf]
      %v2587 = vld [vmem:[%s582 + $0x6b8] sm:$0xf]
      %v2588 = vld [vmem:[%s582 + $0x6bc] sm:$0xf]
      %v2589 = vld [vmem:[%s582 + $0x6c0] sm:$0xf]
      %v2590 = vld [vmem:[%s582 + $0x6c4] sm:$0xf]
      %v2591 = vld [vmem:[%s582 + $0x6c8] sm:$0xf]
      %v2592 = vld [vmem:[%s582 + $0x6cc] sm:$0xf]
      %v2593 = vld [vmem:[%s582 + $0x6d0] sm:$0xf]
      %v2594 = vld [vmem:[%s582 + $0x6d4] sm:$0xf]
      %v2595 = vld [vmem:[%s582 + $0x6d8] sm:$0xf]
      %v2596 = vld [vmem:[%s582 + $0x6dc] sm:$0xf]
      %v2597 = vld [vmem:[%s582 + $0x6e0] sm:$0xf]
      %v2598 = vld [vmem:[%s582 + $0x6e4] sm:$0xf]
      %v2599 = vld [vmem:[%s582 + $0x6e8] sm:$0xf]
      %v2600 = vld [vmem:[%s582 + $0x6ec] sm:$0xf]
      %v2601 = vld [vmem:[%s582 + $0x6f0] sm:$0xf]
      %v2602 = vld [vmem:[%s582 + $0x6f4] sm:$0xf]
      %v2603 = vld [vmem:[%s582 + $0x6f8] sm:$0xf]
      %v2604 = vld [vmem:[%s582 + $0x6fc] sm:$0xf]
      %v2605 = vld [vmem:[%s582 + $0x700] sm:$0xf]
      %v2606 = vld [vmem:[%s582 + $0x704] sm:$0xf]
      %v2607 = vld [vmem:[%s582 + $0x708] sm:$0xf]
      %v2608 = vld [vmem:[%s582 + $0x70c] sm:$0xf]
      %v2609 = vld [vmem:[%s582 + $0x710] sm:$0xf]
      %v2610 = vld [vmem:[%s582 + $0x714] sm:$0xf]
      %v2611 = vld [vmem:[%s582 + $0x718] sm:$0xf]
      %v2612 = vld [vmem:[%s582 + $0x71c] sm:$0xf]
      %v2613 = vld [vmem:[%s582 + $0x720] sm:$0xf]
      %v2614 = vld [vmem:[%s582 + $0x724] sm:$0xf]
      %v2615 = vld [vmem:[%s582 + $0x728] sm:$0xf]
      %v2616 = vld [vmem:[%s582 + $0x72c] sm:$0xf]
      %v2617 = vld [vmem:[%s582 + $0x730] sm:$0xf]
      %v2618 = vld [vmem:[%s582 + $0x734] sm:$0xf]
      %v2619 = vld [vmem:[%s582 + $0x738] sm:$0xf]
      %v2620 = vld [vmem:[%s582 + $0x73c] sm:$0xf]
      %v2621 = vld [vmem:[%s582 + $0x740] sm:$0xf]
      %v2622 = vld [vmem:[%s582 + $0x744] sm:$0xf]
      %v2623 = vld [vmem:[%s582 + $0x748] sm:$0xf]
      %v2624 = vld [vmem:[%s582 + $0x74c] sm:$0xf]
      %v2625 = vld [vmem:[%s582 + $0x750] sm:$0xf]
      %v2626 = vld [vmem:[%s582 + $0x754] sm:$0xf]
      %v2627 = vld [vmem:[%s582 + $0x758] sm:$0xf]
      %v2628 = vld [vmem:[%s582 + $0x75c] sm:$0xf]
      %v2629 = vld [vmem:[%s582 + $0x760] sm:$0xf]
      %v2630 = vld [vmem:[%s582 + $0x764] sm:$0xf]
      %v2631 = vld [vmem:[%s582 + $0x768] sm:$0xf]
      %v2632 = vld [vmem:[%s582 + $0x76c] sm:$0xf]
      %v2633 = vld [vmem:[%s582 + $0x770] sm:$0xf]
      %v2634 = vld [vmem:[%s582 + $0x774] sm:$0xf]
      %v2635 = vld [vmem:[%s582 + $0x778] sm:$0xf]
      %v2636 = vld [vmem:[%s582 + $0x77c] sm:$0xf]
      %v2637 = vld [vmem:[%s582 + $0x780] sm:$0xf]
      %v2638 = vld [vmem:[%s582 + $0x784] sm:$0xf]
      %v2639 = vld [vmem:[%s582 + $0x788] sm:$0xf]
      %v2640 = vld [vmem:[%s582 + $0x78c] sm:$0xf]
      %v2641 = vld [vmem:[%s582 + $0x790] sm:$0xf]
      %v2642 = vld [vmem:[%s582 + $0x794] sm:$0xf]
      %v2643 = vld [vmem:[%s582 + $0x798] sm:$0xf]
      %v2644 = vld [vmem:[%s582 + $0x79c] sm:$0xf]
      %v2645 = vld [vmem:[%s582 + $0x7a0] sm:$0xf]
      %v2646 = vld [vmem:[%s582 + $0x7a4] sm:$0xf]
      %v2647 = vld [vmem:[%s582 + $0x7a8] sm:$0xf]
      %v2648 = vld [vmem:[%s582 + $0x7ac] sm:$0xf]
      %v2649 = vld [vmem:[%s582 + $0x7b0] sm:$0xf]
      %v2650 = vld [vmem:[%s582 + $0x7b4] sm:$0xf]
      %v2651 = vld [vmem:[%s582 + $0x7b8] sm:$0xf]
      %v2652 = vld [vmem:[%s582 + $0x7bc] sm:$0xf]
      %v2653 = vld [vmem:[%s582 + $0x7c0] sm:$0xf]
      %v2654 = vld [vmem:[%s582 + $0x7c4] sm:$0xf]
      %v2655 = vld [vmem:[%s582 + $0x7c8] sm:$0xf]
      %v2656 = vld [vmem:[%s582 + $0x7cc] sm:$0xf]
      %v2657 = vld [vmem:[%s582 + $0x7d0] sm:$0xf]
      %v2658 = vld [vmem:[%s582 + $0x7d4] sm:$0xf]
      %v2659 = vld [vmem:[%s582 + $0x7d8] sm:$0xf]
      %v2660 = vld [vmem:[%s582 + $0x7dc] sm:$0xf]
      %v2661 = vld [vmem:[%s582 + $0x7e0] sm:$0xf]
      %v2662 = vld [vmem:[%s582 + $0x7e4] sm:$0xf]
      %v2663 = vld [vmem:[%s582 + $0x7e8] sm:$0xf]
      %v2664 = vld [vmem:[%s582 + $0x7ec] sm:$0xf]
      %v2665 = vld [vmem:[%s582 + $0x7f0] sm:$0xf]
      %v2666 = vld [vmem:[%s582 + $0x7f4] sm:$0xf]
      %v2667 = vld [vmem:[%s582 + $0x7f8] sm:$0xf]
      %v2668 = vld [vmem:[%s582 + $0x7fc] sm:$0xf]
      %v2669 = vrcp.pop 2.0
      %v2670 = vmul.f32 %v717, %v2669
      %v2671 = vmul.f32 %v718, %v2669
      %v2672 = vmul.f32 %v731, %v2669
      %v2673 = vmul.f32 %v732, %v2669
      %v2674 = vfloor.f32 %v2670
      %v2675 = vfloor.f32 %v2671
      %v2676 = vfloor.f32 %v2672
      %v2677 = vfloor.f32 %v2673
      %v2678 = vceil.f32 %v2670
      %v2679 = vceil.f32 %v2671
      %v2680 = vmin.f32 %v2678, 63.0
      %v2681 = vmin.f32 %v2679, 63.0
      %v2682 = vceil.f32 %v2672
      %v2683 = vceil.f32 %v2673
      %v2684 = vmin.f32 %v2682, 63.0
      %v2685 = vmin.f32 %v2683, 63.0
      %v2686 = vsub.f32 %v2680, %v2674
      %v2687 = vsub.f32 %v2681, %v2675
      %v2688 = vsub.f32 %v2684, %v2676
      %v2689 = vsub.f32 %v2685, %v2677
      %2692 = vrot.lane.b32.xlu0 %v2688, 127
      %v2693 = vpop.permute.xlu0 %2692
      %2694 = vrot.lane.b32.xlu0 %v2689, 127
      %v2695 = vpop.permute.xlu0 %2694
      %v2698 = vmul.f32 %v2686, %v2693
      %v2699 = vmul.f32 %v2687, %v2695
      %v2700 = vcvt.f32.s32.to.zero.pseudo %v2676
      %v2701 = vcvt.f32.s32.to.zero.pseudo %v2677
      %v2702 = vmul.u32 %v2700, 64
      %v2703 = vmul.u32 %v2701, 64
      %v2704 = vcvt.f32.s32.to.zero.pseudo %v2674
      %v2705 = vcvt.f32.s32.to.zero.pseudo %v2675
      %2706 = vrot.lane.b32.xlu0 %v2704, 1
      %v2707 = vpop.permute.xlu0 %2706
      %2708 = vrot.lane.b32.xlu0 %v2705, 1
      %v2709 = vpop.permute.xlu0 %2708
      %v2710 = vadd.s32 %v2702, %v2707
      %v2711 = vadd.s32 %v2703, %v2709
      %v2712 = vadd.s32 %v991, 1024
      %v2713 = vadd.s32 %v991, 1152
      %v2714 = vadd.s32 %v991, 1280
      %v2715 = vadd.s32 %v991, 1408
      %v2716 = vadd.s32 %v991, 1536
      %v2717 = vadd.s32 %v991, 1664
      %v2718 = vadd.s32 %v991, 1792
      %v2719 = vadd.s32 %v991, 1920
      %v2720 = vadd.s32 %v991, 2048
      %v2721 = vadd.s32 %v991, 2176
      %v2722 = vadd.s32 %v991, 2304
      %v2723 = vadd.s32 %v991, 2432
      %v2724 = vadd.s32 %v991, 2560
      %v2725 = vadd.s32 %v991, 2688
      %v2726 = vadd.s32 %v991, 2816
      %v2727 = vadd.s32 %v991, 2944
      %v2728 = vadd.s32 %v991, 3072
      %v2729 = vadd.s32 %v991, 3200
      %v2730 = vadd.s32 %v991, 3328
      %v2731 = vadd.s32 %v991, 3456
      %v2732 = vadd.s32 %v991, 3584
      %v2733 = vadd.s32 %v991, 3712
      %v2734 = vadd.s32 %v991, 3840
      %v2735 = vadd.s32 %v991, 3968
      %2736 = vset.pattern.permute.xlu0 1
      %2737 = vperm.xlu0 %2736, %v2710
      %v2738 = vpop.permute.xlu0 %2737
      %2739 = vset.pattern.permute.xlu0 1
      %2740 = vperm.xlu0 %2739, %v2711
      %v2741 = vpop.permute.xlu0 %2740
      %vm2742 = vcmp.eq.s32.totalorder %v991, %v2738
      %vm2743 = vcmp.eq.s32.totalorder %v992, %v2738
      %vm2744 = vcmp.eq.s32.totalorder %v993, %v2738
      %vm2745 = vcmp.eq.s32.totalorder %v994, %v2738
      %vm2746 = vcmp.eq.s32.totalorder %v995, %v2738
      %vm2747 = vcmp.eq.s32.totalorder %v996, %v2738
      %vm2748 = vcmp.eq.s32.totalorder %v997, %v2738
      %vm2749 = vcmp.eq.s32.totalorder %v998, %v2738
      %vm2750 = vcmp.eq.s32.totalorder %v2712, %v2738
      %vm2751 = vcmp.eq.s32.totalorder %v2713, %v2738
      %vm2752 = vcmp.eq.s32.totalorder %v2714, %v2738
      %vm2753 = vcmp.eq.s32.totalorder %v2715, %v2738
      %vm2754 = vcmp.eq.s32.totalorder %v2716, %v2738
      %vm2755 = vcmp.eq.s32.totalorder %v2717, %v2738
      %vm2756 = vcmp.eq.s32.totalorder %v2718, %v2738
      %vm2757 = vcmp.eq.s32.totalorder %v2719, %v2738
      %vm2758 = vcmp.eq.s32.totalorder %v2720, %v2738
      %vm2759 = vcmp.eq.s32.totalorder %v2721, %v2738
      %vm2760 = vcmp.eq.s32.totalorder %v2722, %v2738
      %vm2761 = vcmp.eq.s32.totalorder %v2723, %v2738
      %vm2762 = vcmp.eq.s32.totalorder %v2724, %v2738
      %vm2763 = vcmp.eq.s32.totalorder %v2725, %v2738
      %vm2764 = vcmp.eq.s32.totalorder %v2726, %v2738
      %vm2765 = vcmp.eq.s32.totalorder %v2727, %v2738
      %vm2766 = vcmp.eq.s32.totalorder %v2728, %v2738
      %vm2767 = vcmp.eq.s32.totalorder %v2729, %v2738
      %vm2768 = vcmp.eq.s32.totalorder %v2730, %v2738
      %vm2769 = vcmp.eq.s32.totalorder %v2731, %v2738
      %vm2770 = vcmp.eq.s32.totalorder %v2732, %v2738
      %vm2771 = vcmp.eq.s32.totalorder %v2733, %v2738
      %vm2772 = vcmp.eq.s32.totalorder %v2734, %v2738
      %vm2773 = vcmp.eq.s32.totalorder %v2735, %v2738
      %vm2774 = vcmp.eq.s32.totalorder %v991, %v2741
      %vm2775 = vcmp.eq.s32.totalorder %v992, %v2741
      %vm2776 = vcmp.eq.s32.totalorder %v993, %v2741
      %vm2777 = vcmp.eq.s32.totalorder %v994, %v2741
      %vm2778 = vcmp.eq.s32.totalorder %v995, %v2741
      %vm2779 = vcmp.eq.s32.totalorder %v996, %v2741
      %vm2780 = vcmp.eq.s32.totalorder %v997, %v2741
      %vm2781 = vcmp.eq.s32.totalorder %v998, %v2741
      %vm2782 = vcmp.eq.s32.totalorder %v2712, %v2741
      %vm2783 = vcmp.eq.s32.totalorder %v2713, %v2741
      %vm2784 = vcmp.eq.s32.totalorder %v2714, %v2741
      %vm2785 = vcmp.eq.s32.totalorder %v2715, %v2741
      %vm2786 = vcmp.eq.s32.totalorder %v2716, %v2741
      %vm2787 = vcmp.eq.s32.totalorder %v2717, %v2741
      %vm2788 = vcmp.eq.s32.totalorder %v2718, %v2741
      %vm2789 = vcmp.eq.s32.totalorder %v2719, %v2741
      %vm2790 = vcmp.eq.s32.totalorder %v2720, %v2741
      %vm2791 = vcmp.eq.s32.totalorder %v2721, %v2741
      %vm2792 = vcmp.eq.s32.totalorder %v2722, %v2741
      %vm2793 = vcmp.eq.s32.totalorder %v2723, %v2741
      %vm2794 = vcmp.eq.s32.totalorder %v2724, %v2741
      %vm2795 = vcmp.eq.s32.totalorder %v2725, %v2741
      %vm2796 = vcmp.eq.s32.totalorder %v2726, %v2741
      %vm2797 = vcmp.eq.s32.totalorder %v2727, %v2741
      %vm2798 = vcmp.eq.s32.totalorder %v2728, %v2741
      %vm2799 = vcmp.eq.s32.totalorder %v2729, %v2741
      %vm2800 = vcmp.eq.s32.totalorder %v2730, %v2741
      %vm2801 = vcmp.eq.s32.totalorder %v2731, %v2741
      %vm2802 = vcmp.eq.s32.totalorder %v2732, %v2741
      %vm2803 = vcmp.eq.s32.totalorder %v2733, %v2741
      %vm2804 = vcmp.eq.s32.totalorder %v2734, %v2741
      %vm2805 = vcmp.eq.s32.totalorder %v2735, %v2741
      %2807 = vset.pattern.permute.xlu0 0
      %2808 = vperm.xlu0 %2807, %v2698
      %v2809 = vpop.permute.xlu0 %2808
      %2812 = vset.pattern.permute.xlu0 0
      %2813 = vperm.xlu0 %2812, %v2699
      %v2814 = vpop.permute.xlu0 %2813
      %v2816 = vsel %vm2742, %v2809, 0.0
      %v2817 = vsel %vm2743, %v2809, 0.0
      %v2818 = vsel %vm2744, %v2809, 0.0
      %v2819 = vsel %vm2745, %v2809, 0.0
      %v2820 = vsel %vm2746, %v2809, 0.0
      %v2821 = vsel %vm2747, %v2809, 0.0
      %v2822 = vsel %vm2748, %v2809, 0.0
      %v2823 = vsel %vm2749, %v2809, 0.0
      %v2824 = vsel %vm2750, %v2809, 0.0
      %v2825 = vsel %vm2751, %v2809, 0.0
      %v2826 = vsel %vm2752, %v2809, 0.0
      %v2827 = vsel %vm2753, %v2809, 0.0
      %v2828 = vsel %vm2754, %v2809, 0.0
      %v2829 = vsel %vm2755, %v2809, 0.0
      %v2830 = vsel %vm2756, %v2809, 0.0
      %v2831 = vsel %vm2757, %v2809, 0.0
      %v2832 = vsel %vm2758, %v2809, 0.0
      %v2833 = vsel %vm2759, %v2809, 0.0
      %v2834 = vsel %vm2760, %v2809, 0.0
      %v2835 = vsel %vm2761, %v2809, 0.0
      %v2836 = vsel %vm2762, %v2809, 0.0
      %v2837 = vsel %vm2763, %v2809, 0.0
      %v2838 = vsel %vm2764, %v2809, 0.0
      %v2839 = vsel %vm2765, %v2809, 0.0
      %v2840 = vsel %vm2766, %v2809, 0.0
      %v2841 = vsel %vm2767, %v2809, 0.0
      %v2842 = vsel %vm2768, %v2809, 0.0
      %v2843 = vsel %vm2769, %v2809, 0.0
      %v2844 = vsel %vm2770, %v2809, 0.0
      %v2845 = vsel %vm2771, %v2809, 0.0
      %v2846 = vsel %vm2772, %v2809, 0.0
      %v2847 = vsel %vm2773, %v2809, 0.0
      %v2848 = vsel %vm2774, %v2814, 0.0
      %v2849 = vsel %vm2775, %v2814, 0.0
      %v2850 = vsel %vm2776, %v2814, 0.0
      %v2851 = vsel %vm2777, %v2814, 0.0
      %v2852 = vsel %vm2778, %v2814, 0.0
      %v2853 = vsel %vm2779, %v2814, 0.0
      %v2854 = vsel %vm2780, %v2814, 0.0
      %v2855 = vsel %vm2781, %v2814, 0.0
      %v2856 = vsel %vm2782, %v2814, 0.0
      %v2857 = vsel %vm2783, %v2814, 0.0
      %v2858 = vsel %vm2784, %v2814, 0.0
      %v2859 = vsel %vm2785, %v2814, 0.0
      %v2860 = vsel %vm2786, %v2814, 0.0
      %v2861 = vsel %vm2787, %v2814, 0.0
      %v2862 = vsel %vm2788, %v2814, 0.0
      %v2863 = vsel %vm2789, %v2814, 0.0
      %v2864 = vsel %vm2790, %v2814, 0.0
      %v2865 = vsel %vm2791, %v2814, 0.0
      %v2866 = vsel %vm2792, %v2814, 0.0
      %v2867 = vsel %vm2793, %v2814, 0.0
      %v2868 = vsel %vm2794, %v2814, 0.0
      %v2869 = vsel %vm2795, %v2814, 0.0
      %v2870 = vsel %vm2796, %v2814, 0.0
      %v2871 = vsel %vm2797, %v2814, 0.0
      %v2872 = vsel %vm2798, %v2814, 0.0
      %v2873 = vsel %vm2799, %v2814, 0.0
      %v2874 = vsel %vm2800, %v2814, 0.0
      %v2875 = vsel %vm2801, %v2814, 0.0
      %v2876 = vsel %vm2802, %v2814, 0.0
      %v2877 = vsel %vm2803, %v2814, 0.0
      %v2878 = vsel %vm2804, %v2814, 0.0
      %v2879 = vsel %vm2805, %v2814, 0.0
      %v2880 = vpack.c.bf16 %v2848, %v2816
      %v2881 = vpack.c.bf16 %v2849, %v2817
      %v2882 = vpack.c.bf16 %v2850, %v2818
      %v2883 = vpack.c.bf16 %v2851, %v2819
      %v2884 = vpack.c.bf16 %v2852, %v2820
      %v2885 = vpack.c.bf16 %v2853, %v2821
      %v2886 = vpack.c.bf16 %v2854, %v2822
      %v2887 = vpack.c.bf16 %v2855, %v2823
      %v2888 = vpack.c.bf16 %v2856, %v2824
      %v2889 = vpack.c.bf16 %v2857, %v2825
      %v2890 = vpack.c.bf16 %v2858, %v2826
      %v2891 = vpack.c.bf16 %v2859, %v2827
      %v2892 = vpack.c.bf16 %v2860, %v2828
      %v2893 = vpack.c.bf16 %v2861, %v2829
      %v2894 = vpack.c.bf16 %v2862, %v2830
      %v2895 = vpack.c.bf16 %v2863, %v2831
      %v2896 = vpack.c.bf16 %v2864, %v2832
      %v2897 = vpack.c.bf16 %v2865, %v2833
      %v2898 = vpack.c.bf16 %v2866, %v2834
      %v2899 = vpack.c.bf16 %v2867, %v2835
      %v2900 = vpack.c.bf16 %v2868, %v2836
      %v2901 = vpack.c.bf16 %v2869, %v2837
      %v2902 = vpack.c.bf16 %v2870, %v2838
      %v2903 = vpack.c.bf16 %v2871, %v2839
      %v2904 = vpack.c.bf16 %v2872, %v2840
      %v2905 = vpack.c.bf16 %v2873, %v2841
      %v2906 = vpack.c.bf16 %v2874, %v2842
      %v2907 = vpack.c.bf16 %v2875, %v2843
      %v2908 = vpack.c.bf16 %v2876, %v2844
      %v2909 = vpack.c.bf16 %v2877, %v2845
      %v2910 = vpack.c.bf16 %v2878, %v2846
      %v2911 = vpack.c.bf16 %v2879, %v2847
      %v3424 = vunpack.c.l.b16 %v2157
      %v3425 = vunpack.c.l.b16 %v2158
      %v3426 = vunpack.c.l.b16 %v2159
      %v3427 = vunpack.c.l.b16 %v2160
      %v3428 = vunpack.c.l.b16 %v2161
      %v3429 = vunpack.c.l.b16 %v2162
      %v3430 = vunpack.c.l.b16 %v2163
      %v3431 = vunpack.c.l.b16 %v2164
      %v3432 = vunpack.c.l.b16 %v2165
      %v3433 = vunpack.c.l.b16 %v2166
      %v3434 = vunpack.c.l.b16 %v2167
      %v3435 = vunpack.c.l.b16 %v2168
      %v3436 = vunpack.c.l.b16 %v2169
      %v3437 = vunpack.c.l.b16 %v2170
      %v3438 = vunpack.c.l.b16 %v2171
      %v3439 = vunpack.c.l.b16 %v2172
      %v3440 = vunpack.c.l.b16 %v2173
      %v3441 = vunpack.c.l.b16 %v2174
      %v3442 = vunpack.c.l.b16 %v2175
      %v3443 = vunpack.c.l.b16 %v2176
      %v3444 = vunpack.c.l.b16 %v2177
      %v3445 = vunpack.c.l.b16 %v2178
      %v3446 = vunpack.c.l.b16 %v2179
      %v3447 = vunpack.c.l.b16 %v2180
      %v3448 = vunpack.c.l.b16 %v2181
      %v3449 = vunpack.c.l.b16 %v2182
      %v3450 = vunpack.c.l.b16 %v2183
      %v3451 = vunpack.c.l.b16 %v2184
      %v3452 = vunpack.c.l.b16 %v2185
      %v3453 = vunpack.c.l.b16 %v2186
      %v3454 = vunpack.c.l.b16 %v2187
      %v3455 = vunpack.c.l.b16 %v2188
      %v3456 = vunpack.c.l.b16 %v2189
      %v3457 = vunpack.c.l.b16 %v2190
      %v3458 = vunpack.c.l.b16 %v2191
      %v3459 = vunpack.c.l.b16 %v2192
      %v3460 = vunpack.c.l.b16 %v2193
      %v3461 = vunpack.c.l.b16 %v2194
      %v3462 = vunpack.c.l.b16 %v2195
      %v3463 = vunpack.c.l.b16 %v2196
      %v3464 = vunpack.c.l.b16 %v2197
      %v3465 = vunpack.c.l.b16 %v2198
      %v3466 = vunpack.c.l.b16 %v2199
      %v3467 = vunpack.c.l.b16 %v2200
      %v3468 = vunpack.c.l.b16 %v2201
      %v3469 = vunpack.c.l.b16 %v2202
      %v3470 = vunpack.c.l.b16 %v2203
      %v3471 = vunpack.c.l.b16 %v2204
      %v3472 = vunpack.c.l.b16 %v2205
      %v3473 = vunpack.c.l.b16 %v2206
      %v3474 = vunpack.c.l.b16 %v2207
      %v3475 = vunpack.c.l.b16 %v2208
      %v3476 = vunpack.c.l.b16 %v2209
      %v3477 = vunpack.c.l.b16 %v2210
      %v3478 = vunpack.c.l.b16 %v2211
      %v3479 = vunpack.c.l.b16 %v2212
      %v3480 = vunpack.c.l.b16 %v2213
      %v3481 = vunpack.c.l.b16 %v2214
      %v3482 = vunpack.c.l.b16 %v2215
      %v3483 = vunpack.c.l.b16 %v2216
      %v3484 = vunpack.c.l.b16 %v2217
      %v3485 = vunpack.c.l.b16 %v2218
      %v3486 = vunpack.c.l.b16 %v2219
      %v3487 = vunpack.c.l.b16 %v2220
      %v3488 = vunpack.c.l.b16 %v2221
      %v3489 = vunpack.c.l.b16 %v2222
      %v3490 = vunpack.c.l.b16 %v2223
      %v3491 = vunpack.c.l.b16 %v2224
      %v3492 = vunpack.c.l.b16 %v2225
      %v3493 = vunpack.c.l.b16 %v2226
      %v3494 = vunpack.c.l.b16 %v2227
      %v3495 = vunpack.c.l.b16 %v2228
      %v3496 = vunpack.c.l.b16 %v2229
      %v3497 = vunpack.c.l.b16 %v2230
      %v3498 = vunpack.c.l.b16 %v2231
      %v3499 = vunpack.c.l.b16 %v2232
      %v3500 = vunpack.c.l.b16 %v2233
      %v3501 = vunpack.c.l.b16 %v2234
      %v3502 = vunpack.c.l.b16 %v2235
      %v3503 = vunpack.c.l.b16 %v2236
      %v3504 = vunpack.c.l.b16 %v2237
      %v3505 = vunpack.c.l.b16 %v2238
      %v3506 = vunpack.c.l.b16 %v2239
      %v3507 = vunpack.c.l.b16 %v2240
      %v3508 = vunpack.c.l.b16 %v2241
      %v3509 = vunpack.c.l.b16 %v2242
      %v3510 = vunpack.c.l.b16 %v2243
      %v3511 = vunpack.c.l.b16 %v2244
      %v3512 = vunpack.c.l.b16 %v2245
      %v3513 = vunpack.c.l.b16 %v2246
      %v3514 = vunpack.c.l.b16 %v2247
      %v3515 = vunpack.c.l.b16 %v2248
      %v3516 = vunpack.c.l.b16 %v2249
      %v3517 = vunpack.c.l.b16 %v2250
      %v3518 = vunpack.c.l.b16 %v2251
      %v3519 = vunpack.c.l.b16 %v2252
      %v3520 = vunpack.c.l.b16 %v2253
      %v3521 = vunpack.c.l.b16 %v2254
      %v3522 = vunpack.c.l.b16 %v2255
      %v3523 = vunpack.c.l.b16 %v2256
      %v3524 = vunpack.c.l.b16 %v2257
      %v3525 = vunpack.c.l.b16 %v2258
      %v3526 = vunpack.c.l.b16 %v2259
      %v3527 = vunpack.c.l.b16 %v2260
      %v3528 = vunpack.c.l.b16 %v2261
      %v3529 = vunpack.c.l.b16 %v2262
      %v3530 = vunpack.c.l.b16 %v2263
      %v3531 = vunpack.c.l.b16 %v2264
      %v3532 = vunpack.c.l.b16 %v2265
      %v3533 = vunpack.c.l.b16 %v2266
      %v3534 = vunpack.c.l.b16 %v2267
      %v3535 = vunpack.c.l.b16 %v2268
      %v3536 = vunpack.c.l.b16 %v2269
      %v3537 = vunpack.c.l.b16 %v2270
      %v3538 = vunpack.c.l.b16 %v2271
      %v3539 = vunpack.c.l.b16 %v2272
      %v3540 = vunpack.c.l.b16 %v2273
      %v3541 = vunpack.c.l.b16 %v2274
      %v3542 = vunpack.c.l.b16 %v2275
      %v3543 = vunpack.c.l.b16 %v2276
      %v3544 = vunpack.c.l.b16 %v2277
      %v3545 = vunpack.c.l.b16 %v2278
      %v3546 = vunpack.c.l.b16 %v2279
      %v3547 = vunpack.c.l.b16 %v2280
      %v3548 = vunpack.c.l.b16 %v2281
      %v3549 = vunpack.c.l.b16 %v2282
      %v3550 = vunpack.c.l.b16 %v2283
      %v3551 = vunpack.c.l.b16 %v2284
      %v3552 = vunpack.c.l.b16 %v2285
      %v3553 = vunpack.c.l.b16 %v2286
      %v3554 = vunpack.c.l.b16 %v2287
      %v3555 = vunpack.c.l.b16 %v2288
      %v3556 = vunpack.c.l.b16 %v2289
      %v3557 = vunpack.c.l.b16 %v2290
      %v3558 = vunpack.c.l.b16 %v2291
      %v3559 = vunpack.c.l.b16 %v2292
      %v3560 = vunpack.c.l.b16 %v2293
      %v3561 = vunpack.c.l.b16 %v2294
      %v3562 = vunpack.c.l.b16 %v2295
      %v3563 = vunpack.c.l.b16 %v2296
      %v3564 = vunpack.c.l.b16 %v2297
      %v3565 = vunpack.c.l.b16 %v2298
      %v3566 = vunpack.c.l.b16 %v2299
      %v3567 = vunpack.c.l.b16 %v2300
      %v3568 = vunpack.c.l.b16 %v2301
      %v3569 = vunpack.c.l.b16 %v2302
      %v3570 = vunpack.c.l.b16 %v2303
      %v3571 = vunpack.c.l.b16 %v2304
      %v3572 = vunpack.c.l.b16 %v2305
      %v3573 = vunpack.c.l.b16 %v2306
      %v3574 = vunpack.c.l.b16 %v2307
      %v3575 = vunpack.c.l.b16 %v2308
      %v3576 = vunpack.c.l.b16 %v2309
      %v3577 = vunpack.c.l.b16 %v2310
      %v3578 = vunpack.c.l.b16 %v2311
      %v3579 = vunpack.c.l.b16 %v2312
      %v3580 = vunpack.c.l.b16 %v2313
      %v3581 = vunpack.c.l.b16 %v2314
      %v3582 = vunpack.c.l.b16 %v2315
      %v3583 = vunpack.c.l.b16 %v2316
      %v3584 = vunpack.c.l.b16 %v2317
      %v3585 = vunpack.c.l.b16 %v2318
      %v3586 = vunpack.c.l.b16 %v2319
      %v3587 = vunpack.c.l.b16 %v2320
      %v3588 = vunpack.c.l.b16 %v2321
      %v3589 = vunpack.c.l.b16 %v2322
      %v3590 = vunpack.c.l.b16 %v2323
      %v3591 = vunpack.c.l.b16 %v2324
      %v3592 = vunpack.c.l.b16 %v2325
      %v3593 = vunpack.c.l.b16 %v2326
      %v3594 = vunpack.c.l.b16 %v2327
      %v3595 = vunpack.c.l.b16 %v2328
      %v3596 = vunpack.c.l.b16 %v2329
      %v3597 = vunpack.c.l.b16 %v2330
      %v3598 = vunpack.c.l.b16 %v2331
      %v3599 = vunpack.c.l.b16 %v2332
      %v3600 = vunpack.c.l.b16 %v2333
      %v3601 = vunpack.c.l.b16 %v2334
      %v3602 = vunpack.c.l.b16 %v2335
      %v3603 = vunpack.c.l.b16 %v2336
      %v3604 = vunpack.c.l.b16 %v2337
      %v3605 = vunpack.c.l.b16 %v2338
      %v3606 = vunpack.c.l.b16 %v2339
      %v3607 = vunpack.c.l.b16 %v2340
      %v3608 = vunpack.c.l.b16 %v2341
      %v3609 = vunpack.c.l.b16 %v2342
      %v3610 = vunpack.c.l.b16 %v2343
      %v3611 = vunpack.c.l.b16 %v2344
      %v3612 = vunpack.c.l.b16 %v2345
      %v3613 = vunpack.c.l.b16 %v2346
      %v3614 = vunpack.c.l.b16 %v2347
      %v3615 = vunpack.c.l.b16 %v2348
      %v3616 = vunpack.c.l.b16 %v2349
      %v3617 = vunpack.c.l.b16 %v2350
      %v3618 = vunpack.c.l.b16 %v2351
      %v3619 = vunpack.c.l.b16 %v2352
      %v3620 = vunpack.c.l.b16 %v2353
      %v3621 = vunpack.c.l.b16 %v2354
      %v3622 = vunpack.c.l.b16 %v2355
      %v3623 = vunpack.c.l.b16 %v2356
      %v3624 = vunpack.c.l.b16 %v2357
      %v3625 = vunpack.c.l.b16 %v2358
      %v3626 = vunpack.c.l.b16 %v2359
      %v3627 = vunpack.c.l.b16 %v2360
      %v3628 = vunpack.c.l.b16 %v2361
      %v3629 = vunpack.c.l.b16 %v2362
      %v3630 = vunpack.c.l.b16 %v2363
      %v3631 = vunpack.c.l.b16 %v2364
      %v3632 = vunpack.c.l.b16 %v2365
      %v3633 = vunpack.c.l.b16 %v2366
      %v3634 = vunpack.c.l.b16 %v2367
      %v3635 = vunpack.c.l.b16 %v2368
      %v3636 = vunpack.c.l.b16 %v2369
      %v3637 = vunpack.c.l.b16 %v2370
      %v3638 = vunpack.c.l.b16 %v2371
      %v3639 = vunpack.c.l.b16 %v2372
      %v3640 = vunpack.c.l.b16 %v2373
      %v3641 = vunpack.c.l.b16 %v2374
      %v3642 = vunpack.c.l.b16 %v2375
      %v3643 = vunpack.c.l.b16 %v2376
      %v3644 = vunpack.c.l.b16 %v2377
      %v3645 = vunpack.c.l.b16 %v2378
      %v3646 = vunpack.c.l.b16 %v2379
      %v3647 = vunpack.c.l.b16 %v2380
      %v3648 = vunpack.c.l.b16 %v2381
      %v3649 = vunpack.c.l.b16 %v2382
      %v3650 = vunpack.c.l.b16 %v2383
      %v3651 = vunpack.c.l.b16 %v2384
      %v3652 = vunpack.c.l.b16 %v2385
      %v3653 = vunpack.c.l.b16 %v2386
      %v3654 = vunpack.c.l.b16 %v2387
      %v3655 = vunpack.c.l.b16 %v2388
      %v3656 = vunpack.c.l.b16 %v2389
      %v3657 = vunpack.c.l.b16 %v2390
      %v3658 = vunpack.c.l.b16 %v2391
      %v3659 = vunpack.c.l.b16 %v2392
      %v3660 = vunpack.c.l.b16 %v2393
      %v3661 = vunpack.c.l.b16 %v2394
      %v3662 = vunpack.c.l.b16 %v2395
      %v3663 = vunpack.c.l.b16 %v2396
      %v3664 = vunpack.c.l.b16 %v2397
      %v3665 = vunpack.c.l.b16 %v2398
      %v3666 = vunpack.c.l.b16 %v2399
      %v3667 = vunpack.c.l.b16 %v2400
      %v3668 = vunpack.c.l.b16 %v2401
      %v3669 = vunpack.c.l.b16 %v2402
      %v3670 = vunpack.c.l.b16 %v2403
      %v3671 = vunpack.c.l.b16 %v2404
      %v3672 = vunpack.c.l.b16 %v2405
      %v3673 = vunpack.c.l.b16 %v2406
      %v3674 = vunpack.c.l.b16 %v2407
      %v3675 = vunpack.c.l.b16 %v2408
      %v3676 = vunpack.c.l.b16 %v2409
      %v3677 = vunpack.c.l.b16 %v2410
      %v3678 = vunpack.c.l.b16 %v2411
      %v3679 = vunpack.c.l.b16 %v2412
      %v3680 = vunpack.c.l.b16 %v2413
      %v3681 = vunpack.c.l.b16 %v2414
      %v3682 = vunpack.c.l.b16 %v2415
      %v3683 = vunpack.c.l.b16 %v2416
      %v3684 = vunpack.c.l.b16 %v2417
      %v3685 = vunpack.c.l.b16 %v2418
      %v3686 = vunpack.c.l.b16 %v2419
      %v3687 = vunpack.c.l.b16 %v2420
      %v3688 = vunpack.c.l.b16 %v2421
      %v3689 = vunpack.c.l.b16 %v2422
      %v3690 = vunpack.c.l.b16 %v2423
      %v3691 = vunpack.c.l.b16 %v2424
      %v3692 = vunpack.c.l.b16 %v2425
      %v3693 = vunpack.c.l.b16 %v2426
      %v3694 = vunpack.c.l.b16 %v2427
      %v3695 = vunpack.c.l.b16 %v2428
      %v3696 = vunpack.c.l.b16 %v2429
      %v3697 = vunpack.c.l.b16 %v2430
      %v3698 = vunpack.c.l.b16 %v2431
      %v3699 = vunpack.c.l.b16 %v2432
      %v3700 = vunpack.c.l.b16 %v2433
      %v3701 = vunpack.c.l.b16 %v2434
      %v3702 = vunpack.c.l.b16 %v2435
      %v3703 = vunpack.c.l.b16 %v2436
      %v3704 = vunpack.c.l.b16 %v2437
      %v3705 = vunpack.c.l.b16 %v2438
      %v3706 = vunpack.c.l.b16 %v2439
      %v3707 = vunpack.c.l.b16 %v2440
      %v3708 = vunpack.c.l.b16 %v2441
      %v3709 = vunpack.c.l.b16 %v2442
      %v3710 = vunpack.c.l.b16 %v2443
      %v3711 = vunpack.c.l.b16 %v2444
      %v3712 = vunpack.c.l.b16 %v2445
      %v3713 = vunpack.c.l.b16 %v2446
      %v3714 = vunpack.c.l.b16 %v2447
      %v3715 = vunpack.c.l.b16 %v2448
      %v3716 = vunpack.c.l.b16 %v2449
      %v3717 = vunpack.c.l.b16 %v2450
      %v3718 = vunpack.c.l.b16 %v2451
      %v3719 = vunpack.c.l.b16 %v2452
      %v3720 = vunpack.c.l.b16 %v2453
      %v3721 = vunpack.c.l.b16 %v2454
      %v3722 = vunpack.c.l.b16 %v2455
      %v3723 = vunpack.c.l.b16 %v2456
      %v3724 = vunpack.c.l.b16 %v2457
      %v3725 = vunpack.c.l.b16 %v2458
      %v3726 = vunpack.c.l.b16 %v2459
      %v3727 = vunpack.c.l.b16 %v2460
      %v3728 = vunpack.c.l.b16 %v2461
      %v3729 = vunpack.c.l.b16 %v2462
      %v3730 = vunpack.c.l.b16 %v2463
      %v3731 = vunpack.c.l.b16 %v2464
      %v3732 = vunpack.c.l.b16 %v2465
      %v3733 = vunpack.c.l.b16 %v2466
      %v3734 = vunpack.c.l.b16 %v2467
      %v3735 = vunpack.c.l.b16 %v2468
      %v3736 = vunpack.c.l.b16 %v2469
      %v3737 = vunpack.c.l.b16 %v2470
      %v3738 = vunpack.c.l.b16 %v2471
      %v3739 = vunpack.c.l.b16 %v2472
      %v3740 = vunpack.c.l.b16 %v2473
      %v3741 = vunpack.c.l.b16 %v2474
      %v3742 = vunpack.c.l.b16 %v2475
      %v3743 = vunpack.c.l.b16 %v2476
      %v3744 = vunpack.c.l.b16 %v2477
      %v3745 = vunpack.c.l.b16 %v2478
      %v3746 = vunpack.c.l.b16 %v2479
      %v3747 = vunpack.c.l.b16 %v2480
      %v3748 = vunpack.c.l.b16 %v2481
      %v3749 = vunpack.c.l.b16 %v2482
      %v3750 = vunpack.c.l.b16 %v2483
      %v3751 = vunpack.c.l.b16 %v2484
      %v3752 = vunpack.c.l.b16 %v2485
      %v3753 = vunpack.c.l.b16 %v2486
      %v3754 = vunpack.c.l.b16 %v2487
      %v3755 = vunpack.c.l.b16 %v2488
      %v3756 = vunpack.c.l.b16 %v2489
      %v3757 = vunpack.c.l.b16 %v2490
      %v3758 = vunpack.c.l.b16 %v2491
      %v3759 = vunpack.c.l.b16 %v2492
      %v3760 = vunpack.c.l.b16 %v2493
      %v3761 = vunpack.c.l.b16 %v2494
      %v3762 = vunpack.c.l.b16 %v2495
      %v3763 = vunpack.c.l.b16 %v2496
      %v3764 = vunpack.c.l.b16 %v2497
      %v3765 = vunpack.c.l.b16 %v2498
      %v3766 = vunpack.c.l.b16 %v2499
      %v3767 = vunpack.c.l.b16 %v2500
      %v3768 = vunpack.c.l.b16 %v2501
      %v3769 = vunpack.c.l.b16 %v2502
      %v3770 = vunpack.c.l.b16 %v2503
      %v3771 = vunpack.c.l.b16 %v2504
      %v3772 = vunpack.c.l.b16 %v2505
      %v3773 = vunpack.c.l.b16 %v2506
      %v3774 = vunpack.c.l.b16 %v2507
      %v3775 = vunpack.c.l.b16 %v2508
      %v3776 = vunpack.c.l.b16 %v2509
      %v3777 = vunpack.c.l.b16 %v2510
      %v3778 = vunpack.c.l.b16 %v2511
      %v3779 = vunpack.c.l.b16 %v2512
      %v3780 = vunpack.c.l.b16 %v2513
      %v3781 = vunpack.c.l.b16 %v2514
      %v3782 = vunpack.c.l.b16 %v2515
      %v3783 = vunpack.c.l.b16 %v2516
      %v3784 = vunpack.c.l.b16 %v2517
      %v3785 = vunpack.c.l.b16 %v2518
      %v3786 = vunpack.c.l.b16 %v2519
      %v3787 = vunpack.c.l.b16 %v2520
      %v3788 = vunpack.c.l.b16 %v2521
      %v3789 = vunpack.c.l.b16 %v2522
      %v3790 = vunpack.c.l.b16 %v2523
      %v3791 = vunpack.c.l.b16 %v2524
      %v3792 = vunpack.c.l.b16 %v2525
      %v3793 = vunpack.c.l.b16 %v2526
      %v3794 = vunpack.c.l.b16 %v2527
      %v3795 = vunpack.c.l.b16 %v2528
      %v3796 = vunpack.c.l.b16 %v2529
      %v3797 = vunpack.c.l.b16 %v2530
      %v3798 = vunpack.c.l.b16 %v2531
      %v3799 = vunpack.c.l.b16 %v2532
      %v3800 = vunpack.c.l.b16 %v2533
      %v3801 = vunpack.c.l.b16 %v2534
      %v3802 = vunpack.c.l.b16 %v2535
      %v3803 = vunpack.c.l.b16 %v2536
      %v3804 = vunpack.c.l.b16 %v2537
      %v3805 = vunpack.c.l.b16 %v2538
      %v3806 = vunpack.c.l.b16 %v2539
      %v3807 = vunpack.c.l.b16 %v2540
      %v3808 = vunpack.c.l.b16 %v2541
      %v3809 = vunpack.c.l.b16 %v2542
      %v3810 = vunpack.c.l.b16 %v2543
      %v3811 = vunpack.c.l.b16 %v2544
      %v3812 = vunpack.c.l.b16 %v2545
      %v3813 = vunpack.c.l.b16 %v2546
      %v3814 = vunpack.c.l.b16 %v2547
      %v3815 = vunpack.c.l.b16 %v2548
      %v3816 = vunpack.c.l.b16 %v2549
      %v3817 = vunpack.c.l.b16 %v2550
      %v3818 = vunpack.c.l.b16 %v2551
      %v3819 = vunpack.c.l.b16 %v2552
      %v3820 = vunpack.c.l.b16 %v2553
      %v3821 = vunpack.c.l.b16 %v2554
      %v3822 = vunpack.c.l.b16 %v2555
      %v3823 = vunpack.c.l.b16 %v2556
      %v3824 = vunpack.c.l.b16 %v2557
      %v3825 = vunpack.c.l.b16 %v2558
      %v3826 = vunpack.c.l.b16 %v2559
      %v3827 = vunpack.c.l.b16 %v2560
      %v3828 = vunpack.c.l.b16 %v2561
      %v3829 = vunpack.c.l.b16 %v2562
      %v3830 = vunpack.c.l.b16 %v2563
      %v3831 = vunpack.c.l.b16 %v2564
      %v3832 = vunpack.c.l.b16 %v2565
      %v3833 = vunpack.c.l.b16 %v2566
      %v3834 = vunpack.c.l.b16 %v2567
      %v3835 = vunpack.c.l.b16 %v2568
      %v3836 = vunpack.c.l.b16 %v2569
      %v3837 = vunpack.c.l.b16 %v2570
      %v3838 = vunpack.c.l.b16 %v2571
      %v3839 = vunpack.c.l.b16 %v2572
      %v3840 = vunpack.c.l.b16 %v2573
      %v3841 = vunpack.c.l.b16 %v2574
      %v3842 = vunpack.c.l.b16 %v2575
      %v3843 = vunpack.c.l.b16 %v2576
      %v3844 = vunpack.c.l.b16 %v2577
      %v3845 = vunpack.c.l.b16 %v2578
      %v3846 = vunpack.c.l.b16 %v2579
      %v3847 = vunpack.c.l.b16 %v2580
      %v3848 = vunpack.c.l.b16 %v2581
      %v3849 = vunpack.c.l.b16 %v2582
      %v3850 = vunpack.c.l.b16 %v2583
      %v3851 = vunpack.c.l.b16 %v2584
      %v3852 = vunpack.c.l.b16 %v2585
      %v3853 = vunpack.c.l.b16 %v2586
      %v3854 = vunpack.c.l.b16 %v2587
      %v3855 = vunpack.c.l.b16 %v2588
      %v3856 = vunpack.c.l.b16 %v2589
      %v3857 = vunpack.c.l.b16 %v2590
      %v3858 = vunpack.c.l.b16 %v2591
      %v3859 = vunpack.c.l.b16 %v2592
      %v3860 = vunpack.c.l.b16 %v2593
      %v3861 = vunpack.c.l.b16 %v2594
      %v3862 = vunpack.c.l.b16 %v2595
      %v3863 = vunpack.c.l.b16 %v2596
      %v3864 = vunpack.c.l.b16 %v2597
      %v3865 = vunpack.c.l.b16 %v2598
      %v3866 = vunpack.c.l.b16 %v2599
      %v3867 = vunpack.c.l.b16 %v2600
      %v3868 = vunpack.c.l.b16 %v2601
      %v3869 = vunpack.c.l.b16 %v2602
      %v3870 = vunpack.c.l.b16 %v2603
      %v3871 = vunpack.c.l.b16 %v2604
      %v3872 = vunpack.c.l.b16 %v2605
      %v3873 = vunpack.c.l.b16 %v2606
      %v3874 = vunpack.c.l.b16 %v2607
      %v3875 = vunpack.c.l.b16 %v2608
      %v3876 = vunpack.c.l.b16 %v2609
      %v3877 = vunpack.c.l.b16 %v2610
      %v3878 = vunpack.c.l.b16 %v2611
      %v3879 = vunpack.c.l.b16 %v2612
      %v3880 = vunpack.c.l.b16 %v2613
      %v3881 = vunpack.c.l.b16 %v2614
      %v3882 = vunpack.c.l.b16 %v2615
      %v3883 = vunpack.c.l.b16 %v2616
      %v3884 = vunpack.c.l.b16 %v2617
      %v3885 = vunpack.c.l.b16 %v2618
      %v3886 = vunpack.c.l.b16 %v2619
      %v3887 = vunpack.c.l.b16 %v2620
      %v3888 = vunpack.c.l.b16 %v2621
      %v3889 = vunpack.c.l.b16 %v2622
      %v3890 = vunpack.c.l.b16 %v2623
      %v3891 = vunpack.c.l.b16 %v2624
      %v3892 = vunpack.c.l.b16 %v2625
      %v3893 = vunpack.c.l.b16 %v2626
      %v3894 = vunpack.c.l.b16 %v2627
      %v3895 = vunpack.c.l.b16 %v2628
      %v3896 = vunpack.c.l.b16 %v2629
      %v3897 = vunpack.c.l.b16 %v2630
      %v3898 = vunpack.c.l.b16 %v2631
      %v3899 = vunpack.c.l.b16 %v2632
      %v3900 = vunpack.c.l.b16 %v2633
      %v3901 = vunpack.c.l.b16 %v2634
      %v3902 = vunpack.c.l.b16 %v2635
      %v3903 = vunpack.c.l.b16 %v2636
      %v3904 = vunpack.c.l.b16 %v2637
      %v3905 = vunpack.c.l.b16 %v2638
      %v3906 = vunpack.c.l.b16 %v2639
      %v3907 = vunpack.c.l.b16 %v2640
      %v3908 = vunpack.c.l.b16 %v2641
      %v3909 = vunpack.c.l.b16 %v2642
      %v3910 = vunpack.c.l.b16 %v2643
      %v3911 = vunpack.c.l.b16 %v2644
      %v3912 = vunpack.c.l.b16 %v2645
      %v3913 = vunpack.c.l.b16 %v2646
      %v3914 = vunpack.c.l.b16 %v2647
      %v3915 = vunpack.c.l.b16 %v2648
      %v3916 = vunpack.c.l.b16 %v2649
      %v3917 = vunpack.c.l.b16 %v2650
      %v3918 = vunpack.c.l.b16 %v2651
      %v3919 = vunpack.c.l.b16 %v2652
      %v3920 = vunpack.c.l.b16 %v2653
      %v3921 = vunpack.c.l.b16 %v2654
      %v3922 = vunpack.c.l.b16 %v2655
      %v3923 = vunpack.c.l.b16 %v2656
      %v3924 = vunpack.c.l.b16 %v2657
      %v3925 = vunpack.c.l.b16 %v2658
      %v3926 = vunpack.c.l.b16 %v2659
      %v3927 = vunpack.c.l.b16 %v2660
      %v3928 = vunpack.c.l.b16 %v2661
      %v3929 = vunpack.c.l.b16 %v2662
      %v3930 = vunpack.c.l.b16 %v2663
      %v3931 = vunpack.c.l.b16 %v2664
      %v3932 = vunpack.c.l.b16 %v2665
      %v3933 = vunpack.c.l.b16 %v2666
      %v3934 = vunpack.c.l.b16 %v2667
      %v3935 = vunpack.c.l.b16 %v2668
      %v3936 = vpack.c.b16 %v3425, %v3424
      %v3937 = vpack.c.b16 %v3427, %v3426
      %v3938 = vpack.c.b16 %v3429, %v3428
      %v3939 = vpack.c.b16 %v3431, %v3430
      %v3940 = vpack.c.b16 %v3433, %v3432
      %v3941 = vpack.c.b16 %v3435, %v3434
      %v3942 = vpack.c.b16 %v3437, %v3436
      %v3943 = vpack.c.b16 %v3439, %v3438
      %v3944 = vpack.c.b16 %v3441, %v3440
      %v3945 = vpack.c.b16 %v3443, %v3442
      %v3946 = vpack.c.b16 %v3445, %v3444
      %v3947 = vpack.c.b16 %v3447, %v3446
      %v3948 = vpack.c.b16 %v3449, %v3448
      %v3949 = vpack.c.b16 %v3451, %v3450
      %v3950 = vpack.c.b16 %v3453, %v3452
      %v3951 = vpack.c.b16 %v3455, %v3454
      %v3952 = vpack.c.b16 %v3457, %v3456
      %v3953 = vpack.c.b16 %v3459, %v3458
      %v3954 = vpack.c.b16 %v3461, %v3460
      %v3955 = vpack.c.b16 %v3463, %v3462
      %v3956 = vpack.c.b16 %v3465, %v3464
      %v3957 = vpack.c.b16 %v3467, %v3466
      %v3958 = vpack.c.b16 %v3469, %v3468
      %v3959 = vpack.c.b16 %v3471, %v3470
      %v3960 = vpack.c.b16 %v3473, %v3472
      %v3961 = vpack.c.b16 %v3475, %v3474
      %v3962 = vpack.c.b16 %v3477, %v3476
      %v3963 = vpack.c.b16 %v3479, %v3478
      %v3964 = vpack.c.b16 %v3481, %v3480
      %v3965 = vpack.c.b16 %v3483, %v3482
      %v3966 = vpack.c.b16 %v3485, %v3484
      %v3967 = vpack.c.b16 %v3487, %v3486
      %v3968 = vpack.c.b16 %v3489, %v3488
      %v3969 = vpack.c.b16 %v3491, %v3490
      %v3970 = vpack.c.b16 %v3493, %v3492
      %v3971 = vpack.c.b16 %v3495, %v3494
      %v3972 = vpack.c.b16 %v3497, %v3496
      %v3973 = vpack.c.b16 %v3499, %v3498
      %v3974 = vpack.c.b16 %v3501, %v3500
      %v3975 = vpack.c.b16 %v3503, %v3502
      %v3976 = vpack.c.b16 %v3505, %v3504
      %v3977 = vpack.c.b16 %v3507, %v3506
      %v3978 = vpack.c.b16 %v3509, %v3508
      %v3979 = vpack.c.b16 %v3511, %v3510
      %v3980 = vpack.c.b16 %v3513, %v3512
      %v3981 = vpack.c.b16 %v3515, %v3514
      %v3982 = vpack.c.b16 %v3517, %v3516
      %v3983 = vpack.c.b16 %v3519, %v3518
      %v3984 = vpack.c.b16 %v3521, %v3520
      %v3985 = vpack.c.b16 %v3523, %v3522
      %v3986 = vpack.c.b16 %v3525, %v3524
      %v3987 = vpack.c.b16 %v3527, %v3526
      %v3988 = vpack.c.b16 %v3529, %v3528
      %v3989 = vpack.c.b16 %v3531, %v3530
      %v3990 = vpack.c.b16 %v3533, %v3532
      %v3991 = vpack.c.b16 %v3535, %v3534
      %v3992 = vpack.c.b16 %v3537, %v3536
      %v3993 = vpack.c.b16 %v3539, %v3538
      %v3994 = vpack.c.b16 %v3541, %v3540
      %v3995 = vpack.c.b16 %v3543, %v3542
      %v3996 = vpack.c.b16 %v3545, %v3544
      %v3997 = vpack.c.b16 %v3547, %v3546
      %v3998 = vpack.c.b16 %v3549, %v3548
      %v3999 = vpack.c.b16 %v3551, %v3550
      %v4000 = vpack.c.b16 %v3553, %v3552
      %v4001 = vpack.c.b16 %v3555, %v3554
      %v4002 = vpack.c.b16 %v3557, %v3556
      %v4003 = vpack.c.b16 %v3559, %v3558
      %v4004 = vpack.c.b16 %v3561, %v3560
      %v4005 = vpack.c.b16 %v3563, %v3562
      %v4006 = vpack.c.b16 %v3565, %v3564
      %v4007 = vpack.c.b16 %v3567, %v3566
      %v4008 = vpack.c.b16 %v3569, %v3568
      %v4009 = vpack.c.b16 %v3571, %v3570
      %v4010 = vpack.c.b16 %v3573, %v3572
      %v4011 = vpack.c.b16 %v3575, %v3574
      %v4012 = vpack.c.b16 %v3577, %v3576
      %v4013 = vpack.c.b16 %v3579, %v3578
      %v4014 = vpack.c.b16 %v3581, %v3580
      %v4015 = vpack.c.b16 %v3583, %v3582
      %v4016 = vpack.c.b16 %v3585, %v3584
      %v4017 = vpack.c.b16 %v3587, %v3586
      %v4018 = vpack.c.b16 %v3589, %v3588
      %v4019 = vpack.c.b16 %v3591, %v3590
      %v4020 = vpack.c.b16 %v3593, %v3592
      %v4021 = vpack.c.b16 %v3595, %v3594
      %v4022 = vpack.c.b16 %v3597, %v3596
      %v4023 = vpack.c.b16 %v3599, %v3598
      %v4024 = vpack.c.b16 %v3601, %v3600
      %v4025 = vpack.c.b16 %v3603, %v3602
      %v4026 = vpack.c.b16 %v3605, %v3604
      %v4027 = vpack.c.b16 %v3607, %v3606
      %v4028 = vpack.c.b16 %v3609, %v3608
      %v4029 = vpack.c.b16 %v3611, %v3610
      %v4030 = vpack.c.b16 %v3613, %v3612
      %v4031 = vpack.c.b16 %v3615, %v3614
      %v4032 = vpack.c.b16 %v3617, %v3616
      %v4033 = vpack.c.b16 %v3619, %v3618
      %v4034 = vpack.c.b16 %v3621, %v3620
      %v4035 = vpack.c.b16 %v3623, %v3622
      %v4036 = vpack.c.b16 %v3625, %v3624
      %v4037 = vpack.c.b16 %v3627, %v3626
      %v4038 = vpack.c.b16 %v3629, %v3628
      %v4039 = vpack.c.b16 %v3631, %v3630
      %v4040 = vpack.c.b16 %v3633, %v3632
      %v4041 = vpack.c.b16 %v3635, %v3634
      %v4042 = vpack.c.b16 %v3637, %v3636
      %v4043 = vpack.c.b16 %v3639, %v3638
      %v4044 = vpack.c.b16 %v3641, %v3640
      %v4045 = vpack.c.b16 %v3643, %v3642
      %v4046 = vpack.c.b16 %v3645, %v3644
      %v4047 = vpack.c.b16 %v3647, %v3646
      %v4048 = vpack.c.b16 %v3649, %v3648
      %v4049 = vpack.c.b16 %v3651, %v3650
      %v4050 = vpack.c.b16 %v3653, %v3652
      %v4051 = vpack.c.b16 %v3655, %v3654
      %v4052 = vpack.c.b16 %v3657, %v3656
      %v4053 = vpack.c.b16 %v3659, %v3658
      %v4054 = vpack.c.b16 %v3661, %v3660
      %v4055 = vpack.c.b16 %v3663, %v3662
      %v4056 = vpack.c.b16 %v3665, %v3664
      %v4057 = vpack.c.b16 %v3667, %v3666
      %v4058 = vpack.c.b16 %v3669, %v3668
      %v4059 = vpack.c.b16 %v3671, %v3670
      %v4060 = vpack.c.b16 %v3673, %v3672
      %v4061 = vpack.c.b16 %v3675, %v3674
      %v4062 = vpack.c.b16 %v3677, %v3676
      %v4063 = vpack.c.b16 %v3679, %v3678
      %v4064 = vpack.c.b16 %v3681, %v3680
      %v4065 = vpack.c.b16 %v3683, %v3682
      %v4066 = vpack.c.b16 %v3685, %v3684
      %v4067 = vpack.c.b16 %v3687, %v3686
      %v4068 = vpack.c.b16 %v3689, %v3688
      %v4069 = vpack.c.b16 %v3691, %v3690
      %v4070 = vpack.c.b16 %v3693, %v3692
      %v4071 = vpack.c.b16 %v3695, %v3694
      %v4072 = vpack.c.b16 %v3697, %v3696
      %v4073 = vpack.c.b16 %v3699, %v3698
      %v4074 = vpack.c.b16 %v3701, %v3700
      %v4075 = vpack.c.b16 %v3703, %v3702
      %v4076 = vpack.c.b16 %v3705, %v3704
      %v4077 = vpack.c.b16 %v3707, %v3706
      %v4078 = vpack.c.b16 %v3709, %v3708
      %v4079 = vpack.c.b16 %v3711, %v3710
      %v4080 = vpack.c.b16 %v3713, %v3712
      %v4081 = vpack.c.b16 %v3715, %v3714
      %v4082 = vpack.c.b16 %v3717, %v3716
      %v4083 = vpack.c.b16 %v3719, %v3718
      %v4084 = vpack.c.b16 %v3721, %v3720
      %v4085 = vpack.c.b16 %v3723, %v3722
      %v4086 = vpack.c.b16 %v3725, %v3724
      %v4087 = vpack.c.b16 %v3727, %v3726
      %v4088 = vpack.c.b16 %v3729, %v3728
      %v4089 = vpack.c.b16 %v3731, %v3730
      %v4090 = vpack.c.b16 %v3733, %v3732
      %v4091 = vpack.c.b16 %v3735, %v3734
      %v4092 = vpack.c.b16 %v3737, %v3736
      %v4093 = vpack.c.b16 %v3739, %v3738
      %v4094 = vpack.c.b16 %v3741, %v3740
      %v4095 = vpack.c.b16 %v3743, %v3742
      %v4096 = vpack.c.b16 %v3745, %v3744
      %v4097 = vpack.c.b16 %v3747, %v3746
      %v4098 = vpack.c.b16 %v3749, %v3748
      %v4099 = vpack.c.b16 %v3751, %v3750
      %v4100 = vpack.c.b16 %v3753, %v3752
      %v4101 = vpack.c.b16 %v3755, %v3754
      %v4102 = vpack.c.b16 %v3757, %v3756
      %v4103 = vpack.c.b16 %v3759, %v3758
      %v4104 = vpack.c.b16 %v3761, %v3760
      %v4105 = vpack.c.b16 %v3763, %v3762
      %v4106 = vpack.c.b16 %v3765, %v3764
      %v4107 = vpack.c.b16 %v3767, %v3766
      %v4108 = vpack.c.b16 %v3769, %v3768
      %v4109 = vpack.c.b16 %v3771, %v3770
      %v4110 = vpack.c.b16 %v3773, %v3772
      %v4111 = vpack.c.b16 %v3775, %v3774
      %v4112 = vpack.c.b16 %v3777, %v3776
      %v4113 = vpack.c.b16 %v3779, %v3778
      %v4114 = vpack.c.b16 %v3781, %v3780
      %v4115 = vpack.c.b16 %v3783, %v3782
      %v4116 = vpack.c.b16 %v3785, %v3784
      %v4117 = vpack.c.b16 %v3787, %v3786
      %v4118 = vpack.c.b16 %v3789, %v3788
      %v4119 = vpack.c.b16 %v3791, %v3790
      %v4120 = vpack.c.b16 %v3793, %v3792
      %v4121 = vpack.c.b16 %v3795, %v3794
      %v4122 = vpack.c.b16 %v3797, %v3796
      %v4123 = vpack.c.b16 %v3799, %v3798
      %v4124 = vpack.c.b16 %v3801, %v3800
      %v4125 = vpack.c.b16 %v3803, %v3802
      %v4126 = vpack.c.b16 %v3805, %v3804
      %v4127 = vpack.c.b16 %v3807, %v3806
      %v4128 = vpack.c.b16 %v3809, %v3808
      %v4129 = vpack.c.b16 %v3811, %v3810
      %v4130 = vpack.c.b16 %v3813, %v3812
      %v4131 = vpack.c.b16 %v3815, %v3814
      %v4132 = vpack.c.b16 %v3817, %v3816
      %v4133 = vpack.c.b16 %v3819, %v3818
      %v4134 = vpack.c.b16 %v3821, %v3820
      %v4135 = vpack.c.b16 %v3823, %v3822
      %v4136 = vpack.c.b16 %v3825, %v3824
      %v4137 = vpack.c.b16 %v3827, %v3826
      %v4138 = vpack.c.b16 %v3829, %v3828
      %v4139 = vpack.c.b16 %v3831, %v3830
      %v4140 = vpack.c.b16 %v3833, %v3832
      %v4141 = vpack.c.b16 %v3835, %v3834
      %v4142 = vpack.c.b16 %v3837, %v3836
      %v4143 = vpack.c.b16 %v3839, %v3838
      %v4144 = vpack.c.b16 %v3841, %v3840
      %v4145 = vpack.c.b16 %v3843, %v3842
      %v4146 = vpack.c.b16 %v3845, %v3844
      %v4147 = vpack.c.b16 %v3847, %v3846
      %v4148 = vpack.c.b16 %v3849, %v3848
      %v4149 = vpack.c.b16 %v3851, %v3850
      %v4150 = vpack.c.b16 %v3853, %v3852
      %v4151 = vpack.c.b16 %v3855, %v3854
      %v4152 = vpack.c.b16 %v3857, %v3856
      %v4153 = vpack.c.b16 %v3859, %v3858
      %v4154 = vpack.c.b16 %v3861, %v3860
      %v4155 = vpack.c.b16 %v3863, %v3862
      %v4156 = vpack.c.b16 %v3865, %v3864
      %v4157 = vpack.c.b16 %v3867, %v3866
      %v4158 = vpack.c.b16 %v3869, %v3868
      %v4159 = vpack.c.b16 %v3871, %v3870
      %v4160 = vpack.c.b16 %v3873, %v3872
      %v4161 = vpack.c.b16 %v3875, %v3874
      %v4162 = vpack.c.b16 %v3877, %v3876
      %v4163 = vpack.c.b16 %v3879, %v3878
      %v4164 = vpack.c.b16 %v3881, %v3880
      %v4165 = vpack.c.b16 %v3883, %v3882
      %v4166 = vpack.c.b16 %v3885, %v3884
      %v4167 = vpack.c.b16 %v3887, %v3886
      %v4168 = vpack.c.b16 %v3889, %v3888
      %v4169 = vpack.c.b16 %v3891, %v3890
      %v4170 = vpack.c.b16 %v3893, %v3892
      %v4171 = vpack.c.b16 %v3895, %v3894
      %v4172 = vpack.c.b16 %v3897, %v3896
      %v4173 = vpack.c.b16 %v3899, %v3898
      %v4174 = vpack.c.b16 %v3901, %v3900
      %v4175 = vpack.c.b16 %v3903, %v3902
      %v4176 = vpack.c.b16 %v3905, %v3904
      %v4177 = vpack.c.b16 %v3907, %v3906
      %v4178 = vpack.c.b16 %v3909, %v3908
      %v4179 = vpack.c.b16 %v3911, %v3910
      %v4180 = vpack.c.b16 %v3913, %v3912
      %v4181 = vpack.c.b16 %v3915, %v3914
      %v4182 = vpack.c.b16 %v3917, %v3916
      %v4183 = vpack.c.b16 %v3919, %v3918
      %v4184 = vpack.c.b16 %v3921, %v3920
      %v4185 = vpack.c.b16 %v3923, %v3922
      %v4186 = vpack.c.b16 %v3925, %v3924
      %v4187 = vpack.c.b16 %v3927, %v3926
      %v4188 = vpack.c.b16 %v3929, %v3928
      %v4189 = vpack.c.b16 %v3931, %v3930
      %v4190 = vpack.c.b16 %v3933, %v3932
      %v4191 = vpack.c.b16 %v3935, %v3934
      %4448 = vmatprep.subr.bf16.mxu0 0
      %4449 = vmatpush1.bf16.msra.mxu0 %v3936
      %4450 = vmatprep.subr.bf16.mxu0 0
      %4451 = vmatpush1.bf16.msra.mxu0 %v3937
      %4452 = vmatprep.subr.bf16.mxu0 0
      %4453 = vmatpush1.bf16.msra.mxu0 %v3938
      %4454 = vmatprep.subr.bf16.mxu0 0
      %4455 = vmatpush1.bf16.msra.mxu0 %v3939
      %4456 = vmatprep.subr.bf16.mxu0 0
      %4457 = vmatpush1.bf16.msra.mxu0 %v3940
      %4458 = vmatprep.subr.bf16.mxu0 0
      %4459 = vmatpush1.bf16.msra.mxu0 %v3941
      %4460 = vmatprep.subr.bf16.mxu0 0
      %4461 = vmatpush1.bf16.msra.mxu0 %v3942
      %4462 = vmatprep.subr.bf16.mxu0 0
      %4463 = vmatpush1.bf16.msra.mxu0 %v3943
      %4464 = vmatprep.subr.bf16.mxu0 0
      %4465 = vmatpush1.bf16.msra.mxu0 %v3944
      %4466 = vmatprep.subr.bf16.mxu0 0
      %4467 = vmatpush1.bf16.msra.mxu0 %v3945
      %4468 = vmatprep.subr.bf16.mxu0 0
      %4469 = vmatpush1.bf16.msra.mxu0 %v3946
      %4470 = vmatprep.subr.bf16.mxu0 0
      %4471 = vmatpush1.bf16.msra.mxu0 %v3947
      %4472 = vmatprep.subr.bf16.mxu0 0
      %4473 = vmatpush1.bf16.msra.mxu0 %v3948
      %4474 = vmatprep.subr.bf16.mxu0 0
      %4475 = vmatpush1.bf16.msra.mxu0 %v3949
      %4476 = vmatprep.subr.bf16.mxu0 0
      %4477 = vmatpush1.bf16.msra.mxu0 %v3950
      %4478 = vmatprep.subr.bf16.mxu0 0
      %4479 = vmatpush1.bf16.msra.mxu0 %v3951
      %4480 = vmatprep.mubr.bf16.mxu0 %v2881
      %4481 = vmatmul.mubr.bf16.gmra.mrb[0].mxu0 %v2880
      %v4482 = vpop.f32.mrb[0].mxu0
      %v4483 = vadd.f32 0.0, %v4482
      %v4484 = vpop.f32.mrb[0].mxu0
      %v4485 = vpop.f32.mrb[0].mxu0
      %v4486 = vadd.f32 0.0, %v4485
      %v4487 = vpop.f32.mrb[0].mxu0
      %4488 = vdwg.mxu0
      %4489 = vmatprep.subr.bf16.mxu0 0
      %4490 = vmatpush1.bf16.msra.mxu0 %v3952
      %4491 = vmatprep.subr.bf16.mxu0 0
      %4492 = vmatpush1.bf16.msra.mxu0 %v3953
      %4493 = vmatprep.subr.bf16.mxu0 0
      %4494 = vmatpush1.bf16.msra.mxu0 %v3954
      %4495 = vmatprep.subr.bf16.mxu0 0
      %4496 = vmatpush1.bf16.msra.mxu0 %v3955
      %4497 = vmatprep.subr.bf16.mxu0 0
      %4498 = vmatpush1.bf16.msra.mxu0 %v3956
      %4499 = vmatprep.subr.bf16.mxu0 0
      %4500 = vmatpush1.bf16.msra.mxu0 %v3957
      %4501 = vmatprep.subr.bf16.mxu0 0
      %4502 = vmatpush1.bf16.msra.mxu0 %v3958
      %4503 = vmatprep.subr.bf16.mxu0 0
      %4504 = vmatpush1.bf16.msra.mxu0 %v3959
      %4505 = vmatprep.subr.bf16.mxu0 0
      %4506 = vmatpush1.bf16.msra.mxu0 %v3960
      %4507 = vmatprep.subr.bf16.mxu0 0
      %4508 = vmatpush1.bf16.msra.mxu0 %v3961
      %4509 = vmatprep.subr.bf16.mxu0 0
      %4510 = vmatpush1.bf16.msra.mxu0 %v3962
      %4511 = vmatprep.subr.bf16.mxu0 0
      %4512 = vmatpush1.bf16.msra.mxu0 %v3963
      %4513 = vmatprep.subr.bf16.mxu0 0
      %4514 = vmatpush1.bf16.msra.mxu0 %v3964
      %4515 = vmatprep.subr.bf16.mxu0 0
      %4516 = vmatpush1.bf16.msra.mxu0 %v3965
      %4517 = vmatprep.subr.bf16.mxu0 0
      %4518 = vmatpush1.bf16.msra.mxu0 %v3966
      %4519 = vmatprep.subr.bf16.mxu0 0
      %4520 = vmatpush1.bf16.msra.mxu0 %v3967
      %4521 = vmatprep.mubr.bf16.mxu0 %v2883
      %4522 = vmatmul.mubr.bf16.gmra.mrb[0].mxu0 %v2882
      %v4523 = vpop.f32.mrb[0].mxu0
      %v4524 = vadd.f32 %v4483, %v4523
      %v4525 = vpop.f32.mrb[0].mxu0
      %v4526 = vpop.f32.mrb[0].mxu0
      %v4527 = vadd.f32 %v4486, %v4526
      %v4528 = vpop.f32.mrb[0].mxu0
      %4529 = vdwg.mxu0
      %4530 = vmatprep.subr.bf16.mxu0 0
      %4531 = vmatpush1.bf16.msra.mxu0 %v3968
      %4532 = vmatprep.subr.bf16.mxu0 0
      %4533 = vmatpush1.bf16.msra.mxu0 %v3969
      %4534 = vmatprep.subr.bf16.mxu0 0
      %4535 = vmatpush1.bf16.msra.mxu0 %v3970
      %4536 = vmatprep.subr.bf16.mxu0 0
      %4537 = vmatpush1.bf16.msra.mxu0 %v3971
      %4538 = vmatprep.subr.bf16.mxu0 0
      %4539 = vmatpush1.bf16.msra.mxu0 %v3972
      %4540 = vmatprep.subr.bf16.mxu0 0
      %4541 = vmatpush1.bf16.msra.mxu0 %v3973
      %4542 = vmatprep.subr.bf16.mxu0 0
      %4543 = vmatpush1.bf16.msra.mxu0 %v3974
      %4544 = vmatprep.subr.bf16.mxu0 0
      %4545 = vmatpush1.bf16.msra.mxu0 %v3975
      %4546 = vmatprep.subr.bf16.mxu0 0
      %4547 = vmatpush1.bf16.msra.mxu0 %v3976
      %4548 = vmatprep.subr.bf16.mxu0 0
      %4549 = vmatpush1.bf16.msra.mxu0 %v3977
      %4550 = vmatprep.subr.bf16.mxu0 0
      %4551 = vmatpush1.bf16.msra.mxu0 %v3978
      %4552 = vmatprep.subr.bf16.mxu0 0
      %4553 = vmatpush1.bf16.msra.mxu0 %v3979
      %4554 = vmatprep.subr.bf16.mxu0 0
      %4555 = vmatpush1.bf16.msra.mxu0 %v3980
      %4556 = vmatprep.subr.bf16.mxu0 0
      %4557 = vmatpush1.bf16.msra.mxu0 %v3981
      %4558 = vmatprep.subr.bf16.mxu0 0
      %4559 = vmatpush1.bf16.msra.mxu0 %v3982
      %4560 = vmatprep.subr.bf16.mxu0 0
      %4561 = vmatpush1.bf16.msra.mxu0 %v3983
      %4562 = vmatprep.mubr.bf16.mxu0 %v2885
      %4563 = vmatmul.mubr.bf16.gmra.mrb[0].mxu0 %v2884
      %v4564 = vpop.f32.mrb[0].mxu0
      %v4565 = vadd.f32 %v4524, %v4564
      %v4566 = vpop.f32.mrb[0].mxu0
      %v4567 = vpop.f32.mrb[0].mxu0
      %v4568 = vadd.f32 %v4527, %v4567
      %v4569 = vpop.f32.mrb[0].mxu0
      %4570 = vdwg.mxu0
      %4571 = vmatprep.subr.bf16.mxu0 0
      %4572 = vmatpush1.bf16.msra.mxu0 %v3984
      %4573 = vmatprep.subr.bf16.mxu0 0
      %4574 = vmatpush1.bf16.msra.mxu0 %v3985
      %4575 = vmatprep.subr.bf16.mxu0 0
      %4576 = vmatpush1.bf16.msra.mxu0 %v3986
      %4577 = vmatprep.subr.bf16.mxu0 0
      %4578 = vmatpush1.bf16.msra.mxu0 %v3987
      %4579 = vmatprep.subr.bf16.mxu0 0
      %4580 = vmatpush1.bf16.msra.mxu0 %v3988
      %4581 = vmatprep.subr.bf16.mxu0 0
      %4582 = vmatpush1.bf16.msra.mxu0 %v3989
      %4583 = vmatprep.subr.bf16.mxu0 0
      %4584 = vmatpush1.bf16.msra.mxu0 %v3990
      %4585 = vmatprep.subr.bf16.mxu0 0
      %4586 = vmatpush1.bf16.msra.mxu0 %v3991
      %4587 = vmatprep.subr.bf16.mxu0 0
      %4588 = vmatpush1.bf16.msra.mxu0 %v3992
      %4589 = vmatprep.subr.bf16.mxu0 0
      %4590 = vmatpush1.bf16.msra.mxu0 %v3993
      %4591 = vmatprep.subr.bf16.mxu0 0
      %4592 = vmatpush1.bf16.msra.mxu0 %v3994
      %4593 = vmatprep.subr.bf16.mxu0 0
      %4594 = vmatpush1.bf16.msra.mxu0 %v3995
      %4595 = vmatprep.subr.bf16.mxu0 0
      %4596 = vmatpush1.bf16.msra.mxu0 %v3996
      %4597 = vmatprep.subr.bf16.mxu0 0
      %4598 = vmatpush1.bf16.msra.mxu0 %v3997
      %4599 = vmatprep.subr.bf16.mxu0 0
      %4600 = vmatpush1.bf16.msra.mxu0 %v3998
      %4601 = vmatprep.subr.bf16.mxu0 0
      %4602 = vmatpush1.bf16.msra.mxu0 %v3999
      %4603 = vmatprep.mubr.bf16.mxu0 %v2887
      %4604 = vmatmul.mubr.bf16.gmra.mrb[0].mxu0 %v2886
      %v4605 = vpop.f32.mrb[0].mxu0
      %v4606 = vadd.f32 %v4565, %v4605
      %v4607 = vpop.f32.mrb[0].mxu0
      %v4608 = vpop.f32.mrb[0].mxu0
      %v4609 = vadd.f32 %v4568, %v4608
      %v4610 = vpop.f32.mrb[0].mxu0
      %4611 = vdwg.mxu0
      %4612 = vmatprep.subr.bf16.mxu0 0
      %4613 = vmatpush1.bf16.msra.mxu0 %v4000
      %4614 = vmatprep.subr.bf16.mxu0 0
      %4615 = vmatpush1.bf16.msra.mxu0 %v4001
      %4616 = vmatprep.subr.bf16.mxu0 0
      %4617 = vmatpush1.bf16.msra.mxu0 %v4002
      %4618 = vmatprep.subr.bf16.mxu0 0
      %4619 = vmatpush1.bf16.msra.mxu0 %v4003
      %4620 = vmatprep.subr.bf16.mxu0 0
      %4621 = vmatpush1.bf16.msra.mxu0 %v4004
      %4622 = vmatprep.subr.bf16.mxu0 0
      %4623 = vmatpush1.bf16.msra.mxu0 %v4005
      %4624 = vmatprep.subr.bf16.mxu0 0
      %4625 = vmatpush1.bf16.msra.mxu0 %v4006
      %4626 = vmatprep.subr.bf16.mxu0 0
      %4627 = vmatpush1.bf16.msra.mxu0 %v4007
      %4628 = vmatprep.subr.bf16.mxu0 0
      %4629 = vmatpush1.bf16.msra.mxu0 %v4008
      %4630 = vmatprep.subr.bf16.mxu0 0
      %4631 = vmatpush1.bf16.msra.mxu0 %v4009
      %4632 = vmatprep.subr.bf16.mxu0 0
      %4633 = vmatpush1.bf16.msra.mxu0 %v4010
      %4634 = vmatprep.subr.bf16.mxu0 0
      %4635 = vmatpush1.bf16.msra.mxu0 %v4011
      %4636 = vmatprep.subr.bf16.mxu0 0
      %4637 = vmatpush1.bf16.msra.mxu0 %v4012
      %4638 = vmatprep.subr.bf16.mxu0 0
      %4639 = vmatpush1.bf16.msra.mxu0 %v4013
      %4640 = vmatprep.subr.bf16.mxu0 0
      %4641 = vmatpush1.bf16.msra.mxu0 %v4014
      %4642 = vmatprep.subr.bf16.mxu0 0
      %4643 = vmatpush1.bf16.msra.mxu0 %v4015
      %4644 = vmatprep.mubr.bf16.mxu0 %v2889
      %4645 = vmatmul.mubr.bf16.gmra.mrb[0].mxu0 %v2888
      %v4646 = vpop.f32.mrb[0].mxu0
      %v4647 = vadd.f32 %v4606, %v4646
      %v4648 = vpop.f32.mrb[0].mxu0
      %v4649 = vpop.f32.mrb[0].mxu0
      %v4650 = vadd.f32 %v4609, %v4649
      %v4651 = vpop.f32.mrb[0].mxu0
      %4652 = vdwg.mxu0
      %4653 = vmatprep.subr.bf16.mxu0 0
      %4654 = vmatpush1.bf16.msra.mxu0 %v4016
      %4655 = vmatprep.subr.bf16.mxu0 0
      %4656 = vmatpush1.bf16.msra.mxu0 %v4017
      %4657 = vmatprep.subr.bf16.mxu0 0
      %4658 = vmatpush1.bf16.msra.mxu0 %v4018
      %4659 = vmatprep.subr.bf16.mxu0 0
      %4660 = vmatpush1.bf16.msra.mxu0 %v4019
      %4661 = vmatprep.subr.bf16.mxu0 0
      %4662 = vmatpush1.bf16.msra.mxu0 %v4020
      %4663 = vmatprep.subr.bf16.mxu0 0
      %4664 = vmatpush1.bf16.msra.mxu0 %v4021
      %4665 = vmatprep.subr.bf16.mxu0 0
      %4666 = vmatpush1.bf16.msra.mxu0 %v4022
      %4667 = vmatprep.subr.bf16.mxu0 0
      %4668 = vmatpush1.bf16.msra.mxu0 %v4023
      %4669 = vmatprep.subr.bf16.mxu0 0
      %4670 = vmatpush1.bf16.msra.mxu0 %v4024
      %4671 = vmatprep.subr.bf16.mxu0 0
      %4672 = vmatpush1.bf16.msra.mxu0 %v4025
      %4673 = vmatprep.subr.bf16.mxu0 0
      %4674 = vmatpush1.bf16.msra.mxu0 %v4026
      %4675 = vmatprep.subr.bf16.mxu0 0
      %4676 = vmatpush1.bf16.msra.mxu0 %v4027
      %4677 = vmatprep.subr.bf16.mxu0 0
      %4678 = vmatpush1.bf16.msra.mxu0 %v4028
      %4679 = vmatprep.subr.bf16.mxu0 0
      %4680 = vmatpush1.bf16.msra.mxu0 %v4029
      %4681 = vmatprep.subr.bf16.mxu0 0
      %4682 = vmatpush1.bf16.msra.mxu0 %v4030
      %4683 = vmatprep.subr.bf16.mxu0 0
      %4684 = vmatpush1.bf16.msra.mxu0 %v4031
      %4685 = vmatprep.mubr.bf16.mxu0 %v2891
      %4686 = vmatmul.mubr.bf16.gmra.mrb[0].mxu0 %v2890
      %v4687 = vpop.f32.mrb[0].mxu0
      %v4688 = vadd.f32 %v4647, %v4687
      %v4689 = vpop.f32.mrb[0].mxu0
      %v4690 = vpop.f32.mrb[0].mxu0
      %v4691 = vadd.f32 %v4650, %v4690
      %v4692 = vpop.f32.mrb[0].mxu0
      %4693 = vdwg.mxu0
      %4694 = vmatprep.subr.bf16.mxu0 0
      %4695 = vmatpush1.bf16.msra.mxu0 %v4032
      %4696 = vmatprep.subr.bf16.mxu0 0
      %4697 = vmatpush1.bf16.msra.mxu0 %v4033
      %4698 = vmatprep.subr.bf16.mxu0 0
      %4699 = vmatpush1.bf16.msra.mxu0 %v4034
      %4700 = vmatprep.subr.bf16.mxu0 0
      %4701 = vmatpush1.bf16.msra.mxu0 %v4035
      %4702 = vmatprep.subr.bf16.mxu0 0
      %4703 = vmatpush1.bf16.msra.mxu0 %v4036
      %4704 = vmatprep.subr.bf16.mxu0 0
      %4705 = vmatpush1.bf16.msra.mxu0 %v4037
      %4706 = vmatprep.subr.bf16.mxu0 0
      %4707 = vmatpush1.bf16.msra.mxu0 %v4038
      %4708 = vmatprep.subr.bf16.mxu0 0
      %4709 = vmatpush1.bf16.msra.mxu0 %v4039
      %4710 = vmatprep.subr.bf16.mxu0 0
      %4711 = vmatpush1.bf16.msra.mxu0 %v4040
      %4712 = vmatprep.subr.bf16.mxu0 0
      %4713 = vmatpush1.bf16.msra.mxu0 %v4041
      %4714 = vmatprep.subr.bf16.mxu0 0
      %4715 = vmatpush1.bf16.msra.mxu0 %v4042
      %4716 = vmatprep.subr.bf16.mxu0 0
      %4717 = vmatpush1.bf16.msra.mxu0 %v4043
      %4718 = vmatprep.subr.bf16.mxu0 0
      %4719 = vmatpush1.bf16.msra.mxu0 %v4044
      %4720 = vmatprep.subr.bf16.mxu0 0
      %4721 = vmatpush1.bf16.msra.mxu0 %v4045
      %4722 = vmatprep.subr.bf16.mxu0 0
      %4723 = vmatpush1.bf16.msra.mxu0 %v4046
      %4724 = vmatprep.subr.bf16.mxu0 0
      %4725 = vmatpush1.bf16.msra.mxu0 %v4047
      %4726 = vmatprep.mubr.bf16.mxu0 %v2893
      %4727 = vmatmul.mubr.bf16.gmra.mrb[0].mxu0 %v2892
      %v4728 = vpop.f32.mrb[0].mxu0
      %v4729 = vadd.f32 %v4688, %v4728
      %v4730 = vpop.f32.mrb[0].mxu0
      %v4731 = vpop.f32.mrb[0].mxu0
      %v4732 = vadd.f32 %v4691, %v4731
      %v4733 = vpop.f32.mrb[0].mxu0
      %4734 = vdwg.mxu0
      %4735 = vmatprep.subr.bf16.mxu0 0
      %4736 = vmatpush1.bf16.msra.mxu0 %v4048
      %4737 = vmatprep.subr.bf16.mxu0 0
      %4738 = vmatpush1.bf16.msra.mxu0 %v4049
      %4739 = vmatprep.subr.bf16.mxu0 0
      %4740 = vmatpush1.bf16.msra.mxu0 %v4050
      %4741 = vmatprep.subr.bf16.mxu0 0
      %4742 = vmatpush1.bf16.msra.mxu0 %v4051
      %4743 = vmatprep.subr.bf16.mxu0 0
      %4744 = vmatpush1.bf16.msra.mxu0 %v4052
      %4745 = vmatprep.subr.bf16.mxu0 0
      %4746 = vmatpush1.bf16.msra.mxu0 %v4053
      %4747 = vmatprep.subr.bf16.mxu0 0
      %4748 = vmatpush1.bf16.msra.mxu0 %v4054
      %4749 = vmatprep.subr.bf16.mxu0 0
      %4750 = vmatpush1.bf16.msra.mxu0 %v4055
      %4751 = vmatprep.subr.bf16.mxu0 0
      %4752 = vmatpush1.bf16.msra.mxu0 %v4056
      %4753 = vmatprep.subr.bf16.mxu0 0
      %4754 = vmatpush1.bf16.msra.mxu0 %v4057
      %4755 = vmatprep.subr.bf16.mxu0 0
      %4756 = vmatpush1.bf16.msra.mxu0 %v4058
      %4757 = vmatprep.subr.bf16.mxu0 0
      %4758 = vmatpush1.bf16.msra.mxu0 %v4059
      %4759 = vmatprep.subr.bf16.mxu0 0
      %4760 = vmatpush1.bf16.msra.mxu0 %v4060
      %4761 = vmatprep.subr.bf16.mxu0 0
      %4762 = vmatpush1.bf16.msra.mxu0 %v4061
      %4763 = vmatprep.subr.bf16.mxu0 0
      %4764 = vmatpush1.bf16.msra.mxu0 %v4062
      %4765 = vmatprep.subr.bf16.mxu0 0
      %4766 = vmatpush1.bf16.msra.mxu0 %v4063
      %4767 = vmatprep.mubr.bf16.mxu0 %v2895
      %4768 = vmatmul.mubr.bf16.gmra.mrb[0].mxu0 %v2894
      %v4769 = vpop.f32.mrb[0].mxu0
      %v4770 = vadd.f32 %v4729, %v4769
      %v4771 = vpop.f32.mrb[0].mxu0
      %v4772 = vpop.f32.mrb[0].mxu0
      %v4773 = vadd.f32 %v4732, %v4772
      %v4774 = vpop.f32.mrb[0].mxu0
      %4775 = vdwg.mxu0
      %4776 = vmatprep.subr.bf16.mxu0 0
      %4777 = vmatpush1.bf16.msra.mxu0 %v4064
      %4778 = vmatprep.subr.bf16.mxu0 0
      %4779 = vmatpush1.bf16.msra.mxu0 %v4065
      %4780 = vmatprep.subr.bf16.mxu0 0
      %4781 = vmatpush1.bf16.msra.mxu0 %v4066
      %4782 = vmatprep.subr.bf16.mxu0 0
      %4783 = vmatpush1.bf16.msra.mxu0 %v4067
      %4784 = vmatprep.subr.bf16.mxu0 0
      %4785 = vmatpush1.bf16.msra.mxu0 %v4068
      %4786 = vmatprep.subr.bf16.mxu0 0
      %4787 = vmatpush1.bf16.msra.mxu0 %v4069
      %4788 = vmatprep.subr.bf16.mxu0 0
      %4789 = vmatpush1.bf16.msra.mxu0 %v4070
      %4790 = vmatprep.subr.bf16.mxu0 0
      %4791 = vmatpush1.bf16.msra.mxu0 %v4071
      %4792 = vmatprep.subr.bf16.mxu0 0
      %4793 = vmatpush1.bf16.msra.mxu0 %v4072
      %4794 = vmatprep.subr.bf16.mxu0 0
      %4795 = vmatpush1.bf16.msra.mxu0 %v4073
      %4796 = vmatprep.subr.bf16.mxu0 0
      %4797 = vmatpush1.bf16.msra.mxu0 %v4074
      %4798 = vmatprep.subr.bf16.mxu0 0
      %4799 = vmatpush1.bf16.msra.mxu0 %v4075
      %4800 = vmatprep.subr.bf16.mxu0 0
      %4801 = vmatpush1.bf16.msra.mxu0 %v4076
      %4802 = vmatprep.subr.bf16.mxu0 0
      %4803 = vmatpush1.bf16.msra.mxu0 %v4077
      %4804 = vmatprep.subr.bf16.mxu0 0
      %4805 = vmatpush1.bf16.msra.mxu0 %v4078
      %4806 = vmatprep.subr.bf16.mxu0 0
      %4807 = vmatpush1.bf16.msra.mxu0 %v4079
      %4808 = vmatprep.mubr.bf16.mxu0 %v2897
      %4809 = vmatmul.mubr.bf16.gmra.mrb[0].mxu0 %v2896
      %v4810 = vpop.f32.mrb[0].mxu0
      %v4811 = vadd.f32 %v4770, %v4810
      %v4812 = vpop.f32.mrb[0].mxu0
      %v4813 = vpop.f32.mrb[0].mxu0
      %v4814 = vadd.f32 %v4773, %v4813
      %v4815 = vpop.f32.mrb[0].mxu0
      %4816 = vdwg.mxu0
      %4817 = vmatprep.subr.bf16.mxu0 0
      %4818 = vmatpush1.bf16.msra.mxu0 %v4080
      %4819 = vmatprep.subr.bf16.mxu0 0
      %4820 = vmatpush1.bf16.msra.mxu0 %v4081
      %4821 = vmatprep.subr.bf16.mxu0 0
      %4822 = vmatpush1.bf16.msra.mxu0 %v4082
      %4823 = vmatprep.subr.bf16.mxu0 0
      %4824 = vmatpush1.bf16.msra.mxu0 %v4083
      %4825 = vmatprep.subr.bf16.mxu0 0
      %4826 = vmatpush1.bf16.msra.mxu0 %v4084
      %4827 = vmatprep.subr.bf16.mxu0 0
      %4828 = vmatpush1.bf16.msra.mxu0 %v4085
      %4829 = vmatprep.subr.bf16.mxu0 0
      %4830 = vmatpush1.bf16.msra.mxu0 %v4086
      %4831 = vmatprep.subr.bf16.mxu0 0
      %4832 = vmatpush1.bf16.msra.mxu0 %v4087
      %4833 = vmatprep.subr.bf16.mxu0 0
      %4834 = vmatpush1.bf16.msra.mxu0 %v4088
      %4835 = vmatprep.subr.bf16.mxu0 0
      %4836 = vmatpush1.bf16.msra.mxu0 %v4089
      %4837 = vmatprep.subr.bf16.mxu0 0
      %4838 = vmatpush1.bf16.msra.mxu0 %v4090
      %4839 = vmatprep.subr.bf16.mxu0 0
      %4840 = vmatpush1.bf16.msra.mxu0 %v4091
      %4841 = vmatprep.subr.bf16.mxu0 0
      %4842 = vmatpush1.bf16.msra.mxu0 %v4092
      %4843 = vmatprep.subr.bf16.mxu0 0
      %4844 = vmatpush1.bf16.msra.mxu0 %v4093
      %4845 = vmatprep.subr.bf16.mxu0 0
      %4846 = vmatpush1.bf16.msra.mxu0 %v4094
      %4847 = vmatprep.subr.bf16.mxu0 0
      %4848 = vmatpush1.bf16.msra.mxu0 %v4095
      %4849 = vmatprep.mubr.bf16.mxu0 %v2899
      %4850 = vmatmul.mubr.bf16.gmra.mrb[0].mxu0 %v2898
      %v4851 = vpop.f32.mrb[0].mxu0
      %v4852 = vadd.f32 %v4811, %v4851
      %v4853 = vpop.f32.mrb[0].mxu0
      %v4854 = vpop.f32.mrb[0].mxu0
      %v4855 = vadd.f32 %v4814, %v4854
      %v4856 = vpop.f32.mrb[0].mxu0
      %4857 = vdwg.mxu0
      %4858 = vmatprep.subr.bf16.mxu0 0
      %4859 = vmatpush1.bf16.msra.mxu0 %v4096
      %4860 = vmatprep.subr.bf16.mxu0 0
      %4861 = vmatpush1.bf16.msra.mxu0 %v4097
      %4862 = vmatprep.subr.bf16.mxu0 0
      %4863 = vmatpush1.bf16.msra.mxu0 %v4098
      %4864 = vmatprep.subr.bf16.mxu0 0
      %4865 = vmatpush1.bf16.msra.mxu0 %v4099
      %4866 = vmatprep.subr.bf16.mxu0 0
      %4867 = vmatpush1.bf16.msra.mxu0 %v4100
      %4868 = vmatprep.subr.bf16.mxu0 0
      %4869 = vmatpush1.bf16.msra.mxu0 %v4101
      %4870 = vmatprep.subr.bf16.mxu0 0
      %4871 = vmatpush1.bf16.msra.mxu0 %v4102
      %4872 = vmatprep.subr.bf16.mxu0 0
      %4873 = vmatpush1.bf16.msra.mxu0 %v4103
      %4874 = vmatprep.subr.bf16.mxu0 0
      %4875 = vmatpush1.bf16.msra.mxu0 %v4104
      %4876 = vmatprep.subr.bf16.mxu0 0
      %4877 = vmatpush1.bf16.msra.mxu0 %v4105
      %4878 = vmatprep.subr.bf16.mxu0 0
      %4879 = vmatpush1.bf16.msra.mxu0 %v4106
      %4880 = vmatprep.subr.bf16.mxu0 0
      %4881 = vmatpush1.bf16.msra.mxu0 %v4107
      %4882 = vmatprep.subr.bf16.mxu0 0
      %4883 = vmatpush1.bf16.msra.mxu0 %v4108
      %4884 = vmatprep.subr.bf16.mxu0 0
      %4885 = vmatpush1.bf16.msra.mxu0 %v4109
      %4886 = vmatprep.subr.bf16.mxu0 0
      %4887 = vmatpush1.bf16.msra.mxu0 %v4110
      %4888 = vmatprep.subr.bf16.mxu0 0
      %4889 = vmatpush1.bf16.msra.mxu0 %v4111
      %4890 = vmatprep.mubr.bf16.mxu0 %v2901
      %4891 = vmatmul.mubr.bf16.gmra.mrb[0].mxu0 %v2900
      %v4892 = vpop.f32.mrb[0].mxu0
      %v4893 = vadd.f32 %v4852, %v4892
      %v4894 = vpop.f32.mrb[0].mxu0
      %v4895 = vpop.f32.mrb[0].mxu0
      %v4896 = vadd.f32 %v4855, %v4895
      %v4897 = vpop.f32.mrb[0].mxu0
      %4898 = vdwg.mxu0
      %4899 = vmatprep.subr.bf16.mxu0 0
      %4900 = vmatpush1.bf16.msra.mxu0 %v4112
      %4901 = vmatprep.subr.bf16.mxu0 0
      %4902 = vmatpush1.bf16.msra.mxu0 %v4113
      %4903 = vmatprep.subr.bf16.mxu0 0
      %4904 = vmatpush1.bf16.msra.mxu0 %v4114
      %4905 = vmatprep.subr.bf16.mxu0 0
      %4906 = vmatpush1.bf16.msra.mxu0 %v4115
      %4907 = vmatprep.subr.bf16.mxu0 0
      %4908 = vmatpush1.bf16.msra.mxu0 %v4116
      %4909 = vmatprep.subr.bf16.mxu0 0
      %4910 = vmatpush1.bf16.msra.mxu0 %v4117
      %4911 = vmatprep.subr.bf16.mxu0 0
      %4912 = vmatpush1.bf16.msra.mxu0 %v4118
      %4913 = vmatprep.subr.bf16.mxu0 0
      %4914 = vmatpush1.bf16.msra.mxu0 %v4119
      %4915 = vmatprep.subr.bf16.mxu0 0
      %4916 = vmatpush1.bf16.msra.mxu0 %v4120
      %4917 = vmatprep.subr.bf16.mxu0 0
      %4918 = vmatpush1.bf16.msra.mxu0 %v4121
      %4919 = vmatprep.subr.bf16.mxu0 0
      %4920 = vmatpush1.bf16.msra.mxu0 %v4122
      %4921 = vmatprep.subr.bf16.mxu0 0
      %4922 = vmatpush1.bf16.msra.mxu0 %v4123
      %4923 = vmatprep.subr.bf16.mxu0 0
      %4924 = vmatpush1.bf16.msra.mxu0 %v4124
      %4925 = vmatprep.subr.bf16.mxu0 0
      %4926 = vmatpush1.bf16.msra.mxu0 %v4125
      %4927 = vmatprep.subr.bf16.mxu0 0
      %4928 = vmatpush1.bf16.msra.mxu0 %v4126
      %4929 = vmatprep.subr.bf16.mxu0 0
      %4930 = vmatpush1.bf16.msra.mxu0 %v4127
      %4931 = vmatprep.mubr.bf16.mxu0 %v2903
      %4932 = vmatmul.mubr.bf16.gmra.mrb[0].mxu0 %v2902
      %v4933 = vpop.f32.mrb[0].mxu0
      %v4934 = vadd.f32 %v4893, %v4933
      %v4935 = vpop.f32.mrb[0].mxu0
      %v4936 = vpop.f32.mrb[0].mxu0
      %v4937 = vadd.f32 %v4896, %v4936
      %v4938 = vpop.f32.mrb[0].mxu0
      %4939 = vdwg.mxu0
      %4940 = vmatprep.subr.bf16.mxu0 0
      %4941 = vmatpush1.bf16.msra.mxu0 %v4128
      %4942 = vmatprep.subr.bf16.mxu0 0
      %4943 = vmatpush1.bf16.msra.mxu0 %v4129
      %4944 = vmatprep.subr.bf16.mxu0 0
      %4945 = vmatpush1.bf16.msra.mxu0 %v4130
      %4946 = vmatprep.subr.bf16.mxu0 0
      %4947 = vmatpush1.bf16.msra.mxu0 %v4131
      %4948 = vmatprep.subr.bf16.mxu0 0
      %4949 = vmatpush1.bf16.msra.mxu0 %v4132
      %4950 = vmatprep.subr.bf16.mxu0 0
      %4951 = vmatpush1.bf16.msra.mxu0 %v4133
      %4952 = vmatprep.subr.bf16.mxu0 0
      %4953 = vmatpush1.bf16.msra.mxu0 %v4134
      %4954 = vmatprep.subr.bf16.mxu0 0
      %4955 = vmatpush1.bf16.msra.mxu0 %v4135
      %4956 = vmatprep.subr.bf16.mxu0 0
      %4957 = vmatpush1.bf16.msra.mxu0 %v4136
      %4958 = vmatprep.subr.bf16.mxu0 0
      %4959 = vmatpush1.bf16.msra.mxu0 %v4137
      %4960 = vmatprep.subr.bf16.mxu0 0
      %4961 = vmatpush1.bf16.msra.mxu0 %v4138
      %4962 = vmatprep.subr.bf16.mxu0 0
      %4963 = vmatpush1.bf16.msra.mxu0 %v4139
      %4964 = vmatprep.subr.bf16.mxu0 0
      %4965 = vmatpush1.bf16.msra.mxu0 %v4140
      %4966 = vmatprep.subr.bf16.mxu0 0
      %4967 = vmatpush1.bf16.msra.mxu0 %v4141
      %4968 = vmatprep.subr.bf16.mxu0 0
      %4969 = vmatpush1.bf16.msra.mxu0 %v4142
      %4970 = vmatprep.subr.bf16.mxu0 0
      %4971 = vmatpush1.bf16.msra.mxu0 %v4143
      %4972 = vmatprep.mubr.bf16.mxu0 %v2905
      %4973 = vmatmul.mubr.bf16.gmra.mrb[0].mxu0 %v2904
      %v4974 = vpop.f32.mrb[0].mxu0
      %v4975 = vadd.f32 %v4934, %v4974
      %v4976 = vpop.f32.mrb[0].mxu0
      %v4977 = vpop.f32.mrb[0].mxu0
      %v4978 = vadd.f32 %v4937, %v4977
      %v4979 = vpop.f32.mrb[0].mxu0
      %4980 = vdwg.mxu0
      %4981 = vmatprep.subr.bf16.mxu0 0
      %4982 = vmatpush1.bf16.msra.mxu0 %v4144
      %4983 = vmatprep.subr.bf16.mxu0 0
      %4984 = vmatpush1.bf16.msra.mxu0 %v4145
      %4985 = vmatprep.subr.bf16.mxu0 0
      %4986 = vmatpush1.bf16.msra.mxu0 %v4146
      %4987 = vmatprep.subr.bf16.mxu0 0
      %4988 = vmatpush1.bf16.msra.mxu0 %v4147
      %4989 = vmatprep.subr.bf16.mxu0 0
      %4990 = vmatpush1.bf16.msra.mxu0 %v4148
      %4991 = vmatprep.subr.bf16.mxu0 0
      %4992 = vmatpush1.bf16.msra.mxu0 %v4149
      %4993 = vmatprep.subr.bf16.mxu0 0
      %4994 = vmatpush1.bf16.msra.mxu0 %v4150
      %4995 = vmatprep.subr.bf16.mxu0 0
      %4996 = vmatpush1.bf16.msra.mxu0 %v4151
      %4997 = vmatprep.subr.bf16.mxu0 0
      %4998 = vmatpush1.bf16.msra.mxu0 %v4152
      %4999 = vmatprep.subr.bf16.mxu0 0
      %5000 = vmatpush1.bf16.msra.mxu0 %v4153
      %5001 = vmatprep.subr.bf16.mxu0 0
      %5002 = vmatpush1.bf16.msra.mxu0 %v4154
      %5003 = vmatprep.subr.bf16.mxu0 0
      %5004 = vmatpush1.bf16.msra.mxu0 %v4155
      %5005 = vmatprep.subr.bf16.mxu0 0
      %5006 = vmatpush1.bf16.msra.mxu0 %v4156
      %5007 = vmatprep.subr.bf16.mxu0 0
      %5008 = vmatpush1.bf16.msra.mxu0 %v4157
      %5009 = vmatprep.subr.bf16.mxu0 0
      %5010 = vmatpush1.bf16.msra.mxu0 %v4158
      %5011 = vmatprep.subr.bf16.mxu0 0
      %5012 = vmatpush1.bf16.msra.mxu0 %v4159
      %5013 = vmatprep.mubr.bf16.mxu0 %v2907
      %5014 = vmatmul.mubr.bf16.gmra.mrb[0].mxu0 %v2906
      %v5015 = vpop.f32.mrb[0].mxu0
      %v5016 = vadd.f32 %v4975, %v5015
      %v5017 = vpop.f32.mrb[0].mxu0
      %v5018 = vpop.f32.mrb[0].mxu0
      %v5019 = vadd.f32 %v4978, %v5018
      %v5020 = vpop.f32.mrb[0].mxu0
      %5021 = vdwg.mxu0
      %5022 = vmatprep.subr.bf16.mxu0 0
      %5023 = vmatpush1.bf16.msra.mxu0 %v4160
      %5024 = vmatprep.subr.bf16.mxu0 0
      %5025 = vmatpush1.bf16.msra.mxu0 %v4161
      %5026 = vmatprep.subr.bf16.mxu0 0
      %5027 = vmatpush1.bf16.msra.mxu0 %v4162
      %5028 = vmatprep.subr.bf16.mxu0 0
      %5029 = vmatpush1.bf16.msra.mxu0 %v4163
      %5030 = vmatprep.subr.bf16.mxu0 0
      %5031 = vmatpush1.bf16.msra.mxu0 %v4164
      %5032 = vmatprep.subr.bf16.mxu0 0
      %5033 = vmatpush1.bf16.msra.mxu0 %v4165
      %5034 = vmatprep.subr.bf16.mxu0 0
      %5035 = vmatpush1.bf16.msra.mxu0 %v4166
      %5036 = vmatprep.subr.bf16.mxu0 0
      %5037 = vmatpush1.bf16.msra.mxu0 %v4167
      %5038 = vmatprep.subr.bf16.mxu0 0
      %5039 = vmatpush1.bf16.msra.mxu0 %v4168
      %5040 = vmatprep.subr.bf16.mxu0 0
      %5041 = vmatpush1.bf16.msra.mxu0 %v4169
      %5042 = vmatprep.subr.bf16.mxu0 0
      %5043 = vmatpush1.bf16.msra.mxu0 %v4170
      %5044 = vmatprep.subr.bf16.mxu0 0
      %5045 = vmatpush1.bf16.msra.mxu0 %v4171
      %5046 = vmatprep.subr.bf16.mxu0 0
      %5047 = vmatpush1.bf16.msra.mxu0 %v4172
      %5048 = vmatprep.subr.bf16.mxu0 0
      %5049 = vmatpush1.bf16.msra.mxu0 %v4173
      %5050 = vmatprep.subr.bf16.mxu0 0
      %5051 = vmatpush1.bf16.msra.mxu0 %v4174
      %5052 = vmatprep.subr.bf16.mxu0 0
      %5053 = vmatpush1.bf16.msra.mxu0 %v4175
      %5054 = vmatprep.mubr.bf16.mxu0 %v2909
      %5055 = vmatmul.mubr.bf16.gmra.mrb[0].mxu0 %v2908
      %v5056 = vpop.f32.mrb[0].mxu0
      %v5057 = vadd.f32 %v5016, %v5056
      %v5058 = vpop.f32.mrb[0].mxu0
      %v5059 = vpop.f32.mrb[0].mxu0
      %v5060 = vadd.f32 %v5019, %v5059
      %v5061 = vpop.f32.mrb[0].mxu0
      %5062 = vdwg.mxu0
      %5063 = vmatprep.subr.bf16.mxu0 0
      %5064 = vmatpush1.bf16.msra.mxu0 %v4176
      %5065 = vmatprep.subr.bf16.mxu0 0
      %5066 = vmatpush1.bf16.msra.mxu0 %v4177
      %5067 = vmatprep.subr.bf16.mxu0 0
      %5068 = vmatpush1.bf16.msra.mxu0 %v4178
      %5069 = vmatprep.subr.bf16.mxu0 0
      %5070 = vmatpush1.bf16.msra.mxu0 %v4179
      %5071 = vmatprep.subr.bf16.mxu0 0
      %5072 = vmatpush1.bf16.msra.mxu0 %v4180
      %5073 = vmatprep.subr.bf16.mxu0 0
      %5074 = vmatpush1.bf16.msra.mxu0 %v4181
      %5075 = vmatprep.subr.bf16.mxu0 0
      %5076 = vmatpush1.bf16.msra.mxu0 %v4182
      %5077 = vmatprep.subr.bf16.mxu0 0
      %5078 = vmatpush1.bf16.msra.mxu0 %v4183
      %5079 = vmatprep.subr.bf16.mxu0 0
      %5080 = vmatpush1.bf16.msra.mxu0 %v4184
      %5081 = vmatprep.subr.bf16.mxu0 0
      %5082 = vmatpush1.bf16.msra.mxu0 %v4185
      %5083 = vmatprep.subr.bf16.mxu0 0
      %5084 = vmatpush1.bf16.msra.mxu0 %v4186
      %5085 = vmatprep.subr.bf16.mxu0 0
      %5086 = vmatpush1.bf16.msra.mxu0 %v4187
      %5087 = vmatprep.subr.bf16.mxu0 0
      %5088 = vmatpush1.bf16.msra.mxu0 %v4188
      %5089 = vmatprep.subr.bf16.mxu0 0
      %5090 = vmatpush1.bf16.msra.mxu0 %v4189
      %5091 = vmatprep.subr.bf16.mxu0 0
      %5092 = vmatpush1.bf16.msra.mxu0 %v4190
      %5093 = vmatprep.subr.bf16.mxu0 0
      %5094 = vmatpush1.bf16.msra.mxu0 %v4191
      %5095 = vmatprep.mubr.bf16.mxu0 %v2911
      %5096 = vmatmul.mubr.bf16.gmra.mrb[0].mxu0 %v2910
      %v5097 = vpop.f32.mrb[0].mxu0
      %v5098 = vadd.f32 %v5057, %v5097
      %v5099 = vpop.f32.mrb[0].mxu0
      %v5100 = vpop.f32.mrb[0].mxu0
      %v5101 = vadd.f32 %v5060, %v5100
      %v5102 = vpop.f32.mrb[0].mxu0
      %5103 = vdwg.mxu0
      %v5104 = vpack.c.bf16 %v1600, %v1597
      %v5105 = vpack.c.bf16 %v1903, %v1899
      %v5106 = vpack.c.bf16 %v1905, %v1901
      %v5107 = vpack.c.bf16 %v2110, %v2106
      %v5108 = vpack.c.bf16 %v2112, %v2108
      %v5109 = vpack.c.bf16 %v2153, %v2149
      %v5110 = vpack.c.bf16 %v2155, %v2151
      %v5111 = vpack.c.bf16 %v5101, %v5098
      %v5112 = vld [vmem:[%s8] sm:$0xf]
      %v5113 = vld [vmem:[%s8 + $0x4] sm:$0xf]
      %v5114 = vld [vmem:[%s8 + $0x8] sm:$0xf]
      %v5115 = vld [vmem:[%s8 + $0xc] sm:$0xf]
      %v5116 = vld [vmem:[%s8 + $0x10] sm:$0xf]
      %v5117 = vld [vmem:[%s8 + $0x14] sm:$0xf]
      %v5118 = vld [vmem:[%s8 + $0x18] sm:$0xf]
      %v5119 = vld [vmem:[%s8 + $0x1c] sm:$0xf]
      %v5120 = vld [vmem:[%s8 + $0x20] sm:$0xf]
      %v5121 = vld [vmem:[%s8 + $0x24] sm:$0xf]
      %v5122 = vld [vmem:[%s8 + $0x28] sm:$0xf]
      %v5123 = vld [vmem:[%s8 + $0x2c] sm:$0xf]
      %v5124 = vld [vmem:[%s8 + $0x30] sm:$0xf]
      %v5125 = vld [vmem:[%s8 + $0x34] sm:$0xf]
      %v5126 = vld [vmem:[%s8 + $0x38] sm:$0xf]
      %v5127 = vld [vmem:[%s8 + $0x3c] sm:$0xf]
      %v5128 = vld [vmem:[%s8 + $0x40] sm:$0xf]
      %v5129 = vld [vmem:[%s8 + $0x44] sm:$0xf]
      %v5130 = vld [vmem:[%s8 + $0x48] sm:$0xf]
      %v5131 = vld [vmem:[%s8 + $0x4c] sm:$0xf]
      %v5132 = vld [vmem:[%s8 + $0x50] sm:$0xf]
      %v5133 = vld [vmem:[%s8 + $0x54] sm:$0xf]
      %v5134 = vld [vmem:[%s8 + $0x58] sm:$0xf]
      %v5135 = vld [vmem:[%s8 + $0x5c] sm:$0xf]
      %v5136 = vld [vmem:[%s8 + $0x60] sm:$0xf]
      %v5137 = vld [vmem:[%s8 + $0x64] sm:$0xf]
      %v5138 = vld [vmem:[%s8 + $0x68] sm:$0xf]
      %v5139 = vld [vmem:[%s8 + $0x6c] sm:$0xf]
      %v5140 = vld [vmem:[%s8 + $0x70] sm:$0xf]
      %v5141 = vld [vmem:[%s8 + $0x74] sm:$0xf]
      %v5142 = vld [vmem:[%s8 + $0x78] sm:$0xf]
      %v5143 = vld [vmem:[%s8 + $0x7c] sm:$0xf]
      %v5144 = vld [vmem:[%s8 + $0x80] sm:$0xf]
      %v5145 = vld [vmem:[%s8 + $0x84] sm:$0xf]
      %v5146 = vld [vmem:[%s8 + $0x88] sm:$0xf]
      %v5147 = vld [vmem:[%s8 + $0x8c] sm:$0xf]
      %v5148 = vld [vmem:[%s8 + $0x90] sm:$0xf]
      %v5149 = vld [vmem:[%s8 + $0x94] sm:$0xf]
      %v5150 = vld [vmem:[%s8 + $0x98] sm:$0xf]
      %v5151 = vld [vmem:[%s8 + $0x9c] sm:$0xf]
      %v5152 = vld [vmem:[%s8 + $0xa0] sm:$0xf]
      %v5153 = vld [vmem:[%s8 + $0xa4] sm:$0xf]
      %v5154 = vld [vmem:[%s8 + $0xa8] sm:$0xf]
      %v5155 = vld [vmem:[%s8 + $0xac] sm:$0xf]
      %v5156 = vld [vmem:[%s8 + $0xb0] sm:$0xf]
      %v5157 = vld [vmem:[%s8 + $0xb4] sm:$0xf]
      %v5158 = vld [vmem:[%s8 + $0xb8] sm:$0xf]
      %v5159 = vld [vmem:[%s8 + $0xbc] sm:$0xf]
      %v5160 = vld [vmem:[%s8 + $0xc0] sm:$0xf]
      %v5161 = vld [vmem:[%s8 + $0xc4] sm:$0xf]
      %v5162 = vld [vmem:[%s8 + $0xc8] sm:$0xf]
      %v5163 = vld [vmem:[%s8 + $0xcc] sm:$0xf]
      %v5164 = vld [vmem:[%s8 + $0xd0] sm:$0xf]
      %v5165 = vld [vmem:[%s8 + $0xd4] sm:$0xf]
      %v5166 = vld [vmem:[%s8 + $0xd8] sm:$0xf]
      %v5167 = vld [vmem:[%s8 + $0xdc] sm:$0xf]
      %v5168 = vld [vmem:[%s8 + $0xe0] sm:$0xf]
      %v5169 = vld [vmem:[%s8 + $0xe4] sm:$0xf]
      %v5170 = vld [vmem:[%s8 + $0xe8] sm:$0xf]
      %v5171 = vld [vmem:[%s8 + $0xec] sm:$0xf]
      %v5172 = vld [vmem:[%s8 + $0xf0] sm:$0xf]
      %v5173 = vld [vmem:[%s8 + $0xf4] sm:$0xf]
      %v5174 = vld [vmem:[%s8 + $0xf8] sm:$0xf]
      %v5175 = vld [vmem:[%s8 + $0xfc] sm:$0xf]
      %v5176 = vld [vmem:[%s8 + $0x100] sm:$0xf]
      %v5177 = vld [vmem:[%s8 + $0x104] sm:$0xf]
      %v5178 = vld [vmem:[%s8 + $0x108] sm:$0xf]
      %v5179 = vld [vmem:[%s8 + $0x10c] sm:$0xf]
      %v5180 = vld [vmem:[%s8 + $0x110] sm:$0xf]
      %v5181 = vld [vmem:[%s8 + $0x114] sm:$0xf]
      %v5182 = vld [vmem:[%s8 + $0x118] sm:$0xf]
      %v5183 = vld [vmem:[%s8 + $0x11c] sm:$0xf]
      %v5184 = vld [vmem:[%s8 + $0x120] sm:$0xf]
      %v5185 = vld [vmem:[%s8 + $0x124] sm:$0xf]
      %v5186 = vld [vmem:[%s8 + $0x128] sm:$0xf]
      %v5187 = vld [vmem:[%s8 + $0x12c] sm:$0xf]
      %v5188 = vld [vmem:[%s8 + $0x130] sm:$0xf]
      %v5189 = vld [vmem:[%s8 + $0x134] sm:$0xf]
      %v5190 = vld [vmem:[%s8 + $0x138] sm:$0xf]
      %v5191 = vld [vmem:[%s8 + $0x13c] sm:$0xf]
      %v5192 = vld [vmem:[%s8 + $0x140] sm:$0xf]
      %v5193 = vld [vmem:[%s8 + $0x144] sm:$0xf]
      %v5194 = vld [vmem:[%s8 + $0x148] sm:$0xf]
      %v5195 = vld [vmem:[%s8 + $0x14c] sm:$0xf]
      %v5196 = vld [vmem:[%s8 + $0x150] sm:$0xf]
      %v5197 = vld [vmem:[%s8 + $0x154] sm:$0xf]
      %v5198 = vld [vmem:[%s8 + $0x158] sm:$0xf]
      %v5199 = vld [vmem:[%s8 + $0x15c] sm:$0xf]
      %v5200 = vld [vmem:[%s8 + $0x160] sm:$0xf]
      %v5201 = vld [vmem:[%s8 + $0x164] sm:$0xf]
      %v5202 = vld [vmem:[%s8 + $0x168] sm:$0xf]
      %v5203 = vld [vmem:[%s8 + $0x16c] sm:$0xf]
      %v5204 = vld [vmem:[%s8 + $0x170] sm:$0xf]
      %v5205 = vld [vmem:[%s8 + $0x174] sm:$0xf]
      %v5206 = vld [vmem:[%s8 + $0x178] sm:$0xf]
      %v5207 = vld [vmem:[%s8 + $0x17c] sm:$0xf]
      %v5208 = vld [vmem:[%s8 + $0x180] sm:$0xf]
      %v5209 = vld [vmem:[%s8 + $0x184] sm:$0xf]
      %v5210 = vld [vmem:[%s8 + $0x188] sm:$0xf]
      %v5211 = vld [vmem:[%s8 + $0x18c] sm:$0xf]
      %v5212 = vld [vmem:[%s8 + $0x190] sm:$0xf]
      %v5213 = vld [vmem:[%s8 + $0x194] sm:$0xf]
      %v5214 = vld [vmem:[%s8 + $0x198] sm:$0xf]
      %v5215 = vld [vmem:[%s8 + $0x19c] sm:$0xf]
      %v5216 = vld [vmem:[%s8 + $0x1a0] sm:$0xf]
      %v5217 = vld [vmem:[%s8 + $0x1a4] sm:$0xf]
      %v5218 = vld [vmem:[%s8 + $0x1a8] sm:$0xf]
      %v5219 = vld [vmem:[%s8 + $0x1ac] sm:$0xf]
      %v5220 = vld [vmem:[%s8 + $0x1b0] sm:$0xf]
      %v5221 = vld [vmem:[%s8 + $0x1b4] sm:$0xf]
      %v5222 = vld [vmem:[%s8 + $0x1b8] sm:$0xf]
      %v5223 = vld [vmem:[%s8 + $0x1bc] sm:$0xf]
      %v5224 = vld [vmem:[%s8 + $0x1c0] sm:$0xf]
      %v5225 = vld [vmem:[%s8 + $0x1c4] sm:$0xf]
      %v5226 = vld [vmem:[%s8 + $0x1c8] sm:$0xf]
      %v5227 = vld [vmem:[%s8 + $0x1cc] sm:$0xf]
      %v5228 = vld [vmem:[%s8 + $0x1d0] sm:$0xf]
      %v5229 = vld [vmem:[%s8 + $0x1d4] sm:$0xf]
      %v5230 = vld [vmem:[%s8 + $0x1d8] sm:$0xf]
      %v5231 = vld [vmem:[%s8 + $0x1dc] sm:$0xf]
      %v5352 = vunpack.c.l.b16 %v5112
      %v5353 = vunpack.c.l.b16 %v5113
      %v5354 = vunpack.c.l.b16 %v5114
      %v5355 = vunpack.c.l.b16 %v5115
      %v5356 = vunpack.c.l.b16 %v5116
      %v5357 = vunpack.c.l.b16 %v5117
      %v5358 = vunpack.c.l.b16 %v5118
      %v5359 = vunpack.c.l.b16 %v5119
      %v5360 = vunpack.c.l.b16 %v5120
      %v5361 = vunpack.c.l.b16 %v5121
      %v5362 = vunpack.c.l.b16 %v5122
      %v5363 = vunpack.c.l.b16 %v5123
      %v5364 = vunpack.c.l.b16 %v5124
      %v5365 = vunpack.c.l.b16 %v5125
      %v5366 = vunpack.c.l.b16 %v5126
      %v5367 = vunpack.c.l.b16 %v5127
      %v5368 = vunpack.c.l.b16 %v5128
      %v5369 = vunpack.c.l.b16 %v5129
      %v5370 = vunpack.c.l.b16 %v5130
      %v5371 = vunpack.c.l.b16 %v5131
      %v5372 = vunpack.c.l.b16 %v5132
      %v5373 = vunpack.c.l.b16 %v5133
      %v5374 = vunpack.c.l.b16 %v5134
      %v5375 = vunpack.c.l.b16 %v5135
      %v5376 = vunpack.c.l.b16 %v5136
      %v5377 = vunpack.c.l.b16 %v5137
      %v5378 = vunpack.c.l.b16 %v5138
      %v5379 = vunpack.c.l.b16 %v5139
      %v5380 = vunpack.c.l.b16 %v5140
      %v5381 = vunpack.c.l.b16 %v5141
      %v5382 = vunpack.c.l.b16 %v5142
      %v5383 = vunpack.c.l.b16 %v5143
      %v5384 = vunpack.c.l.b16 %v5144
      %v5385 = vunpack.c.l.b16 %v5145
      %v5386 = vunpack.c.l.b16 %v5146
      %v5387 = vunpack.c.l.b16 %v5147
      %v5388 = vunpack.c.l.b16 %v5148
      %v5389 = vunpack.c.l.b16 %v5149
      %v5390 = vunpack.c.l.b16 %v5150
      %v5391 = vunpack.c.l.b16 %v5151
      %v5392 = vunpack.c.l.b16 %v5152
      %v5393 = vunpack.c.l.b16 %v5153
      %v5394 = vunpack.c.l.b16 %v5154
      %v5395 = vunpack.c.l.b16 %v5155
      %v5396 = vunpack.c.l.b16 %v5156
      %v5397 = vunpack.c.l.b16 %v5157
      %v5398 = vunpack.c.l.b16 %v5158
      %v5399 = vunpack.c.l.b16 %v5159
      %v5400 = vunpack.c.l.b16 %v5160
      %v5401 = vunpack.c.l.b16 %v5161
      %v5402 = vunpack.c.l.b16 %v5162
      %v5403 = vunpack.c.l.b16 %v5163
      %v5404 = vunpack.c.l.b16 %v5164
      %v5405 = vunpack.c.l.b16 %v5165
      %v5406 = vunpack.c.l.b16 %v5166
      %v5407 = vunpack.c.l.b16 %v5167
      %v5408 = vunpack.c.l.b16 %v5168
      %v5409 = vunpack.c.l.b16 %v5169
      %v5410 = vunpack.c.l.b16 %v5170
      %v5411 = vunpack.c.l.b16 %v5171
      %v5412 = vunpack.c.l.b16 %v5172
      %v5413 = vunpack.c.l.b16 %v5173
      %v5414 = vunpack.c.l.b16 %v5174
      %v5415 = vunpack.c.l.b16 %v5175
      %v5416 = vunpack.c.l.b16 %v5176
      %v5417 = vunpack.c.l.b16 %v5177
      %v5418 = vunpack.c.l.b16 %v5178
      %v5419 = vunpack.c.l.b16 %v5179
      %v5420 = vunpack.c.l.b16 %v5180
      %v5421 = vunpack.c.l.b16 %v5181
      %v5422 = vunpack.c.l.b16 %v5182
      %v5423 = vunpack.c.l.b16 %v5183
      %v5424 = vunpack.c.l.b16 %v5184
      %v5425 = vunpack.c.l.b16 %v5185
      %v5426 = vunpack.c.l.b16 %v5186
      %v5427 = vunpack.c.l.b16 %v5187
      %v5428 = vunpack.c.l.b16 %v5188
      %v5429 = vunpack.c.l.b16 %v5189
      %v5430 = vunpack.c.l.b16 %v5190
      %v5431 = vunpack.c.l.b16 %v5191
      %v5432 = vunpack.c.l.b16 %v5192
      %v5433 = vunpack.c.l.b16 %v5193
      %v5434 = vunpack.c.l.b16 %v5194
      %v5435 = vunpack.c.l.b16 %v5195
      %v5436 = vunpack.c.l.b16 %v5196
      %v5437 = vunpack.c.l.b16 %v5197
      %v5438 = vunpack.c.l.b16 %v5198
      %v5439 = vunpack.c.l.b16 %v5199
      %v5440 = vunpack.c.l.b16 %v5200
      %v5441 = vunpack.c.l.b16 %v5201
      %v5442 = vunpack.c.l.b16 %v5202
      %v5443 = vunpack.c.l.b16 %v5203
      %v5444 = vunpack.c.l.b16 %v5204
      %v5445 = vunpack.c.l.b16 %v5205
      %v5446 = vunpack.c.l.b16 %v5206
      %v5447 = vunpack.c.l.b16 %v5207
      %v5448 = vunpack.c.l.b16 %v5208
      %v5449 = vunpack.c.l.b16 %v5209
      %v5450 = vunpack.c.l.b16 %v5210
      %v5451 = vunpack.c.l.b16 %v5211
      %v5452 = vunpack.c.l.b16 %v5212
      %v5453 = vunpack.c.l.b16 %v5213
      %v5454 = vunpack.c.l.b16 %v5214
      %v5455 = vunpack.c.l.b16 %v5215
      %v5456 = vunpack.c.l.b16 %v5216
      %v5457 = vunpack.c.l.b16 %v5217
      %v5458 = vunpack.c.l.b16 %v5218
      %v5459 = vunpack.c.l.b16 %v5219
      %v5460 = vunpack.c.l.b16 %v5220
      %v5461 = vunpack.c.l.b16 %v5221
      %v5462 = vunpack.c.l.b16 %v5222
      %v5463 = vunpack.c.l.b16 %v5223
      %v5464 = vunpack.c.l.b16 %v5224
      %v5465 = vunpack.c.l.b16 %v5225
      %v5466 = vunpack.c.l.b16 %v5226
      %v5467 = vunpack.c.l.b16 %v5227
      %v5468 = vunpack.c.l.b16 %v5228
      %v5469 = vunpack.c.l.b16 %v5229
      %v5470 = vunpack.c.l.b16 %v5230
      %v5471 = vunpack.c.l.b16 %v5231
      %v5472 = vpack.c.b16 %v5353, %v5352
      %v5473 = vpack.c.b16 %v5355, %v5354
      %v5474 = vpack.c.b16 %v5357, %v5356
      %v5475 = vpack.c.b16 %v5359, %v5358
      %v5476 = vpack.c.b16 %v5361, %v5360
      %v5477 = vpack.c.b16 %v5363, %v5362
      %v5478 = vpack.c.b16 %v5365, %v5364
      %v5479 = vpack.c.b16 %v5367, %v5366
      %v5480 = vpack.c.b16 %v5369, %v5368
      %v5481 = vpack.c.b16 %v5371, %v5370
      %v5482 = vpack.c.b16 %v5373, %v5372
      %v5483 = vpack.c.b16 %v5375, %v5374
      %v5484 = vpack.c.b16 %v5377, %v5376
      %v5485 = vpack.c.b16 %v5379, %v5378
      %v5486 = vpack.c.b16 %v5381, %v5380
      %v5487 = vpack.c.b16 %v5383, %v5382
      %v5488 = vpack.c.b16 %v5385, %v5384
      %v5489 = vpack.c.b16 %v5387, %v5386
      %v5490 = vpack.c.b16 %v5389, %v5388
      %v5491 = vpack.c.b16 %v5391, %v5390
      %v5492 = vpack.c.b16 %v5393, %v5392
      %v5493 = vpack.c.b16 %v5395, %v5394
      %v5494 = vpack.c.b16 %v5397, %v5396
      %v5495 = vpack.c.b16 %v5399, %v5398
      %v5496 = vpack.c.b16 %v5401, %v5400
      %v5497 = vpack.c.b16 %v5403, %v5402
      %v5498 = vpack.c.b16 %v5405, %v5404
      %v5499 = vpack.c.b16 %v5407, %v5406
      %v5500 = vpack.c.b16 %v5409, %v5408
      %v5501 = vpack.c.b16 %v5411, %v5410
      %v5502 = vpack.c.b16 %v5413, %v5412
      %v5503 = vpack.c.b16 %v5415, %v5414
      %v5504 = vpack.c.b16 %v5417, %v5416
      %v5505 = vpack.c.b16 %v5419, %v5418
      %v5506 = vpack.c.b16 %v5421, %v5420
      %v5507 = vpack.c.b16 %v5423, %v5422
      %v5508 = vpack.c.b16 %v5425, %v5424
      %v5509 = vpack.c.b16 %v5427, %v5426
      %v5510 = vpack.c.b16 %v5429, %v5428
      %v5511 = vpack.c.b16 %v5431, %v5430
      %v5512 = vpack.c.b16 %v5433, %v5432
      %v5513 = vpack.c.b16 %v5435, %v5434
      %v5514 = vpack.c.b16 %v5437, %v5436
      %v5515 = vpack.c.b16 %v5439, %v5438
      %v5516 = vpack.c.b16 %v5441, %v5440
      %v5517 = vpack.c.b16 %v5443, %v5442
      %v5518 = vpack.c.b16 %v5445, %v5444
      %v5519 = vpack.c.b16 %v5447, %v5446
      %v5520 = vpack.c.b16 %v5449, %v5448
      %v5521 = vpack.c.b16 %v5451, %v5450
      %v5522 = vpack.c.b16 %v5453, %v5452
      %v5523 = vpack.c.b16 %v5455, %v5454
      %v5524 = vpack.c.b16 %v5457, %v5456
      %v5525 = vpack.c.b16 %v5459, %v5458
      %v5526 = vpack.c.b16 %v5461, %v5460
      %v5527 = vpack.c.b16 %v5463, %v5462
      %v5528 = vpack.c.b16 %v5465, %v5464
      %v5529 = vpack.c.b16 %v5467, %v5466
      %v5530 = vpack.c.b16 %v5469, %v5468
      %v5531 = vpack.c.b16 %v5471, %v5470
      %v5593 = vsel %vm2067, %v5111, 0
      %5595 = vmatprep.subr.bf16.mxu0 0
      %5596 = vmatpush1.bf16.msra.mxu0 %v5472
      %5597 = vmatprep.subr.bf16.mxu0 0
      %5598 = vmatpush1.bf16.msra.mxu0 %v5473
      %5599 = vmatprep.subr.bf16.mxu0 0
      %5600 = vmatpush1.bf16.msra.mxu0 %v5474
      %5601 = vmatprep.subr.bf16.mxu0 0
      %5602 = vmatpush1.bf16.msra.mxu0 %v5475
      %5603 = vmatprep.subr.bf16.mxu0 0
      %5604 = vmatpush1.bf16.msra.mxu0 %v5476
      %5605 = vmatprep.subr.bf16.mxu0 0
      %5606 = vmatpush1.bf16.msra.mxu0 %v5477
      %5607 = vmatprep.subr.bf16.mxu0 0
      %5608 = vmatpush1.bf16.msra.mxu0 %v5478
      %5609 = vmatprep.subr.bf16.mxu0 0
      %5610 = vmatpush1.bf16.msra.mxu0 %v5479
      %5611 = vmatprep.subr.bf16.mxu0 0
      %5612 = vmatpush1.bf16.msra.mxu0 %v5480
      %5613 = vmatprep.subr.bf16.mxu0 0
      %5614 = vmatpush1.bf16.msra.mxu0 %v5481
      %5615 = vmatprep.subr.bf16.mxu0 0
      %5616 = vmatpush1.bf16.msra.mxu0 %v5482
      %5617 = vmatprep.subr.bf16.mxu0 0
      %5618 = vmatpush1.bf16.msra.mxu0 %v5483
      %5619 = vmatprep.subr.bf16.mxu0 0
      %5620 = vmatpush1.bf16.msra.mxu0 %v5484
      %5621 = vmatprep.subr.bf16.mxu0 0
      %5622 = vmatpush1.bf16.msra.mxu0 %v5485
      %5623 = vmatprep.subr.bf16.mxu0 0
      %5624 = vmatpush1.bf16.msra.mxu0 %v5486
      %5625 = vmatprep.subr.bf16.mxu0 0
      %5626 = vmatpush1.bf16.msra.mxu0 %v5487
      %5627 = vmatprep.mubr.bf16.mxu0 %v5105
      %5628 = vmatmul.mubr.bf16.gmra.mrb[0].mxu0 %v5104
      %v5629 = vpop.f32.mrb[0].mxu0
      %v5630 = vadd.f32 0.0, %v5629
      %v5631 = vpop.f32.mrb[0].mxu0
      %v5632 = vpop.f32.mrb[0].mxu0
      %v5633 = vadd.f32 0.0, %v5632
      %v5634 = vpop.f32.mrb[0].mxu0
      %5635 = vdwg.mxu0
      %5636 = vmatprep.subr.bf16.mxu0 0
      %5637 = vmatpush1.bf16.msra.mxu0 %v5488
      %5638 = vmatprep.subr.bf16.mxu0 0
      %5639 = vmatpush1.bf16.msra.mxu0 %v5489
      %5640 = vmatprep.subr.bf16.mxu0 0
      %5641 = vmatpush1.bf16.msra.mxu0 %v5490
      %5642 = vmatprep.subr.bf16.mxu0 0
      %5643 = vmatpush1.bf16.msra.mxu0 %v5491
      %5644 = vmatprep.subr.bf16.mxu0 0
      %5645 = vmatpush1.bf16.msra.mxu0 %v5492
      %5646 = vmatprep.subr.bf16.mxu0 0
      %5647 = vmatpush1.bf16.msra.mxu0 %v5493
      %5648 = vmatprep.subr.bf16.mxu0 0
      %5649 = vmatpush1.bf16.msra.mxu0 %v5494
      %5650 = vmatprep.subr.bf16.mxu0 0
      %5651 = vmatpush1.bf16.msra.mxu0 %v5495
      %5652 = vmatprep.subr.bf16.mxu0 0
      %5653 = vmatpush1.bf16.msra.mxu0 %v5496
      %5654 = vmatprep.subr.bf16.mxu0 0
      %5655 = vmatpush1.bf16.msra.mxu0 %v5497
      %5656 = vmatprep.subr.bf16.mxu0 0
      %5657 = vmatpush1.bf16.msra.mxu0 %v5498
      %5658 = vmatprep.subr.bf16.mxu0 0
      %5659 = vmatpush1.bf16.msra.mxu0 %v5499
      %5660 = vmatprep.subr.bf16.mxu0 0
      %5661 = vmatpush1.bf16.msra.mxu0 %v5500
      %5662 = vmatprep.subr.bf16.mxu0 0
      %5663 = vmatpush1.bf16.msra.mxu0 %v5501
      %5664 = vmatprep.subr.bf16.mxu0 0
      %5665 = vmatpush1.bf16.msra.mxu0 %v5502
      %5666 = vmatprep.subr.bf16.mxu0 0
      %5667 = vmatpush1.bf16.msra.mxu0 %v5503
      %5668 = vmatprep.mubr.bf16.mxu0 %v5107
      %5669 = vmatmul.mubr.bf16.gmra.mrb[0].mxu0 %v5106
      %v5670 = vpop.f32.mrb[0].mxu0
      %v5671 = vadd.f32 %v5630, %v5670
      %v5672 = vpop.f32.mrb[0].mxu0
      %v5673 = vpop.f32.mrb[0].mxu0
      %v5674 = vadd.f32 %v5633, %v5673
      %v5675 = vpop.f32.mrb[0].mxu0
      %5676 = vdwg.mxu0
      %5677 = vmatprep.subr.bf16.mxu0 0
      %5678 = vmatpush1.bf16.msra.mxu0 %v5504
      %5679 = vmatprep.subr.bf16.mxu0 0
      %5680 = vmatpush1.bf16.msra.mxu0 %v5505
      %5681 = vmatprep.subr.bf16.mxu0 0
      %5682 = vmatpush1.bf16.msra.mxu0 %v5506
      %5683 = vmatprep.subr.bf16.mxu0 0
      %5684 = vmatpush1.bf16.msra.mxu0 %v5507
      %5685 = vmatprep.subr.bf16.mxu0 0
      %5686 = vmatpush1.bf16.msra.mxu0 %v5508
      %5687 = vmatprep.subr.bf16.mxu0 0
      %5688 = vmatpush1.bf16.msra.mxu0 %v5509
      %5689 = vmatprep.subr.bf16.mxu0 0
      %5690 = vmatpush1.bf16.msra.mxu0 %v5510
      %5691 = vmatprep.subr.bf16.mxu0 0
      %5692 = vmatpush1.bf16.msra.mxu0 %v5511
      %5693 = vmatprep.subr.bf16.mxu0 0
      %5694 = vmatpush1.bf16.msra.mxu0 %v5512
      %5695 = vmatprep.subr.bf16.mxu0 0
      %5696 = vmatpush1.bf16.msra.mxu0 %v5513
      %5697 = vmatprep.subr.bf16.mxu0 0
      %5698 = vmatpush1.bf16.msra.mxu0 %v5514
      %5699 = vmatprep.subr.bf16.mxu0 0
      %5700 = vmatpush1.bf16.msra.mxu0 %v5515
      %5701 = vmatprep.subr.bf16.mxu0 0
      %5702 = vmatpush1.bf16.msra.mxu0 %v5516
      %5703 = vmatprep.subr.bf16.mxu0 0
      %5704 = vmatpush1.bf16.msra.mxu0 %v5517
      %5705 = vmatprep.subr.bf16.mxu0 0
      %5706 = vmatpush1.bf16.msra.mxu0 %v5518
      %5707 = vmatprep.subr.bf16.mxu0 0
      %5708 = vmatpush1.bf16.msra.mxu0 %v5519
      %5709 = vmatprep.mubr.bf16.mxu0 %v5109
      %5710 = vmatmul.mubr.bf16.gmra.mrb[0].mxu0 %v5108
      %v5711 = vpop.f32.mrb[0].mxu0
      %v5712 = vadd.f32 %v5671, %v5711
      %v5713 = vpop.f32.mrb[0].mxu0
      %v5714 = vpop.f32.mrb[0].mxu0
      %v5715 = vadd.f32 %v5674, %v5714
      %v5716 = vpop.f32.mrb[0].mxu0
      %5717 = vdwg.mxu0
      %5718 = vmatprep.subr.bf16.mxu0 0
      %5719 = vmatpush1.bf16.msra.mxu0 %v5520
      %5720 = vmatprep.subr.bf16.mxu0 0
      %5721 = vmatpush1.bf16.msra.mxu0 %v5521
      %5722 = vmatprep.subr.bf16.mxu0 0
      %5723 = vmatpush1.bf16.msra.mxu0 %v5522
      %5724 = vmatprep.subr.bf16.mxu0 0
      %5725 = vmatpush1.bf16.msra.mxu0 %v5523
      %5726 = vmatprep.subr.bf16.mxu0 0
      %5727 = vmatpush1.bf16.msra.mxu0 %v5524
      %5728 = vmatprep.subr.bf16.mxu0 0
      %5729 = vmatpush1.bf16.msra.mxu0 %v5525
      %5730 = vmatprep.subr.bf16.mxu0 0
      %5731 = vmatpush1.bf16.msra.mxu0 %v5526
      %5732 = vmatprep.subr.bf16.mxu0 0
      %5733 = vmatpush1.bf16.msra.mxu0 %v5527
      %5734 = vmatprep.subr.bf16.mxu0 0
      %5735 = vmatpush1.bf16.msra.mxu0 %v5528
      %5736 = vmatprep.subr.bf16.mxu0 0
      %5737 = vmatpush1.bf16.msra.mxu0 %v5529
      %5738 = vmatprep.subr.bf16.mxu0 0
      %5739 = vmatpush1.bf16.msra.mxu0 %v5530
      %5740 = vmatprep.subr.bf16.mxu0 0
      %5741 = vmatpush1.bf16.msra.mxu0 %v5531
      %5742 = vmatprep.subr.bf16.mxu0 0
      %5743 = vmatpush1.bf16.msra.mxu0 0
      %5744 = vmatprep.subr.bf16.mxu0 0
      %5745 = vmatpush1.bf16.msra.mxu0 0
      %5746 = vmatprep.subr.bf16.mxu0 0
      %5747 = vmatpush1.bf16.msra.mxu0 0
      %5748 = vmatprep.subr.bf16.mxu0 0
      %5749 = vmatpush1.bf16.msra.mxu0 0
      %5750 = vmatprep.mubr.bf16.mxu0 %v5593
      %5751 = vmatmul.mubr.bf16.gmra.mrb[0].mxu0 %v5110
      %v5752 = vpop.f32.mrb[0].mxu0
      %v5753 = vadd.f32 %v5712, %v5752
      %v5754 = vpop.f32.mrb[0].mxu0
      %v5755 = vpop.f32.mrb[0].mxu0
      %v5756 = vadd.f32 %v5715, %v5755
      %v5757 = vpop.f32.mrb[0].mxu0
      %5758 = vdwg.mxu0
      %v5759 = vadd.f32 %v811, %v5753
      %v5760 = vadd.f32 %v816, %v5756
      %v5761 = vmax.f32 %v5759, 0.0
      %v5762 = vmax.f32 %v5760, 0.0
      %v5763 = vld [vmem:[%s9] sm:$0xff]
      %v5764 = vld [vmem:[%s9 + $0x8] sm:$0xff]
      %v5765 = vld [vmem:[%s9 + $0x10] sm:$0xff]
      %v5766 = vld [vmem:[%s9 + $0x18] sm:$0xff]
      %v5767 = vld [vmem:[%s9 + $0x20] sm:$0xff]
      %v5768 = vld [vmem:[%s9 + $0x28] sm:$0xff]
      %v5769 = vld [vmem:[%s9 + $0x30] sm:$0xff]
      %v5770 = vld [vmem:[%s9 + $0x38] sm:$0xff]
      %v5771 = vld [vmem:[%s10] sm:$0x1]
      %v5773 = vlaneseq
      %v5774 = vshrl.u32 %v5773, 7
      %v5775 = vsub.s32 0, %v5774
      %v5776 = vrot.slane %v5771, %v5775
      %v5779 = vsel %vm2067, %v5761, 0
      %v5782 = vsel %vm2067, %v5762, 0
      %5784 = vmatprep.subr.mxu0 0.0
      %5785 = vmatpush1.msra.mxu0 %v5763
      %5786 = vmatprep.subr.mxu0 0.0
      %5787 = vmatpush1.msra.mxu0 %v5764
      %5788 = vmatprep.subr.mxu0 0.0
      %5789 = vmatpush1.msra.mxu0 %v5765
      %5790 = vmatprep.subr.mxu0 0.0
      %5791 = vmatpush1.msra.mxu0 %v5766
      %5792 = vmatprep.subr.mxu0 0.0
      %5793 = vmatpush1.msra.mxu0 %v5767
      %5794 = vmatprep.subr.mxu0 0.0
      %5795 = vmatpush1.msra.mxu0 %v5768
      %5796 = vmatprep.subr.mxu0 0.0
      %5797 = vmatpush1.msra.mxu0 %v5769
      %5798 = vmatprep.subr.mxu0 0.0
      %5799 = vmatpush1.msra.mxu0 %v5770
      %5800 = vmatprep.subr.mxu0 0.0
      %5801 = vmatpush1.msra.mxu0 0.0
      %5802 = vmatprep.subr.mxu0 0.0
      %5803 = vmatpush1.msra.mxu0 0.0
      %5804 = vmatprep.subr.mxu0 0.0
      %5805 = vmatpush1.msra.mxu0 0.0
      %5806 = vmatprep.subr.mxu0 0.0
      %5807 = vmatpush1.msra.mxu0 0.0
      %5808 = vmatprep.subr.mxu0 0.0
      %5809 = vmatpush1.msra.mxu0 0.0
      %5810 = vmatprep.subr.mxu0 0.0
      %5811 = vmatpush1.msra.mxu0 0.0
      %5812 = vmatprep.subr.mxu0 0.0
      %5813 = vmatpush1.msra.mxu0 0.0
      %5814 = vmatprep.subr.mxu0 0.0
      %5815 = vmatpush1.msra.mxu0 0.0
      %5816 = vmatprep.subr.mxu0 0.0
      %5817 = vmatpush1.msra.mxu0 0.0
      %5818 = vmatprep.subr.mxu0 0.0
      %5819 = vmatpush1.msra.mxu0 0.0
      %5820 = vmatprep.subr.mxu0 0.0
      %5821 = vmatpush1.msra.mxu0 0.0
      %5822 = vmatprep.subr.mxu0 0.0
      %5823 = vmatpush1.msra.mxu0 0.0
      %5824 = vmatprep.subr.mxu0 0.0
      %5825 = vmatpush1.msra.mxu0 0.0
      %5826 = vmatprep.subr.mxu0 0.0
      %5827 = vmatpush1.msra.mxu0 0.0
      %5828 = vmatprep.subr.mxu0 0.0
      %5829 = vmatpush1.msra.mxu0 0.0
      %5830 = vmatprep.subr.mxu0 0.0
      %5831 = vmatpush1.msra.mxu0 0.0
      %5832 = vmatprep.subr.mxu0 0.0
      %5833 = vmatpush1.msra.mxu0 0.0
      %5834 = vmatprep.subr.mxu0 0.0
      %5835 = vmatpush1.msra.mxu0 0.0
      %5836 = vmatprep.subr.mxu0 0.0
      %5837 = vmatpush1.msra.mxu0 0.0
      %5838 = vmatprep.subr.mxu0 0.0
      %5839 = vmatpush1.msra.mxu0 0.0
      %5840 = vmatprep.subr.mxu0 0.0
      %5841 = vmatpush1.msra.mxu0 0.0
      %5842 = vmatprep.subr.mxu0 0.0
      %5843 = vmatpush1.msra.mxu0 0.0
      %5844 = vmatprep.subr.mxu0 0.0
      %5845 = vmatpush1.msra.mxu0 0.0
      %5846 = vmatprep.subr.mxu0 0.0
      %5847 = vmatpush1.msra.mxu0 0.0
      %5848 = vmatprep.mubr.f32.mxu0 0.0
      %5849 = vmatmul.mubr.f32.gmra.mrb[0].mxu0 %v5779
      %v5850 = vpop.f32.mrb[0].mxu0
      %v5851 = vadd.f32 %v5776, %v5850
      %v5852 = vpop.f32.mrb[0].mxu0
      %5853 = vmatprep.mubr.f32.mxu0 0.0
      %5854 = vmatmul.mubr.f32.gmra.mrb[0].mxu0 %v5782
      %v5855 = vpop.f32.mrb[0].mxu0
      %v5856 = vadd.f32 %v5776, %v5855
      %v5857 = vpop.f32.mrb[0].mxu0
      %5858 = vdwg.mxu0
      %v5860 = vsel %vm620, %v5851, 0
      %v5863 = vsel %vm620, %v5856, 0
      %5865 = vmatprep.subr.mxu0 0.0
      %5866 = vmatpush1.msra.mxu0 %v626
      %5867 = vmatprep.subr.mxu0 0.0
      %5868 = vmatpush1.msra.mxu0 0.0
      %5869 = vmatprep.subr.mxu0 0.0
      %5870 = vmatpush1.msra.mxu0 0.0
      %5871 = vmatprep.subr.mxu0 0.0
      %5872 = vmatpush1.msra.mxu0 0.0
      %5873 = vmatprep.subr.mxu0 0.0
      %5874 = vmatpush1.msra.mxu0 0.0
      %5875 = vmatprep.subr.mxu0 0.0
      %5876 = vmatpush1.msra.mxu0 0.0
      %5877 = vmatprep.subr.mxu0 0.0
      %5878 = vmatpush1.msra.mxu0 0.0
      %5879 = vmatprep.subr.mxu0 0.0
      %5880 = vmatpush1.msra.mxu0 0.0
      %5881 = vmatprep.subr.mxu0 0.0
      %5882 = vmatpush1.msra.mxu0 0.0
      %5883 = vmatprep.subr.mxu0 0.0
      %5884 = vmatpush1.msra.mxu0 0.0
      %5885 = vmatprep.subr.mxu0 0.0
      %5886 = vmatpush1.msra.mxu0 0.0
      %5887 = vmatprep.subr.mxu0 0.0
      %5888 = vmatpush1.msra.mxu0 0.0
      %5889 = vmatprep.subr.mxu0 0.0
      %5890 = vmatpush1.msra.mxu0 0.0
      %5891 = vmatprep.subr.mxu0 0.0
      %5892 = vmatpush1.msra.mxu0 0.0
      %5893 = vmatprep.subr.mxu0 0.0
      %5894 = vmatpush1.msra.mxu0 0.0
      %5895 = vmatprep.subr.mxu0 0.0
      %5896 = vmatpush1.msra.mxu0 0.0
      %5897 = vmatprep.subr.mxu0 0.0
      %5898 = vmatpush1.msra.mxu0 0.0
      %5899 = vmatprep.subr.mxu0 0.0
      %5900 = vmatpush1.msra.mxu0 0.0
      %5901 = vmatprep.subr.mxu0 0.0
      %5902 = vmatpush1.msra.mxu0 0.0
      %5903 = vmatprep.subr.mxu0 0.0
      %5904 = vmatpush1.msra.mxu0 0.0
      %5905 = vmatprep.subr.mxu0 0.0
      %5906 = vmatpush1.msra.mxu0 0.0
      %5907 = vmatprep.subr.mxu0 0.0
      %5908 = vmatpush1.msra.mxu0 0.0
      %5909 = vmatprep.subr.mxu0 0.0
      %5910 = vmatpush1.msra.mxu0 0.0
      %5911 = vmatprep.subr.mxu0 0.0
      %5912 = vmatpush1.msra.mxu0 0.0
      %5913 = vmatprep.subr.mxu0 0.0
      %5914 = vmatpush1.msra.mxu0 0.0
      %5915 = vmatprep.subr.mxu0 0.0
      %5916 = vmatpush1.msra.mxu0 0.0
      %5917 = vmatprep.subr.mxu0 0.0
      %5918 = vmatpush1.msra.mxu0 0.0
      %5919 = vmatprep.subr.mxu0 0.0
      %5920 = vmatpush1.msra.mxu0 0.0
      %5921 = vmatprep.subr.mxu0 0.0
      %5922 = vmatpush1.msra.mxu0 0.0
      %5923 = vmatprep.subr.mxu0 0.0
      %5924 = vmatpush1.msra.mxu0 0.0
      %5925 = vmatprep.subr.mxu0 0.0
      %5926 = vmatpush1.msra.mxu0 0.0
      %5927 = vmatprep.subr.mxu0 0.0
      %5928 = vmatpush1.msra.mxu0 0.0
      %5929 = vmatprep.mubr.f32.mxu0 0.0
      %5930 = vmatmul.mubr.f32.gmra.mrb[0].mxu0 %v5860
      %v5931 = vpop.f32.mrb[0].mxu0
      %v5932 = vadd.f32 %v610, %v5931
      %v5933 = vpop.f32.mrb[0].mxu0
      %5934 = vmatprep.mubr.f32.mxu0 0.0
      %5935 = vmatmul.mubr.f32.gmra.mrb[0].mxu0 %v5863
      %v5936 = vpop.f32.mrb[0].mxu0
      %v5937 = vadd.f32 %v610, %v5936
      %v5938 = vpop.f32.mrb[0].mxu0
      %5939 = vdwg.mxu0
      %5942 = vrot.lane.b32.xlu0 %v5932, 126
      %v5943 = vpop.permute.xlu0 %5942
      %5944 = vrot.lane.b32.xlu0 %v5937, 126
      %v5945 = vpop.permute.xlu0 %5944
      %v5948 = vrcp.pop %v5943
      %v5949 = vmul.f32 %v5932, %v5948
      %v5950 = vrcp.pop %v5945
      %v5951 = vmul.f32 %v5937, %v5950
      %v5952 = vmax.f32 %v5949, 0.0
      %v5953 = vmax.f32 %v5951, 0.0
      %v5954 = vmin.f32 %v5952, 127.0
      %v5955 = vmin.f32 %v5953, 127.0
      %5956 = vrot.lane.b32.xlu0 %v5932, 127
      %v5957 = vpop.permute.xlu0 %5956
      %5958 = vrot.lane.b32.xlu0 %v5937, 127
      %v5959 = vpop.permute.xlu0 %5958
      %v5962 = vrcp.pop %v5957
      %v5963 = vmul.f32 %v5932, %v5962
      %v5964 = vrcp.pop %v5959
      %v5965 = vmul.f32 %v5937, %v5964
      %v5966 = vmax.f32 %v5963, 0.0
      %v5967 = vmax.f32 %v5965, 0.0
      %v5968 = vmin.f32 %v5966, 127.0
      %v5969 = vmin.f32 %v5967, 127.0
      %v5970 = vld [vmem:[%s11] sm:$0x7]
      %v5971 = vld [vmem:[%s577] sm:$0x1]
      %v5973 = vlaneseq
      %v5974 = vshrl.u32 %v5973, 7
      %v5975 = vsub.s32 0, %v5974
      %v5976 = vrot.slane %v5971, %v5975
      %v5979 = vsel %vm625, %v5970, 0
      %5981 = vmatprep.subr.mxu0 0.0
      %5982 = vmatpush1.msra.mxu0 %v5979
      %5983 = vmatprep.subr.mxu0 0.0
      %5984 = vmatpush1.msra.mxu0 0.0
      %5985 = vmatprep.subr.mxu0 0.0
      %5986 = vmatpush1.msra.mxu0 0.0
      %5987 = vmatprep.subr.mxu0 0.0
      %5988 = vmatpush1.msra.mxu0 0.0
      %5989 = vmatprep.subr.mxu0 0.0
      %5990 = vmatpush1.msra.mxu0 0.0
      %5991 = vmatprep.subr.mxu0 0.0
      %5992 = vmatpush1.msra.mxu0 0.0
      %5993 = vmatprep.subr.mxu0 0.0
      %5994 = vmatpush1.msra.mxu0 0.0
      %5995 = vmatprep.subr.mxu0 0.0
      %5996 = vmatpush1.msra.mxu0 0.0
      %5997 = vmatprep.subr.mxu0 0.0
      %5998 = vmatpush1.msra.mxu0 0.0
      %5999 = vmatprep.subr.mxu0 0.0
      %6000 = vmatpush1.msra.mxu0 0.0
      %6001 = vmatprep.subr.mxu0 0.0
      %6002 = vmatpush1.msra.mxu0 0.0
      %6003 = vmatprep.subr.mxu0 0.0
      %6004 = vmatpush1.msra.mxu0 0.0
      %6005 = vmatprep.subr.mxu0 0.0
      %6006 = vmatpush1.msra.mxu0 0.0
      %6007 = vmatprep.subr.mxu0 0.0
      %6008 = vmatpush1.msra.mxu0 0.0
      %6009 = vmatprep.subr.mxu0 0.0
      %6010 = vmatpush1.msra.mxu0 0.0
      %6011 = vmatprep.subr.mxu0 0.0
      %6012 = vmatpush1.msra.mxu0 0.0
      %6013 = vmatprep.subr.mxu0 0.0
      %6014 = vmatpush1.msra.mxu0 0.0
      %6015 = vmatprep.subr.mxu0 0.0
      %6016 = vmatpush1.msra.mxu0 0.0
      %6017 = vmatprep.subr.mxu0 0.0
      %6018 = vmatpush1.msra.mxu0 0.0
      %6019 = vmatprep.subr.mxu0 0.0
      %6020 = vmatpush1.msra.mxu0 0.0
      %6021 = vmatprep.subr.mxu0 0.0
      %6022 = vmatpush1.msra.mxu0 0.0
      %6023 = vmatprep.subr.mxu0 0.0
      %6024 = vmatpush1.msra.mxu0 0.0
      %6025 = vmatprep.subr.mxu0 0.0
      %6026 = vmatpush1.msra.mxu0 0.0
      %6027 = vmatprep.subr.mxu0 0.0
      %6028 = vmatpush1.msra.mxu0 0.0
      %6029 = vmatprep.subr.mxu0 0.0
      %6030 = vmatpush1.msra.mxu0 0.0
      %6031 = vmatprep.subr.mxu0 0.0
      %6032 = vmatpush1.msra.mxu0 0.0
      %6033 = vmatprep.subr.mxu0 0.0
      %6034 = vmatpush1.msra.mxu0 0.0
      %6035 = vmatprep.subr.mxu0 0.0
      %6036 = vmatpush1.msra.mxu0 0.0
      %6037 = vmatprep.subr.mxu0 0.0
      %6038 = vmatpush1.msra.mxu0 0.0
      %6039 = vmatprep.subr.mxu0 0.0
      %6040 = vmatpush1.msra.mxu0 0.0
      %6041 = vmatprep.subr.mxu0 0.0
      %6042 = vmatpush1.msra.mxu0 0.0
      %6043 = vmatprep.subr.mxu0 0.0
      %6044 = vmatpush1.msra.mxu0 0.0
      %6045 = vmatprep.mubr.f32.mxu0 0.0
      %6046 = vmatmul.mubr.f32.gmra.mrb[0].mxu0 %v5860
      %v6047 = vpop.f32.mrb[0].mxu0
      %v6048 = vadd.f32 %v5976, %v6047
      %v6049 = vpop.f32.mrb[0].mxu0
      %6050 = vmatprep.mubr.f32.mxu0 0.0
      %6051 = vmatmul.mubr.f32.gmra.mrb[0].mxu0 %v5863
      %v6052 = vpop.f32.mrb[0].mxu0
      %v6053 = vadd.f32 %v5976, %v6052
      %v6054 = vpop.f32.mrb[0].mxu0
      %6055 = vdwg.mxu0
      %v6056 = vmul.f32 %v5954, %v947
      %v6057 = vmul.f32 %v5955, %v947
      %v6058 = vmul.f32 %v5968, %v947
      %v6059 = vmul.f32 %v5969, %v947
      %v6060 = vfloor.f32 %v6056
      %v6061 = vfloor.f32 %v6057
      %v6062 = vfloor.f32 %v6058
      %v6063 = vfloor.f32 %v6059
      %v6064 = vceil.f32 %v6056
      %v6065 = vceil.f32 %v6057
      %v6066 = vmin.f32 %v6064, 31.0
      %v6067 = vmin.f32 %v6065, 31.0
      %v6068 = vceil.f32 %v6058
      %v6069 = vceil.f32 %v6059
      %v6070 = vmin.f32 %v6068, 31.0
      %v6071 = vmin.f32 %v6069, 31.0
      %v6072 = vsub.f32 %v6066, %v6060
      %v6073 = vsub.f32 %v6067, %v6061
      %v6074 = vsub.f32 %v6070, %v6062
      %v6075 = vsub.f32 %v6071, %v6063
      %6078 = vrot.lane.b32.xlu0 %v6074, 127
      %v6079 = vpop.permute.xlu0 %6078
      %6080 = vrot.lane.b32.xlu0 %v6075, 127
      %v6081 = vpop.permute.xlu0 %6080
      %v6084 = vmul.f32 %v6072, %v6079
      %v6085 = vmul.f32 %v6073, %v6081
      %v6086 = vcvt.f32.s32.to.zero.pseudo %v6062
      %v6087 = vcvt.f32.s32.to.zero.pseudo %v6063
      %v6088 = vmul.u32 %v6086, 32
      %v6089 = vmul.u32 %v6087, 32
      %v6090 = vcvt.f32.s32.to.zero.pseudo %v6060
      %v6091 = vcvt.f32.s32.to.zero.pseudo %v6061
      %6092 = vrot.lane.b32.xlu0 %v6090, 1
      %v6093 = vpop.permute.xlu0 %6092
      %6094 = vrot.lane.b32.xlu0 %v6091, 1
      %v6095 = vpop.permute.xlu0 %6094
      %v6096 = vadd.s32 %v6088, %v6093
      %v6097 = vadd.s32 %v6089, %v6095
      %6098 = vset.pattern.permute.xlu0 1
      %6099 = vperm.xlu0 %6098, %v6096
      %v6100 = vpop.permute.xlu0 %6099
      %6101 = vset.pattern.permute.xlu0 1
      %6102 = vperm.xlu0 %6101, %v6097
      %v6103 = vpop.permute.xlu0 %6102
      %vm6104 = vcmp.eq.s32.totalorder %v991, %v6100
      %vm6105 = vcmp.eq.s32.totalorder %v992, %v6100
      %vm6106 = vcmp.eq.s32.totalorder %v993, %v6100
      %vm6107 = vcmp.eq.s32.totalorder %v994, %v6100
      %vm6108 = vcmp.eq.s32.totalorder %v995, %v6100
      %vm6109 = vcmp.eq.s32.totalorder %v996, %v6100
      %vm6110 = vcmp.eq.s32.totalorder %v997, %v6100
      %vm6111 = vcmp.eq.s32.totalorder %v998, %v6100
      %vm6112 = vcmp.eq.s32.totalorder %v991, %v6103
      %vm6113 = vcmp.eq.s32.totalorder %v992, %v6103
      %vm6114 = vcmp.eq.s32.totalorder %v993, %v6103
      %vm6115 = vcmp.eq.s32.totalorder %v994, %v6103
      %vm6116 = vcmp.eq.s32.totalorder %v995, %v6103
      %vm6117 = vcmp.eq.s32.totalorder %v996, %v6103
      %vm6118 = vcmp.eq.s32.totalorder %v997, %v6103
      %vm6119 = vcmp.eq.s32.totalorder %v998, %v6103
      %6121 = vset.pattern.permute.xlu0 0
      %6122 = vperm.xlu0 %6121, %v6084
      %v6123 = vpop.permute.xlu0 %6122
      %6126 = vset.pattern.permute.xlu0 0
      %6127 = vperm.xlu0 %6126, %v6085
      %v6128 = vpop.permute.xlu0 %6127
      %v6130 = vsel %vm6104, %v6123, 0.0
      %v6131 = vsel %vm6105, %v6123, 0.0
      %v6132 = vsel %vm6106, %v6123, 0.0
      %v6133 = vsel %vm6107, %v6123, 0.0
      %v6134 = vsel %vm6108, %v6123, 0.0
      %v6135 = vsel %vm6109, %v6123, 0.0
      %v6136 = vsel %vm6110, %v6123, 0.0
      %v6137 = vsel %vm6111, %v6123, 0.0
      %v6138 = vsel %vm6112, %v6128, 0.0
      %v6139 = vsel %vm6113, %v6128, 0.0
      %v6140 = vsel %vm6114, %v6128, 0.0
      %v6141 = vsel %vm6115, %v6128, 0.0
      %v6142 = vsel %vm6116, %v6128, 0.0
      %v6143 = vsel %vm6117, %v6128, 0.0
      %v6144 = vsel %vm6118, %v6128, 0.0
      %v6145 = vsel %vm6119, %v6128, 0.0
      %v6146 = vpack.c.bf16 %v6138, %v6130
      %v6147 = vpack.c.bf16 %v6139, %v6131
      %v6148 = vpack.c.bf16 %v6140, %v6132
      %v6149 = vpack.c.bf16 %v6141, %v6133
      %v6150 = vpack.c.bf16 %v6142, %v6134
      %v6151 = vpack.c.bf16 %v6143, %v6135
      %v6152 = vpack.c.bf16 %v6144, %v6136
      %v6153 = vpack.c.bf16 %v6145, %v6137
      %6154 = vmatprep.subr.bf16.mxu0 0
      %6155 = vmatpush1.bf16.msra.mxu0 %v1311
      %6156 = vmatprep.subr.bf16.mxu0 0
      %6157 = vmatpush1.bf16.msra.mxu0 %v1312
      %6158 = vmatprep.subr.bf16.mxu0 0
      %6159 = vmatpush1.bf16.msra.mxu0 %v1313
      %6160 = vmatprep.subr.bf16.mxu0 0
      %6161 = vmatpush1.bf16.msra.mxu0 %v1314
      %6162 = vmatprep.subr.bf16.mxu0 0
      %6163 = vmatpush1.bf16.msra.mxu0 %v1315
      %6164 = vmatprep.subr.bf16.mxu0 0
      %6165 = vmatpush1.bf16.msra.mxu0 %v1316
      %6166 = vmatprep.subr.bf16.mxu0 0
      %6167 = vmatpush1.bf16.msra.mxu0 %v1317
      %6168 = vmatprep.subr.bf16.mxu0 0
      %6169 = vmatpush1.bf16.msra.mxu0 %v1318
      %6170 = vmatprep.subr.bf16.mxu0 0
      %6171 = vmatpush1.bf16.msra.mxu0 %v1319
      %6172 = vmatprep.subr.bf16.mxu0 0
      %6173 = vmatpush1.bf16.msra.mxu0 %v1320
      %6174 = vmatprep.subr.bf16.mxu0 0
      %6175 = vmatpush1.bf16.msra.mxu0 %v1321
      %6176 = vmatprep.subr.bf16.mxu0 0
      %6177 = vmatpush1.bf16.msra.mxu0 %v1322
      %6178 = vmatprep.subr.bf16.mxu0 0
      %6179 = vmatpush1.bf16.msra.mxu0 %v1323
      %6180 = vmatprep.subr.bf16.mxu0 0
      %6181 = vmatpush1.bf16.msra.mxu0 %v1324
      %6182 = vmatprep.subr.bf16.mxu0 0
      %6183 = vmatpush1.bf16.msra.mxu0 %v1325
      %6184 = vmatprep.subr.bf16.mxu0 0
      %6185 = vmatpush1.bf16.msra.mxu0 %v1326
      %6186 = vmatprep.mubr.bf16.mxu0 %v6147
      %6187 = vmatmul.mubr.bf16.gmra.mrb[0].mxu0 %v6146
      %v6188 = vpop.f32.mrb[0].mxu0
      %v6189 = vadd.f32 0.0, %v6188
      %v6190 = vpop.f32.mrb[0].mxu0
      %v6191 = vpop.f32.mrb[0].mxu0
      %v6192 = vadd.f32 0.0, %v6191
      %v6193 = vpop.f32.mrb[0].mxu0
      %6194 = vdwg.mxu0
      %6195 = vmatprep.subr.bf16.mxu0 0
      %6196 = vmatpush1.bf16.msra.mxu0 %v1327
      %6197 = vmatprep.subr.bf16.mxu0 0
      %6198 = vmatpush1.bf16.msra.mxu0 %v1328
      %6199 = vmatprep.subr.bf16.mxu0 0
      %6200 = vmatpush1.bf16.msra.mxu0 %v1329
      %6201 = vmatprep.subr.bf16.mxu0 0
      %6202 = vmatpush1.bf16.msra.mxu0 %v1330
      %6203 = vmatprep.subr.bf16.mxu0 0
      %6204 = vmatpush1.bf16.msra.mxu0 %v1331
      %6205 = vmatprep.subr.bf16.mxu0 0
      %6206 = vmatpush1.bf16.msra.mxu0 %v1332
      %6207 = vmatprep.subr.bf16.mxu0 0
      %6208 = vmatpush1.bf16.msra.mxu0 %v1333
      %6209 = vmatprep.subr.bf16.mxu0 0
      %6210 = vmatpush1.bf16.msra.mxu0 %v1334
      %6211 = vmatprep.subr.bf16.mxu0 0
      %6212 = vmatpush1.bf16.msra.mxu0 %v1335
      %6213 = vmatprep.subr.bf16.mxu0 0
      %6214 = vmatpush1.bf16.msra.mxu0 %v1336
      %6215 = vmatprep.subr.bf16.mxu0 0
      %6216 = vmatpush1.bf16.msra.mxu0 %v1337
      %6217 = vmatprep.subr.bf16.mxu0 0
      %6218 = vmatpush1.bf16.msra.mxu0 %v1338
      %6219 = vmatprep.subr.bf16.mxu0 0
      %6220 = vmatpush1.bf16.msra.mxu0 %v1339
      %6221 = vmatprep.subr.bf16.mxu0 0
      %6222 = vmatpush1.bf16.msra.mxu0 %v1340
      %6223 = vmatprep.subr.bf16.mxu0 0
      %6224 = vmatpush1.bf16.msra.mxu0 %v1341
      %6225 = vmatprep.subr.bf16.mxu0 0
      %6226 = vmatpush1.bf16.msra.mxu0 %v1342
      %6227 = vmatprep.mubr.bf16.mxu0 %v6149
      %6228 = vmatmul.mubr.bf16.gmra.mrb[0].mxu0 %v6148
      %v6229 = vpop.f32.mrb[0].mxu0
      %v6230 = vadd.f32 %v6189, %v6229
      %v6231 = vpop.f32.mrb[0].mxu0
      %v6232 = vpop.f32.mrb[0].mxu0
      %v6233 = vadd.f32 %v6192, %v6232
      %v6234 = vpop.f32.mrb[0].mxu0
      %6235 = vdwg.mxu0
      %6236 = vmatprep.subr.bf16.mxu0 0
      %6237 = vmatpush1.bf16.msra.mxu0 %v1343
      %6238 = vmatprep.subr.bf16.mxu0 0
      %6239 = vmatpush1.bf16.msra.mxu0 %v1344
      %6240 = vmatprep.subr.bf16.mxu0 0
      %6241 = vmatpush1.bf16.msra.mxu0 %v1345
      %6242 = vmatprep.subr.bf16.mxu0 0
      %6243 = vmatpush1.bf16.msra.mxu0 %v1346
      %6244 = vmatprep.subr.bf16.mxu0 0
      %6245 = vmatpush1.bf16.msra.mxu0 %v1347
      %6246 = vmatprep.subr.bf16.mxu0 0
      %6247 = vmatpush1.bf16.msra.mxu0 %v1348
      %6248 = vmatprep.subr.bf16.mxu0 0
      %6249 = vmatpush1.bf16.msra.mxu0 %v1349
      %6250 = vmatprep.subr.bf16.mxu0 0
      %6251 = vmatpush1.bf16.msra.mxu0 %v1350
      %6252 = vmatprep.subr.bf16.mxu0 0
      %6253 = vmatpush1.bf16.msra.mxu0 %v1351
      %6254 = vmatprep.subr.bf16.mxu0 0
      %6255 = vmatpush1.bf16.msra.mxu0 %v1352
      %6256 = vmatprep.subr.bf16.mxu0 0
      %6257 = vmatpush1.bf16.msra.mxu0 %v1353
      %6258 = vmatprep.subr.bf16.mxu0 0
      %6259 = vmatpush1.bf16.msra.mxu0 %v1354
      %6260 = vmatprep.subr.bf16.mxu0 0
      %6261 = vmatpush1.bf16.msra.mxu0 %v1355
      %6262 = vmatprep.subr.bf16.mxu0 0
      %6263 = vmatpush1.bf16.msra.mxu0 %v1356
      %6264 = vmatprep.subr.bf16.mxu0 0
      %6265 = vmatpush1.bf16.msra.mxu0 %v1357
      %6266 = vmatprep.subr.bf16.mxu0 0
      %6267 = vmatpush1.bf16.msra.mxu0 %v1358
      %6268 = vmatprep.mubr.bf16.mxu0 %v6151
      %6269 = vmatmul.mubr.bf16.gmra.mrb[0].mxu0 %v6150
      %v6270 = vpop.f32.mrb[0].mxu0
      %v6271 = vadd.f32 %v6230, %v6270
      %v6272 = vpop.f32.mrb[0].mxu0
      %v6273 = vpop.f32.mrb[0].mxu0
      %v6274 = vadd.f32 %v6233, %v6273
      %v6275 = vpop.f32.mrb[0].mxu0
      %6276 = vdwg.mxu0
      %6277 = vmatprep.subr.bf16.mxu0 0
      %6278 = vmatpush1.bf16.msra.mxu0 %v1359
      %6279 = vmatprep.subr.bf16.mxu0 0
      %6280 = vmatpush1.bf16.msra.mxu0 %v1360
      %6281 = vmatprep.subr.bf16.mxu0 0
      %6282 = vmatpush1.bf16.msra.mxu0 %v1361
      %6283 = vmatprep.subr.bf16.mxu0 0
      %6284 = vmatpush1.bf16.msra.mxu0 %v1362
      %6285 = vmatprep.subr.bf16.mxu0 0
      %6286 = vmatpush1.bf16.msra.mxu0 %v1363
      %6287 = vmatprep.subr.bf16.mxu0 0
      %6288 = vmatpush1.bf16.msra.mxu0 %v1364
      %6289 = vmatprep.subr.bf16.mxu0 0
      %6290 = vmatpush1.bf16.msra.mxu0 %v1365
      %6291 = vmatprep.subr.bf16.mxu0 0
      %6292 = vmatpush1.bf16.msra.mxu0 %v1366
      %6293 = vmatprep.subr.bf16.mxu0 0
      %6294 = vmatpush1.bf16.msra.mxu0 %v1367
      %6295 = vmatprep.subr.bf16.mxu0 0
      %6296 = vmatpush1.bf16.msra.mxu0 %v1368
      %6297 = vmatprep.subr.bf16.mxu0 0
      %6298 = vmatpush1.bf16.msra.mxu0 %v1369
      %6299 = vmatprep.subr.bf16.mxu0 0
      %6300 = vmatpush1.bf16.msra.mxu0 %v1370
      %6301 = vmatprep.subr.bf16.mxu0 0
      %6302 = vmatpush1.bf16.msra.mxu0 %v1371
      %6303 = vmatprep.subr.bf16.mxu0 0
      %6304 = vmatpush1.bf16.msra.mxu0 %v1372
      %6305 = vmatprep.subr.bf16.mxu0 0
      %6306 = vmatpush1.bf16.msra.mxu0 %v1373
      %6307 = vmatprep.subr.bf16.mxu0 0
      %6308 = vmatpush1.bf16.msra.mxu0 %v1374
      %6309 = vmatprep.mubr.bf16.mxu0 %v6153
      %6310 = vmatmul.mubr.bf16.gmra.mrb[0].mxu0 %v6152
      %v6311 = vpop.f32.mrb[0].mxu0
      %v6312 = vadd.f32 %v6271, %v6311
      %v6313 = vpop.f32.mrb[0].mxu0
      %v6314 = vpop.f32.mrb[0].mxu0
      %v6315 = vadd.f32 %v6274, %v6314
      %v6316 = vpop.f32.mrb[0].mxu0
      %6317 = vdwg.mxu0
      %v6318 = vmul.f32 %v5954, %v1635
      %v6319 = vmul.f32 %v5955, %v1635
      %v6320 = vmul.f32 %v5968, %v1635
      %v6321 = vmul.f32 %v5969, %v1635
      %v6322 = vfloor.f32 %v6318
      %v6323 = vfloor.f32 %v6319
      %v6324 = vfloor.f32 %v6320
      %v6325 = vfloor.f32 %v6321
      %v6326 = vceil.f32 %v6318
      %v6327 = vceil.f32 %v6319
      %v6328 = vmin.f32 %v6326, 15.0
      %v6329 = vmin.f32 %v6327, 15.0
      %v6330 = vceil.f32 %v6320
      %v6331 = vceil.f32 %v6321
      %v6332 = vmin.f32 %v6330, 15.0
      %v6333 = vmin.f32 %v6331, 15.0
      %v6334 = vsub.f32 %v6328, %v6322
      %v6335 = vsub.f32 %v6329, %v6323
      %v6336 = vsub.f32 %v6332, %v6324
      %v6337 = vsub.f32 %v6333, %v6325
      %6340 = vrot.lane.b32.xlu0 %v6336, 127
      %v6341 = vpop.permute.xlu0 %6340
      %6342 = vrot.lane.b32.xlu0 %v6337, 127
      %v6343 = vpop.permute.xlu0 %6342
      %v6346 = vmul.f32 %v6334, %v6341
      %v6347 = vmul.f32 %v6335, %v6343
      %v6348 = vcvt.f32.s32.to.zero.pseudo %v6324
      %v6349 = vcvt.f32.s32.to.zero.pseudo %v6325
      %v6350 = vmul.u32 %v6348, 16
      %v6351 = vmul.u32 %v6349, 16
      %v6352 = vcvt.f32.s32.to.zero.pseudo %v6322
      %v6353 = vcvt.f32.s32.to.zero.pseudo %v6323
      %6354 = vrot.lane.b32.xlu0 %v6352, 1
      %v6355 = vpop.permute.xlu0 %6354
      %6356 = vrot.lane.b32.xlu0 %v6353, 1
      %v6357 = vpop.permute.xlu0 %6356
      %v6358 = vadd.s32 %v6350, %v6355
      %v6359 = vadd.s32 %v6351, %v6357
      %6360 = vset.pattern.permute.xlu0 1
      %6361 = vperm.xlu0 %6360, %v6358
      %v6362 = vpop.permute.xlu0 %6361
      %6363 = vset.pattern.permute.xlu0 1
      %6364 = vperm.xlu0 %6363, %v6359
      %v6365 = vpop.permute.xlu0 %6364
      %vm6366 = vcmp.eq.s32.totalorder %v991, %v6362
      %vm6367 = vcmp.eq.s32.totalorder %v992, %v6362
      %vm6368 = vcmp.eq.s32.totalorder %v991, %v6365
      %vm6369 = vcmp.eq.s32.totalorder %v992, %v6365
      %6371 = vset.pattern.permute.xlu0 0
      %6372 = vperm.xlu0 %6371, %v6346
      %v6373 = vpop.permute.xlu0 %6372
      %6376 = vset.pattern.permute.xlu0 0
      %6377 = vperm.xlu0 %6376, %v6347
      %v6378 = vpop.permute.xlu0 %6377
      %v6380 = vsel %vm6366, %v6373, 0.0
      %v6381 = vsel %vm6367, %v6373, 0.0
      %v6382 = vsel %vm6368, %v6378, 0.0
      %v6383 = vsel %vm6369, %v6378, 0.0
      %v6384 = vpack.c.bf16 %v6382, %v6380
      %v6385 = vpack.c.bf16 %v6383, %v6381
      %6386 = vmatprep.subr.bf16.mxu0 %v1801
      %6387 = vmatpush1.bf16.msra.mxu0 %v1800
      %6388 = vmatprep.subr.bf16.mxu0 %v1803
      %6389 = vmatpush1.bf16.msra.mxu0 %v1802
      %6390 = vmatprep.subr.bf16.mxu0 %v1805
      %6391 = vmatpush1.bf16.msra.mxu0 %v1804
      %6392 = vmatprep.subr.bf16.mxu0 %v1807
      %6393 = vmatpush1.bf16.msra.mxu0 %v1806
      %6394 = vmatprep.subr.bf16.mxu0 %v1809
      %6395 = vmatpush1.bf16.msra.mxu0 %v1808
      %6396 = vmatprep.subr.bf16.mxu0 %v1811
      %6397 = vmatpush1.bf16.msra.mxu0 %v1810
      %6398 = vmatprep.subr.bf16.mxu0 %v1813
      %6399 = vmatpush1.bf16.msra.mxu0 %v1812
      %6400 = vmatprep.subr.bf16.mxu0 %v1815
      %6401 = vmatpush1.bf16.msra.mxu0 %v1814
      %6402 = vmatprep.subr.bf16.mxu0 %v1817
      %6403 = vmatpush1.bf16.msra.mxu0 %v1816
      %6404 = vmatprep.subr.bf16.mxu0 %v1819
      %6405 = vmatpush1.bf16.msra.mxu0 %v1818
      %6406 = vmatprep.subr.bf16.mxu0 %v1821
      %6407 = vmatpush1.bf16.msra.mxu0 %v1820
      %6408 = vmatprep.subr.bf16.mxu0 %v1823
      %6409 = vmatpush1.bf16.msra.mxu0 %v1822
      %6410 = vmatprep.subr.bf16.mxu0 %v1825
      %6411 = vmatpush1.bf16.msra.mxu0 %v1824
      %6412 = vmatprep.subr.bf16.mxu0 %v1827
      %6413 = vmatpush1.bf16.msra.mxu0 %v1826
      %6414 = vmatprep.subr.bf16.mxu0 %v1829
      %6415 = vmatpush1.bf16.msra.mxu0 %v1828
      %6416 = vmatprep.subr.bf16.mxu0 %v1831
      %6417 = vmatpush1.bf16.msra.mxu0 %v1830
      %6418 = vmatprep.mubr.bf16.mxu0 %v6385
      %6419 = vmatmul.mubr.bf16.gmra.mrb[0].mxu0 %v6384
      %v6420 = vpop.f32.mrb[0].mxu0
      %v6421 = vadd.f32 0.0, %v6420
      %v6422 = vpop.f32.mrb[0].mxu0
      %v6423 = vadd.f32 0.0, %v6422
      %v6424 = vpop.f32.mrb[0].mxu0
      %v6425 = vadd.f32 0.0, %v6424
      %v6426 = vpop.f32.mrb[0].mxu0
      %v6427 = vadd.f32 0.0, %v6426
      %6428 = vdwg.mxu0
      %v6429 = vmul.f32 %v5954, %v1923
      %v6430 = vmul.f32 %v5955, %v1923
      %v6431 = vmul.f32 %v5968, %v1923
      %v6432 = vmul.f32 %v5969, %v1923
      %v6433 = vfloor.f32 %v6429
      %v6434 = vfloor.f32 %v6430
      %v6435 = vfloor.f32 %v6431
      %v6436 = vfloor.f32 %v6432
      %v6437 = vceil.f32 %v6429
      %v6438 = vceil.f32 %v6430
      %v6439 = vmin.f32 %v6437, 7.0
      %v6440 = vmin.f32 %v6438, 7.0
      %v6441 = vceil.f32 %v6431
      %v6442 = vceil.f32 %v6432
      %v6443 = vmin.f32 %v6441, 7.0
      %v6444 = vmin.f32 %v6442, 7.0
      %v6445 = vsub.f32 %v6439, %v6433
      %v6446 = vsub.f32 %v6440, %v6434
      %v6447 = vsub.f32 %v6443, %v6435
      %v6448 = vsub.f32 %v6444, %v6436
      %6451 = vrot.lane.b32.xlu0 %v6447, 127
      %v6452 = vpop.permute.xlu0 %6451
      %6453 = vrot.lane.b32.xlu0 %v6448, 127
      %v6454 = vpop.permute.xlu0 %6453
      %v6457 = vmul.f32 %v6445, %v6452
      %v6458 = vmul.f32 %v6446, %v6454
      %v6459 = vcvt.f32.s32.to.zero.pseudo %v6435
      %v6460 = vcvt.f32.s32.to.zero.pseudo %v6436
      %v6461 = vmul.u32 %v6459, 8
      %v6462 = vmul.u32 %v6460, 8
      %v6463 = vcvt.f32.s32.to.zero.pseudo %v6433
      %v6464 = vcvt.f32.s32.to.zero.pseudo %v6434
      %6465 = vrot.lane.b32.xlu0 %v6463, 1
      %v6466 = vpop.permute.xlu0 %6465
      %6467 = vrot.lane.b32.xlu0 %v6464, 1
      %v6468 = vpop.permute.xlu0 %6467
      %v6469 = vadd.s32 %v6461, %v6466
      %v6470 = vadd.s32 %v6462, %v6468
      %6471 = vset.pattern.permute.xlu0 1
      %6472 = vperm.xlu0 %6471, %v6469
      %v6473 = vpop.permute.xlu0 %6472
      %6474 = vset.pattern.permute.xlu0 1
      %6475 = vperm.xlu0 %6474, %v6470
      %v6476 = vpop.permute.xlu0 %6475
      %vm6477 = vcmp.eq.s32.totalorder %v991, %v6473
      %vm6478 = vcmp.eq.s32.totalorder %v991, %v6476
      %6480 = vset.pattern.permute.xlu0 0
      %6481 = vperm.xlu0 %6480, %v6457
      %v6482 = vpop.permute.xlu0 %6481
      %6485 = vset.pattern.permute.xlu0 0
      %6486 = vperm.xlu0 %6485, %v6458
      %v6487 = vpop.permute.xlu0 %6486
      %v6489 = vsel %vm6477, %v6482, 0.0
      %v6490 = vsel %vm6478, %v6487, 0.0
      %v6491 = vpack.c.bf16 %v6490, %v6489
      %v6493 = vsel %vm2067, %v6491, 0
      %6495 = vmatprep.subr.bf16.mxu0 %v2036
      %6496 = vmatpush1.bf16.msra.mxu0 %v2035
      %6497 = vmatprep.subr.bf16.mxu0 %v2040
      %6498 = vmatpush1.bf16.msra.mxu0 %v2039
      %6499 = vmatprep.subr.bf16.mxu0 %v2044
      %6500 = vmatpush1.bf16.msra.mxu0 %v2043
      %6501 = vmatprep.subr.bf16.mxu0 %v2048
      %6502 = vmatpush1.bf16.msra.mxu0 %v2047
      %6503 = vmatprep.subr.bf16.mxu0 0
      %6504 = vmatpush1.bf16.msra.mxu0 0
      %6505 = vmatprep.subr.bf16.mxu0 0
      %6506 = vmatpush1.bf16.msra.mxu0 0
      %6507 = vmatprep.subr.bf16.mxu0 0
      %6508 = vmatpush1.bf16.msra.mxu0 0
      %6509 = vmatprep.subr.bf16.mxu0 0
      %6510 = vmatpush1.bf16.msra.mxu0 0
      %6511 = vmatprep.subr.bf16.mxu0 0
      %6512 = vmatpush1.bf16.msra.mxu0 0
      %6513 = vmatprep.subr.bf16.mxu0 0
      %6514 = vmatpush1.bf16.msra.mxu0 0
      %6515 = vmatprep.subr.bf16.mxu0 0
      %6516 = vmatpush1.bf16.msra.mxu0 0
      %6517 = vmatprep.subr.bf16.mxu0 0
      %6518 = vmatpush1.bf16.msra.mxu0 0
      %6519 = vmatprep.subr.bf16.mxu0 0
      %6520 = vmatpush1.bf16.msra.mxu0 0
      %6521 = vmatprep.subr.bf16.mxu0 0
      %6522 = vmatpush1.bf16.msra.mxu0 0
      %6523 = vmatprep.subr.bf16.mxu0 0
      %6524 = vmatpush1.bf16.msra.mxu0 0
      %6525 = vmatprep.subr.bf16.mxu0 0
      %6526 = vmatpush1.bf16.msra.mxu0 0
      %6527 = vmatprep.mubr.bf16.mxu0 0
      %6528 = vmatmul.mubr.bf16.gmra.mrb[0].mxu0 %v6493
      %v6529 = vpop.f32.mrb[0].mxu0
      %v6530 = vadd.f32 0.0, %v6529
      %v6531 = vpop.f32.mrb[0].mxu0
      %v6532 = vadd.f32 0.0, %v6531
      %v6533 = vpop.f32.mrb[0].mxu0
      %v6534 = vadd.f32 0.0, %v6533
      %v6535 = vpop.f32.mrb[0].mxu0
      %v6536 = vadd.f32 0.0, %v6535
      %6537 = vdwg.mxu0
      %6538 = vmatprep.subr.bf16.mxu0 %v2038
      %6539 = vmatpush1.bf16.msra.mxu0 %v2037
      %6540 = vmatprep.subr.bf16.mxu0 %v2042
      %6541 = vmatpush1.bf16.msra.mxu0 %v2041
      %6542 = vmatprep.subr.bf16.mxu0 %v2046
      %6543 = vmatpush1.bf16.msra.mxu0 %v2045
      %6544 = vmatprep.subr.bf16.mxu0 %v2050
      %6545 = vmatpush1.bf16.msra.mxu0 %v2049
      %6546 = vmatprep.subr.bf16.mxu0 0
      %6547 = vmatpush1.bf16.msra.mxu0 0
      %6548 = vmatprep.subr.bf16.mxu0 0
      %6549 = vmatpush1.bf16.msra.mxu0 0
      %6550 = vmatprep.subr.bf16.mxu0 0
      %6551 = vmatpush1.bf16.msra.mxu0 0
      %6552 = vmatprep.subr.bf16.mxu0 0
      %6553 = vmatpush1.bf16.msra.mxu0 0
      %6554 = vmatprep.subr.bf16.mxu0 0
      %6555 = vmatpush1.bf16.msra.mxu0 0
      %6556 = vmatprep.subr.bf16.mxu0 0
      %6557 = vmatpush1.bf16.msra.mxu0 0
      %6558 = vmatprep.subr.bf16.mxu0 0
      %6559 = vmatpush1.bf16.msra.mxu0 0
      %6560 = vmatprep.subr.bf16.mxu0 0
      %6561 = vmatpush1.bf16.msra.mxu0 0
      %6562 = vmatprep.subr.bf16.mxu0 0
      %6563 = vmatpush1.bf16.msra.mxu0 0
      %6564 = vmatprep.subr.bf16.mxu0 0
      %6565 = vmatpush1.bf16.msra.mxu0 0
      %6566 = vmatprep.subr.bf16.mxu0 0
      %6567 = vmatpush1.bf16.msra.mxu0 0
      %6568 = vmatprep.subr.bf16.mxu0 0
      %6569 = vmatpush1.bf16.msra.mxu0 0
      %6570 = vmatprep.mubr.bf16.mxu0 0
      %6571 = vmatmul.mubr.bf16.gmra.mrb[0].mxu0 %v6493
      %v6572 = vpop.f32.mrb[0].mxu0
      %v6573 = vadd.f32 0.0, %v6572
      %v6574 = vpop.f32.mrb[0].mxu0
      %v6575 = vadd.f32 0.0, %v6574
      %v6576 = vpop.f32.mrb[0].mxu0
      %v6577 = vadd.f32 0.0, %v6576
      %v6578 = vpop.f32.mrb[0].mxu0
      %v6579 = vadd.f32 0.0, %v6578
      %6580 = vdwg.mxu0
      %v6581 = vmul.f32 %v5954, %v2669
      %v6582 = vmul.f32 %v5955, %v2669
      %v6583 = vmul.f32 %v5968, %v2669
      %v6584 = vmul.f32 %v5969, %v2669
      %v6585 = vfloor.f32 %v6581
      %v6586 = vfloor.f32 %v6582
      %v6587 = vfloor.f32 %v6583
      %v6588 = vfloor.f32 %v6584
      %v6589 = vceil.f32 %v6581
      %v6590 = vceil.f32 %v6582
      %v6591 = vmin.f32 %v6589, 63.0
      %v6592 = vmin.f32 %v6590, 63.0
      %v6593 = vceil.f32 %v6583
      %v6594 = vceil.f32 %v6584
      %v6595 = vmin.f32 %v6593, 63.0
      %v6596 = vmin.f32 %v6594, 63.0
      %v6597 = vsub.f32 %v6591, %v6585
      %v6598 = vsub.f32 %v6592, %v6586
      %v6599 = vsub.f32 %v6595, %v6587
      %v6600 = vsub.f32 %v6596, %v6588
      %6603 = vrot.lane.b32.xlu0 %v6599, 127
      %v6604 = vpop.permute.xlu0 %6603
      %6605 = vrot.lane.b32.xlu0 %v6600, 127
      %v6606 = vpop.permute.xlu0 %6605
      %v6609 = vmul.f32 %v6597, %v6604
      %v6610 = vmul.f32 %v6598, %v6606
      %v6611 = vcvt.f32.s32.to.zero.pseudo %v6587
      %v6612 = vcvt.f32.s32.to.zero.pseudo %v6588
      %v6613 = vmul.u32 %v6611, 64
      %v6614 = vmul.u32 %v6612, 64
      %v6615 = vcvt.f32.s32.to.zero.pseudo %v6585
      %v6616 = vcvt.f32.s32.to.zero.pseudo %v6586
      %6617 = vrot.lane.b32.xlu0 %v6615, 1
      %v6618 = vpop.permute.xlu0 %6617
      %6619 = vrot.lane.b32.xlu0 %v6616, 1
      %v6620 = vpop.permute.xlu0 %6619
      %v6621 = vadd.s32 %v6613, %v6618
      %v6622 = vadd.s32 %v6614, %v6620
      %6623 = vset.pattern.permute.xlu0 1
      %6624 = vperm.xlu0 %6623, %v6621
      %v6625 = vpop.permute.xlu0 %6624
      %6626 = vset.pattern.permute.xlu0 1
      %6627 = vperm.xlu0 %6626, %v6622
      %v6628 = vpop.permute.xlu0 %6627
      %vm6629 = vcmp.eq.s32.totalorder %v991, %v6625
      %vm6630 = vcmp.eq.s32.totalorder %v992, %v6625
      %vm6631 = vcmp.eq.s32.totalorder %v993, %v6625
      %vm6632 = vcmp.eq.s32.totalorder %v994, %v6625
      %vm6633 = vcmp.eq.s32.totalorder %v995, %v6625
      %vm6634 = vcmp.eq.s32.totalorder %v996, %v6625
      %vm6635 = vcmp.eq.s32.totalorder %v997, %v6625
      %vm6636 = vcmp.eq.s32.totalorder %v998, %v6625
      %vm6637 = vcmp.eq.s32.totalorder %v2712, %v6625
      %vm6638 = vcmp.eq.s32.totalorder %v2713, %v6625
      %vm6639 = vcmp.eq.s32.totalorder %v2714, %v6625
      %vm6640 = vcmp.eq.s32.totalorder %v2715, %v6625
      %vm6641 = vcmp.eq.s32.totalorder %v2716, %v6625
      %vm6642 = vcmp.eq.s32.totalorder %v2717, %v6625
      %vm6643 = vcmp.eq.s32.totalorder %v2718, %v6625
      %vm6644 = vcmp.eq.s32.totalorder %v2719, %v6625
      %vm6645 = vcmp.eq.s32.totalorder %v2720, %v6625
      %vm6646 = vcmp.eq.s32.totalorder %v2721, %v6625
      %vm6647 = vcmp.eq.s32.totalorder %v2722, %v6625
      %vm6648 = vcmp.eq.s32.totalorder %v2723, %v6625
      %vm6649 = vcmp.eq.s32.totalorder %v2724, %v6625
      %vm6650 = vcmp.eq.s32.totalorder %v2725, %v6625
      %vm6651 = vcmp.eq.s32.totalorder %v2726, %v6625
      %vm6652 = vcmp.eq.s32.totalorder %v2727, %v6625
      %vm6653 = vcmp.eq.s32.totalorder %v2728, %v6625
      %vm6654 = vcmp.eq.s32.totalorder %v2729, %v6625
      %vm6655 = vcmp.eq.s32.totalorder %v2730, %v6625
      %vm6656 = vcmp.eq.s32.totalorder %v2731, %v6625
      %vm6657 = vcmp.eq.s32.totalorder %v2732, %v6625
      %vm6658 = vcmp.eq.s32.totalorder %v2733, %v6625
      %vm6659 = vcmp.eq.s32.totalorder %v2734, %v6625
      %vm6660 = vcmp.eq.s32.totalorder %v2735, %v6625
      %vm6661 = vcmp.eq.s32.totalorder %v991, %v6628
      %vm6662 = vcmp.eq.s32.totalorder %v992, %v6628
      %vm6663 = vcmp.eq.s32.totalorder %v993, %v6628
      %vm6664 = vcmp.eq.s32.totalorder %v994, %v6628
      %vm6665 = vcmp.eq.s32.totalorder %v995, %v6628
      %vm6666 = vcmp.eq.s32.totalorder %v996, %v6628
      %vm6667 = vcmp.eq.s32.totalorder %v997, %v6628
      %vm6668 = vcmp.eq.s32.totalorder %v998, %v6628
      %vm6669 = vcmp.eq.s32.totalorder %v2712, %v6628
      %vm6670 = vcmp.eq.s32.totalorder %v2713, %v6628
      %vm6671 = vcmp.eq.s32.totalorder %v2714, %v6628
      %vm6672 = vcmp.eq.s32.totalorder %v2715, %v6628
      %vm6673 = vcmp.eq.s32.totalorder %v2716, %v6628
      %vm6674 = vcmp.eq.s32.totalorder %v2717, %v6628
      %vm6675 = vcmp.eq.s32.totalorder %v2718, %v6628
      %vm6676 = vcmp.eq.s32.totalorder %v2719, %v6628
      %vm6677 = vcmp.eq.s32.totalorder %v2720, %v6628
      %vm6678 = vcmp.eq.s32.totalorder %v2721, %v6628
      %vm6679 = vcmp.eq.s32.totalorder %v2722, %v6628
      %vm6680 = vcmp.eq.s32.totalorder %v2723, %v6628
      %vm6681 = vcmp.eq.s32.totalorder %v2724, %v6628
      %vm6682 = vcmp.eq.s32.totalorder %v2725, %v6628
      %vm6683 = vcmp.eq.s32.totalorder %v2726, %v6628
      %vm6684 = vcmp.eq.s32.totalorder %v2727, %v6628
      %vm6685 = vcmp.eq.s32.totalorder %v2728, %v6628
      %vm6686 = vcmp.eq.s32.totalorder %v2729, %v6628
      %vm6687 = vcmp.eq.s32.totalorder %v2730, %v6628
      %vm6688 = vcmp.eq.s32.totalorder %v2731, %v6628
      %vm6689 = vcmp.eq.s32.totalorder %v2732, %v6628
      %vm6690 = vcmp.eq.s32.totalorder %v2733, %v6628
      %vm6691 = vcmp.eq.s32.totalorder %v2734, %v6628
      %vm6692 = vcmp.eq.s32.totalorder %v2735, %v6628
      %6694 = vset.pattern.permute.xlu0 0
      %6695 = vperm.xlu0 %6694, %v6609
      %v6696 = vpop.permute.xlu0 %6695
      %6699 = vset.pattern.permute.xlu0 0
      %6700 = vperm.xlu0 %6699, %v6610
      %v6701 = vpop.permute.xlu0 %6700
      %v6703 = vsel %vm6629, %v6696, 0.0
      %v6704 = vsel %vm6630, %v6696, 0.0
      %v6705 = vsel %vm6631, %v6696, 0.0
      %v6706 = vsel %vm6632, %v6696, 0.0
      %v6707 = vsel %vm6633, %v6696, 0.0
      %v6708 = vsel %vm6634, %v6696, 0.0
      %v6709 = vsel %vm6635, %v6696, 0.0
      %v6710 = vsel %vm6636, %v6696, 0.0
      %v6711 = vsel %vm6637, %v6696, 0.0
      %v6712 = vsel %vm6638, %v6696, 0.0
      %v6713 = vsel %vm6639, %v6696, 0.0
      %v6714 = vsel %vm6640, %v6696, 0.0
      %v6715 = vsel %vm6641, %v6696, 0.0
      %v6716 = vsel %vm6642, %v6696, 0.0
      %v6717 = vsel %vm6643, %v6696, 0.0
      %v6718 = vsel %vm6644, %v6696, 0.0
      %v6719 = vsel %vm6645, %v6696, 0.0
      %v6720 = vsel %vm6646, %v6696, 0.0
      %v6721 = vsel %vm6647, %v6696, 0.0
      %v6722 = vsel %vm6648, %v6696, 0.0
      %v6723 = vsel %vm6649, %v6696, 0.0
      %v6724 = vsel %vm6650, %v6696, 0.0
      %v6725 = vsel %vm6651, %v6696, 0.0
      %v6726 = vsel %vm6652, %v6696, 0.0
      %v6727 = vsel %vm6653, %v6696, 0.0
      %v6728 = vsel %vm6654, %v6696, 0.0
      %v6729 = vsel %vm6655, %v6696, 0.0
      %v6730 = vsel %vm6656, %v6696, 0.0
      %v6731 = vsel %vm6657, %v6696, 0.0
      %v6732 = vsel %vm6658, %v6696, 0.0
      %v6733 = vsel %vm6659, %v6696, 0.0
      %v6734 = vsel %vm6660, %v6696, 0.0
      %v6735 = vsel %vm6661, %v6701, 0.0
      %v6736 = vsel %vm6662, %v6701, 0.0
      %v6737 = vsel %vm6663, %v6701, 0.0
      %v6738 = vsel %vm6664, %v6701, 0.0
      %v6739 = vsel %vm6665, %v6701, 0.0
      %v6740 = vsel %vm6666, %v6701, 0.0
      %v6741 = vsel %vm6667, %v6701, 0.0
      %v6742 = vsel %vm6668, %v6701, 0.0
      %v6743 = vsel %vm6669, %v6701, 0.0
      %v6744 = vsel %vm6670, %v6701, 0.0
      %v6745 = vsel %vm6671, %v6701, 0.0
      %v6746 = vsel %vm6672, %v6701, 0.0
      %v6747 = vsel %vm6673, %v6701, 0.0
      %v6748 = vsel %vm6674, %v6701, 0.0
      %v6749 = vsel %vm6675, %v6701, 0.0
      %v6750 = vsel %vm6676, %v6701, 0.0
      %v6751 = vsel %vm6677, %v6701, 0.0
      %v6752 = vsel %vm6678, %v6701, 0.0
      %v6753 = vsel %vm6679, %v6701, 0.0
      %v6754 = vsel %vm6680, %v6701, 0.0
      %v6755 = vsel %vm6681, %v6701, 0.0
      %v6756 = vsel %vm6682, %v6701, 0.0
      %v6757 = vsel %vm6683, %v6701, 0.0
      %v6758 = vsel %vm6684, %v6701, 0.0
      %v6759 = vsel %vm6685, %v6701, 0.0
      %v6760 = vsel %vm6686, %v6701, 0.0
      %v6761 = vsel %vm6687, %v6701, 0.0
      %v6762 = vsel %vm6688, %v6701, 0.0
      %v6763 = vsel %vm6689, %v6701, 0.0
      %v6764 = vsel %vm6690, %v6701, 0.0
      %v6765 = vsel %vm6691, %v6701, 0.0
      %v6766 = vsel %vm6692, %v6701, 0.0
      %v6767 = vpack.c.bf16 %v6735, %v6703
      %v6768 = vpack.c.bf16 %v6736, %v6704
      %v6769 = vpack.c.bf16 %v6737, %v6705
      %v6770 = vpack.c.bf16 %v6738, %v6706
      %v6771 = vpack.c.bf16 %v6739, %v6707
      %v6772 = vpack.c.bf16 %v6740, %v6708
      %v6773 = vpack.c.bf16 %v6741, %v6709
      %v6774 = vpack.c.bf16 %v6742, %v6710
      %v6775 = vpack.c.bf16 %v6743, %v6711
      %v6776 = vpack.c.bf16 %v6744, %v6712
      %v6777 = vpack.c.bf16 %v6745, %v6713
      %v6778 = vpack.c.bf16 %v6746, %v6714
      %v6779 = vpack.c.bf16 %v6747, %v6715
      %v6780 = vpack.c.bf16 %v6748, %v6716
      %v6781 = vpack.c.bf16 %v6749, %v6717
      %v6782 = vpack.c.bf16 %v6750, %v6718
      %v6783 = vpack.c.bf16 %v6751, %v6719
      %v6784 = vpack.c.bf16 %v6752, %v6720
      %v6785 = vpack.c.bf16 %v6753, %v6721
      %v6786 = vpack.c.bf16 %v6754, %v6722
      %v6787 = vpack.c.bf16 %v6755, %v6723
      %v6788 = vpack.c.bf16 %v6756, %v6724
      %v6789 = vpack.c.bf16 %v6757, %v6725
      %v6790 = vpack.c.bf16 %v6758, %v6726
      %v6791 = vpack.c.bf16 %v6759, %v6727
      %v6792 = vpack.c.bf16 %v6760, %v6728
      %v6793 = vpack.c.bf16 %v6761, %v6729
      %v6794 = vpack.c.bf16 %v6762, %v6730
      %v6795 = vpack.c.bf16 %v6763, %v6731
      %v6796 = vpack.c.bf16 %v6764, %v6732
      %v6797 = vpack.c.bf16 %v6765, %v6733
      %v6798 = vpack.c.bf16 %v6766, %v6734
      %6799 = vmatprep.subr.bf16.mxu0 0
      %6800 = vmatpush1.bf16.msra.mxu0 %v3936
      %6801 = vmatprep.subr.bf16.mxu0 0
      %6802 = vmatpush1.bf16.msra.mxu0 %v3937
      %6803 = vmatprep.subr.bf16.mxu0 0
      %6804 = vmatpush1.bf16.msra.mxu0 %v3938
      %6805 = vmatprep.subr.bf16.mxu0 0
      %6806 = vmatpush1.bf16.msra.mxu0 %v3939
      %6807 = vmatprep.subr.bf16.mxu0 0
      %6808 = vmatpush1.bf16.msra.mxu0 %v3940
      %6809 = vmatprep.subr.bf16.mxu0 0
      %6810 = vmatpush1.bf16.msra.mxu0 %v3941
      %6811 = vmatprep.subr.bf16.mxu0 0
      %6812 = vmatpush1.bf16.msra.mxu0 %v3942
      %6813 = vmatprep.subr.bf16.mxu0 0
      %6814 = vmatpush1.bf16.msra.mxu0 %v3943
      %6815 = vmatprep.subr.bf16.mxu0 0
      %6816 = vmatpush1.bf16.msra.mxu0 %v3944
      %6817 = vmatprep.subr.bf16.mxu0 0
      %6818 = vmatpush1.bf16.msra.mxu0 %v3945
      %6819 = vmatprep.subr.bf16.mxu0 0
      %6820 = vmatpush1.bf16.msra.mxu0 %v3946
      %6821 = vmatprep.subr.bf16.mxu0 0
      %6822 = vmatpush1.bf16.msra.mxu0 %v3947
      %6823 = vmatprep.subr.bf16.mxu0 0
      %6824 = vmatpush1.bf16.msra.mxu0 %v3948
      %6825 = vmatprep.subr.bf16.mxu0 0
      %6826 = vmatpush1.bf16.msra.mxu0 %v3949
      %6827 = vmatprep.subr.bf16.mxu0 0
      %6828 = vmatpush1.bf16.msra.mxu0 %v3950
      %6829 = vmatprep.subr.bf16.mxu0 0
      %6830 = vmatpush1.bf16.msra.mxu0 %v3951
      %6831 = vmatprep.mubr.bf16.mxu0 %v6768
      %6832 = vmatmul.mubr.bf16.gmra.mrb[0].mxu0 %v6767
      %v6833 = vpop.f32.mrb[0].mxu0
      %v6834 = vadd.f32 0.0, %v6833
      %v6835 = vpop.f32.mrb[0].mxu0
      %v6836 = vpop.f32.mrb[0].mxu0
      %v6837 = vadd.f32 0.0, %v6836
      %v6838 = vpop.f32.mrb[0].mxu0
      %6839 = vdwg.mxu0
      %6840 = vmatprep.subr.bf16.mxu0 0
      %6841 = vmatpush1.bf16.msra.mxu0 %v3952
      %6842 = vmatprep.subr.bf16.mxu0 0
      %6843 = vmatpush1.bf16.msra.mxu0 %v3953
      %6844 = vmatprep.subr.bf16.mxu0 0
      %6845 = vmatpush1.bf16.msra.mxu0 %v3954
      %6846 = vmatprep.subr.bf16.mxu0 0
      %6847 = vmatpush1.bf16.msra.mxu0 %v3955
      %6848 = vmatprep.subr.bf16.mxu0 0
      %6849 = vmatpush1.bf16.msra.mxu0 %v3956
      %6850 = vmatprep.subr.bf16.mxu0 0
      %6851 = vmatpush1.bf16.msra.mxu0 %v3957
      %6852 = vmatprep.subr.bf16.mxu0 0
      %6853 = vmatpush1.bf16.msra.mxu0 %v3958
      %6854 = vmatprep.subr.bf16.mxu0 0
      %6855 = vmatpush1.bf16.msra.mxu0 %v3959
      %6856 = vmatprep.subr.bf16.mxu0 0
      %6857 = vmatpush1.bf16.msra.mxu0 %v3960
      %6858 = vmatprep.subr.bf16.mxu0 0
      %6859 = vmatpush1.bf16.msra.mxu0 %v3961
      %6860 = vmatprep.subr.bf16.mxu0 0
      %6861 = vmatpush1.bf16.msra.mxu0 %v3962
      %6862 = vmatprep.subr.bf16.mxu0 0
      %6863 = vmatpush1.bf16.msra.mxu0 %v3963
      %6864 = vmatprep.subr.bf16.mxu0 0
      %6865 = vmatpush1.bf16.msra.mxu0 %v3964
      %6866 = vmatprep.subr.bf16.mxu0 0
      %6867 = vmatpush1.bf16.msra.mxu0 %v3965
      %6868 = vmatprep.subr.bf16.mxu0 0
      %6869 = vmatpush1.bf16.msra.mxu0 %v3966
      %6870 = vmatprep.subr.bf16.mxu0 0
      %6871 = vmatpush1.bf16.msra.mxu0 %v3967
      %6872 = vmatprep.mubr.bf16.mxu0 %v6770
      %6873 = vmatmul.mubr.bf16.gmra.mrb[0].mxu0 %v6769
      %v6874 = vpop.f32.mrb[0].mxu0
      %v6875 = vadd.f32 %v6834, %v6874
      %v6876 = vpop.f32.mrb[0].mxu0
      %v6877 = vpop.f32.mrb[0].mxu0
      %v6878 = vadd.f32 %v6837, %v6877
      %v6879 = vpop.f32.mrb[0].mxu0
      %6880 = vdwg.mxu0
      %6881 = vmatprep.subr.bf16.mxu0 0
      %6882 = vmatpush1.bf16.msra.mxu0 %v3968
      %6883 = vmatprep.subr.bf16.mxu0 0
      %6884 = vmatpush1.bf16.msra.mxu0 %v3969
      %6885 = vmatprep.subr.bf16.mxu0 0
      %6886 = vmatpush1.bf16.msra.mxu0 %v3970
      %6887 = vmatprep.subr.bf16.mxu0 0
      %6888 = vmatpush1.bf16.msra.mxu0 %v3971
      %6889 = vmatprep.subr.bf16.mxu0 0
      %6890 = vmatpush1.bf16.msra.mxu0 %v3972
      %6891 = vmatprep.subr.bf16.mxu0 0
      %6892 = vmatpush1.bf16.msra.mxu0 %v3973
      %6893 = vmatprep.subr.bf16.mxu0 0
      %6894 = vmatpush1.bf16.msra.mxu0 %v3974
      %6895 = vmatprep.subr.bf16.mxu0 0
      %6896 = vmatpush1.bf16.msra.mxu0 %v3975
      %6897 = vmatprep.subr.bf16.mxu0 0
      %6898 = vmatpush1.bf16.msra.mxu0 %v3976
      %6899 = vmatprep.subr.bf16.mxu0 0
      %6900 = vmatpush1.bf16.msra.mxu0 %v3977
      %6901 = vmatprep.subr.bf16.mxu0 0
      %6902 = vmatpush1.bf16.msra.mxu0 %v3978
      %6903 = vmatprep.subr.bf16.mxu0 0
      %6904 = vmatpush1.bf16.msra.mxu0 %v3979
      %6905 = vmatprep.subr.bf16.mxu0 0
      %6906 = vmatpush1.bf16.msra.mxu0 %v3980
      %6907 = vmatprep.subr.bf16.mxu0 0
      %6908 = vmatpush1.bf16.msra.mxu0 %v3981
      %6909 = vmatprep.subr.bf16.mxu0 0
      %6910 = vmatpush1.bf16.msra.mxu0 %v3982
      %6911 = vmatprep.subr.bf16.mxu0 0
      %6912 = vmatpush1.bf16.msra.mxu0 %v3983
      %6913 = vmatprep.mubr.bf16.mxu0 %v6772
      %6914 = vmatmul.mubr.bf16.gmra.mrb[0].mxu0 %v6771
      %v6915 = vpop.f32.mrb[0].mxu0
      %v6916 = vadd.f32 %v6875, %v6915
      %v6917 = vpop.f32.mrb[0].mxu0
      %v6918 = vpop.f32.mrb[0].mxu0
      %v6919 = vadd.f32 %v6878, %v6918
      %v6920 = vpop.f32.mrb[0].mxu0
      %6921 = vdwg.mxu0
      %6922 = vmatprep.subr.bf16.mxu0 0
      %6923 = vmatpush1.bf16.msra.mxu0 %v3984
      %6924 = vmatprep.subr.bf16.mxu0 0
      %6925 = vmatpush1.bf16.msra.mxu0 %v3985
      %6926 = vmatprep.subr.bf16.mxu0 0
      %6927 = vmatpush1.bf16.msra.mxu0 %v3986
      %6928 = vmatprep.subr.bf16.mxu0 0
      %6929 = vmatpush1.bf16.msra.mxu0 %v3987
      %6930 = vmatprep.subr.bf16.mxu0 0
      %6931 = vmatpush1.bf16.msra.mxu0 %v3988
      %6932 = vmatprep.subr.bf16.mxu0 0
      %6933 = vmatpush1.bf16.msra.mxu0 %v3989
      %6934 = vmatprep.subr.bf16.mxu0 0
      %6935 = vmatpush1.bf16.msra.mxu0 %v3990
      %6936 = vmatprep.subr.bf16.mxu0 0
      %6937 = vmatpush1.bf16.msra.mxu0 %v3991
      %6938 = vmatprep.subr.bf16.mxu0 0
      %6939 = vmatpush1.bf16.msra.mxu0 %v3992
      %6940 = vmatprep.subr.bf16.mxu0 0
      %6941 = vmatpush1.bf16.msra.mxu0 %v3993
      %6942 = vmatprep.subr.bf16.mxu0 0
      %6943 = vmatpush1.bf16.msra.mxu0 %v3994
      %6944 = vmatprep.subr.bf16.mxu0 0
      %6945 = vmatpush1.bf16.msra.mxu0 %v3995
      %6946 = vmatprep.subr.bf16.mxu0 0
      %6947 = vmatpush1.bf16.msra.mxu0 %v3996
      %6948 = vmatprep.subr.bf16.mxu0 0
      %6949 = vmatpush1.bf16.msra.mxu0 %v3997
      %6950 = vmatprep.subr.bf16.mxu0 0
      %6951 = vmatpush1.bf16.msra.mxu0 %v3998
      %6952 = vmatprep.subr.bf16.mxu0 0
      %6953 = vmatpush1.bf16.msra.mxu0 %v3999
      %6954 = vmatprep.mubr.bf16.mxu0 %v6774
      %6955 = vmatmul.mubr.bf16.gmra.mrb[0].mxu0 %v6773
      %v6956 = vpop.f32.mrb[0].mxu0
      %v6957 = vadd.f32 %v6916, %v6956
      %v6958 = vpop.f32.mrb[0].mxu0
      %v6959 = vpop.f32.mrb[0].mxu0
      %v6960 = vadd.f32 %v6919, %v6959
      %v6961 = vpop.f32.mrb[0].mxu0
      %6962 = vdwg.mxu0
      %6963 = vmatprep.subr.bf16.mxu0 0
      %6964 = vmatpush1.bf16.msra.mxu0 %v4000
      %6965 = vmatprep.subr.bf16.mxu0 0
      %6966 = vmatpush1.bf16.msra.mxu0 %v4001
      %6967 = vmatprep.subr.bf16.mxu0 0
      %6968 = vmatpush1.bf16.msra.mxu0 %v4002
      %6969 = vmatprep.subr.bf16.mxu0 0
      %6970 = vmatpush1.bf16.msra.mxu0 %v4003
      %6971 = vmatprep.subr.bf16.mxu0 0
      %6972 = vmatpush1.bf16.msra.mxu0 %v4004
      %6973 = vmatprep.subr.bf16.mxu0 0
      %6974 = vmatpush1.bf16.msra.mxu0 %v4005
      %6975 = vmatprep.subr.bf16.mxu0 0
      %6976 = vmatpush1.bf16.msra.mxu0 %v4006
      %6977 = vmatprep.subr.bf16.mxu0 0
      %6978 = vmatpush1.bf16.msra.mxu0 %v4007
      %6979 = vmatprep.subr.bf16.mxu0 0
      %6980 = vmatpush1.bf16.msra.mxu0 %v4008
      %6981 = vmatprep.subr.bf16.mxu0 0
      %6982 = vmatpush1.bf16.msra.mxu0 %v4009
      %6983 = vmatprep.subr.bf16.mxu0 0
      %6984 = vmatpush1.bf16.msra.mxu0 %v4010
      %6985 = vmatprep.subr.bf16.mxu0 0
      %6986 = vmatpush1.bf16.msra.mxu0 %v4011
      %6987 = vmatprep.subr.bf16.mxu0 0
      %6988 = vmatpush1.bf16.msra.mxu0 %v4012
      %6989 = vmatprep.subr.bf16.mxu0 0
      %6990 = vmatpush1.bf16.msra.mxu0 %v4013
      %6991 = vmatprep.subr.bf16.mxu0 0
      %6992 = vmatpush1.bf16.msra.mxu0 %v4014
      %6993 = vmatprep.subr.bf16.mxu0 0
      %6994 = vmatpush1.bf16.msra.mxu0 %v4015
      %6995 = vmatprep.mubr.bf16.mxu0 %v6776
      %6996 = vmatmul.mubr.bf16.gmra.mrb[0].mxu0 %v6775
      %v6997 = vpop.f32.mrb[0].mxu0
      %v6998 = vadd.f32 %v6957, %v6997
      %v6999 = vpop.f32.mrb[0].mxu0
      %v7000 = vpop.f32.mrb[0].mxu0
      %v7001 = vadd.f32 %v6960, %v7000
      %v7002 = vpop.f32.mrb[0].mxu0
      %7003 = vdwg.mxu0
      %7004 = vmatprep.subr.bf16.mxu0 0
      %7005 = vmatpush1.bf16.msra.mxu0 %v4016
      %7006 = vmatprep.subr.bf16.mxu0 0
      %7007 = vmatpush1.bf16.msra.mxu0 %v4017
      %7008 = vmatprep.subr.bf16.mxu0 0
      %7009 = vmatpush1.bf16.msra.mxu0 %v4018
      %7010 = vmatprep.subr.bf16.mxu0 0
      %7011 = vmatpush1.bf16.msra.mxu0 %v4019
      %7012 = vmatprep.subr.bf16.mxu0 0
      %7013 = vmatpush1.bf16.msra.mxu0 %v4020
      %7014 = vmatprep.subr.bf16.mxu0 0
      %7015 = vmatpush1.bf16.msra.mxu0 %v4021
      %7016 = vmatprep.subr.bf16.mxu0 0
      %7017 = vmatpush1.bf16.msra.mxu0 %v4022
      %7018 = vmatprep.subr.bf16.mxu0 0
      %7019 = vmatpush1.bf16.msra.mxu0 %v4023
      %7020 = vmatprep.subr.bf16.mxu0 0
      %7021 = vmatpush1.bf16.msra.mxu0 %v4024
      %7022 = vmatprep.subr.bf16.mxu0 0
      %7023 = vmatpush1.bf16.msra.mxu0 %v4025
      %7024 = vmatprep.subr.bf16.mxu0 0
      %7025 = vmatpush1.bf16.msra.mxu0 %v4026
      %7026 = vmatprep.subr.bf16.mxu0 0
      %7027 = vmatpush1.bf16.msra.mxu0 %v4027
      %7028 = vmatprep.subr.bf16.mxu0 0
      %7029 = vmatpush1.bf16.msra.mxu0 %v4028
      %7030 = vmatprep.subr.bf16.mxu0 0
      %7031 = vmatpush1.bf16.msra.mxu0 %v4029
      %7032 = vmatprep.subr.bf16.mxu0 0
      %7033 = vmatpush1.bf16.msra.mxu0 %v4030
      %7034 = vmatprep.subr.bf16.mxu0 0
      %7035 = vmatpush1.bf16.msra.mxu0 %v4031
      %7036 = vmatprep.mubr.bf16.mxu0 %v6778
      %7037 = vmatmul.mubr.bf16.gmra.mrb[0].mxu0 %v6777
      %v7038 = vpop.f32.mrb[0].mxu0
      %v7039 = vadd.f32 %v6998, %v7038
      %v7040 = vpop.f32.mrb[0].mxu0
      %v7041 = vpop.f32.mrb[0].mxu0
      %v7042 = vadd.f32 %v7001, %v7041
      %v7043 = vpop.f32.mrb[0].mxu0
      %7044 = vdwg.mxu0
      %7045 = vmatprep.subr.bf16.mxu0 0
      %7046 = vmatpush1.bf16.msra.mxu0 %v4032
      %7047 = vmatprep.subr.bf16.mxu0 0
      %7048 = vmatpush1.bf16.msra.mxu0 %v4033
      %7049 = vmatprep.subr.bf16.mxu0 0
      %7050 = vmatpush1.bf16.msra.mxu0 %v4034
      %7051 = vmatprep.subr.bf16.mxu0 0
      %7052 = vmatpush1.bf16.msra.mxu0 %v4035
      %7053 = vmatprep.subr.bf16.mxu0 0
      %7054 = vmatpush1.bf16.msra.mxu0 %v4036
      %7055 = vmatprep.subr.bf16.mxu0 0
      %7056 = vmatpush1.bf16.msra.mxu0 %v4037
      %7057 = vmatprep.subr.bf16.mxu0 0
      %7058 = vmatpush1.bf16.msra.mxu0 %v4038
      %7059 = vmatprep.subr.bf16.mxu0 0
      %7060 = vmatpush1.bf16.msra.mxu0 %v4039
      %7061 = vmatprep.subr.bf16.mxu0 0
      %7062 = vmatpush1.bf16.msra.mxu0 %v4040
      %7063 = vmatprep.subr.bf16.mxu0 0
      %7064 = vmatpush1.bf16.msra.mxu0 %v4041
      %7065 = vmatprep.subr.bf16.mxu0 0
      %7066 = vmatpush1.bf16.msra.mxu0 %v4042
      %7067 = vmatprep.subr.bf16.mxu0 0
      %7068 = vmatpush1.bf16.msra.mxu0 %v4043
      %7069 = vmatprep.subr.bf16.mxu0 0
      %7070 = vmatpush1.bf16.msra.mxu0 %v4044
      %7071 = vmatprep.subr.bf16.mxu0 0
      %7072 = vmatpush1.bf16.msra.mxu0 %v4045
      %7073 = vmatprep.subr.bf16.mxu0 0
      %7074 = vmatpush1.bf16.msra.mxu0 %v4046
      %7075 = vmatprep.subr.bf16.mxu0 0
      %7076 = vmatpush1.bf16.msra.mxu0 %v4047
      %7077 = vmatprep.mubr.bf16.mxu0 %v6780
      %7078 = vmatmul.mubr.bf16.gmra.mrb[0].mxu0 %v6779
      %v7079 = vpop.f32.mrb[0].mxu0
      %v7080 = vadd.f32 %v7039, %v7079
      %v7081 = vpop.f32.mrb[0].mxu0
      %v7082 = vpop.f32.mrb[0].mxu0
      %v7083 = vadd.f32 %v7042, %v7082
      %v7084 = vpop.f32.mrb[0].mxu0
      %7085 = vdwg.mxu0
      %7086 = vmatprep.subr.bf16.mxu0 0
      %7087 = vmatpush1.bf16.msra.mxu0 %v4048
      %7088 = vmatprep.subr.bf16.mxu0 0
      %7089 = vmatpush1.bf16.msra.mxu0 %v4049
      %7090 = vmatprep.subr.bf16.mxu0 0
      %7091 = vmatpush1.bf16.msra.mxu0 %v4050
      %7092 = vmatprep.subr.bf16.mxu0 0
      %7093 = vmatpush1.bf16.msra.mxu0 %v4051
      %7094 = vmatprep.subr.bf16.mxu0 0
      %7095 = vmatpush1.bf16.msra.mxu0 %v4052
      %7096 = vmatprep.subr.bf16.mxu0 0
      %7097 = vmatpush1.bf16.msra.mxu0 %v4053
      %7098 = vmatprep.subr.bf16.mxu0 0
      %7099 = vmatpush1.bf16.msra.mxu0 %v4054
      %7100 = vmatprep.subr.bf16.mxu0 0
      %7101 = vmatpush1.bf16.msra.mxu0 %v4055
      %7102 = vmatprep.subr.bf16.mxu0 0
      %7103 = vmatpush1.bf16.msra.mxu0 %v4056
      %7104 = vmatprep.subr.bf16.mxu0 0
      %7105 = vmatpush1.bf16.msra.mxu0 %v4057
      %7106 = vmatprep.subr.bf16.mxu0 0
      %7107 = vmatpush1.bf16.msra.mxu0 %v4058
      %7108 = vmatprep.subr.bf16.mxu0 0
      %7109 = vmatpush1.bf16.msra.mxu0 %v4059
      %7110 = vmatprep.subr.bf16.mxu0 0
      %7111 = vmatpush1.bf16.msra.mxu0 %v4060
      %7112 = vmatprep.subr.bf16.mxu0 0
      %7113 = vmatpush1.bf16.msra.mxu0 %v4061
      %7114 = vmatprep.subr.bf16.mxu0 0
      %7115 = vmatpush1.bf16.msra.mxu0 %v4062
      %7116 = vmatprep.subr.bf16.mxu0 0
      %7117 = vmatpush1.bf16.msra.mxu0 %v4063
      %7118 = vmatprep.mubr.bf16.mxu0 %v6782
      %7119 = vmatmul.mubr.bf16.gmra.mrb[0].mxu0 %v6781
      %v7120 = vpop.f32.mrb[0].mxu0
      %v7121 = vadd.f32 %v7080, %v7120
      %v7122 = vpop.f32.mrb[0].mxu0
      %v7123 = vpop.f32.mrb[0].mxu0
      %v7124 = vadd.f32 %v7083, %v7123
      %v7125 = vpop.f32.mrb[0].mxu0
      %7126 = vdwg.mxu0
      %7127 = vmatprep.subr.bf16.mxu0 0
      %7128 = vmatpush1.bf16.msra.mxu0 %v4064
      %7129 = vmatprep.subr.bf16.mxu0 0
      %7130 = vmatpush1.bf16.msra.mxu0 %v4065
      %7131 = vmatprep.subr.bf16.mxu0 0
      %7132 = vmatpush1.bf16.msra.mxu0 %v4066
      %7133 = vmatprep.subr.bf16.mxu0 0
      %7134 = vmatpush1.bf16.msra.mxu0 %v4067
      %7135 = vmatprep.subr.bf16.mxu0 0
      %7136 = vmatpush1.bf16.msra.mxu0 %v4068
      %7137 = vmatprep.subr.bf16.mxu0 0
      %7138 = vmatpush1.bf16.msra.mxu0 %v4069
      %7139 = vmatprep.subr.bf16.mxu0 0
      %7140 = vmatpush1.bf16.msra.mxu0 %v4070
      %7141 = vmatprep.subr.bf16.mxu0 0
      %7142 = vmatpush1.bf16.msra.mxu0 %v4071
      %7143 = vmatprep.subr.bf16.mxu0 0
      %7144 = vmatpush1.bf16.msra.mxu0 %v4072
      %7145 = vmatprep.subr.bf16.mxu0 0
      %7146 = vmatpush1.bf16.msra.mxu0 %v4073
      %7147 = vmatprep.subr.bf16.mxu0 0
      %7148 = vmatpush1.bf16.msra.mxu0 %v4074
      %7149 = vmatprep.subr.bf16.mxu0 0
      %7150 = vmatpush1.bf16.msra.mxu0 %v4075
      %7151 = vmatprep.subr.bf16.mxu0 0
      %7152 = vmatpush1.bf16.msra.mxu0 %v4076
      %7153 = vmatprep.subr.bf16.mxu0 0
      %7154 = vmatpush1.bf16.msra.mxu0 %v4077
      %7155 = vmatprep.subr.bf16.mxu0 0
      %7156 = vmatpush1.bf16.msra.mxu0 %v4078
      %7157 = vmatprep.subr.bf16.mxu0 0
      %7158 = vmatpush1.bf16.msra.mxu0 %v4079
      %7159 = vmatprep.mubr.bf16.mxu0 %v6784
      %7160 = vmatmul.mubr.bf16.gmra.mrb[0].mxu0 %v6783
      %v7161 = vpop.f32.mrb[0].mxu0
      %v7162 = vadd.f32 %v7121, %v7161
      %v7163 = vpop.f32.mrb[0].mxu0
      %v7164 = vpop.f32.mrb[0].mxu0
      %v7165 = vadd.f32 %v7124, %v7164
      %v7166 = vpop.f32.mrb[0].mxu0
      %7167 = vdwg.mxu0
      %7168 = vmatprep.subr.bf16.mxu0 0
      %7169 = vmatpush1.bf16.msra.mxu0 %v4080
      %7170 = vmatprep.subr.bf16.mxu0 0
      %7171 = vmatpush1.bf16.msra.mxu0 %v4081
      %7172 = vmatprep.subr.bf16.mxu0 0
      %7173 = vmatpush1.bf16.msra.mxu0 %v4082
      %7174 = vmatprep.subr.bf16.mxu0 0
      %7175 = vmatpush1.bf16.msra.mxu0 %v4083
      %7176 = vmatprep.subr.bf16.mxu0 0
      %7177 = vmatpush1.bf16.msra.mxu0 %v4084
      %7178 = vmatprep.subr.bf16.mxu0 0
      %7179 = vmatpush1.bf16.msra.mxu0 %v4085
      %7180 = vmatprep.subr.bf16.mxu0 0
      %7181 = vmatpush1.bf16.msra.mxu0 %v4086
      %7182 = vmatprep.subr.bf16.mxu0 0
      %7183 = vmatpush1.bf16.msra.mxu0 %v4087
      %7184 = vmatprep.subr.bf16.mxu0 0
      %7185 = vmatpush1.bf16.msra.mxu0 %v4088
      %7186 = vmatprep.subr.bf16.mxu0 0
      %7187 = vmatpush1.bf16.msra.mxu0 %v4089
      %7188 = vmatprep.subr.bf16.mxu0 0
      %7189 = vmatpush1.bf16.msra.mxu0 %v4090
      %7190 = vmatprep.subr.bf16.mxu0 0
      %7191 = vmatpush1.bf16.msra.mxu0 %v4091
      %7192 = vmatprep.subr.bf16.mxu0 0
      %7193 = vmatpush1.bf16.msra.mxu0 %v4092
      %7194 = vmatprep.subr.bf16.mxu0 0
      %7195 = vmatpush1.bf16.msra.mxu0 %v4093
      %7196 = vmatprep.subr.bf16.mxu0 0
      %7197 = vmatpush1.bf16.msra.mxu0 %v4094
      %7198 = vmatprep.subr.bf16.mxu0 0
      %7199 = vmatpush1.bf16.msra.mxu0 %v4095
      %7200 = vmatprep.mubr.bf16.mxu0 %v6786
      %7201 = vmatmul.mubr.bf16.gmra.mrb[0].mxu0 %v6785
      %v7202 = vpop.f32.mrb[0].mxu0
      %v7203 = vadd.f32 %v7162, %v7202
      %v7204 = vpop.f32.mrb[0].mxu0
      %v7205 = vpop.f32.mrb[0].mxu0
      %v7206 = vadd.f32 %v7165, %v7205
      %v7207 = vpop.f32.mrb[0].mxu0
      %7208 = vdwg.mxu0
      %7209 = vmatprep.subr.bf16.mxu0 0
      %7210 = vmatpush1.bf16.msra.mxu0 %v4096
      %7211 = vmatprep.subr.bf16.mxu0 0
      %7212 = vmatpush1.bf16.msra.mxu0 %v4097
      %7213 = vmatprep.subr.bf16.mxu0 0
      %7214 = vmatpush1.bf16.msra.mxu0 %v4098
      %7215 = vmatprep.subr.bf16.mxu0 0
      %7216 = vmatpush1.bf16.msra.mxu0 %v4099
      %7217 = vmatprep.subr.bf16.mxu0 0
      %7218 = vmatpush1.bf16.msra.mxu0 %v4100
      %7219 = vmatprep.subr.bf16.mxu0 0
      %7220 = vmatpush1.bf16.msra.mxu0 %v4101
      %7221 = vmatprep.subr.bf16.mxu0 0
      %7222 = vmatpush1.bf16.msra.mxu0 %v4102
      %7223 = vmatprep.subr.bf16.mxu0 0
      %7224 = vmatpush1.bf16.msra.mxu0 %v4103
      %7225 = vmatprep.subr.bf16.mxu0 0
      %7226 = vmatpush1.bf16.msra.mxu0 %v4104
      %7227 = vmatprep.subr.bf16.mxu0 0
      %7228 = vmatpush1.bf16.msra.mxu0 %v4105
      %7229 = vmatprep.subr.bf16.mxu0 0
      %7230 = vmatpush1.bf16.msra.mxu0 %v4106
      %7231 = vmatprep.subr.bf16.mxu0 0
      %7232 = vmatpush1.bf16.msra.mxu0 %v4107
      %7233 = vmatprep.subr.bf16.mxu0 0
      %7234 = vmatpush1.bf16.msra.mxu0 %v4108
      %7235 = vmatprep.subr.bf16.mxu0 0
      %7236 = vmatpush1.bf16.msra.mxu0 %v4109
      %7237 = vmatprep.subr.bf16.mxu0 0
      %7238 = vmatpush1.bf16.msra.mxu0 %v4110
      %7239 = vmatprep.subr.bf16.mxu0 0
      %7240 = vmatpush1.bf16.msra.mxu0 %v4111
      %7241 = vmatprep.mubr.bf16.mxu0 %v6788
      %7242 = vmatmul.mubr.bf16.gmra.mrb[0].mxu0 %v6787
      %v7243 = vpop.f32.mrb[0].mxu0
      %v7244 = vadd.f32 %v7203, %v7243
      %v7245 = vpop.f32.mrb[0].mxu0
      %v7246 = vpop.f32.mrb[0].mxu0
      %v7247 = vadd.f32 %v7206, %v7246
      %v7248 = vpop.f32.mrb[0].mxu0
      %7249 = vdwg.mxu0
      %7250 = vmatprep.subr.bf16.mxu0 0
      %7251 = vmatpush1.bf16.msra.mxu0 %v4112
      %7252 = vmatprep.subr.bf16.mxu0 0
      %7253 = vmatpush1.bf16.msra.mxu0 %v4113
      %7254 = vmatprep.subr.bf16.mxu0 0
      %7255 = vmatpush1.bf16.msra.mxu0 %v4114
      %7256 = vmatprep.subr.bf16.mxu0 0
      %7257 = vmatpush1.bf16.msra.mxu0 %v4115
      %7258 = vmatprep.subr.bf16.mxu0 0
      %7259 = vmatpush1.bf16.msra.mxu0 %v4116
      %7260 = vmatprep.subr.bf16.mxu0 0
      %7261 = vmatpush1.bf16.msra.mxu0 %v4117
      %7262 = vmatprep.subr.bf16.mxu0 0
      %7263 = vmatpush1.bf16.msra.mxu0 %v4118
      %7264 = vmatprep.subr.bf16.mxu0 0
      %7265 = vmatpush1.bf16.msra.mxu0 %v4119
      %7266 = vmatprep.subr.bf16.mxu0 0
      %7267 = vmatpush1.bf16.msra.mxu0 %v4120
      %7268 = vmatprep.subr.bf16.mxu0 0
      %7269 = vmatpush1.bf16.msra.mxu0 %v4121
      %7270 = vmatprep.subr.bf16.mxu0 0
      %7271 = vmatpush1.bf16.msra.mxu0 %v4122
      %7272 = vmatprep.subr.bf16.mxu0 0
      %7273 = vmatpush1.bf16.msra.mxu0 %v4123
      %7274 = vmatprep.subr.bf16.mxu0 0
      %7275 = vmatpush1.bf16.msra.mxu0 %v4124
      %7276 = vmatprep.subr.bf16.mxu0 0
      %7277 = vmatpush1.bf16.msra.mxu0 %v4125
      %7278 = vmatprep.subr.bf16.mxu0 0
      %7279 = vmatpush1.bf16.msra.mxu0 %v4126
      %7280 = vmatprep.subr.bf16.mxu0 0
      %7281 = vmatpush1.bf16.msra.mxu0 %v4127
      %7282 = vmatprep.mubr.bf16.mxu0 %v6790
      %7283 = vmatmul.mubr.bf16.gmra.mrb[0].mxu0 %v6789
      %v7284 = vpop.f32.mrb[0].mxu0
      %v7285 = vadd.f32 %v7244, %v7284
      %v7286 = vpop.f32.mrb[0].mxu0
      %v7287 = vpop.f32.mrb[0].mxu0
      %v7288 = vadd.f32 %v7247, %v7287
      %v7289 = vpop.f32.mrb[0].mxu0
      %7290 = vdwg.mxu0
      %7291 = vmatprep.subr.bf16.mxu0 0
      %7292 = vmatpush1.bf16.msra.mxu0 %v4128
      %7293 = vmatprep.subr.bf16.mxu0 0
      %7294 = vmatpush1.bf16.msra.mxu0 %v4129
      %7295 = vmatprep.subr.bf16.mxu0 0
      %7296 = vmatpush1.bf16.msra.mxu0 %v4130
      %7297 = vmatprep.subr.bf16.mxu0 0
      %7298 = vmatpush1.bf16.msra.mxu0 %v4131
      %7299 = vmatprep.subr.bf16.mxu0 0
      %7300 = vmatpush1.bf16.msra.mxu0 %v4132
      %7301 = vmatprep.subr.bf16.mxu0 0
      %7302 = vmatpush1.bf16.msra.mxu0 %v4133
      %7303 = vmatprep.subr.bf16.mxu0 0
      %7304 = vmatpush1.bf16.msra.mxu0 %v4134
      %7305 = vmatprep.subr.bf16.mxu0 0
      %7306 = vmatpush1.bf16.msra.mxu0 %v4135
      %7307 = vmatprep.subr.bf16.mxu0 0
      %7308 = vmatpush1.bf16.msra.mxu0 %v4136
      %7309 = vmatprep.subr.bf16.mxu0 0
      %7310 = vmatpush1.bf16.msra.mxu0 %v4137
      %7311 = vmatprep.subr.bf16.mxu0 0
      %7312 = vmatpush1.bf16.msra.mxu0 %v4138
      %7313 = vmatprep.subr.bf16.mxu0 0
      %7314 = vmatpush1.bf16.msra.mxu0 %v4139
      %7315 = vmatprep.subr.bf16.mxu0 0
      %7316 = vmatpush1.bf16.msra.mxu0 %v4140
      %7317 = vmatprep.subr.bf16.mxu0 0
      %7318 = vmatpush1.bf16.msra.mxu0 %v4141
      %7319 = vmatprep.subr.bf16.mxu0 0
      %7320 = vmatpush1.bf16.msra.mxu0 %v4142
      %7321 = vmatprep.subr.bf16.mxu0 0
      %7322 = vmatpush1.bf16.msra.mxu0 %v4143
      %7323 = vmatprep.mubr.bf16.mxu0 %v6792
      %7324 = vmatmul.mubr.bf16.gmra.mrb[0].mxu0 %v6791
      %v7325 = vpop.f32.mrb[0].mxu0
      %v7326 = vadd.f32 %v7285, %v7325
      %v7327 = vpop.f32.mrb[0].mxu0
      %v7328 = vpop.f32.mrb[0].mxu0
      %v7329 = vadd.f32 %v7288, %v7328
      %v7330 = vpop.f32.mrb[0].mxu0
      %7331 = vdwg.mxu0
      %7332 = vmatprep.subr.bf16.mxu0 0
      %7333 = vmatpush1.bf16.msra.mxu0 %v4144
      %7334 = vmatprep.subr.bf16.mxu0 0
      %7335 = vmatpush1.bf16.msra.mxu0 %v4145
      %7336 = vmatprep.subr.bf16.mxu0 0
      %7337 = vmatpush1.bf16.msra.mxu0 %v4146
      %7338 = vmatprep.subr.bf16.mxu0 0
      %7339 = vmatpush1.bf16.msra.mxu0 %v4147
      %7340 = vmatprep.subr.bf16.mxu0 0
      %7341 = vmatpush1.bf16.msra.mxu0 %v4148
      %7342 = vmatprep.subr.bf16.mxu0 0
      %7343 = vmatpush1.bf16.msra.mxu0 %v4149
      %7344 = vmatprep.subr.bf16.mxu0 0
      %7345 = vmatpush1.bf16.msra.mxu0 %v4150
      %7346 = vmatprep.subr.bf16.mxu0 0
      %7347 = vmatpush1.bf16.msra.mxu0 %v4151
      %7348 = vmatprep.subr.bf16.mxu0 0
      %7349 = vmatpush1.bf16.msra.mxu0 %v4152
      %7350 = vmatprep.subr.bf16.mxu0 0
      %7351 = vmatpush1.bf16.msra.mxu0 %v4153
      %7352 = vmatprep.subr.bf16.mxu0 0
      %7353 = vmatpush1.bf16.msra.mxu0 %v4154
      %7354 = vmatprep.subr.bf16.mxu0 0
      %7355 = vmatpush1.bf16.msra.mxu0 %v4155
      %7356 = vmatprep.subr.bf16.mxu0 0
      %7357 = vmatpush1.bf16.msra.mxu0 %v4156
      %7358 = vmatprep.subr.bf16.mxu0 0
      %7359 = vmatpush1.bf16.msra.mxu0 %v4157
      %7360 = vmatprep.subr.bf16.mxu0 0
      %7361 = vmatpush1.bf16.msra.mxu0 %v4158
      %7362 = vmatprep.subr.bf16.mxu0 0
      %7363 = vmatpush1.bf16.msra.mxu0 %v4159
      %7364 = vmatprep.mubr.bf16.mxu0 %v6794
      %7365 = vmatmul.mubr.bf16.gmra.mrb[0].mxu0 %v6793
      %v7366 = vpop.f32.mrb[0].mxu0
      %v7367 = vadd.f32 %v7326, %v7366
      %v7368 = vpop.f32.mrb[0].mxu0
      %v7369 = vpop.f32.mrb[0].mxu0
      %v7370 = vadd.f32 %v7329, %v7369
      %v7371 = vpop.f32.mrb[0].mxu0
      %7372 = vdwg.mxu0
      %7373 = vmatprep.subr.bf16.mxu0 0
      %7374 = vmatpush1.bf16.msra.mxu0 %v4160
      %7375 = vmatprep.subr.bf16.mxu0 0
      %7376 = vmatpush1.bf16.msra.mxu0 %v4161
      %7377 = vmatprep.subr.bf16.mxu0 0
      %7378 = vmatpush1.bf16.msra.mxu0 %v4162
      %7379 = vmatprep.subr.bf16.mxu0 0
      %7380 = vmatpush1.bf16.msra.mxu0 %v4163
      %7381 = vmatprep.subr.bf16.mxu0 0
      %7382 = vmatpush1.bf16.msra.mxu0 %v4164
      %7383 = vmatprep.subr.bf16.mxu0 0
      %7384 = vmatpush1.bf16.msra.mxu0 %v4165
      %7385 = vmatprep.subr.bf16.mxu0 0
      %7386 = vmatpush1.bf16.msra.mxu0 %v4166
      %7387 = vmatprep.subr.bf16.mxu0 0
      %7388 = vmatpush1.bf16.msra.mxu0 %v4167
      %7389 = vmatprep.subr.bf16.mxu0 0
      %7390 = vmatpush1.bf16.msra.mxu0 %v4168
      %7391 = vmatprep.subr.bf16.mxu0 0
      %7392 = vmatpush1.bf16.msra.mxu0 %v4169
      %7393 = vmatprep.subr.bf16.mxu0 0
      %7394 = vmatpush1.bf16.msra.mxu0 %v4170
      %7395 = vmatprep.subr.bf16.mxu0 0
      %7396 = vmatpush1.bf16.msra.mxu0 %v4171
      %7397 = vmatprep.subr.bf16.mxu0 0
      %7398 = vmatpush1.bf16.msra.mxu0 %v4172
      %7399 = vmatprep.subr.bf16.mxu0 0
      %7400 = vmatpush1.bf16.msra.mxu0 %v4173
      %7401 = vmatprep.subr.bf16.mxu0 0
      %7402 = vmatpush1.bf16.msra.mxu0 %v4174
      %7403 = vmatprep.subr.bf16.mxu0 0
      %7404 = vmatpush1.bf16.msra.mxu0 %v4175
      %7405 = vmatprep.mubr.bf16.mxu0 %v6796
      %7406 = vmatmul.mubr.bf16.gmra.mrb[0].mxu0 %v6795
      %v7407 = vpop.f32.mrb[0].mxu0
      %v7408 = vadd.f32 %v7367, %v7407
      %v7409 = vpop.f32.mrb[0].mxu0
      %v7410 = vpop.f32.mrb[0].mxu0
      %v7411 = vadd.f32 %v7370, %v7410
      %v7412 = vpop.f32.mrb[0].mxu0
      %7413 = vdwg.mxu0
      %7414 = vmatprep.subr.bf16.mxu0 0
      %7415 = vmatpush1.bf16.msra.mxu0 %v4176
      %7416 = vmatprep.subr.bf16.mxu0 0
      %7417 = vmatpush1.bf16.msra.mxu0 %v4177
      %7418 = vmatprep.subr.bf16.mxu0 0
      %7419 = vmatpush1.bf16.msra.mxu0 %v4178
      %7420 = vmatprep.subr.bf16.mxu0 0
      %7421 = vmatpush1.bf16.msra.mxu0 %v4179
      %7422 = vmatprep.subr.bf16.mxu0 0
      %7423 = vmatpush1.bf16.msra.mxu0 %v4180
      %7424 = vmatprep.subr.bf16.mxu0 0
      %7425 = vmatpush1.bf16.msra.mxu0 %v4181
      %7426 = vmatprep.subr.bf16.mxu0 0
      %7427 = vmatpush1.bf16.msra.mxu0 %v4182
      %7428 = vmatprep.subr.bf16.mxu0 0
      %7429 = vmatpush1.bf16.msra.mxu0 %v4183
      %7430 = vmatprep.subr.bf16.mxu0 0
      %7431 = vmatpush1.bf16.msra.mxu0 %v4184
      %7432 = vmatprep.subr.bf16.mxu0 0
      %7433 = vmatpush1.bf16.msra.mxu0 %v4185
      %7434 = vmatprep.subr.bf16.mxu0 0
      %7435 = vmatpush1.bf16.msra.mxu0 %v4186
      %7436 = vmatprep.subr.bf16.mxu0 0
      %7437 = vmatpush1.bf16.msra.mxu0 %v4187
      %7438 = vmatprep.subr.bf16.mxu0 0
      %7439 = vmatpush1.bf16.msra.mxu0 %v4188
      %7440 = vmatprep.subr.bf16.mxu0 0
      %7441 = vmatpush1.bf16.msra.mxu0 %v4189
      %7442 = vmatprep.subr.bf16.mxu0 0
      %7443 = vmatpush1.bf16.msra.mxu0 %v4190
      %7444 = vmatprep.subr.bf16.mxu0 0
      %7445 = vmatpush1.bf16.msra.mxu0 %v4191
      %7446 = vmatprep.mubr.bf16.mxu0 %v6798
      %7447 = vmatmul.mubr.bf16.gmra.mrb[0].mxu0 %v6797
      %v7448 = vpop.f32.mrb[0].mxu0
      %v7449 = vadd.f32 %v7408, %v7448
      %v7450 = vpop.f32.mrb[0].mxu0
      %v7451 = vpop.f32.mrb[0].mxu0
      %v7452 = vadd.f32 %v7411, %v7451
      %v7453 = vpop.f32.mrb[0].mxu0
      %7454 = vdwg.mxu0
      %v7455 = vpack.c.bf16 %v6315, %v6312
      %v7456 = vpack.c.bf16 %v6425, %v6421
      %v7457 = vpack.c.bf16 %v6427, %v6423
      %v7458 = vpack.c.bf16 %v6534, %v6530
      %v7459 = vpack.c.bf16 %v6536, %v6532
      %v7460 = vpack.c.bf16 %v6577, %v6573
      %v7461 = vpack.c.bf16 %v6579, %v6575
      %v7462 = vpack.c.bf16 %v7452, %v7449
      %v7463 = vld [vmem:[%s12] sm:$0xf]
      %v7464 = vld [vmem:[%s12 + $0x4] sm:$0xf]
      %v7465 = vld [vmem:[%s12 + $0x8] sm:$0xf]
      %v7466 = vld [vmem:[%s12 + $0xc] sm:$0xf]
      %v7467 = vld [vmem:[%s12 + $0x10] sm:$0xf]
      %v7468 = vld [vmem:[%s12 + $0x14] sm:$0xf]
      %v7469 = vld [vmem:[%s12 + $0x18] sm:$0xf]
      %v7470 = vld [vmem:[%s12 + $0x1c] sm:$0xf]
      %v7471 = vld [vmem:[%s12 + $0x20] sm:$0xf]
      %v7472 = vld [vmem:[%s12 + $0x24] sm:$0xf]
      %v7473 = vld [vmem:[%s12 + $0x28] sm:$0xf]
      %v7474 = vld [vmem:[%s12 + $0x2c] sm:$0xf]
      %v7475 = vld [vmem:[%s12 + $0x30] sm:$0xf]
      %v7476 = vld [vmem:[%s12 + $0x34] sm:$0xf]
      %v7477 = vld [vmem:[%s12 + $0x38] sm:$0xf]
      %v7478 = vld [vmem:[%s12 + $0x3c] sm:$0xf]
      %v7479 = vld [vmem:[%s12 + $0x40] sm:$0xf]
      %v7480 = vld [vmem:[%s12 + $0x44] sm:$0xf]
      %v7481 = vld [vmem:[%s12 + $0x48] sm:$0xf]
      %v7482 = vld [vmem:[%s12 + $0x4c] sm:$0xf]
      %v7483 = vld [vmem:[%s12 + $0x50] sm:$0xf]
      %v7484 = vld [vmem:[%s12 + $0x54] sm:$0xf]
      %v7485 = vld [vmem:[%s12 + $0x58] sm:$0xf]
      %v7486 = vld [vmem:[%s12 + $0x5c] sm:$0xf]
      %v7487 = vld [vmem:[%s12 + $0x60] sm:$0xf]
      %v7488 = vld [vmem:[%s12 + $0x64] sm:$0xf]
      %v7489 = vld [vmem:[%s12 + $0x68] sm:$0xf]
      %v7490 = vld [vmem:[%s12 + $0x6c] sm:$0xf]
      %v7491 = vld [vmem:[%s12 + $0x70] sm:$0xf]
      %v7492 = vld [vmem:[%s12 + $0x74] sm:$0xf]
      %v7493 = vld [vmem:[%s12 + $0x78] sm:$0xf]
      %v7494 = vld [vmem:[%s12 + $0x7c] sm:$0xf]
      %v7495 = vld [vmem:[%s12 + $0x80] sm:$0xf]
      %v7496 = vld [vmem:[%s12 + $0x84] sm:$0xf]
      %v7497 = vld [vmem:[%s12 + $0x88] sm:$0xf]
      %v7498 = vld [vmem:[%s12 + $0x8c] sm:$0xf]
      %v7499 = vld [vmem:[%s12 + $0x90] sm:$0xf]
      %v7500 = vld [vmem:[%s12 + $0x94] sm:$0xf]
      %v7501 = vld [vmem:[%s12 + $0x98] sm:$0xf]
      %v7502 = vld [vmem:[%s12 + $0x9c] sm:$0xf]
      %v7503 = vld [vmem:[%s12 + $0xa0] sm:$0xf]
      %v7504 = vld [vmem:[%s12 + $0xa4] sm:$0xf]
      %v7505 = vld [vmem:[%s12 + $0xa8] sm:$0xf]
      %v7506 = vld [vmem:[%s12 + $0xac] sm:$0xf]
      %v7507 = vld [vmem:[%s12 + $0xb0] sm:$0xf]
      %v7508 = vld [vmem:[%s12 + $0xb4] sm:$0xf]
      %v7509 = vld [vmem:[%s12 + $0xb8] sm:$0xf]
      %v7510 = vld [vmem:[%s12 + $0xbc] sm:$0xf]
      %v7511 = vld [vmem:[%s12 + $0xc0] sm:$0xf]
      %v7512 = vld [vmem:[%s12 + $0xc4] sm:$0xf]
      %v7513 = vld [vmem:[%s12 + $0xc8] sm:$0xf]
      %v7514 = vld [vmem:[%s12 + $0xcc] sm:$0xf]
      %v7515 = vld [vmem:[%s12 + $0xd0] sm:$0xf]
      %v7516 = vld [vmem:[%s12 + $0xd4] sm:$0xf]
      %v7517 = vld [vmem:[%s12 + $0xd8] sm:$0xf]
      %v7518 = vld [vmem:[%s12 + $0xdc] sm:$0xf]
      %v7519 = vld [vmem:[%s12 + $0xe0] sm:$0xf]
      %v7520 = vld [vmem:[%s12 + $0xe4] sm:$0xf]
      %v7521 = vld [vmem:[%s12 + $0xe8] sm:$0xf]
      %v7522 = vld [vmem:[%s12 + $0xec] sm:$0xf]
      %v7523 = vld [vmem:[%s12 + $0xf0] sm:$0xf]
      %v7524 = vld [vmem:[%s12 + $0xf4] sm:$0xf]
      %v7525 = vld [vmem:[%s12 + $0xf8] sm:$0xf]
      %v7526 = vld [vmem:[%s12 + $0xfc] sm:$0xf]
      %v7527 = vld [vmem:[%s12 + $0x100] sm:$0xf]
      %v7528 = vld [vmem:[%s12 + $0x104] sm:$0xf]
      %v7529 = vld [vmem:[%s12 + $0x108] sm:$0xf]
      %v7530 = vld [vmem:[%s12 + $0x10c] sm:$0xf]
      %v7531 = vld [vmem:[%s12 + $0x110] sm:$0xf]
      %v7532 = vld [vmem:[%s12 + $0x114] sm:$0xf]
      %v7533 = vld [vmem:[%s12 + $0x118] sm:$0xf]
      %v7534 = vld [vmem:[%s12 + $0x11c] sm:$0xf]
      %v7535 = vld [vmem:[%s12 + $0x120] sm:$0xf]
      %v7536 = vld [vmem:[%s12 + $0x124] sm:$0xf]
      %v7537 = vld [vmem:[%s12 + $0x128] sm:$0xf]
      %v7538 = vld [vmem:[%s12 + $0x12c] sm:$0xf]
      %v7539 = vld [vmem:[%s12 + $0x130] sm:$0xf]
      %v7540 = vld [vmem:[%s12 + $0x134] sm:$0xf]
      %v7541 = vld [vmem:[%s12 + $0x138] sm:$0xf]
      %v7542 = vld [vmem:[%s12 + $0x13c] sm:$0xf]
      %v7543 = vld [vmem:[%s12 + $0x140] sm:$0xf]
      %v7544 = vld [vmem:[%s12 + $0x144] sm:$0xf]
      %v7545 = vld [vmem:[%s12 + $0x148] sm:$0xf]
      %v7546 = vld [vmem:[%s12 + $0x14c] sm:$0xf]
      %v7547 = vld [vmem:[%s12 + $0x150] sm:$0xf]
      %v7548 = vld [vmem:[%s12 + $0x154] sm:$0xf]
      %v7549 = vld [vmem:[%s12 + $0x158] sm:$0xf]
      %v7550 = vld [vmem:[%s12 + $0x15c] sm:$0xf]
      %v7551 = vld [vmem:[%s12 + $0x160] sm:$0xf]
      %v7552 = vld [vmem:[%s12 + $0x164] sm:$0xf]
      %v7553 = vld [vmem:[%s12 + $0x168] sm:$0xf]
      %v7554 = vld [vmem:[%s12 + $0x16c] sm:$0xf]
      %v7555 = vld [vmem:[%s12 + $0x170] sm:$0xf]
      %v7556 = vld [vmem:[%s12 + $0x174] sm:$0xf]
      %v7557 = vld [vmem:[%s12 + $0x178] sm:$0xf]
      %v7558 = vld [vmem:[%s12 + $0x17c] sm:$0xf]
      %v7559 = vld [vmem:[%s12 + $0x180] sm:$0xf]
      %v7560 = vld [vmem:[%s12 + $0x184] sm:$0xf]
      %v7561 = vld [vmem:[%s12 + $0x188] sm:$0xf]
      %v7562 = vld [vmem:[%s12 + $0x18c] sm:$0xf]
      %v7563 = vld [vmem:[%s12 + $0x190] sm:$0xf]
      %v7564 = vld [vmem:[%s12 + $0x194] sm:$0xf]
      %v7565 = vld [vmem:[%s12 + $0x198] sm:$0xf]
      %v7566 = vld [vmem:[%s12 + $0x19c] sm:$0xf]
      %v7567 = vld [vmem:[%s12 + $0x1a0] sm:$0xf]
      %v7568 = vld [vmem:[%s12 + $0x1a4] sm:$0xf]
      %v7569 = vld [vmem:[%s12 + $0x1a8] sm:$0xf]
      %v7570 = vld [vmem:[%s12 + $0x1ac] sm:$0xf]
      %v7571 = vld [vmem:[%s12 + $0x1b0] sm:$0xf]
      %v7572 = vld [vmem:[%s12 + $0x1b4] sm:$0xf]
      %v7573 = vld [vmem:[%s12 + $0x1b8] sm:$0xf]
      %v7574 = vld [vmem:[%s12 + $0x1bc] sm:$0xf]
      %v7575 = vld [vmem:[%s12 + $0x1c0] sm:$0xf]
      %v7576 = vld [vmem:[%s12 + $0x1c4] sm:$0xf]
      %v7577 = vld [vmem:[%s12 + $0x1c8] sm:$0xf]
      %v7578 = vld [vmem:[%s12 + $0x1cc] sm:$0xf]
      %v7579 = vld [vmem:[%s12 + $0x1d0] sm:$0xf]
      %v7580 = vld [vmem:[%s12 + $0x1d4] sm:$0xf]
      %v7581 = vld [vmem:[%s12 + $0x1d8] sm:$0xf]
      %v7582 = vld [vmem:[%s12 + $0x1dc] sm:$0xf]
      %v7703 = vunpack.c.l.b16 %v7463
      %v7704 = vunpack.c.l.b16 %v7464
      %v7705 = vunpack.c.l.b16 %v7465
      %v7706 = vunpack.c.l.b16 %v7466
      %v7707 = vunpack.c.l.b16 %v7467
      %v7708 = vunpack.c.l.b16 %v7468
      %v7709 = vunpack.c.l.b16 %v7469
      %v7710 = vunpack.c.l.b16 %v7470
      %v7711 = vunpack.c.l.b16 %v7471
      %v7712 = vunpack.c.l.b16 %v7472
      %v7713 = vunpack.c.l.b16 %v7473
      %v7714 = vunpack.c.l.b16 %v7474
      %v7715 = vunpack.c.l.b16 %v7475
      %v7716 = vunpack.c.l.b16 %v7476
      %v7717 = vunpack.c.l.b16 %v7477
      %v7718 = vunpack.c.l.b16 %v7478
      %v7719 = vunpack.c.l.b16 %v7479
      %v7720 = vunpack.c.l.b16 %v7480
      %v7721 = vunpack.c.l.b16 %v7481
      %v7722 = vunpack.c.l.b16 %v7482
      %v7723 = vunpack.c.l.b16 %v7483
      %v7724 = vunpack.c.l.b16 %v7484
      %v7725 = vunpack.c.l.b16 %v7485
      %v7726 = vunpack.c.l.b16 %v7486
      %v7727 = vunpack.c.l.b16 %v7487
      %v7728 = vunpack.c.l.b16 %v7488
      %v7729 = vunpack.c.l.b16 %v7489
      %v7730 = vunpack.c.l.b16 %v7490
      %v7731 = vunpack.c.l.b16 %v7491
      %v7732 = vunpack.c.l.b16 %v7492
      %v7733 = vunpack.c.l.b16 %v7493
      %v7734 = vunpack.c.l.b16 %v7494
      %v7735 = vunpack.c.l.b16 %v7495
      %v7736 = vunpack.c.l.b16 %v7496
      %v7737 = vunpack.c.l.b16 %v7497
      %v7738 = vunpack.c.l.b16 %v7498
      %v7739 = vunpack.c.l.b16 %v7499
      %v7740 = vunpack.c.l.b16 %v7500
      %v7741 = vunpack.c.l.b16 %v7501
      %v7742 = vunpack.c.l.b16 %v7502
      %v7743 = vunpack.c.l.b16 %v7503
      %v7744 = vunpack.c.l.b16 %v7504
      %v7745 = vunpack.c.l.b16 %v7505
      %v7746 = vunpack.c.l.b16 %v7506
      %v7747 = vunpack.c.l.b16 %v7507
      %v7748 = vunpack.c.l.b16 %v7508
      %v7749 = vunpack.c.l.b16 %v7509
      %v7750 = vunpack.c.l.b16 %v7510
      %v7751 = vunpack.c.l.b16 %v7511
      %v7752 = vunpack.c.l.b16 %v7512
      %v7753 = vunpack.c.l.b16 %v7513
      %v7754 = vunpack.c.l.b16 %v7514
      %v7755 = vunpack.c.l.b16 %v7515
      %v7756 = vunpack.c.l.b16 %v7516
      %v7757 = vunpack.c.l.b16 %v7517
      %v7758 = vunpack.c.l.b16 %v7518
      %v7759 = vunpack.c.l.b16 %v7519
      %v7760 = vunpack.c.l.b16 %v7520
      %v7761 = vunpack.c.l.b16 %v7521
      %v7762 = vunpack.c.l.b16 %v7522
      %v7763 = vunpack.c.l.b16 %v7523
      %v7764 = vunpack.c.l.b16 %v7524
      %v7765 = vunpack.c.l.b16 %v7525
      %v7766 = vunpack.c.l.b16 %v7526
      %v7767 = vunpack.c.l.b16 %v7527
      %v7768 = vunpack.c.l.b16 %v7528
      %v7769 = vunpack.c.l.b16 %v7529
      %v7770 = vunpack.c.l.b16 %v7530
      %v7771 = vunpack.c.l.b16 %v7531
      %v7772 = vunpack.c.l.b16 %v7532
      %v7773 = vunpack.c.l.b16 %v7533
      %v7774 = vunpack.c.l.b16 %v7534
      %v7775 = vunpack.c.l.b16 %v7535
      %v7776 = vunpack.c.l.b16 %v7536
      %v7777 = vunpack.c.l.b16 %v7537
      %v7778 = vunpack.c.l.b16 %v7538
      %v7779 = vunpack.c.l.b16 %v7539
      %v7780 = vunpack.c.l.b16 %v7540
      %v7781 = vunpack.c.l.b16 %v7541
      %v7782 = vunpack.c.l.b16 %v7542
      %v7783 = vunpack.c.l.b16 %v7543
      %v7784 = vunpack.c.l.b16 %v7544
      %v7785 = vunpack.c.l.b16 %v7545
      %v7786 = vunpack.c.l.b16 %v7546
      %v7787 = vunpack.c.l.b16 %v7547
      %v7788 = vunpack.c.l.b16 %v7548
      %v7789 = vunpack.c.l.b16 %v7549
      %v7790 = vunpack.c.l.b16 %v7550
      %v7791 = vunpack.c.l.b16 %v7551
      %v7792 = vunpack.c.l.b16 %v7552
      %v7793 = vunpack.c.l.b16 %v7553
      %v7794 = vunpack.c.l.b16 %v7554
      %v7795 = vunpack.c.l.b16 %v7555
      %v7796 = vunpack.c.l.b16 %v7556
      %v7797 = vunpack.c.l.b16 %v7557
      %v7798 = vunpack.c.l.b16 %v7558
      %v7799 = vunpack.c.l.b16 %v7559
      %v7800 = vunpack.c.l.b16 %v7560
      %v7801 = vunpack.c.l.b16 %v7561
      %v7802 = vunpack.c.l.b16 %v7562
      %v7803 = vunpack.c.l.b16 %v7563
      %v7804 = vunpack.c.l.b16 %v7564
      %v7805 = vunpack.c.l.b16 %v7565
      %v7806 = vunpack.c.l.b16 %v7566
      %v7807 = vunpack.c.l.b16 %v7567
      %v7808 = vunpack.c.l.b16 %v7568
      %v7809 = vunpack.c.l.b16 %v7569
      %v7810 = vunpack.c.l.b16 %v7570
      %v7811 = vunpack.c.l.b16 %v7571
      %v7812 = vunpack.c.l.b16 %v7572
      %v7813 = vunpack.c.l.b16 %v7573
      %v7814 = vunpack.c.l.b16 %v7574
      %v7815 = vunpack.c.l.b16 %v7575
      %v7816 = vunpack.c.l.b16 %v7576
      %v7817 = vunpack.c.l.b16 %v7577
      %v7818 = vunpack.c.l.b16 %v7578
      %v7819 = vunpack.c.l.b16 %v7579
      %v7820 = vunpack.c.l.b16 %v7580
      %v7821 = vunpack.c.l.b16 %v7581
      %v7822 = vunpack.c.l.b16 %v7582
      %v7823 = vpack.c.b16 %v7704, %v7703
      %v7824 = vpack.c.b16 %v7706, %v7705
      %v7825 = vpack.c.b16 %v7708, %v7707
      %v7826 = vpack.c.b16 %v7710, %v7709
      %v7827 = vpack.c.b16 %v7712, %v7711
      %v7828 = vpack.c.b16 %v7714, %v7713
      %v7829 = vpack.c.b16 %v7716, %v7715
      %v7830 = vpack.c.b16 %v7718, %v7717
      %v7831 = vpack.c.b16 %v7720, %v7719
      %v7832 = vpack.c.b16 %v7722, %v7721
      %v7833 = vpack.c.b16 %v7724, %v7723
      %v7834 = vpack.c.b16 %v7726, %v7725
      %v7835 = vpack.c.b16 %v7728, %v7727
      %v7836 = vpack.c.b16 %v7730, %v7729
      %v7837 = vpack.c.b16 %v7732, %v7731
      %v7838 = vpack.c.b16 %v7734, %v7733
      %v7839 = vpack.c.b16 %v7736, %v7735
      %v7840 = vpack.c.b16 %v7738, %v7737
      %v7841 = vpack.c.b16 %v7740, %v7739
      %v7842 = vpack.c.b16 %v7742, %v7741
      %v7843 = vpack.c.b16 %v7744, %v7743
      %v7844 = vpack.c.b16 %v7746, %v7745
      %v7845 = vpack.c.b16 %v7748, %v7747
      %v7846 = vpack.c.b16 %v7750, %v7749
      %v7847 = vpack.c.b16 %v7752, %v7751
      %v7848 = vpack.c.b16 %v7754, %v7753
      %v7849 = vpack.c.b16 %v7756, %v7755
      %v7850 = vpack.c.b16 %v7758, %v7757
      %v7851 = vpack.c.b16 %v7760, %v7759
      %v7852 = vpack.c.b16 %v7762, %v7761
      %v7853 = vpack.c.b16 %v7764, %v7763
      %v7854 = vpack.c.b16 %v7766, %v7765
      %v7855 = vpack.c.b16 %v7768, %v7767
      %v7856 = vpack.c.b16 %v7770, %v7769
      %v7857 = vpack.c.b16 %v7772, %v7771
      %v7858 = vpack.c.b16 %v7774, %v7773
      %v7859 = vpack.c.b16 %v7776, %v7775
      %v7860 = vpack.c.b16 %v7778, %v7777
      %v7861 = vpack.c.b16 %v7780, %v7779
      %v7862 = vpack.c.b16 %v7782, %v7781
      %v7863 = vpack.c.b16 %v7784, %v7783
      %v7864 = vpack.c.b16 %v7786, %v7785
      %v7865 = vpack.c.b16 %v7788, %v7787
      %v7866 = vpack.c.b16 %v7790, %v7789
      %v7867 = vpack.c.b16 %v7792, %v7791
      %v7868 = vpack.c.b16 %v7794, %v7793
      %v7869 = vpack.c.b16 %v7796, %v7795
      %v7870 = vpack.c.b16 %v7798, %v7797
      %v7871 = vpack.c.b16 %v7800, %v7799
      %v7872 = vpack.c.b16 %v7802, %v7801
      %v7873 = vpack.c.b16 %v7804, %v7803
      %v7874 = vpack.c.b16 %v7806, %v7805
      %v7875 = vpack.c.b16 %v7808, %v7807
      %v7876 = vpack.c.b16 %v7810, %v7809
      %v7877 = vpack.c.b16 %v7812, %v7811
      %v7878 = vpack.c.b16 %v7814, %v7813
      %v7879 = vpack.c.b16 %v7816, %v7815
      %v7880 = vpack.c.b16 %v7818, %v7817
      %v7881 = vpack.c.b16 %v7820, %v7819
      %v7882 = vpack.c.b16 %v7822, %v7821
      %v7944 = vsel %vm2067, %v7462, 0
      %7946 = vmatprep.subr.bf16.mxu0 0
      %7947 = vmatpush1.bf16.msra.mxu0 %v7823
      %7948 = vmatprep.subr.bf16.mxu0 0
      %7949 = vmatpush1.bf16.msra.mxu0 %v7824
      %7950 = vmatprep.subr.bf16.mxu0 0
      %7951 = vmatpush1.bf16.msra.mxu0 %v7825
      %7952 = vmatprep.subr.bf16.mxu0 0
      %7953 = vmatpush1.bf16.msra.mxu0 %v7826
      %7954 = vmatprep.subr.bf16.mxu0 0
      %7955 = vmatpush1.bf16.msra.mxu0 %v7827
      %7956 = vmatprep.subr.bf16.mxu0 0
      %7957 = vmatpush1.bf16.msra.mxu0 %v7828
      %7958 = vmatprep.subr.bf16.mxu0 0
      %7959 = vmatpush1.bf16.msra.mxu0 %v7829
      %7960 = vmatprep.subr.bf16.mxu0 0
      %7961 = vmatpush1.bf16.msra.mxu0 %v7830
      %7962 = vmatprep.subr.bf16.mxu0 0
      %7963 = vmatpush1.bf16.msra.mxu0 %v7831
      %7964 = vmatprep.subr.bf16.mxu0 0
      %7965 = vmatpush1.bf16.msra.mxu0 %v7832
      %7966 = vmatprep.subr.bf16.mxu0 0
      %7967 = vmatpush1.bf16.msra.mxu0 %v7833
      %7968 = vmatprep.subr.bf16.mxu0 0
      %7969 = vmatpush1.bf16.msra.mxu0 %v7834
      %7970 = vmatprep.subr.bf16.mxu0 0
      %7971 = vmatpush1.bf16.msra.mxu0 %v7835
      %7972 = vmatprep.subr.bf16.mxu0 0
      %7973 = vmatpush1.bf16.msra.mxu0 %v7836
      %7974 = vmatprep.subr.bf16.mxu0 0
      %7975 = vmatpush1.bf16.msra.mxu0 %v7837
      %7976 = vmatprep.subr.bf16.mxu0 0
      %7977 = vmatpush1.bf16.msra.mxu0 %v7838
      %7978 = vmatprep.mubr.bf16.mxu0 %v7456
      %7979 = vmatmul.mubr.bf16.gmra.mrb[0].mxu0 %v7455
      %v7980 = vpop.f32.mrb[0].mxu0
      %v7981 = vadd.f32 0.0, %v7980
      %v7982 = vpop.f32.mrb[0].mxu0
      %v7983 = vpop.f32.mrb[0].mxu0
      %v7984 = vadd.f32 0.0, %v7983
      %v7985 = vpop.f32.mrb[0].mxu0
      %7986 = vdwg.mxu0
      %7987 = vmatprep.subr.bf16.mxu0 0
      %7988 = vmatpush1.bf16.msra.mxu0 %v7839
      %7989 = vmatprep.subr.bf16.mxu0 0
      %7990 = vmatpush1.bf16.msra.mxu0 %v7840
      %7991 = vmatprep.subr.bf16.mxu0 0
      %7992 = vmatpush1.bf16.msra.mxu0 %v7841
      %7993 = vmatprep.subr.bf16.mxu0 0
      %7994 = vmatpush1.bf16.msra.mxu0 %v7842
      %7995 = vmatprep.subr.bf16.mxu0 0
      %7996 = vmatpush1.bf16.msra.mxu0 %v7843
      %7997 = vmatprep.subr.bf16.mxu0 0
      %7998 = vmatpush1.bf16.msra.mxu0 %v7844
      %7999 = vmatprep.subr.bf16.mxu0 0
      %8000 = vmatpush1.bf16.msra.mxu0 %v7845
      %8001 = vmatprep.subr.bf16.mxu0 0
      %8002 = vmatpush1.bf16.msra.mxu0 %v7846
      %8003 = vmatprep.subr.bf16.mxu0 0
      %8004 = vmatpush1.bf16.msra.mxu0 %v7847
      %8005 = vmatprep.subr.bf16.mxu0 0
      %8006 = vmatpush1.bf16.msra.mxu0 %v7848
      %8007 = vmatprep.subr.bf16.mxu0 0
      %8008 = vmatpush1.bf16.msra.mxu0 %v7849
      %8009 = vmatprep.subr.bf16.mxu0 0
      %8010 = vmatpush1.bf16.msra.mxu0 %v7850
      %8011 = vmatprep.subr.bf16.mxu0 0
      %8012 = vmatpush1.bf16.msra.mxu0 %v7851
      %8013 = vmatprep.subr.bf16.mxu0 0
      %8014 = vmatpush1.bf16.msra.mxu0 %v7852
      %8015 = vmatprep.subr.bf16.mxu0 0
      %8016 = vmatpush1.bf16.msra.mxu0 %v7853
      %8017 = vmatprep.subr.bf16.mxu0 0
      %8018 = vmatpush1.bf16.msra.mxu0 %v7854
      %8019 = vmatprep.mubr.bf16.mxu0 %v7458
      %8020 = vmatmul.mubr.bf16.gmra.mrb[0].mxu0 %v7457
      %v8021 = vpop.f32.mrb[0].mxu0
      %v8022 = vadd.f32 %v7981, %v8021
      %v8023 = vpop.f32.mrb[0].mxu0
      %v8024 = vpop.f32.mrb[0].mxu0
      %v8025 = vadd.f32 %v7984, %v8024
      %v8026 = vpop.f32.mrb[0].mxu0
      %8027 = vdwg.mxu0
      %8028 = vmatprep.subr.bf16.mxu0 0
      %8029 = vmatpush1.bf16.msra.mxu0 %v7855
      %8030 = vmatprep.subr.bf16.mxu0 0
      %8031 = vmatpush1.bf16.msra.mxu0 %v7856
      %8032 = vmatprep.subr.bf16.mxu0 0
      %8033 = vmatpush1.bf16.msra.mxu0 %v7857
      %8034 = vmatprep.subr.bf16.mxu0 0
      %8035 = vmatpush1.bf16.msra.mxu0 %v7858
      %8036 = vmatprep.subr.bf16.mxu0 0
      %8037 = vmatpush1.bf16.msra.mxu0 %v7859
      %8038 = vmatprep.subr.bf16.mxu0 0
      %8039 = vmatpush1.bf16.msra.mxu0 %v7860
      %8040 = vmatprep.subr.bf16.mxu0 0
      %8041 = vmatpush1.bf16.msra.mxu0 %v7861
      %8042 = vmatprep.subr.bf16.mxu0 0
      %8043 = vmatpush1.bf16.msra.mxu0 %v7862
      %8044 = vmatprep.subr.bf16.mxu0 0
      %8045 = vmatpush1.bf16.msra.mxu0 %v7863
      %8046 = vmatprep.subr.bf16.mxu0 0
      %8047 = vmatpush1.bf16.msra.mxu0 %v7864
      %8048 = vmatprep.subr.bf16.mxu0 0
      %8049 = vmatpush1.bf16.msra.mxu0 %v7865
      %8050 = vmatprep.subr.bf16.mxu0 0
      %8051 = vmatpush1.bf16.msra.mxu0 %v7866
      %8052 = vmatprep.subr.bf16.mxu0 0
      %8053 = vmatpush1.bf16.msra.mxu0 %v7867
      %8054 = vmatprep.subr.bf16.mxu0 0
      %8055 = vmatpush1.bf16.msra.mxu0 %v7868
      %8056 = vmatprep.subr.bf16.mxu0 0
      %8057 = vmatpush1.bf16.msra.mxu0 %v7869
      %8058 = vmatprep.subr.bf16.mxu0 0
      %8059 = vmatpush1.bf16.msra.mxu0 %v7870
      %8060 = vmatprep.mubr.bf16.mxu0 %v7460
      %8061 = vmatmul.mubr.bf16.gmra.mrb[0].mxu0 %v7459
      %v8062 = vpop.f32.mrb[0].mxu0
      %v8063 = vadd.f32 %v8022, %v8062
      %v8064 = vpop.f32.mrb[0].mxu0
      %v8065 = vpop.f32.mrb[0].mxu0
      %v8066 = vadd.f32 %v8025, %v8065
      %v8067 = vpop.f32.mrb[0].mxu0
      %8068 = vdwg.mxu0
      %8069 = vmatprep.subr.bf16.mxu0 0
      %8070 = vmatpush1.bf16.msra.mxu0 %v7871
      %8071 = vmatprep.subr.bf16.mxu0 0
      %8072 = vmatpush1.bf16.msra.mxu0 %v7872
      %8073 = vmatprep.subr.bf16.mxu0 0
      %8074 = vmatpush1.bf16.msra.mxu0 %v7873
      %8075 = vmatprep.subr.bf16.mxu0 0
      %8076 = vmatpush1.bf16.msra.mxu0 %v7874
      %8077 = vmatprep.subr.bf16.mxu0 0
      %8078 = vmatpush1.bf16.msra.mxu0 %v7875
      %8079 = vmatprep.subr.bf16.mxu0 0
      %8080 = vmatpush1.bf16.msra.mxu0 %v7876
      %8081 = vmatprep.subr.bf16.mxu0 0
      %8082 = vmatpush1.bf16.msra.mxu0 %v7877
      %8083 = vmatprep.subr.bf16.mxu0 0
      %8084 = vmatpush1.bf16.msra.mxu0 %v7878
      %8085 = vmatprep.subr.bf16.mxu0 0
      %8086 = vmatpush1.bf16.msra.mxu0 %v7879
      %8087 = vmatprep.subr.bf16.mxu0 0
      %8088 = vmatpush1.bf16.msra.mxu0 %v7880
      %8089 = vmatprep.subr.bf16.mxu0 0
      %8090 = vmatpush1.bf16.msra.mxu0 %v7881
      %8091 = vmatprep.subr.bf16.mxu0 0
      %8092 = vmatpush1.bf16.msra.mxu0 %v7882
      %8093 = vmatprep.subr.bf16.mxu0 0
      %8094 = vmatpush1.bf16.msra.mxu0 0
      %8095 = vmatprep.subr.bf16.mxu0 0
      %8096 = vmatpush1.bf16.msra.mxu0 0
      %8097 = vmatprep.subr.bf16.mxu0 0
      %8098 = vmatpush1.bf16.msra.mxu0 0
      %8099 = vmatprep.subr.bf16.mxu0 0
      %8100 = vmatpush1.bf16.msra.mxu0 0
      %8101 = vmatprep.mubr.bf16.mxu0 %v7944
      %8102 = vmatmul.mubr.bf16.gmra.mrb[0].mxu0 %v7461
      %v8103 = vpop.f32.mrb[0].mxu0
      %v8104 = vadd.f32 %v8063, %v8103
      %v8105 = vpop.f32.mrb[0].mxu0
      %v8106 = vpop.f32.mrb[0].mxu0
      %v8107 = vadd.f32 %v8066, %v8106
      %v8108 = vpop.f32.mrb[0].mxu0
      %8109 = vdwg.mxu0
      %v8110 = vadd.f32 %v6048, %v8104
      %v8111 = vadd.f32 %v6053, %v8107
      %v8112 = vmax.f32 %v8110, 0.0
      %v8113 = vmax.f32 %v8111, 0.0
      %v8114 = vld [vmem:[%s13] sm:$0xff]
      %v8115 = vld [vmem:[%s13 + $0x8] sm:$0xff]
      %v8116 = vld [vmem:[%s13 + $0x10] sm:$0xff]
      %v8117 = vld [vmem:[%s13 + $0x18] sm:$0xff]
      %v8118 = vld [vmem:[%s13 + $0x20] sm:$0xff]
      %v8119 = vld [vmem:[%s13 + $0x28] sm:$0xff]
      %v8120 = vld [vmem:[%s13 + $0x30] sm:$0xff]
      %v8121 = vld [vmem:[%s13 + $0x38] sm:$0xff]
      %v8122 = vld [vmem:[%s14] sm:$0x1]
      %v8124 = vlaneseq
      %v8125 = vshrl.u32 %v8124, 7
      %v8126 = vsub.s32 0, %v8125
      %v8127 = vrot.slane %v8122, %v8126
      %v8130 = vsel %vm2067, %v8112, 0
      %v8133 = vsel %vm2067, %v8113, 0
      %8135 = vmatprep.subr.mxu0 0.0
      %8136 = vmatpush1.msra.mxu0 %v8114
      %8137 = vmatprep.subr.mxu0 0.0
      %8138 = vmatpush1.msra.mxu0 %v8115
      %8139 = vmatprep.subr.mxu0 0.0
      %8140 = vmatpush1.msra.mxu0 %v8116
      %8141 = vmatprep.subr.mxu0 0.0
      %8142 = vmatpush1.msra.mxu0 %v8117
      %8143 = vmatprep.subr.mxu0 0.0
      %8144 = vmatpush1.msra.mxu0 %v8118
      %8145 = vmatprep.subr.mxu0 0.0
      %8146 = vmatpush1.msra.mxu0 %v8119
      %8147 = vmatprep.subr.mxu0 0.0
      %8148 = vmatpush1.msra.mxu0 %v8120
      %8149 = vmatprep.subr.mxu0 0.0
      %8150 = vmatpush1.msra.mxu0 %v8121
      %8151 = vmatprep.subr.mxu0 0.0
      %8152 = vmatpush1.msra.mxu0 0.0
      %8153 = vmatprep.subr.mxu0 0.0
      %8154 = vmatpush1.msra.mxu0 0.0
      %8155 = vmatprep.subr.mxu0 0.0
      %8156 = vmatpush1.msra.mxu0 0.0
      %8157 = vmatprep.subr.mxu0 0.0
      %8158 = vmatpush1.msra.mxu0 0.0
      %8159 = vmatprep.subr.mxu0 0.0
      %8160 = vmatpush1.msra.mxu0 0.0
      %8161 = vmatprep.subr.mxu0 0.0
      %8162 = vmatpush1.msra.mxu0 0.0
      %8163 = vmatprep.subr.mxu0 0.0
      %8164 = vmatpush1.msra.mxu0 0.0
      %8165 = vmatprep.subr.mxu0 0.0
      %8166 = vmatpush1.msra.mxu0 0.0
      %8167 = vmatprep.subr.mxu0 0.0
      %8168 = vmatpush1.msra.mxu0 0.0
      %8169 = vmatprep.subr.mxu0 0.0
      %8170 = vmatpush1.msra.mxu0 0.0
      %8171 = vmatprep.subr.mxu0 0.0
      %8172 = vmatpush1.msra.mxu0 0.0
      %8173 = vmatprep.subr.mxu0 0.0
      %8174 = vmatpush1.msra.mxu0 0.0
      %8175 = vmatprep.subr.mxu0 0.0
      %8176 = vmatpush1.msra.mxu0 0.0
      %8177 = vmatprep.subr.mxu0 0.0
      %8178 = vmatpush1.msra.mxu0 0.0
      %8179 = vmatprep.subr.mxu0 0.0
      %8180 = vmatpush1.msra.mxu0 0.0
      %8181 = vmatprep.subr.mxu0 0.0
      %8182 = vmatpush1.msra.mxu0 0.0
      %8183 = vmatprep.subr.mxu0 0.0
      %8184 = vmatpush1.msra.mxu0 0.0
      %8185 = vmatprep.subr.mxu0 0.0
      %8186 = vmatpush1.msra.mxu0 0.0
      %8187 = vmatprep.subr.mxu0 0.0
      %8188 = vmatpush1.msra.mxu0 0.0
      %8189 = vmatprep.subr.mxu0 0.0
      %8190 = vmatpush1.msra.mxu0 0.0
      %8191 = vmatprep.subr.mxu0 0.0
      %8192 = vmatpush1.msra.mxu0 0.0
      %8193 = vmatprep.subr.mxu0 0.0
      %8194 = vmatpush1.msra.mxu0 0.0
      %8195 = vmatprep.subr.mxu0 0.0
      %8196 = vmatpush1.msra.mxu0 0.0
      %8197 = vmatprep.subr.mxu0 0.0
      %8198 = vmatpush1.msra.mxu0 0.0
      %8199 = vmatprep.mubr.f32.mxu0 0.0
      %8200 = vmatmul.mubr.f32.gmra.mrb[0].mxu0 %v8130
      %v8201 = vpop.f32.mrb[0].mxu0
      %v8202 = vadd.f32 %v8127, %v8201
      %v8203 = vpop.f32.mrb[0].mxu0
      %8204 = vmatprep.mubr.f32.mxu0 0.0
      %8205 = vmatmul.mubr.f32.gmra.mrb[0].mxu0 %v8133
      %v8206 = vpop.f32.mrb[0].mxu0
      %v8207 = vadd.f32 %v8127, %v8206
      %v8208 = vpop.f32.mrb[0].mxu0
      %8209 = vdwg.mxu0
      %8212 = vrot.lane.b32.xlu0 %v8202, 3
      %v8213 = vpop.permute.xlu0 %8212
      %8214 = vrot.lane.b32.xlu0 %v8207, 3
      %v8215 = vpop.permute.xlu0 %8214
      %8220 = vrot.lane.b32.xlu0 %v5968, 5
      %v8221 = vpop.permute.xlu0 %8220
      %8222 = vrot.lane.b32.xlu0 %v5969, 5
      %v8223 = vpop.permute.xlu0 %8222
      %8228 = vrot.lane.b32.xlu0 %v5954, 7
      %v8229 = vpop.permute.xlu0 %8228
      %8230 = vrot.lane.b32.xlu0 %v5955, 7
      %v8231 = vpop.permute.xlu0 %8230
      %v8234 = vsel %vm620, %v5851, %v8213
      %v8235 = vsel %vm620, %v5856, %v8215
      %vm8236 = vcmask 48128
      %v8237 = vsel %vm8236, %v8234, %v8221
      %v8238 = vsel %vm8236, %v8235, %v8223
      %vm8239 = vcmask 56320
      %v8240 = vsel %vm8239, %v8237, %v8229
      %v8241 = vsel %vm8239, %v8238, %v8231
      %vm8242 = vcmask 64512
      %8243 = vst.msk [vmem:[%s602] sm:$0xff] %vm8242, %v8240
      %8244 = vst.msk [vmem:[%s602 + $0x8] sm:$0xff] %vm8242, %v8241
      %p8245 = scmp.lt.s32.totalorder %s26, 1
      %s8246 = scalar_select %p8245, %s26, 1
      %s8247 = smul.addr %s8246, 2
      %s8248 = smul.addr %s8247, 8
      %s8249 = scalar_lea.vmem %s15, %s8248
      // Predicated region
      $region81: #{generator_vanilla_forward.1} parent=79 // pred_check
        %p8250 = pneg %p394
      $region82: #{generator_vanilla_forward.1} parent=79 // pred_check_branch
        %8252 = sbr.rel (%p8250) target = $region84
      $region83: #{generator_vanilla_forward.1} parent=79 // pred_region
        _
      $region84: #{generator_vanilla_forward.1} parent=79 // pred_fallthru
        _
    $region80: #{generator_vanilla_forward.1} parent=5 // pred_fallthru
      _
    %p8253 = scmp.le.s32.totalorder 2, %s21
    // Predicated region
    $region85: #{generator_vanilla_forward.1} parent=5 // pred_check
      %p8254 = pneg %p8253
    $region86: #{generator_vanilla_forward.1} parent=5 // pred_check_branch
      %8256 = sbr.rel (%p8254) target = $region88
    $region87: #{generator_vanilla_forward.1} parent=5 // pred_region
      %s8257 = ssub.s32 %s21, 2
      // Predicated region
      $region89: #{generator_vanilla_forward.1} parent=87 // pred_check
        %p8258 = pneg %p400
      $region90: #{generator_vanilla_forward.1} parent=87 // pred_check_branch
        %8260 = sbr.rel (%p8258) target = $region92
      $region91: #{generator_vanilla_forward.1} parent=87 // pred_region
        %p8261 = scmp.lt.s32.totalorder %s27, 1
        %s8262 = scalar_select %p8261, %s27, 1
        %s8263 = smul.addr %s8262, 2
        %s8264 = smul.addr %s8263, 8
        %s8265 = scalar_lea.vmem %s15, %s8264
      $region92: #{generator_vanilla_forward.1} parent=87 // pred_fallthru
        _
    $region88: #{generator_vanilla_forward.1} parent=5 // pred_fallthru
      _
  $region6: #{generator_vanilla_forward.1} parent=0 // loop_footer
    %s25 = sadd.s32 1, %s21
  $region7: #{generator_vanilla_forward.1} parent=0 // loop_footer_branch
    %20 = sbr.rel target = $region3
  $region8: #{generator_vanilla_forward.1} parent=0 // loop_exit
    _

</llo_original>
